<compile_context>
chip_gen: v7x
topology: tpu7x:2x2x1
jax: 0.10.0
libtpu: 0.0.40
codegen_flags: <defaults>
</compile_context>

<pallas_src>
import jax
import jax.numpy as jnp
from jax.experimental import pallas as pl
from jax.experimental.pallas import tpu as pltpu

# ----------------------------- configuration --------------------------------
DIM = 32                   # d_model
DEPTH = 2                  # number of Mamba layers
CATEGORIES = (3, 5, 7)     # category cardinalities
NUM_CONT = 4               # number of continuous features
NUM_SPECIAL = 2            # special tokens
DIM_OUT = 1                # logits dim

D_STATE = 16               # MambaConfig.d_state
EXPAND = 2                 # MambaConfig.expand_factor
D_CONV = 4                 # MambaConfig.d_conv
D_INNER = EXPAND * DIM     # 64
DT_RANK = -(-DIM // 16)    # ceil(d_model / 16) = 2

SEQ_LEN = 1 + len(CATEGORIES) + NUM_CONT   # cls + categorical + continuous = 8

RMS_EPS = 1e-5
LN_EPS = 1e-5

# row layout of the packed per-layer "vec" slab (VEC_ROWS, D_INNER):
#   rows 0..D_CONV-1 : depthwise conv taps (cross-correlation order)
ROW_CONV_BIAS = D_CONV      # conv1d bias
ROW_DT_BIAS = D_CONV + 1    # dt_proj bias
ROW_D_SKIP = D_CONV + 2     # D skip parameter
VEC_ROWS = 8                # padded to a full sublane tile

MAT_COLS = D_INNER + 2 * D_STATE + DIM    # [wdelta | B | C | wout] = 128 lanes


# ------------------------------ small helpers -------------------------------
def _silu(x):
    return x * (1.0 / (1.0 + jnp.exp(-x)))


def _softplus(x):
    # numerically stable softplus using only exp/log/abs/max
    return jnp.maximum(x, 0.0) + jnp.log(1.0 + jnp.exp(-jnp.abs(x)))


def _shift_rows(x, k):
    """Causal row shift: out[r] = x[r-k] for r >= k, 0 otherwise (static k)."""
    return jnp.concatenate(
        [jnp.zeros((k, x.shape[1]), x.dtype), x[:x.shape[0] - k, :]], axis=0)


# --------------------------- fused forward kernel ----------------------------
def fused_forward_kernel(x_ref, rms_ref, win_ref, vec_ref, mat_ref, at_ref,
                         head_ref, o_ref, y_scr):
    L = SEQ_LEN
    N = D_STATE
    ED = D_INNER
    R = x_ref.shape[1]            # rows in this batch tile = L * TB
    TB = R // L                   # sequences in this tile

    # t-major rows within the tile: row r = t*TB + b_local
    x = x_ref[0]                                              # (R, D) f32

    for li in range(DEPTH):                                   # static (DEPTH=2)
        rms_w = rms_ref[li]                                   # (1, D)      f32
        win = win_ref[li]                                     # (D, 2*ED)   bf16
        vec = vec_ref[li]                                     # (8, ED)     f32
        mat = mat_ref[li]                                     # (ED, 128)   bf16
        At = at_ref[li]                                       # (N, ED)     f32

        conv_bias = vec[ROW_CONV_BIAS:ROW_CONV_BIAS + 1, :]   # (1, ED)
        dt_bias = vec[ROW_DT_BIAS:ROW_DT_BIAS + 1, :]         # (1, ED)
        d_skip = vec[ROW_D_SKIP:ROW_D_SKIP + 1, :]            # (1, ED)

        # RMSNorm (pre-norm of the residual block)
        var = jnp.mean(x * x, axis=-1, keepdims=True)
        xn = x * jax.lax.rsqrt(var + RMS_EPS) * rms_w

        # in_proj -> (x_inner, z): one lane-dense bf16 MXU matmul, f32 acc
        xz = jnp.dot(xn.astype(jnp.bfloat16), win,
                     preferred_element_type=jnp.float32)      # (R, 2*ED) f32
        xin = xz[:, :ED]
        z = xz[:, ED:]

        # causal depthwise conv1d: zero-padded row shifts (t-major layout:
        # token (t-s, b) sits exactly s*TB rows above; rows with t < s get 0,
        # which reproduces the conv's zero padding and batch boundaries).
        conv = xin * vec[D_CONV - 1:D_CONV, :]                # shift-0 tap
        for s in range(1, D_CONV):
            conv = conv + (_shift_rows(xin, s * TB)
                           * vec[D_CONV - 1 - s:D_CONV - s, :])
        xc = _silu(conv + conv_bias)                          # (R, ED) f32

        # x_proj (+ dt_proj low-rank path folded host-side): one bf16 matmul
        xcw = jnp.dot(xc.astype(jnp.bfloat16), mat[:, :ED + 2 * N],
                      preferred_element_type=jnp.float32)     # (R, ED+2N)
        delta = _softplus(xcw[:, :ED] + dt_bias)              # (R, ED)
        Bm = xcw[:, ED:ED + N]                                # (R, N)
        Cm = xcw[:, ED + N:ED + 2 * N]                        # (R, N)
        dx = delta * xc                                       # (R, ED)

        # time-major batched selective scan: only L=8 sequential steps, the
        # state for all TB sequences is carried at once as N (TB, ED) slabs;
        # the y_t = C.h contraction is a VPU multiply + accumulate over N.
        At_rows = [At[n:n + 1, :] for n in range(N)]          # (1, ED) each
        Bcols = [Bm[:, n:n + 1] for n in range(N)]            # (R, 1) each
        Ccols = [Cm[:, n:n + 1] for n in range(N)]            # (R, 1) each
        h = [jnp.zeros((TB, ED), jnp.float32) for _ in range(N)]
        for t in range(L):                                    # static, L=8
            lo = t * TB
            d_t = delta[lo:lo + TB, :]                        # (TB, ED)
            dx_t = dx[lo:lo + TB, :]                          # (TB, ED)
            y_t = jnp.zeros((TB, ED), jnp.float32)
            for n in range(N):                                # static, N=16
                dA = jnp.exp(d_t * At_rows[n])                # (TB, ED)
                h[n] = dA * h[n] + Bcols[n][lo:lo + TB, :] * dx_t
                y_t = y_t + Ccols[n][lo:lo + TB, :] * h[n]
            y_scr[lo:lo + TB, :] = y_t                        # VMEM scratch

        # D skip, z gate, out_proj + residual (bf16 MXU, f32 acc)
        y = (y_scr[...] + xc * d_skip) * _silu(z)             # (R, ED) f32
        x = x + jnp.dot(y.astype(jnp.bfloat16), mat[:, ED + 2 * N:],
                        preferred_element_type=jnp.float32)   # (R, D)

    # head: per-sequence mean over time -> LayerNorm -> Linear(dim, 1)
    xm = x[0:TB, :]
    for t in range(1, L):
        xm = xm + x[t * TB:(t + 1) * TB, :]
    xm = xm * (1.0 / L)                                       # (TB, D)
    mu = jnp.mean(xm, axis=-1, keepdims=True)
    var = jnp.mean((xm - mu) * (xm - mu), axis=-1, keepdims=True)
    xh = ((xm - mu) * jax.lax.rsqrt(var + LN_EPS)
          * head_ref[0:1, :] + head_ref[1:2, :])
    logits = (jnp.sum(xh * head_ref[2:3, :], axis=-1, keepdims=True)
              + head_ref[3:4, 0:1])
    o_ref[...] = logits                                       # (TB, 1)


# ------------------------------ parameter init --------------------------------
def init_params(key):
    ks = iter(jax.random.split(key, 64))

    def nrm(shape, scale=0.1):
        return scale * jax.random.normal(next(ks), shape, dtype=jnp.float32)

    total_tokens = sum(CATEGORIES) + NUM_SPECIAL
    params = {
        "embed": nrm((total_tokens, DIM), 1.0),
        # F.pad(categories,(1,0),value=num_special).cumsum()[:-1]
        "cat_offset": jnp.cumsum(jnp.array((NUM_SPECIAL,) + CATEGORIES[:-1],
                                           jnp.int32)),
        "num_w": nrm((NUM_CONT, DIM), 1.0),
        "num_b": nrm((NUM_CONT, DIM), 1.0),
        "cls": nrm((1, 1, DIM), 1.0),
    }
    layers = []
    A_log = jnp.log(jnp.tile(jnp.arange(1, D_STATE + 1, dtype=jnp.float32),
                             (D_INNER, 1)))
    for _ in range(DEPTH):
        layers.append({
            "rms_w": jnp.ones((DIM,), jnp.float32),
            "win_t": nrm((DIM, 2 * D_INNER)),                # in_proj.weight^T
            "convw": nrm((D_CONV, D_INNER)),                 # conv1d weight (k, ED)
            "convb": nrm((D_INNER,)),
            "wx_t": nrm((D_INNER, DT_RANK + 2 * D_STATE)),   # x_proj.weight^T
            "wdt_t": nrm((DT_RANK, D_INNER)),                # dt_proj.weight^T
            "bdt": nrm((D_INNER,)),
            "A": -jnp.exp(A_log),                            # A = -exp(A_log)
            "Dp": jnp.ones((D_INNER,), jnp.float32),
            "wout_t": nrm((D_INNER, DIM)),                   # out_proj.weight^T
        })
    params["layers"] = layers
    params["head"] = {
        "ln_w": jnp.ones((DIM,), jnp.float32),
        "ln_b": jnp.zeros((DIM,), jnp.float32),
        "w_t": nrm((DIM, DIM_OUT)),
        "b": jnp.zeros((DIM_OUT,), jnp.float32),
    }
    return params


# ------------------------ host-side one-time packing --------------------------
def pack_params(params):
    """Pack per-layer weights into a few DEPTH-stacked slabs (one DMA each).

    Matmul weights (in_proj / fused x_proj+dt_proj / out_proj) are stored as
    bf16 (MXU-native); elementwise parameters stay f32.
    """
    rms_all, win_all, vec_all, mat_all, at_all = [], [], [], [], []
    for lp in params["layers"]:
        rms_all.append(lp["rms_w"].reshape(1, DIM))
        win_all.append(lp["win_t"])                          # (D, 2*ED)
        vec = jnp.zeros((VEC_ROWS, D_INNER), jnp.float32)
        vec = vec.at[0:D_CONV].set(lp["convw"])
        vec = vec.at[ROW_CONV_BIAS].set(lp["convb"])
        vec = vec.at[ROW_DT_BIAS].set(lp["bdt"])
        vec = vec.at[ROW_D_SKIP].set(lp["Dp"])
        vec_all.append(vec)
        # fold x_proj's dt-rank columns with dt_proj: delta = softplus(xc@Wd + b)
        wdelta = lp["wx_t"][:, :DT_RANK] @ lp["wdt_t"]       # (ED, ED)
        mat_all.append(jnp.concatenate(
            [wdelta,
             lp["wx_t"][:, DT_RANK:DT_RANK + D_STATE],                   # B proj
             lp["wx_t"][:, DT_RANK + D_STATE:DT_RANK + 2 * D_STATE],     # C proj
             lp["wout_t"]], axis=1))                         # (ED, 128)
        at_all.append(lp["A"].T)                             # (N, ED)  == A^T
    hd = params["head"]
    head_all = jnp.stack(                                    # (4, D): DIM_OUT == 1
        [hd["ln_w"], hd["ln_b"], hd["w_t"][:, 0],
         jnp.zeros((DIM,), jnp.float32).at[0].set(hd["b"][0])], axis=0)
    return {
        "rms_all": jnp.stack(rms_all),                                # f32
        "win_all": jnp.stack(win_all).astype(jnp.bfloat16),           # bf16
        "vec_all": jnp.stack(vec_all),                                # f32
        "mat_all": jnp.stack(mat_all).astype(jnp.bfloat16),           # bf16
        "at_all": jnp.stack(at_all),                                  # f32
        "head_all": head_all,                                         # f32
        # embedding-side parameters (plain-JAX glue)
        "embed": params["embed"],
        "cat_offset": params["cat_offset"],
        "num_w": params["num_w"],
        "num_b": params["num_b"],
        "cls": params["cls"],
    }


def _pick_tb(b):
    """Sequences per grid tile: aim for TB*L == 128 MXU rows when possible."""
    if b % 16 == 0:
        return 16
    if b % 8 == 0:
        return 8
    return b  # small / odd batches: one tile holding the whole batch


# --------------------------------- forward ------------------------------------
def forward(packed, x_categ, x_numer):
    # categorical embedding (glue: gather in plain JAX) + numerical embedder
    idx = x_categ + packed["cat_offset"][None, :]
    x_cat = jnp.take(packed["embed"], idx, axis=0)           # (B, n_cat, D)
    x_num = x_numer[..., None] * packed["num_w"][None] + packed["num_b"][None]
    x = jnp.concatenate([x_cat, x_num], axis=1)
    b = x.shape[0]
    cls = jnp.broadcast_to(packed["cls"], (b, 1, DIM))
    x = jnp.concatenate([cls, x], axis=1).astype(jnp.float32)  # (B, L, D)
    assert x.shape[1] == SEQ_LEN, x.shape

    tb = _pick_tb(b)
    g = b // tb
    r = SEQ_LEN * tb
    # t-major repack within each batch tile: row = t*TB + b_local
    x_g = (x.reshape(g, tb, SEQ_LEN, DIM)
            .transpose(0, 2, 1, 3)
            .reshape(g, r, DIM))

    # single fused kernel: DEPTH Mamba layers + mean/LN/Linear head
    return pl.pallas_call(
        fused_forward_kernel,
        out_shape=jax.ShapeDtypeStruct((b, DIM_OUT), jnp.float32),
        grid_spec=pltpu.PrefetchScalarGridSpec(
            num_scalar_prefetch=0,
            grid=(g,),
            in_specs=[
                pl.BlockSpec((1, r, DIM), lambda i: (i, 0, 0)),
                pl.BlockSpec((DEPTH, 1, DIM), lambda i: (0, 0, 0)),
                pl.BlockSpec((DEPTH, DIM, 2 * D_INNER), lambda i: (0, 0, 0)),
                pl.BlockSpec((DEPTH, VEC_ROWS, D_INNER), lambda i: (0, 0, 0)),
                pl.BlockSpec((DEPTH, D_INNER, MAT_COLS), lambda i: (0, 0, 0)),
                pl.BlockSpec((DEPTH, D_STATE, D_INNER), lambda i: (0, 0, 0)),
                pl.BlockSpec((4, DIM), lambda i: (0, 0)),
            ],
            out_specs=pl.BlockSpec((tb, DIM_OUT), lambda i: (i, 0)),
            scratch_shapes=[pltpu.VMEM((r, D_INNER), jnp.float32)],
        ),
        compiler_params=pltpu.CompilerParams(
            dimension_semantics=("parallel",)),
    )(x_g, packed["rms_all"], packed["win_all"], packed["vec_all"],
      packed["mat_all"], packed["at_all"], packed["head_all"])


# ----------------------------------- main --------------------------------------
if __name__ == "__main__":
    key = jax.random.PRNGKey(0)
    kp, kc, kn = jax.random.split(key, 3)
    params = init_params(kp)

    B = 2
    cat_keys = jax.random.split(kc, len(CATEGORIES))
    x_categ = jnp.stack(
        [jax.random.randint(cat_keys[i], (B,), 0, CATEGORIES[i])
         for i in range(len(CATEGORIES))], axis=-1).astype(jnp.int32)
    x_numer = jax.random.normal(kn, (B, NUM_CONT), dtype=jnp.float32)

    packed = pack_params(params)                              # one-time packing
    logits = jax.jit(forward)(packed, x_categ, x_numer)
    jax.block_until_ready(logits)
    assert logits.shape == (B, DIM_OUT), logits.shape
    print("KERNEL_OK")
</pallas_src>

<mosaic_0001>
module attributes {stable_mosaic.version = 11 : i64} {
  func.func @fused_forward_kernel(%arg0: i32, %arg1: memref<1x16x32xf32, #tpu.memory_space<vmem>>, %arg2: memref<2x1x32xf32, #tpu.memory_space<vmem>>, %arg3: memref<2x32x128xbf16, #tpu.memory_space<vmem>>, %arg4: memref<2x8x64xf32, #tpu.memory_space<vmem>>, %arg5: memref<2x64x128xbf16, #tpu.memory_space<vmem>>, %arg6: memref<2x16x64xf32, #tpu.memory_space<vmem>>, %arg7: memref<4x32xf32, #tpu.memory_space<vmem>>, %arg8: memref<2x1xf32, #tpu.memory_space<vmem>>, %arg9: memref<16x64xf32, #tpu.memory_space<vmem>>) attributes {dimension_semantics = [#tpu.dimension_semantics<parallel>], iteration_bounds = array<i64: 1>, scalar_prefetch = 0 : i64, scratch_operands = 1 : i64, tpu.core_type = #tpu.core_type<tc>, window_params = [{transform_indices = @transform_0, window_bounds = array<i64: 1, 16, 32>}, {pipeline_mode = #tpu.pipeline_mode<synchronous>, transform_indices = @transform_1, window_bounds = array<i64: 2, 1, 32>}, {pipeline_mode = #tpu.pipeline_mode<synchronous>, transform_indices = @transform_2, window_bounds = array<i64: 2, 32, 128>}, {pipeline_mode = #tpu.pipeline_mode<synchronous>, transform_indices = @transform_3, window_bounds = array<i64: 2, 8, 64>}, {pipeline_mode = #tpu.pipeline_mode<synchronous>, transform_indices = @transform_4, window_bounds = array<i64: 2, 64, 128>}, {pipeline_mode = #tpu.pipeline_mode<synchronous>, transform_indices = @transform_5, window_bounds = array<i64: 2, 16, 64>}, {pipeline_mode = #tpu.pipeline_mode<synchronous>, transform_indices = @transform_6, window_bounds = array<i64: 4, 32>}, {transform_indices = @transform_7, window_bounds = array<i64: 2, 1>}]} {
    %c0 = arith.constant 0 : index
    %c0_0 = arith.constant 0 : index
    %c0_1 = arith.constant 0 : index
    %0 = vector.load %arg1[%c0, %c0_0, %c0_1] : memref<1x16x32xf32, #tpu.memory_space<vmem>>, vector<1x16x32xf32>
    %1 = vector.shape_cast %0 : vector<1x16x32xf32> to vector<16x32xf32>
    %c0_2 = arith.constant 0 : index
    %c0_3 = arith.constant 0 : index
    %c0_4 = arith.constant 0 : index
    %2 = vector.load %arg2[%c0_2, %c0_3, %c0_4] : memref<2x1x32xf32, #tpu.memory_space<vmem>>, vector<1x1x32xf32>
    %3 = vector.shape_cast %2 : vector<1x1x32xf32> to vector<1x32xf32>
    %c0_5 = arith.constant 0 : index
    %c0_6 = arith.constant 0 : index
    %c0_7 = arith.constant 0 : index
    %4 = vector.load %arg3[%c0_5, %c0_6, %c0_7] : memref<2x32x128xbf16, #tpu.memory_space<vmem>>, vector<1x32x128xbf16>
    %5 = vector.shape_cast %4 : vector<1x32x128xbf16> to vector<32x128xbf16>
    %c0_8 = arith.constant 0 : index
    %c0_9 = arith.constant 0 : index
    %c0_10 = arith.constant 0 : index
    %6 = vector.load %arg4[%c0_8, %c0_9, %c0_10] : memref<2x8x64xf32, #tpu.memory_space<vmem>>, vector<1x8x64xf32>
    %7 = vector.shape_cast %6 : vector<1x8x64xf32> to vector<8x64xf32>
    %c0_11 = arith.constant 0 : index
    %c0_12 = arith.constant 0 : index
    %c0_13 = arith.constant 0 : index
    %8 = vector.load %arg5[%c0_11, %c0_12, %c0_13] : memref<2x64x128xbf16, #tpu.memory_space<vmem>>, vector<1x64x128xbf16>
    %9 = vector.shape_cast %8 : vector<1x64x128xbf16> to vector<64x128xbf16>
    %c0_14 = arith.constant 0 : index
    %c0_15 = arith.constant 0 : index
    %c0_16 = arith.constant 0 : index
    %10 = vector.load %arg6[%c0_14, %c0_15, %c0_16] : memref<2x16x64xf32, #tpu.memory_space<vmem>>, vector<1x16x64xf32>
    %11 = vector.shape_cast %10 : vector<1x16x64xf32> to vector<16x64xf32>
    %12 = vector.extract_strided_slice %7 {offsets = [4, 0], sizes = [1, 64], strides = [1, 1]} : vector<8x64xf32> to vector<1x64xf32>
    %13 = vector.extract_strided_slice %7 {offsets = [5, 0], sizes = [1, 64], strides = [1, 1]} : vector<8x64xf32> to vector<1x64xf32>
    %14 = vector.extract_strided_slice %7 {offsets = [6, 0], sizes = [1, 64], strides = [1, 1]} : vector<8x64xf32> to vector<1x64xf32>
    %15 = arith.mulf %1, %1 : vector<16x32xf32>
    %cst = arith.constant dense<0.000000e+00> : vector<16xf32>
    %16 = vector.multi_reduction <add>, %15, %cst [1] : vector<16x32xf32> to vector<16xf32>
    %17 = vector.shape_cast %16 : vector<16xf32> to vector<16x1xf32>
    %cst_17 = arith.constant 3.200000e+01 : f32
    %18 = vector.broadcast %cst_17 : f32 to vector<16x1xf32>
    %19 = arith.divf %17, %18 : vector<16x1xf32>
    %cst_18 = arith.constant 9.99999974E-6 : f32
    %20 = vector.broadcast %cst_18 : f32 to vector<16x1xf32>
    %21 = arith.addf %19, %20 : vector<16x1xf32>
    %22 = math.rsqrt %21 : vector<16x1xf32>
    %23 = vector.broadcast %22 : vector<16x1xf32> to vector<16x32xf32>
    %24 = arith.mulf %1, %23 : vector<16x32xf32>
    %25 = vector.broadcast %3 : vector<1x32xf32> to vector<16x32xf32>
    %26 = arith.mulf %24, %25 : vector<16x32xf32>
    %27 = arith.truncf %26 : vector<16x32xf32> to vector<16x32xbf16>
    %cst_19 = arith.constant dense<0.000000e+00> : vector<16x128xf32>
    %28 = tpu.matmul %27, %5, %cst_19 {dimension_numbers = #tpu.dot_dimension_numbers<[1], [0], [0], [1], [0, 0, 1, 1], [], []>} : vector<16x32xbf16>, vector<32x128xbf16>, vector<16x128xf32> -> vector<16x128xf32>
    %29 = vector.extract_strided_slice %28 {offsets = [0, 0], sizes = [16, 64], strides = [1, 1]} : vector<16x128xf32> to vector<16x64xf32>
    %30 = vector.extract_strided_slice %28 {offsets = [0, 64], sizes = [16, 64], strides = [1, 1]} : vector<16x128xf32> to vector<16x64xf32>
    %31 = vector.extract_strided_slice %7 {offsets = [3, 0], sizes = [1, 64], strides = [1, 1]} : vector<8x64xf32> to vector<1x64xf32>
    %32 = vector.broadcast %31 : vector<1x64xf32> to vector<16x64xf32>
    %33 = arith.mulf %29, %32 : vector<16x64xf32>
    %cst_20 = arith.constant 0.000000e+00 : f32
    %34 = vector.broadcast %cst_20 : f32 to vector<2x64xf32>
    %35 = vector.extract_strided_slice %29 {offsets = [0, 0], sizes = [14, 64], strides = [1, 1]} : vector<16x64xf32> to vector<14x64xf32>
    %36 = tpu.concatenate %34, %35 in 0 : vector<2x64xf32>, vector<14x64xf32> -> vector<16x64xf32>
    %37 = vector.extract_strided_slice %7 {offsets = [2, 0], sizes = [1, 64], strides = [1, 1]} : vector<8x64xf32> to vector<1x64xf32>
    %38 = vector.broadcast %37 : vector<1x64xf32> to vector<16x64xf32>
    %39 = arith.mulf %36, %38 : vector<16x64xf32>
    %40 = arith.addf %33, %39 : vector<16x64xf32>
    %cst_21 = arith.constant 0.000000e+00 : f32
    %41 = vector.broadcast %cst_21 : f32 to vector<4x64xf32>
    %42 = vector.extract_strided_slice %29 {offsets = [0, 0], sizes = [12, 64], strides = [1, 1]} : vector<16x64xf32> to vector<12x64xf32>
    %43 = tpu.concatenate %41, %42 in 0 : vector<4x64xf32>, vector<12x64xf32> -> vector<16x64xf32>
    %44 = vector.extract_strided_slice %7 {offsets = [1, 0], sizes = [1, 64], strides = [1, 1]} : vector<8x64xf32> to vector<1x64xf32>
    %45 = vector.broadcast %44 : vector<1x64xf32> to vector<16x64xf32>
    %46 = arith.mulf %43, %45 : vector<16x64xf32>
    %47 = arith.addf %40, %46 : vector<16x64xf32>
    %cst_22 = arith.constant 0.000000e+00 : f32
    %48 = vector.broadcast %cst_22 : f32 to vector<6x64xf32>
    %49 = vector.extract_strided_slice %29 {offsets = [0, 0], sizes = [10, 64], strides = [1, 1]} : vector<16x64xf32> to vector<10x64xf32>
    %50 = tpu.concatenate %48, %49 in 0 : vector<6x64xf32>, vector<10x64xf32> -> vector<16x64xf32>
    %51 = vector.extract_strided_slice %7 {offsets = [0, 0], sizes = [1, 64], strides = [1, 1]} : vector<8x64xf32> to vector<1x64xf32>
    %52 = vector.broadcast %51 : vector<1x64xf32> to vector<16x64xf32>
    %53 = arith.mulf %50, %52 : vector<16x64xf32>
    %54 = arith.addf %47, %53 : vector<16x64xf32>
    %55 = vector.broadcast %12 : vector<1x64xf32> to vector<16x64xf32>
    %56 = arith.addf %54, %55 : vector<16x64xf32>
    %cst_23 = arith.constant 0.000000e+00 : f32
    %57 = vector.broadcast %cst_23 : f32 to vector<16x64xf32>
    %58 = arith.subf %57, %56 : vector<16x64xf32>
    %59 = math.exp %58 : vector<16x64xf32>
    %cst_24 = arith.constant 1.000000e+00 : f32
    %60 = vector.broadcast %cst_24 : f32 to vector<16x64xf32>
    %61 = arith.addf %60, %59 : vector<16x64xf32>
    %cst_25 = arith.constant 1.000000e+00 : f32
    %62 = vector.broadcast %cst_25 : f32 to vector<16x64xf32>
    %63 = arith.divf %62, %61 : vector<16x64xf32>
    %64 = arith.mulf %56, %63 : vector<16x64xf32>
    %65 = arith.truncf %64 : vector<16x64xf32> to vector<16x64xbf16>
    %66 = vector.extract_strided_slice %9 {offsets = [0, 0], sizes = [64, 96], strides = [1, 1]} : vector<64x128xbf16> to vector<64x96xbf16>
    %cst_26 = arith.constant dense<0.000000e+00> : vector<16x96xf32>
    %67 = tpu.matmul %65, %66, %cst_26 {dimension_numbers = #tpu.dot_dimension_numbers<[1], [0], [0], [1], [0, 0, 1, 1], [], []>} : vector<16x64xbf16>, vector<64x96xbf16>, vector<16x96xf32> -> vector<16x96xf32>
    %68 = vector.extract_strided_slice %67 {offsets = [0, 0], sizes = [16, 64], strides = [1, 1]} : vector<16x96xf32> to vector<16x64xf32>
    %69 = vector.broadcast %13 : vector<1x64xf32> to vector<16x64xf32>
    %70 = arith.addf %68, %69 : vector<16x64xf32>
    %cst_27 = arith.constant 0.000000e+00 : f32
    %71 = vector.broadcast %cst_27 : f32 to vector<16x64xf32>
    %72 = arith.maximumf %70, %71 : vector<16x64xf32>
    %73 = math.absf %70 : vector<16x64xf32>
    %cst_28 = arith.constant 0.000000e+00 : f32
    %74 = vector.broadcast %cst_28 : f32 to vector<16x64xf32>
    %75 = arith.subf %74, %73 : vector<16x64xf32>
    %76 = math.exp %75 : vector<16x64xf32>
    %cst_29 = arith.constant 1.000000e+00 : f32
    %77 = vector.broadcast %cst_29 : f32 to vector<16x64xf32>
    %78 = arith.addf %77, %76 : vector<16x64xf32>
    %79 = math.log %78 : vector<16x64xf32>
    %80 = arith.addf %72, %79 : vector<16x64xf32>
    %81 = vector.extract_strided_slice %67 {offsets = [0, 64], sizes = [16, 16], strides = [1, 1]} : vector<16x96xf32> to vector<16x16xf32>
    %82 = vector.extract_strided_slice %67 {offsets = [0, 80], sizes = [16, 16], strides = [1, 1]} : vector<16x96xf32> to vector<16x16xf32>
    %83 = arith.mulf %80, %64 : vector<16x64xf32>
    %84 = vector.extract_strided_slice %11 {offsets = [0, 0], sizes = [1, 64], strides = [1, 1]} : vector<16x64xf32> to vector<1x64xf32>
    %85 = vector.extract_strided_slice %11 {offsets = [1, 0], sizes = [1, 64], strides = [1, 1]} : vector<16x64xf32> to vector<1x64xf32>
    %86 = vector.extract_strided_slice %11 {offsets = [2, 0], sizes = [1, 64], strides = [1, 1]} : vector<16x64xf32> to vector<1x64xf32>
    %87 = vector.extract_strided_slice %11 {offsets = [3, 0], sizes = [1, 64], strides = [1, 1]} : vector<16x64xf32> to vector<1x64xf32>
    %88 = vector.extract_strided_slice %11 {offsets = [4, 0], sizes = [1, 64], strides = [1, 1]} : vector<16x64xf32> to vector<1x64xf32>
    %89 = vector.extract_strided_slice %11 {offsets = [5, 0], sizes = [1, 64], strides = [1, 1]} : vector<16x64xf32> to vector<1x64xf32>
    %90 = vector.extract_strided_slice %11 {offsets = [6, 0], sizes = [1, 64], strides = [1, 1]} : vector<16x64xf32> to vector<1x64xf32>
    %91 = vector.extract_strided_slice %11 {offsets = [7, 0], sizes = [1, 64], strides = [1, 1]} : vector<16x64xf32> to vector<1x64xf32>
    %92 = vector.extract_strided_slice %11 {offsets = [8, 0], sizes = [1, 64], strides = [1, 1]} : vector<16x64xf32> to vector<1x64xf32>
    %93 = vector.extract_strided_slice %11 {offsets = [9, 0], sizes = [1, 64], strides = [1, 1]} : vector<16x64xf32> to vector<1x64xf32>
    %94 = vector.extract_strided_slice %11 {offsets = [10, 0], sizes = [1, 64], strides = [1, 1]} : vector<16x64xf32> to vector<1x64xf32>
    %95 = vector.extract_strided_slice %11 {offsets = [11, 0], sizes = [1, 64], strides = [1, 1]} : vector<16x64xf32> to vector<1x64xf32>
    %96 = vector.extract_strided_slice %11 {offsets = [12, 0], sizes = [1, 64], strides = [1, 1]} : vector<16x64xf32> to vector<1x64xf32>
    %97 = vector.extract_strided_slice %11 {offsets = [13, 0], sizes = [1, 64], strides = [1, 1]} : vector<16x64xf32> to vector<1x64xf32>
    %98 = vector.extract_strided_slice %11 {offsets = [14, 0], sizes = [1, 64], strides = [1, 1]} : vector<16x64xf32> to vector<1x64xf32>
    %99 = vector.extract_strided_slice %11 {offsets = [15, 0], sizes = [1, 64], strides = [1, 1]} : vector<16x64xf32> to vector<1x64xf32>
    %100 = vector.extract_strided_slice %81 {offsets = [0, 0], sizes = [16, 1], strides = [1, 1]} : vector<16x16xf32> to vector<16x1xf32>
    %101 = vector.extract_strided_slice %81 {offsets = [0, 1], sizes = [16, 1], strides = [1, 1]} : vector<16x16xf32> to vector<16x1xf32>
    %102 = vector.extract_strided_slice %81 {offsets = [0, 2], sizes = [16, 1], strides = [1, 1]} : vector<16x16xf32> to vector<16x1xf32>
    %103 = vector.extract_strided_slice %81 {offsets = [0, 3], sizes = [16, 1], strides = [1, 1]} : vector<16x16xf32> to vector<16x1xf32>
    %104 = vector.extract_strided_slice %81 {offsets = [0, 4], sizes = [16, 1], strides = [1, 1]} : vector<16x16xf32> to vector<16x1xf32>
    %105 = vector.extract_strided_slice %81 {offsets = [0, 5], sizes = [16, 1], strides = [1, 1]} : vector<16x16xf32> to vector<16x1xf32>
    %106 = vector.extract_strided_slice %81 {offsets = [0, 6], sizes = [16, 1], strides = [1, 1]} : vector<16x16xf32> to vector<16x1xf32>
    %107 = vector.extract_strided_slice %81 {offsets = [0, 7], sizes = [16, 1], strides = [1, 1]} : vector<16x16xf32> to vector<16x1xf32>
    %108 = vector.extract_strided_slice %81 {offsets = [0, 8], sizes = [16, 1], strides = [1, 1]} : vector<16x16xf32> to vector<16x1xf32>
    %109 = vector.extract_strided_slice %81 {offsets = [0, 9], sizes = [16, 1], strides = [1, 1]} : vector<16x16xf32> to vector<16x1xf32>
    %110 = vector.extract_strided_slice %81 {offsets = [0, 10], sizes = [16, 1], strides = [1, 1]} : vector<16x16xf32> to vector<16x1xf32>
    %111 = vector.extract_strided_slice %81 {offsets = [0, 11], sizes = [16, 1], strides = [1, 1]} : vector<16x16xf32> to vector<16x1xf32>
    %112 = vector.extract_strided_slice %81 {offsets = [0, 12], sizes = [16, 1], strides = [1, 1]} : vector<16x16xf32> to vector<16x1xf32>
    %113 = vector.extract_strided_slice %81 {offsets = [0, 13], sizes = [16, 1], strides = [1, 1]} : vector<16x16xf32> to vector<16x1xf32>
    %114 = vector.extract_strided_slice %81 {offsets = [0, 14], sizes = [16, 1], strides = [1, 1]} : vector<16x16xf32> to vector<16x1xf32>
    %115 = vector.extract_strided_slice %81 {offsets = [0, 15], sizes = [16, 1], strides = [1, 1]} : vector<16x16xf32> to vector<16x1xf32>
    %116 = vector.extract_strided_slice %82 {offsets = [0, 0], sizes = [16, 1], strides = [1, 1]} : vector<16x16xf32> to vector<16x1xf32>
    %117 = vector.extract_strided_slice %82 {offsets = [0, 1], sizes = [16, 1], strides = [1, 1]} : vector<16x16xf32> to vector<16x1xf32>
    %118 = vector.extract_strided_slice %82 {offsets = [0, 2], sizes = [16, 1], strides = [1, 1]} : vector<16x16xf32> to vector<16x1xf32>
    %119 = vector.extract_strided_slice %82 {offsets = [0, 3], sizes = [16, 1], strides = [1, 1]} : vector<16x16xf32> to vector<16x1xf32>
    %120 = vector.extract_strided_slice %82 {offsets = [0, 4], sizes = [16, 1], strides = [1, 1]} : vector<16x16xf32> to vector<16x1xf32>
    %121 = vector.extract_strided_slice %82 {offsets = [0, 5], sizes = [16, 1], strides = [1, 1]} : vector<16x16xf32> to vector<16x1xf32>
    %122 = vector.extract_strided_slice %82 {offsets = [0, 6], sizes = [16, 1], strides = [1, 1]} : vector<16x16xf32> to vector<16x1xf32>
    %123 = vector.extract_strided_slice %82 {offsets = [0, 7], sizes = [16, 1], strides = [1, 1]} : vector<16x16xf32> to vector<16x1xf32>
    %124 = vector.extract_strided_slice %82 {offsets = [0, 8], sizes = [16, 1], strides = [1, 1]} : vector<16x16xf32> to vector<16x1xf32>
    %125 = vector.extract_strided_slice %82 {offsets = [0, 9], sizes = [16, 1], strides = [1, 1]} : vector<16x16xf32> to vector<16x1xf32>
    %126 = vector.extract_strided_slice %82 {offsets = [0, 10], sizes = [16, 1], strides = [1, 1]} : vector<16x16xf32> to vector<16x1xf32>
    %127 = vector.extract_strided_slice %82 {offsets = [0, 11], sizes = [16, 1], strides = [1, 1]} : vector<16x16xf32> to vector<16x1xf32>
    %128 = vector.extract_strided_slice %82 {offsets = [0, 12], sizes = [16, 1], strides = [1, 1]} : vector<16x16xf32> to vector<16x1xf32>
    %129 = vector.extract_strided_slice %82 {offsets = [0, 13], sizes = [16, 1], strides = [1, 1]} : vector<16x16xf32> to vector<16x1xf32>
    %130 = vector.extract_strided_slice %82 {offsets = [0, 14], sizes = [16, 1], strides = [1, 1]} : vector<16x16xf32> to vector<16x1xf32>
    %131 = vector.extract_strided_slice %82 {offsets = [0, 15], sizes = [16, 1], strides = [1, 1]} : vector<16x16xf32> to vector<16x1xf32>
    %cst_30 = arith.constant 0.000000e+00 : f32
    %132 = vector.broadcast %cst_30 : f32 to vector<2x64xf32>
    %cst_31 = arith.constant 0.000000e+00 : f32
    %133 = vector.broadcast %cst_31 : f32 to vector<2x64xf32>
    %cst_32 = arith.constant 0.000000e+00 : f32
    %134 = vector.broadcast %cst_32 : f32 to vector<2x64xf32>
    %cst_33 = arith.constant 0.000000e+00 : f32
    %135 = vector.broadcast %cst_33 : f32 to vector<2x64xf32>
    %cst_34 = arith.constant 0.000000e+00 : f32
    %136 = vector.broadcast %cst_34 : f32 to vector<2x64xf32>
    %cst_35 = arith.constant 0.000000e+00 : f32
    %137 = vector.broadcast %cst_35 : f32 to vector<2x64xf32>
    %cst_36 = arith.constant 0.000000e+00 : f32
    %138 = vector.broadcast %cst_36 : f32 to vector<2x64xf32>
    %cst_37 = arith.constant 0.000000e+00 : f32
    %139 = vector.broadcast %cst_37 : f32 to vector<2x64xf32>
    %cst_38 = arith.constant 0.000000e+00 : f32
    %140 = vector.broadcast %cst_38 : f32 to vector<2x64xf32>
    %cst_39 = arith.constant 0.000000e+00 : f32
    %141 = vector.broadcast %cst_39 : f32 to vector<2x64xf32>
    %cst_40 = arith.constant 0.000000e+00 : f32
    %142 = vector.broadcast %cst_40 : f32 to vector<2x64xf32>
    %cst_41 = arith.constant 0.000000e+00 : f32
    %143 = vector.broadcast %cst_41 : f32 to vector<2x64xf32>
    %cst_42 = arith.constant 0.000000e+00 : f32
    %144 = vector.broadcast %cst_42 : f32 to vector<2x64xf32>
    %cst_43 = arith.constant 0.000000e+00 : f32
    %145 = vector.broadcast %cst_43 : f32 to vector<2x64xf32>
    %cst_44 = arith.constant 0.000000e+00 : f32
    %146 = vector.broadcast %cst_44 : f32 to vector<2x64xf32>
    %cst_45 = arith.constant 0.000000e+00 : f32
    %147 = vector.broadcast %cst_45 : f32 to vector<2x64xf32>
    %148 = vector.extract_strided_slice %80 {offsets = [0, 0], sizes = [2, 64], strides = [1, 1]} : vector<16x64xf32> to vector<2x64xf32>
    %149 = vector.extract_strided_slice %83 {offsets = [0, 0], sizes = [2, 64], strides = [1, 1]} : vector<16x64xf32> to vector<2x64xf32>
    %cst_46 = arith.constant 0.000000e+00 : f32
    %150 = vector.broadcast %cst_46 : f32 to vector<2x64xf32>
    %151 = vector.broadcast %84 : vector<1x64xf32> to vector<2x64xf32>
    %152 = arith.mulf %148, %151 : vector<2x64xf32>
    %153 = math.exp %152 : vector<2x64xf32>
    %154 = arith.mulf %153, %132 : vector<2x64xf32>
    %155 = vector.extract_strided_slice %100 {offsets = [0, 0], sizes = [2, 1], strides = [1, 1]} : vector<16x1xf32> to vector<2x1xf32>
    %156 = vector.broadcast %155 : vector<2x1xf32> to vector<2x64xf32>
    %157 = arith.mulf %156, %149 : vector<2x64xf32>
    %158 = arith.addf %154, %157 : vector<2x64xf32>
    %159 = vector.extract_strided_slice %116 {offsets = [0, 0], sizes = [2, 1], strides = [1, 1]} : vector<16x1xf32> to vector<2x1xf32>
    %160 = vector.broadcast %159 : vector<2x1xf32> to vector<2x64xf32>
    %161 = arith.mulf %160, %158 : vector<2x64xf32>
    %162 = arith.addf %150, %161 : vector<2x64xf32>
    %163 = vector.broadcast %85 : vector<1x64xf32> to vector<2x64xf32>
    %164 = arith.mulf %148, %163 : vector<2x64xf32>
    %165 = math.exp %164 : vector<2x64xf32>
    %166 = arith.mulf %165, %133 : vector<2x64xf32>
    %167 = vector.extract_strided_slice %101 {offsets = [0, 0], sizes = [2, 1], strides = [1, 1]} : vector<16x1xf32> to vector<2x1xf32>
    %168 = vector.broadcast %167 : vector<2x1xf32> to vector<2x64xf32>
    %169 = arith.mulf %168, %149 : vector<2x64xf32>
    %170 = arith.addf %166, %169 : vector<2x64xf32>
    %171 = vector.extract_strided_slice %117 {offsets = [0, 0], sizes = [2, 1], strides = [1, 1]} : vector<16x1xf32> to vector<2x1xf32>
    %172 = vector.broadcast %171 : vector<2x1xf32> to vector<2x64xf32>
    %173 = arith.mulf %172, %170 : vector<2x64xf32>
    %174 = arith.addf %162, %173 : vector<2x64xf32>
    %175 = vector.broadcast %86 : vector<1x64xf32> to vector<2x64xf32>
    %176 = arith.mulf %148, %175 : vector<2x64xf32>
    %177 = math.exp %176 : vector<2x64xf32>
    %178 = arith.mulf %177, %134 : vector<2x64xf32>
    %179 = vector.extract_strided_slice %102 {offsets = [0, 0], sizes = [2, 1], strides = [1, 1]} : vector<16x1xf32> to vector<2x1xf32>
    %180 = vector.broadcast %179 : vector<2x1xf32> to vector<2x64xf32>
    %181 = arith.mulf %180, %149 : vector<2x64xf32>
    %182 = arith.addf %178, %181 : vector<2x64xf32>
    %183 = vector.extract_strided_slice %118 {offsets = [0, 0], sizes = [2, 1], strides = [1, 1]} : vector<16x1xf32> to vector<2x1xf32>
    %184 = vector.broadcast %183 : vector<2x1xf32> to vector<2x64xf32>
    %185 = arith.mulf %184, %182 : vector<2x64xf32>
    %186 = arith.addf %174, %185 : vector<2x64xf32>
    %187 = vector.broadcast %87 : vector<1x64xf32> to vector<2x64xf32>
    %188 = arith.mulf %148, %187 : vector<2x64xf32>
    %189 = math.exp %188 : vector<2x64xf32>
    %190 = arith.mulf %189, %135 : vector<2x64xf32>
    %191 = vector.extract_strided_slice %103 {offsets = [0, 0], sizes = [2, 1], strides = [1, 1]} : vector<16x1xf32> to vector<2x1xf32>
    %192 = vector.broadcast %191 : vector<2x1xf32> to vector<2x64xf32>
    %193 = arith.mulf %192, %149 : vector<2x64xf32>
    %194 = arith.addf %190, %193 : vector<2x64xf32>
    %195 = vector.extract_strided_slice %119 {offsets = [0, 0], sizes = [2, 1], strides = [1, 1]} : vector<16x1xf32> to vector<2x1xf32>
    %196 = vector.broadcast %195 : vector<2x1xf32> to vector<2x64xf32>
    %197 = arith.mulf %196, %194 : vector<2x64xf32>
    %198 = arith.addf %186, %197 : vector<2x64xf32>
    %199 = vector.broadcast %88 : vector<1x64xf32> to vector<2x64xf32>
    %200 = arith.mulf %148, %199 : vector<2x64xf32>
    %201 = math.exp %200 : vector<2x64xf32>
    %202 = arith.mulf %201, %136 : vector<2x64xf32>
    %203 = vector.extract_strided_slice %104 {offsets = [0, 0], sizes = [2, 1], strides = [1, 1]} : vector<16x1xf32> to vector<2x1xf32>
    %204 = vector.broadcast %203 : vector<2x1xf32> to vector<2x64xf32>
    %205 = arith.mulf %204, %149 : vector<2x64xf32>
    %206 = arith.addf %202, %205 : vector<2x64xf32>
    %207 = vector.extract_strided_slice %120 {offsets = [0, 0], sizes = [2, 1], strides = [1, 1]} : vector<16x1xf32> to vector<2x1xf32>
    %208 = vector.broadcast %207 : vector<2x1xf32> to vector<2x64xf32>
    %209 = arith.mulf %208, %206 : vector<2x64xf32>
    %210 = arith.addf %198, %209 : vector<2x64xf32>
    %211 = vector.broadcast %89 : vector<1x64xf32> to vector<2x64xf32>
    %212 = arith.mulf %148, %211 : vector<2x64xf32>
    %213 = math.exp %212 : vector<2x64xf32>
    %214 = arith.mulf %213, %137 : vector<2x64xf32>
    %215 = vector.extract_strided_slice %105 {offsets = [0, 0], sizes = [2, 1], strides = [1, 1]} : vector<16x1xf32> to vector<2x1xf32>
    %216 = vector.broadcast %215 : vector<2x1xf32> to vector<2x64xf32>
    %217 = arith.mulf %216, %149 : vector<2x64xf32>
    %218 = arith.addf %214, %217 : vector<2x64xf32>
    %219 = vector.extract_strided_slice %121 {offsets = [0, 0], sizes = [2, 1], strides = [1, 1]} : vector<16x1xf32> to vector<2x1xf32>
    %220 = vector.broadcast %219 : vector<2x1xf32> to vector<2x64xf32>
    %221 = arith.mulf %220, %218 : vector<2x64xf32>
    %222 = arith.addf %210, %221 : vector<2x64xf32>
    %223 = vector.broadcast %90 : vector<1x64xf32> to vector<2x64xf32>
    %224 = arith.mulf %148, %223 : vector<2x64xf32>
    %225 = math.exp %224 : vector<2x64xf32>
    %226 = arith.mulf %225, %138 : vector<2x64xf32>
    %227 = vector.extract_strided_slice %106 {offsets = [0, 0], sizes = [2, 1], strides = [1, 1]} : vector<16x1xf32> to vector<2x1xf32>
    %228 = vector.broadcast %227 : vector<2x1xf32> to vector<2x64xf32>
    %229 = arith.mulf %228, %149 : vector<2x64xf32>
    %230 = arith.addf %226, %229 : vector<2x64xf32>
    %231 = vector.extract_strided_slice %122 {offsets = [0, 0], sizes = [2, 1], strides = [1, 1]} : vector<16x1xf32> to vector<2x1xf32>
    %232 = vector.broadcast %231 : vector<2x1xf32> to vector<2x64xf32>
    %233 = arith.mulf %232, %230 : vector<2x64xf32>
    %234 = arith.addf %222, %233 : vector<2x64xf32>
    %235 = vector.broadcast %91 : vector<1x64xf32> to vector<2x64xf32>
    %236 = arith.mulf %148, %235 : vector<2x64xf32>
    %237 = math.exp %236 : vector<2x64xf32>
    %238 = arith.mulf %237, %139 : vector<2x64xf32>
    %239 = vector.extract_strided_slice %107 {offsets = [0, 0], sizes = [2, 1], strides = [1, 1]} : vector<16x1xf32> to vector<2x1xf32>
    %240 = vector.broadcast %239 : vector<2x1xf32> to vector<2x64xf32>
    %241 = arith.mulf %240, %149 : vector<2x64xf32>
    %242 = arith.addf %238, %241 : vector<2x64xf32>
    %243 = vector.extract_strided_slice %123 {offsets = [0, 0], sizes = [2, 1], strides = [1, 1]} : vector<16x1xf32> to vector<2x1xf32>
    %244 = vector.broadcast %243 : vector<2x1xf32> to vector<2x64xf32>
    %245 = arith.mulf %244, %242 : vector<2x64xf32>
    %246 = arith.addf %234, %245 : vector<2x64xf32>
    %247 = vector.broadcast %92 : vector<1x64xf32> to vector<2x64xf32>
    %248 = arith.mulf %148, %247 : vector<2x64xf32>
    %249 = math.exp %248 : vector<2x64xf32>
    %250 = arith.mulf %249, %140 : vector<2x64xf32>
    %251 = vector.extract_strided_slice %108 {offsets = [0, 0], sizes = [2, 1], strides = [1, 1]} : vector<16x1xf32> to vector<2x1xf32>
    %252 = vector.broadcast %251 : vector<2x1xf32> to vector<2x64xf32>
    %253 = arith.mulf %252, %149 : vector<2x64xf32>
    %254 = arith.addf %250, %253 : vector<2x64xf32>
    %255 = vector.extract_strided_slice %124 {offsets = [0, 0], sizes = [2, 1], strides = [1, 1]} : vector<16x1xf32> to vector<2x1xf32>
    %256 = vector.broadcast %255 : vector<2x1xf32> to vector<2x64xf32>
    %257 = arith.mulf %256, %254 : vector<2x64xf32>
    %258 = arith.addf %246, %257 : vector<2x64xf32>
    %259 = vector.broadcast %93 : vector<1x64xf32> to vector<2x64xf32>
    %260 = arith.mulf %148, %259 : vector<2x64xf32>
    %261 = math.exp %260 : vector<2x64xf32>
    %262 = arith.mulf %261, %141 : vector<2x64xf32>
    %263 = vector.extract_strided_slice %109 {offsets = [0, 0], sizes = [2, 1], strides = [1, 1]} : vector<16x1xf32> to vector<2x1xf32>
    %264 = vector.broadcast %263 : vector<2x1xf32> to vector<2x64xf32>
    %265 = arith.mulf %264, %149 : vector<2x64xf32>
    %266 = arith.addf %262, %265 : vector<2x64xf32>
    %267 = vector.extract_strided_slice %125 {offsets = [0, 0], sizes = [2, 1], strides = [1, 1]} : vector<16x1xf32> to vector<2x1xf32>
    %268 = vector.broadcast %267 : vector<2x1xf32> to vector<2x64xf32>
    %269 = arith.mulf %268, %266 : vector<2x64xf32>
    %270 = arith.addf %258, %269 : vector<2x64xf32>
    %271 = vector.broadcast %94 : vector<1x64xf32> to vector<2x64xf32>
    %272 = arith.mulf %148, %271 : vector<2x64xf32>
    %273 = math.exp %272 : vector<2x64xf32>
    %274 = arith.mulf %273, %142 : vector<2x64xf32>
    %275 = vector.extract_strided_slice %110 {offsets = [0, 0], sizes = [2, 1], strides = [1, 1]} : vector<16x1xf32> to vector<2x1xf32>
    %276 = vector.broadcast %275 : vector<2x1xf32> to vector<2x64xf32>
    %277 = arith.mulf %276, %149 : vector<2x64xf32>
    %278 = arith.addf %274, %277 : vector<2x64xf32>
    %279 = vector.extract_strided_slice %126 {offsets = [0, 0], sizes = [2, 1], strides = [1, 1]} : vector<16x1xf32> to vector<2x1xf32>
    %280 = vector.broadcast %279 : vector<2x1xf32> to vector<2x64xf32>
    %281 = arith.mulf %280, %278 : vector<2x64xf32>
    %282 = arith.addf %270, %281 : vector<2x64xf32>
    %283 = vector.broadcast %95 : vector<1x64xf32> to vector<2x64xf32>
    %284 = arith.mulf %148, %283 : vector<2x64xf32>
    %285 = math.exp %284 : vector<2x64xf32>
    %286 = arith.mulf %285, %143 : vector<2x64xf32>
    %287 = vector.extract_strided_slice %111 {offsets = [0, 0], sizes = [2, 1], strides = [1, 1]} : vector<16x1xf32> to vector<2x1xf32>
    %288 = vector.broadcast %287 : vector<2x1xf32> to vector<2x64xf32>
    %289 = arith.mulf %288, %149 : vector<2x64xf32>
    %290 = arith.addf %286, %289 : vector<2x64xf32>
    %291 = vector.extract_strided_slice %127 {offsets = [0, 0], sizes = [2, 1], strides = [1, 1]} : vector<16x1xf32> to vector<2x1xf32>
    %292 = vector.broadcast %291 : vector<2x1xf32> to vector<2x64xf32>
    %293 = arith.mulf %292, %290 : vector<2x64xf32>
    %294 = arith.addf %282, %293 : vector<2x64xf32>
    %295 = vector.broadcast %96 : vector<1x64xf32> to vector<2x64xf32>
    %296 = arith.mulf %148, %295 : vector<2x64xf32>
    %297 = math.exp %296 : vector<2x64xf32>
    %298 = arith.mulf %297, %144 : vector<2x64xf32>
    %299 = vector.extract_strided_slice %112 {offsets = [0, 0], sizes = [2, 1], strides = [1, 1]} : vector<16x1xf32> to vector<2x1xf32>
    %300 = vector.broadcast %299 : vector<2x1xf32> to vector<2x64xf32>
    %301 = arith.mulf %300, %149 : vector<2x64xf32>
    %302 = arith.addf %298, %301 : vector<2x64xf32>
    %303 = vector.extract_strided_slice %128 {offsets = [0, 0], sizes = [2, 1], strides = [1, 1]} : vector<16x1xf32> to vector<2x1xf32>
    %304 = vector.broadcast %303 : vector<2x1xf32> to vector<2x64xf32>
    %305 = arith.mulf %304, %302 : vector<2x64xf32>
    %306 = arith.addf %294, %305 : vector<2x64xf32>
    %307 = vector.broadcast %97 : vector<1x64xf32> to vector<2x64xf32>
    %308 = arith.mulf %148, %307 : vector<2x64xf32>
    %309 = math.exp %308 : vector<2x64xf32>
    %310 = arith.mulf %309, %145 : vector<2x64xf32>
    %311 = vector.extract_strided_slice %113 {offsets = [0, 0], sizes = [2, 1], strides = [1, 1]} : vector<16x1xf32> to vector<2x1xf32>
    %312 = vector.broadcast %311 : vector<2x1xf32> to vector<2x64xf32>
    %313 = arith.mulf %312, %149 : vector<2x64xf32>
    %314 = arith.addf %310, %313 : vector<2x64xf32>
    %315 = vector.extract_strided_slice %129 {offsets = [0, 0], sizes = [2, 1], strides = [1, 1]} : vector<16x1xf32> to vector<2x1xf32>
    %316 = vector.broadcast %315 : vector<2x1xf32> to vector<2x64xf32>
    %317 = arith.mulf %316, %314 : vector<2x64xf32>
    %318 = arith.addf %306, %317 : vector<2x64xf32>
    %319 = vector.broadcast %98 : vector<1x64xf32> to vector<2x64xf32>
    %320 = arith.mulf %148, %319 : vector<2x64xf32>
    %321 = math.exp %320 : vector<2x64xf32>
    %322 = arith.mulf %321, %146 : vector<2x64xf32>
    %323 = vector.extract_strided_slice %114 {offsets = [0, 0], sizes = [2, 1], strides = [1, 1]} : vector<16x1xf32> to vector<2x1xf32>
    %324 = vector.broadcast %323 : vector<2x1xf32> to vector<2x64xf32>
    %325 = arith.mulf %324, %149 : vector<2x64xf32>
    %326 = arith.addf %322, %325 : vector<2x64xf32>
    %327 = vector.extract_strided_slice %130 {offsets = [0, 0], sizes = [2, 1], strides = [1, 1]} : vector<16x1xf32> to vector<2x1xf32>
    %328 = vector.broadcast %327 : vector<2x1xf32> to vector<2x64xf32>
    %329 = arith.mulf %328, %326 : vector<2x64xf32>
    %330 = arith.addf %318, %329 : vector<2x64xf32>
    %331 = vector.broadcast %99 : vector<1x64xf32> to vector<2x64xf32>
    %332 = arith.mulf %148, %331 : vector<2x64xf32>
    %333 = math.exp %332 : vector<2x64xf32>
    %334 = arith.mulf %333, %147 : vector<2x64xf32>
    %335 = vector.extract_strided_slice %115 {offsets = [0, 0], sizes = [2, 1], strides = [1, 1]} : vector<16x1xf32> to vector<2x1xf32>
    %336 = vector.broadcast %335 : vector<2x1xf32> to vector<2x64xf32>
    %337 = arith.mulf %336, %149 : vector<2x64xf32>
    %338 = arith.addf %334, %337 : vector<2x64xf32>
    %339 = vector.extract_strided_slice %131 {offsets = [0, 0], sizes = [2, 1], strides = [1, 1]} : vector<16x1xf32> to vector<2x1xf32>
    %340 = vector.broadcast %339 : vector<2x1xf32> to vector<2x64xf32>
    %341 = arith.mulf %340, %338 : vector<2x64xf32>
    %342 = arith.addf %330, %341 : vector<2x64xf32>
    %c0_47 = arith.constant 0 : index
    %c0_48 = arith.constant 0 : index
    %343 = vector.load %arg9[%c0_47, %c0_48] : memref<16x64xf32, #tpu.memory_space<vmem>>, vector<2x64xf32>
    tpu.vector_store %arg9[%c0_47, %c0_48], %342 {strides = array<i32>} : memref<16x64xf32, #tpu.memory_space<vmem>>, vector<2x64xf32>,
    %344 = vector.extract_strided_slice %80 {offsets = [2, 0], sizes = [2, 64], strides = [1, 1]} : vector<16x64xf32> to vector<2x64xf32>
    %345 = vector.extract_strided_slice %83 {offsets = [2, 0], sizes = [2, 64], strides = [1, 1]} : vector<16x64xf32> to vector<2x64xf32>
    %cst_49 = arith.constant 0.000000e+00 : f32
    %346 = vector.broadcast %cst_49 : f32 to vector<2x64xf32>
    %347 = vector.broadcast %84 : vector<1x64xf32> to vector<2x64xf32>
    %348 = arith.mulf %344, %347 : vector<2x64xf32>
    %349 = math.exp %348 : vector<2x64xf32>
    %350 = arith.mulf %349, %158 : vector<2x64xf32>
    %351 = vector.extract_strided_slice %100 {offsets = [2, 0], sizes = [2, 1], strides = [1, 1]} : vector<16x1xf32> to vector<2x1xf32>
    %352 = vector.broadcast %351 : vector<2x1xf32> to vector<2x64xf32>
    %353 = arith.mulf %352, %345 : vector<2x64xf32>
    %354 = arith.addf %350, %353 : vector<2x64xf32>
    %355 = vector.extract_strided_slice %116 {offsets = [2, 0], sizes = [2, 1], strides = [1, 1]} : vector<16x1xf32> to vector<2x1xf32>
    %356 = vector.broadcast %355 : vector<2x1xf32> to vector<2x64xf32>
    %357 = arith.mulf %356, %354 : vector<2x64xf32>
    %358 = arith.addf %346, %357 : vector<2x64xf32>
    %359 = vector.broadcast %85 : vector<1x64xf32> to vector<2x64xf32>
    %360 = arith.mulf %344, %359 : vector<2x64xf32>
    %361 = math.exp %360 : vector<2x64xf32>
    %362 = arith.mulf %361, %170 : vector<2x64xf32>
    %363 = vector.extract_strided_slice %101 {offsets = [2, 0], sizes = [2, 1], strides = [1, 1]} : vector<16x1xf32> to vector<2x1xf32>
    %364 = vector.broadcast %363 : vector<2x1xf32> to vector<2x64xf32>
    %365 = arith.mulf %364, %345 : vector<2x64xf32>
    %366 = arith.addf %362, %365 : vector<2x64xf32>
    %367 = vector.extract_strided_slice %117 {offsets = [2, 0], sizes = [2, 1], strides = [1, 1]} : vector<16x1xf32> to vector<2x1xf32>
    %368 = vector.broadcast %367 : vector<2x1xf32> to vector<2x64xf32>
    %369 = arith.mulf %368, %366 : vector<2x64xf32>
    %370 = arith.addf %358, %369 : vector<2x64xf32>
    %371 = vector.broadcast %86 : vector<1x64xf32> to vector<2x64xf32>
    %372 = arith.mulf %344, %371 : vector<2x64xf32>
    %373 = math.exp %372 : vector<2x64xf32>
    %374 = arith.mulf %373, %182 : vector<2x64xf32>
    %375 = vector.extract_strided_slice %102 {offsets = [2, 0], sizes = [2, 1], strides = [1, 1]} : vector<16x1xf32> to vector<2x1xf32>
    %376 = vector.broadcast %375 : vector<2x1xf32> to vector<2x64xf32>
    %377 = arith.mulf %376, %345 : vector<2x64xf32>
    %378 = arith.addf %374, %377 : vector<2x64xf32>
    %379 = vector.extract_strided_slice %118 {offsets = [2, 0], sizes = [2, 1], strides = [1, 1]} : vector<16x1xf32> to vector<2x1xf32>
    %380 = vector.broadcast %379 : vector<2x1xf32> to vector<2x64xf32>
    %381 = arith.mulf %380, %378 : vector<2x64xf32>
    %382 = arith.addf %370, %381 : vector<2x64xf32>
    %383 = vector.broadcast %87 : vector<1x64xf32> to vector<2x64xf32>
    %384 = arith.mulf %344, %383 : vector<2x64xf32>
    %385 = math.exp %384 : vector<2x64xf32>
    %386 = arith.mulf %385, %194 : vector<2x64xf32>
    %387 = vector.extract_strided_slice %103 {offsets = [2, 0], sizes = [2, 1], strides = [1, 1]} : vector<16x1xf32> to vector<2x1xf32>
    %388 = vector.broadcast %387 : vector<2x1xf32> to vector<2x64xf32>
    %389 = arith.mulf %388, %345 : vector<2x64xf32>
    %390 = arith.addf %386, %389 : vector<2x64xf32>
    %391 = vector.extract_strided_slice %119 {offsets = [2, 0], sizes = [2, 1], strides = [1, 1]} : vector<16x1xf32> to vector<2x1xf32>
    %392 = vector.broadcast %391 : vector<2x1xf32> to vector<2x64xf32>
    %393 = arith.mulf %392, %390 : vector<2x64xf32>
    %394 = arith.addf %382, %393 : vector<2x64xf32>
    %395 = vector.broadcast %88 : vector<1x64xf32> to vector<2x64xf32>
    %396 = arith.mulf %344, %395 : vector<2x64xf32>
    %397 = math.exp %396 : vector<2x64xf32>
    %398 = arith.mulf %397, %206 : vector<2x64xf32>
    %399 = vector.extract_strided_slice %104 {offsets = [2, 0], sizes = [2, 1], strides = [1, 1]} : vector<16x1xf32> to vector<2x1xf32>
    %400 = vector.broadcast %399 : vector<2x1xf32> to vector<2x64xf32>
    %401 = arith.mulf %400, %345 : vector<2x64xf32>
    %402 = arith.addf %398, %401 : vector<2x64xf32>
    %403 = vector.extract_strided_slice %120 {offsets = [2, 0], sizes = [2, 1], strides = [1, 1]} : vector<16x1xf32> to vector<2x1xf32>
    %404 = vector.broadcast %403 : vector<2x1xf32> to vector<2x64xf32>
    %405 = arith.mulf %404, %402 : vector<2x64xf32>
    %406 = arith.addf %394, %405 : vector<2x64xf32>
    %407 = vector.broadcast %89 : vector<1x64xf32> to vector<2x64xf32>
    %408 = arith.mulf %344, %407 : vector<2x64xf32>
    %409 = math.exp %408 : vector<2x64xf32>
    %410 = arith.mulf %409, %218 : vector<2x64xf32>
    %411 = vector.extract_strided_slice %105 {offsets = [2, 0], sizes = [2, 1], strides = [1, 1]} : vector<16x1xf32> to vector<2x1xf32>
    %412 = vector.broadcast %411 : vector<2x1xf32> to vector<2x64xf32>
    %413 = arith.mulf %412, %345 : vector<2x64xf32>
    %414 = arith.addf %410, %413 : vector<2x64xf32>
    %415 = vector.extract_strided_slice %121 {offsets = [2, 0], sizes = [2, 1], strides = [1, 1]} : vector<16x1xf32> to vector<2x1xf32>
    %416 = vector.broadcast %415 : vector<2x1xf32> to vector<2x64xf32>
    %417 = arith.mulf %416, %414 : vector<2x64xf32>
    %418 = arith.addf %406, %417 : vector<2x64xf32>
    %419 = vector.broadcast %90 : vector<1x64xf32> to vector<2x64xf32>
    %420 = arith.mulf %344, %419 : vector<2x64xf32>
    %421 = math.exp %420 : vector<2x64xf32>
    %422 = arith.mulf %421, %230 : vector<2x64xf32>
    %423 = vector.extract_strided_slice %106 {offsets = [2, 0], sizes = [2, 1], strides = [1, 1]} : vector<16x1xf32> to vector<2x1xf32>
    %424 = vector.broadcast %423 : vector<2x1xf32> to vector<2x64xf32>
    %425 = arith.mulf %424, %345 : vector<2x64xf32>
    %426 = arith.addf %422, %425 : vector<2x64xf32>
    %427 = vector.extract_strided_slice %122 {offsets = [2, 0], sizes = [2, 1], strides = [1, 1]} : vector<16x1xf32> to vector<2x1xf32>
    %428 = vector.broadcast %427 : vector<2x1xf32> to vector<2x64xf32>
    %429 = arith.mulf %428, %426 : vector<2x64xf32>
    %430 = arith.addf %418, %429 : vector<2x64xf32>
    %431 = vector.broadcast %91 : vector<1x64xf32> to vector<2x64xf32>
    %432 = arith.mulf %344, %431 : vector<2x64xf32>
    %433 = math.exp %432 : vector<2x64xf32>
    %434 = arith.mulf %433, %242 : vector<2x64xf32>
    %435 = vector.extract_strided_slice %107 {offsets = [2, 0], sizes = [2, 1], strides = [1, 1]} : vector<16x1xf32> to vector<2x1xf32>
    %436 = vector.broadcast %435 : vector<2x1xf32> to vector<2x64xf32>
    %437 = arith.mulf %436, %345 : vector<2x64xf32>
    %438 = arith.addf %434, %437 : vector<2x64xf32>
    %439 = vector.extract_strided_slice %123 {offsets = [2, 0], sizes = [2, 1], strides = [1, 1]} : vector<16x1xf32> to vector<2x1xf32>
    %440 = vector.broadcast %439 : vector<2x1xf32> to vector<2x64xf32>
    %441 = arith.mulf %440, %438 : vector<2x64xf32>
    %442 = arith.addf %430, %441 : vector<2x64xf32>
    %443 = vector.broadcast %92 : vector<1x64xf32> to vector<2x64xf32>
    %444 = arith.mulf %344, %443 : vector<2x64xf32>
    %445 = math.exp %444 : vector<2x64xf32>
    %446 = arith.mulf %445, %254 : vector<2x64xf32>
    %447 = vector.extract_strided_slice %108 {offsets = [2, 0], sizes = [2, 1], strides = [1, 1]} : vector<16x1xf32> to vector<2x1xf32>
    %448 = vector.broadcast %447 : vector<2x1xf32> to vector<2x64xf32>
    %449 = arith.mulf %448, %345 : vector<2x64xf32>
    %450 = arith.addf %446, %449 : vector<2x64xf32>
    %451 = vector.extract_strided_slice %124 {offsets = [2, 0], sizes = [2, 1], strides = [1, 1]} : vector<16x1xf32> to vector<2x1xf32>
    %452 = vector.broadcast %451 : vector<2x1xf32> to vector<2x64xf32>
    %453 = arith.mulf %452, %450 : vector<2x64xf32>
    %454 = arith.addf %442, %453 : vector<2x64xf32>
    %455 = vector.broadcast %93 : vector<1x64xf32> to vector<2x64xf32>
    %456 = arith.mulf %344, %455 : vector<2x64xf32>
    %457 = math.exp %456 : vector<2x64xf32>
    %458 = arith.mulf %457, %266 : vector<2x64xf32>
    %459 = vector.extract_strided_slice %109 {offsets = [2, 0], sizes = [2, 1], strides = [1, 1]} : vector<16x1xf32> to vector<2x1xf32>
    %460 = vector.broadcast %459 : vector<2x1xf32> to vector<2x64xf32>
    %461 = arith.mulf %460, %345 : vector<2x64xf32>
    %462 = arith.addf %458, %461 : vector<2x64xf32>
    %463 = vector.extract_strided_slice %125 {offsets = [2, 0], sizes = [2, 1], strides = [1, 1]} : vector<16x1xf32> to vector<2x1xf32>
    %464 = vector.broadcast %463 : vector<2x1xf32> to vector<2x64xf32>
    %465 = arith.mulf %464, %462 : vector<2x64xf32>
    %466 = arith.addf %454, %465 : vector<2x64xf32>
    %467 = vector.broadcast %94 : vector<1x64xf32> to vector<2x64xf32>
    %468 = arith.mulf %344, %467 : vector<2x64xf32>
    %469 = math.exp %468 : vector<2x64xf32>
    %470 = arith.mulf %469, %278 : vector<2x64xf32>
    %471 = vector.extract_strided_slice %110 {offsets = [2, 0], sizes = [2, 1], strides = [1, 1]} : vector<16x1xf32> to vector<2x1xf32>
    %472 = vector.broadcast %471 : vector<2x1xf32> to vector<2x64xf32>
    %473 = arith.mulf %472, %345 : vector<2x64xf32>
    %474 = arith.addf %470, %473 : vector<2x64xf32>
    %475 = vector.extract_strided_slice %126 {offsets = [2, 0], sizes = [2, 1], strides = [1, 1]} : vector<16x1xf32> to vector<2x1xf32>
    %476 = vector.broadcast %475 : vector<2x1xf32> to vector<2x64xf32>
    %477 = arith.mulf %476, %474 : vector<2x64xf32>
    %478 = arith.addf %466, %477 : vector<2x64xf32>
    %479 = vector.broadcast %95 : vector<1x64xf32> to vector<2x64xf32>
    %480 = arith.mulf %344, %479 : vector<2x64xf32>
    %481 = math.exp %480 : vector<2x64xf32>
    %482 = arith.mulf %481, %290 : vector<2x64xf32>
    %483 = vector.extract_strided_slice %111 {offsets = [2, 0], sizes = [2, 1], strides = [1, 1]} : vector<16x1xf32> to vector<2x1xf32>
    %484 = vector.broadcast %483 : vector<2x1xf32> to vector<2x64xf32>
    %485 = arith.mulf %484, %345 : vector<2x64xf32>
    %486 = arith.addf %482, %485 : vector<2x64xf32>
    %487 = vector.extract_strided_slice %127 {offsets = [2, 0], sizes = [2, 1], strides = [1, 1]} : vector<16x1xf32> to vector<2x1xf32>
    %488 = vector.broadcast %487 : vector<2x1xf32> to vector<2x64xf32>
    %489 = arith.mulf %488, %486 : vector<2x64xf32>
    %490 = arith.addf %478, %489 : vector<2x64xf32>
    %491 = vector.broadcast %96 : vector<1x64xf32> to vector<2x64xf32>
    %492 = arith.mulf %344, %491 : vector<2x64xf32>
    %493 = math.exp %492 : vector<2x64xf32>
    %494 = arith.mulf %493, %302 : vector<2x64xf32>
    %495 = vector.extract_strided_slice %112 {offsets = [2, 0], sizes = [2, 1], strides = [1, 1]} : vector<16x1xf32> to vector<2x1xf32>
    %496 = vector.broadcast %495 : vector<2x1xf32> to vector<2x64xf32>
    %497 = arith.mulf %496, %345 : vector<2x64xf32>
    %498 = arith.addf %494, %497 : vector<2x64xf32>
    %499 = vector.extract_strided_slice %128 {offsets = [2, 0], sizes = [2, 1], strides = [1, 1]} : vector<16x1xf32> to vector<2x1xf32>
    %500 = vector.broadcast %499 : vector<2x1xf32> to vector<2x64xf32>
    %501 = arith.mulf %500, %498 : vector<2x64xf32>
    %502 = arith.addf %490, %501 : vector<2x64xf32>
    %503 = vector.broadcast %97 : vector<1x64xf32> to vector<2x64xf32>
    %504 = arith.mulf %344, %503 : vector<2x64xf32>
    %505 = math.exp %504 : vector<2x64xf32>
    %506 = arith.mulf %505, %314 : vector<2x64xf32>
    %507 = vector.extract_strided_slice %113 {offsets = [2, 0], sizes = [2, 1], strides = [1, 1]} : vector<16x1xf32> to vector<2x1xf32>
    %508 = vector.broadcast %507 : vector<2x1xf32> to vector<2x64xf32>
    %509 = arith.mulf %508, %345 : vector<2x64xf32>
    %510 = arith.addf %506, %509 : vector<2x64xf32>
    %511 = vector.extract_strided_slice %129 {offsets = [2, 0], sizes = [2, 1], strides = [1, 1]} : vector<16x1xf32> to vector<2x1xf32>
    %512 = vector.broadcast %511 : vector<2x1xf32> to vector<2x64xf32>
    %513 = arith.mulf %512, %510 : vector<2x64xf32>
    %514 = arith.addf %502, %513 : vector<2x64xf32>
    %515 = vector.broadcast %98 : vector<1x64xf32> to vector<2x64xf32>
    %516 = arith.mulf %344, %515 : vector<2x64xf32>
    %517 = math.exp %516 : vector<2x64xf32>
    %518 = arith.mulf %517, %326 : vector<2x64xf32>
    %519 = vector.extract_strided_slice %114 {offsets = [2, 0], sizes = [2, 1], strides = [1, 1]} : vector<16x1xf32> to vector<2x1xf32>
    %520 = vector.broadcast %519 : vector<2x1xf32> to vector<2x64xf32>
    %521 = arith.mulf %520, %345 : vector<2x64xf32>
    %522 = arith.addf %518, %521 : vector<2x64xf32>
    %523 = vector.extract_strided_slice %130 {offsets = [2, 0], sizes = [2, 1], strides = [1, 1]} : vector<16x1xf32> to vector<2x1xf32>
    %524 = vector.broadcast %523 : vector<2x1xf32> to vector<2x64xf32>
    %525 = arith.mulf %524, %522 : vector<2x64xf32>
    %526 = arith.addf %514, %525 : vector<2x64xf32>
    %527 = vector.broadcast %99 : vector<1x64xf32> to vector<2x64xf32>
    %528 = arith.mulf %344, %527 : vector<2x64xf32>
    %529 = math.exp %528 : vector<2x64xf32>
    %530 = arith.mulf %529, %338 : vector<2x64xf32>
    %531 = vector.extract_strided_slice %115 {offsets = [2, 0], sizes = [2, 1], strides = [1, 1]} : vector<16x1xf32> to vector<2x1xf32>
    %532 = vector.broadcast %531 : vector<2x1xf32> to vector<2x64xf32>
    %533 = arith.mulf %532, %345 : vector<2x64xf32>
    %534 = arith.addf %530, %533 : vector<2x64xf32>
    %535 = vector.extract_strided_slice %131 {offsets = [2, 0], sizes = [2, 1], strides = [1, 1]} : vector<16x1xf32> to vector<2x1xf32>
    %536 = vector.broadcast %535 : vector<2x1xf32> to vector<2x64xf32>
    %537 = arith.mulf %536, %534 : vector<2x64xf32>
    %538 = arith.addf %526, %537 : vector<2x64xf32>
    %c2 = arith.constant 2 : index
    %c0_50 = arith.constant 0 : index
    %539 = vector.load %arg9[%c2, %c0_50] : memref<16x64xf32, #tpu.memory_space<vmem>>, vector<2x64xf32>
    tpu.vector_store %arg9[%c2, %c0_50], %538 {strides = array<i32>} : memref<16x64xf32, #tpu.memory_space<vmem>>, vector<2x64xf32>,
    %540 = vector.extract_strided_slice %80 {offsets = [4, 0], sizes = [2, 64], strides = [1, 1]} : vector<16x64xf32> to vector<2x64xf32>
    %541 = vector.extract_strided_slice %83 {offsets = [4, 0], sizes = [2, 64], strides = [1, 1]} : vector<16x64xf32> to vector<2x64xf32>
    %cst_51 = arith.constant 0.000000e+00 : f32
    %542 = vector.broadcast %cst_51 : f32 to vector<2x64xf32>
    %543 = vector.broadcast %84 : vector<1x64xf32> to vector<2x64xf32>
    %544 = arith.mulf %540, %543 : vector<2x64xf32>
    %545 = math.exp %544 : vector<2x64xf32>
    %546 = arith.mulf %545, %354 : vector<2x64xf32>
    %547 = vector.extract_strided_slice %100 {offsets = [4, 0], sizes = [2, 1], strides = [1, 1]} : vector<16x1xf32> to vector<2x1xf32>
    %548 = vector.broadcast %547 : vector<2x1xf32> to vector<2x64xf32>
    %549 = arith.mulf %548, %541 : vector<2x64xf32>
    %550 = arith.addf %546, %549 : vector<2x64xf32>
    %551 = vector.extract_strided_slice %116 {offsets = [4, 0], sizes = [2, 1], strides = [1, 1]} : vector<16x1xf32> to vector<2x1xf32>
    %552 = vector.broadcast %551 : vector<2x1xf32> to vector<2x64xf32>
    %553 = arith.mulf %552, %550 : vector<2x64xf32>
    %554 = arith.addf %542, %553 : vector<2x64xf32>
    %555 = vector.broadcast %85 : vector<1x64xf32> to vector<2x64xf32>
    %556 = arith.mulf %540, %555 : vector<2x64xf32>
    %557 = math.exp %556 : vector<2x64xf32>
    %558 = arith.mulf %557, %366 : vector<2x64xf32>
    %559 = vector.extract_strided_slice %101 {offsets = [4, 0], sizes = [2, 1], strides = [1, 1]} : vector<16x1xf32> to vector<2x1xf32>
    %560 = vector.broadcast %559 : vector<2x1xf32> to vector<2x64xf32>
    %561 = arith.mulf %560, %541 : vector<2x64xf32>
    %562 = arith.addf %558, %561 : vector<2x64xf32>
    %563 = vector.extract_strided_slice %117 {offsets = [4, 0], sizes = [2, 1], strides = [1, 1]} : vector<16x1xf32> to vector<2x1xf32>
    %564 = vector.broadcast %563 : vector<2x1xf32> to vector<2x64xf32>
    %565 = arith.mulf %564, %562 : vector<2x64xf32>
    %566 = arith.addf %554, %565 : vector<2x64xf32>
    %567 = vector.broadcast %86 : vector<1x64xf32> to vector<2x64xf32>
    %568 = arith.mulf %540, %567 : vector<2x64xf32>
    %569 = math.exp %568 : vector<2x64xf32>
    %570 = arith.mulf %569, %378 : vector<2x64xf32>
    %571 = vector.extract_strided_slice %102 {offsets = [4, 0], sizes = [2, 1], strides = [1, 1]} : vector<16x1xf32> to vector<2x1xf32>
    %572 = vector.broadcast %571 : vector<2x1xf32> to vector<2x64xf32>
    %573 = arith.mulf %572, %541 : vector<2x64xf32>
    %574 = arith.addf %570, %573 : vector<2x64xf32>
    %575 = vector.extract_strided_slice %118 {offsets = [4, 0], sizes = [2, 1], strides = [1, 1]} : vector<16x1xf32> to vector<2x1xf32>
    %576 = vector.broadcast %575 : vector<2x1xf32> to vector<2x64xf32>
    %577 = arith.mulf %576, %574 : vector<2x64xf32>
    %578 = arith.addf %566, %577 : vector<2x64xf32>
    %579 = vector.broadcast %87 : vector<1x64xf32> to vector<2x64xf32>
    %580 = arith.mulf %540, %579 : vector<2x64xf32>
    %581 = math.exp %580 : vector<2x64xf32>
    %582 = arith.mulf %581, %390 : vector<2x64xf32>
    %583 = vector.extract_strided_slice %103 {offsets = [4, 0], sizes = [2, 1], strides = [1, 1]} : vector<16x1xf32> to vector<2x1xf32>
    %584 = vector.broadcast %583 : vector<2x1xf32> to vector<2x64xf32>
    %585 = arith.mulf %584, %541 : vector<2x64xf32>
    %586 = arith.addf %582, %585 : vector<2x64xf32>
    %587 = vector.extract_strided_slice %119 {offsets = [4, 0], sizes = [2, 1], strides = [1, 1]} : vector<16x1xf32> to vector<2x1xf32>
    %588 = vector.broadcast %587 : vector<2x1xf32> to vector<2x64xf32>
    %589 = arith.mulf %588, %586 : vector<2x64xf32>
    %590 = arith.addf %578, %589 : vector<2x64xf32>
    %591 = vector.broadcast %88 : vector<1x64xf32> to vector<2x64xf32>
    %592 = arith.mulf %540, %591 : vector<2x64xf32>
    %593 = math.exp %592 : vector<2x64xf32>
    %594 = arith.mulf %593, %402 : vector<2x64xf32>
    %595 = vector.extract_strided_slice %104 {offsets = [4, 0], sizes = [2, 1], strides = [1, 1]} : vector<16x1xf32> to vector<2x1xf32>
    %596 = vector.broadcast %595 : vector<2x1xf32> to vector<2x64xf32>
    %597 = arith.mulf %596, %541 : vector<2x64xf32>
    %598 = arith.addf %594, %597 : vector<2x64xf32>
    %599 = vector.extract_strided_slice %120 {offsets = [4, 0], sizes = [2, 1], strides = [1, 1]} : vector<16x1xf32> to vector<2x1xf32>
    %600 = vector.broadcast %599 : vector<2x1xf32> to vector<2x64xf32>
    %601 = arith.mulf %600, %598 : vector<2x64xf32>
    %602 = arith.addf %590, %601 : vector<2x64xf32>
    %603 = vector.broadcast %89 : vector<1x64xf32> to vector<2x64xf32>
    %604 = arith.mulf %540, %603 : vector<2x64xf32>
    %605 = math.exp %604 : vector<2x64xf32>
    %606 = arith.mulf %605, %414 : vector<2x64xf32>
    %607 = vector.extract_strided_slice %105 {offsets = [4, 0], sizes = [2, 1], strides = [1, 1]} : vector<16x1xf32> to vector<2x1xf32>
    %608 = vector.broadcast %607 : vector<2x1xf32> to vector<2x64xf32>
    %609 = arith.mulf %608, %541 : vector<2x64xf32>
    %610 = arith.addf %606, %609 : vector<2x64xf32>
    %611 = vector.extract_strided_slice %121 {offsets = [4, 0], sizes = [2, 1], strides = [1, 1]} : vector<16x1xf32> to vector<2x1xf32>
    %612 = vector.broadcast %611 : vector<2x1xf32> to vector<2x64xf32>
    %613 = arith.mulf %612, %610 : vector<2x64xf32>
    %614 = arith.addf %602, %613 : vector<2x64xf32>
    %615 = vector.broadcast %90 : vector<1x64xf32> to vector<2x64xf32>
    %616 = arith.mulf %540, %615 : vector<2x64xf32>
    %617 = math.exp %616 : vector<2x64xf32>
    %618 = arith.mulf %617, %426 : vector<2x64xf32>
    %619 = vector.extract_strided_slice %106 {offsets = [4, 0], sizes = [2, 1], strides = [1, 1]} : vector<16x1xf32> to vector<2x1xf32>
    %620 = vector.broadcast %619 : vector<2x1xf32> to vector<2x64xf32>
    %621 = arith.mulf %620, %541 : vector<2x64xf32>
    %622 = arith.addf %618, %621 : vector<2x64xf32>
    %623 = vector.extract_strided_slice %122 {offsets = [4, 0], sizes = [2, 1], strides = [1, 1]} : vector<16x1xf32> to vector<2x1xf32>
    %624 = vector.broadcast %623 : vector<2x1xf32> to vector<2x64xf32>
    %625 = arith.mulf %624, %622 : vector<2x64xf32>
    %626 = arith.addf %614, %625 : vector<2x64xf32>
    %627 = vector.broadcast %91 : vector<1x64xf32> to vector<2x64xf32>
    %628 = arith.mulf %540, %627 : vector<2x64xf32>
    %629 = math.exp %628 : vector<2x64xf32>
    %630 = arith.mulf %629, %438 : vector<2x64xf32>
    %631 = vector.extract_strided_slice %107 {offsets = [4, 0], sizes = [2, 1], strides = [1, 1]} : vector<16x1xf32> to vector<2x1xf32>
    %632 = vector.broadcast %631 : vector<2x1xf32> to vector<2x64xf32>
    %633 = arith.mulf %632, %541 : vector<2x64xf32>
    %634 = arith.addf %630, %633 : vector<2x64xf32>
    %635 = vector.extract_strided_slice %123 {offsets = [4, 0], sizes = [2, 1], strides = [1, 1]} : vector<16x1xf32> to vector<2x1xf32>
    %636 = vector.broadcast %635 : vector<2x1xf32> to vector<2x64xf32>
    %637 = arith.mulf %636, %634 : vector<2x64xf32>
    %638 = arith.addf %626, %637 : vector<2x64xf32>
    %639 = vector.broadcast %92 : vector<1x64xf32> to vector<2x64xf32>
    %640 = arith.mulf %540, %639 : vector<2x64xf32>
    %641 = math.exp %640 : vector<2x64xf32>
    %642 = arith.mulf %641, %450 : vector<2x64xf32>
    %643 = vector.extract_strided_slice %108 {offsets = [4, 0], sizes = [2, 1], strides = [1, 1]} : vector<16x1xf32> to vector<2x1xf32>
    %644 = vector.broadcast %643 : vector<2x1xf32> to vector<2x64xf32>
    %645 = arith.mulf %644, %541 : vector<2x64xf32>
    %646 = arith.addf %642, %645 : vector<2x64xf32>
    %647 = vector.extract_strided_slice %124 {offsets = [4, 0], sizes = [2, 1], strides = [1, 1]} : vector<16x1xf32> to vector<2x1xf32>
    %648 = vector.broadcast %647 : vector<2x1xf32> to vector<2x64xf32>
    %649 = arith.mulf %648, %646 : vector<2x64xf32>
    %650 = arith.addf %638, %649 : vector<2x64xf32>
    %651 = vector.broadcast %93 : vector<1x64xf32> to vector<2x64xf32>
    %652 = arith.mulf %540, %651 : vector<2x64xf32>
    %653 = math.exp %652 : vector<2x64xf32>
    %654 = arith.mulf %653, %462 : vector<2x64xf32>
    %655 = vector.extract_strided_slice %109 {offsets = [4, 0], sizes = [2, 1], strides = [1, 1]} : vector<16x1xf32> to vector<2x1xf32>
    %656 = vector.broadcast %655 : vector<2x1xf32> to vector<2x64xf32>
    %657 = arith.mulf %656, %541 : vector<2x64xf32>
    %658 = arith.addf %654, %657 : vector<2x64xf32>
    %659 = vector.extract_strided_slice %125 {offsets = [4, 0], sizes = [2, 1], strides = [1, 1]} : vector<16x1xf32> to vector<2x1xf32>
    %660 = vector.broadcast %659 : vector<2x1xf32> to vector<2x64xf32>
    %661 = arith.mulf %660, %658 : vector<2x64xf32>
    %662 = arith.addf %650, %661 : vector<2x64xf32>
    %663 = vector.broadcast %94 : vector<1x64xf32> to vector<2x64xf32>
    %664 = arith.mulf %540, %663 : vector<2x64xf32>
    %665 = math.exp %664 : vector<2x64xf32>
    %666 = arith.mulf %665, %474 : vector<2x64xf32>
    %667 = vector.extract_strided_slice %110 {offsets = [4, 0], sizes = [2, 1], strides = [1, 1]} : vector<16x1xf32> to vector<2x1xf32>
    %668 = vector.broadcast %667 : vector<2x1xf32> to vector<2x64xf32>
    %669 = arith.mulf %668, %541 : vector<2x64xf32>
    %670 = arith.addf %666, %669 : vector<2x64xf32>
    %671 = vector.extract_strided_slice %126 {offsets = [4, 0], sizes = [2, 1], strides = [1, 1]} : vector<16x1xf32> to vector<2x1xf32>
    %672 = vector.broadcast %671 : vector<2x1xf32> to vector<2x64xf32>
    %673 = arith.mulf %672, %670 : vector<2x64xf32>
    %674 = arith.addf %662, %673 : vector<2x64xf32>
    %675 = vector.broadcast %95 : vector<1x64xf32> to vector<2x64xf32>
    %676 = arith.mulf %540, %675 : vector<2x64xf32>
    %677 = math.exp %676 : vector<2x64xf32>
    %678 = arith.mulf %677, %486 : vector<2x64xf32>
    %679 = vector.extract_strided_slice %111 {offsets = [4, 0], sizes = [2, 1], strides = [1, 1]} : vector<16x1xf32> to vector<2x1xf32>
    %680 = vector.broadcast %679 : vector<2x1xf32> to vector<2x64xf32>
    %681 = arith.mulf %680, %541 : vector<2x64xf32>
    %682 = arith.addf %678, %681 : vector<2x64xf32>
    %683 = vector.extract_strided_slice %127 {offsets = [4, 0], sizes = [2, 1], strides = [1, 1]} : vector<16x1xf32> to vector<2x1xf32>
    %684 = vector.broadcast %683 : vector<2x1xf32> to vector<2x64xf32>
    %685 = arith.mulf %684, %682 : vector<2x64xf32>
    %686 = arith.addf %674, %685 : vector<2x64xf32>
    %687 = vector.broadcast %96 : vector<1x64xf32> to vector<2x64xf32>
    %688 = arith.mulf %540, %687 : vector<2x64xf32>
    %689 = math.exp %688 : vector<2x64xf32>
    %690 = arith.mulf %689, %498 : vector<2x64xf32>
    %691 = vector.extract_strided_slice %112 {offsets = [4, 0], sizes = [2, 1], strides = [1, 1]} : vector<16x1xf32> to vector<2x1xf32>
    %692 = vector.broadcast %691 : vector<2x1xf32> to vector<2x64xf32>
    %693 = arith.mulf %692, %541 : vector<2x64xf32>
    %694 = arith.addf %690, %693 : vector<2x64xf32>
    %695 = vector.extract_strided_slice %128 {offsets = [4, 0], sizes = [2, 1], strides = [1, 1]} : vector<16x1xf32> to vector<2x1xf32>
    %696 = vector.broadcast %695 : vector<2x1xf32> to vector<2x64xf32>
    %697 = arith.mulf %696, %694 : vector<2x64xf32>
    %698 = arith.addf %686, %697 : vector<2x64xf32>
    %699 = vector.broadcast %97 : vector<1x64xf32> to vector<2x64xf32>
    %700 = arith.mulf %540, %699 : vector<2x64xf32>
    %701 = math.exp %700 : vector<2x64xf32>
    %702 = arith.mulf %701, %510 : vector<2x64xf32>
    %703 = vector.extract_strided_slice %113 {offsets = [4, 0], sizes = [2, 1], strides = [1, 1]} : vector<16x1xf32> to vector<2x1xf32>
    %704 = vector.broadcast %703 : vector<2x1xf32> to vector<2x64xf32>
    %705 = arith.mulf %704, %541 : vector<2x64xf32>
    %706 = arith.addf %702, %705 : vector<2x64xf32>
    %707 = vector.extract_strided_slice %129 {offsets = [4, 0], sizes = [2, 1], strides = [1, 1]} : vector<16x1xf32> to vector<2x1xf32>
    %708 = vector.broadcast %707 : vector<2x1xf32> to vector<2x64xf32>
    %709 = arith.mulf %708, %706 : vector<2x64xf32>
    %710 = arith.addf %698, %709 : vector<2x64xf32>
    %711 = vector.broadcast %98 : vector<1x64xf32> to vector<2x64xf32>
    %712 = arith.mulf %540, %711 : vector<2x64xf32>
    %713 = math.exp %712 : vector<2x64xf32>
    %714 = arith.mulf %713, %522 : vector<2x64xf32>
    %715 = vector.extract_strided_slice %114 {offsets = [4, 0], sizes = [2, 1], strides = [1, 1]} : vector<16x1xf32> to vector<2x1xf32>
    %716 = vector.broadcast %715 : vector<2x1xf32> to vector<2x64xf32>
    %717 = arith.mulf %716, %541 : vector<2x64xf32>
    %718 = arith.addf %714, %717 : vector<2x64xf32>
    %719 = vector.extract_strided_slice %130 {offsets = [4, 0], sizes = [2, 1], strides = [1, 1]} : vector<16x1xf32> to vector<2x1xf32>
    %720 = vector.broadcast %719 : vector<2x1xf32> to vector<2x64xf32>
    %721 = arith.mulf %720, %718 : vector<2x64xf32>
    %722 = arith.addf %710, %721 : vector<2x64xf32>
    %723 = vector.broadcast %99 : vector<1x64xf32> to vector<2x64xf32>
    %724 = arith.mulf %540, %723 : vector<2x64xf32>
    %725 = math.exp %724 : vector<2x64xf32>
    %726 = arith.mulf %725, %534 : vector<2x64xf32>
    %727 = vector.extract_strided_slice %115 {offsets = [4, 0], sizes = [2, 1], strides = [1, 1]} : vector<16x1xf32> to vector<2x1xf32>
    %728 = vector.broadcast %727 : vector<2x1xf32> to vector<2x64xf32>
    %729 = arith.mulf %728, %541 : vector<2x64xf32>
    %730 = arith.addf %726, %729 : vector<2x64xf32>
    %731 = vector.extract_strided_slice %131 {offsets = [4, 0], sizes = [2, 1], strides = [1, 1]} : vector<16x1xf32> to vector<2x1xf32>
    %732 = vector.broadcast %731 : vector<2x1xf32> to vector<2x64xf32>
    %733 = arith.mulf %732, %730 : vector<2x64xf32>
    %734 = arith.addf %722, %733 : vector<2x64xf32>
    %c4 = arith.constant 4 : index
    %c0_52 = arith.constant 0 : index
    %735 = vector.load %arg9[%c4, %c0_52] : memref<16x64xf32, #tpu.memory_space<vmem>>, vector<2x64xf32>
    tpu.vector_store %arg9[%c4, %c0_52], %734 {strides = array<i32>} : memref<16x64xf32, #tpu.memory_space<vmem>>, vector<2x64xf32>,
    %736 = vector.extract_strided_slice %80 {offsets = [6, 0], sizes = [2, 64], strides = [1, 1]} : vector<16x64xf32> to vector<2x64xf32>
    %737 = vector.extract_strided_slice %83 {offsets = [6, 0], sizes = [2, 64], strides = [1, 1]} : vector<16x64xf32> to vector<2x64xf32>
    %cst_53 = arith.constant 0.000000e+00 : f32
    %738 = vector.broadcast %cst_53 : f32 to vector<2x64xf32>
    %739 = vector.broadcast %84 : vector<1x64xf32> to vector<2x64xf32>
    %740 = arith.mulf %736, %739 : vector<2x64xf32>
    %741 = math.exp %740 : vector<2x64xf32>
    %742 = arith.mulf %741, %550 : vector<2x64xf32>
    %743 = vector.extract_strided_slice %100 {offsets = [6, 0], sizes = [2, 1], strides = [1, 1]} : vector<16x1xf32> to vector<2x1xf32>
    %744 = vector.broadcast %743 : vector<2x1xf32> to vector<2x64xf32>
    %745 = arith.mulf %744, %737 : vector<2x64xf32>
    %746 = arith.addf %742, %745 : vector<2x64xf32>
    %747 = vector.extract_strided_slice %116 {offsets = [6, 0], sizes = [2, 1], strides = [1, 1]} : vector<16x1xf32> to vector<2x1xf32>
    %748 = vector.broadcast %747 : vector<2x1xf32> to vector<2x64xf32>
    %749 = arith.mulf %748, %746 : vector<2x64xf32>
    %750 = arith.addf %738, %749 : vector<2x64xf32>
    %751 = vector.broadcast %85 : vector<1x64xf32> to vector<2x64xf32>
    %752 = arith.mulf %736, %751 : vector<2x64xf32>
    %753 = math.exp %752 : vector<2x64xf32>
    %754 = arith.mulf %753, %562 : vector<2x64xf32>
    %755 = vector.extract_strided_slice %101 {offsets = [6, 0], sizes = [2, 1], strides = [1, 1]} : vector<16x1xf32> to vector<2x1xf32>
    %756 = vector.broadcast %755 : vector<2x1xf32> to vector<2x64xf32>
    %757 = arith.mulf %756, %737 : vector<2x64xf32>
    %758 = arith.addf %754, %757 : vector<2x64xf32>
    %759 = vector.extract_strided_slice %117 {offsets = [6, 0], sizes = [2, 1], strides = [1, 1]} : vector<16x1xf32> to vector<2x1xf32>
    %760 = vector.broadcast %759 : vector<2x1xf32> to vector<2x64xf32>
    %761 = arith.mulf %760, %758 : vector<2x64xf32>
    %762 = arith.addf %750, %761 : vector<2x64xf32>
    %763 = vector.broadcast %86 : vector<1x64xf32> to vector<2x64xf32>
    %764 = arith.mulf %736, %763 : vector<2x64xf32>
    %765 = math.exp %764 : vector<2x64xf32>
    %766 = arith.mulf %765, %574 : vector<2x64xf32>
    %767 = vector.extract_strided_slice %102 {offsets = [6, 0], sizes = [2, 1], strides = [1, 1]} : vector<16x1xf32> to vector<2x1xf32>
    %768 = vector.broadcast %767 : vector<2x1xf32> to vector<2x64xf32>
    %769 = arith.mulf %768, %737 : vector<2x64xf32>
    %770 = arith.addf %766, %769 : vector<2x64xf32>
    %771 = vector.extract_strided_slice %118 {offsets = [6, 0], sizes = [2, 1], strides = [1, 1]} : vector<16x1xf32> to vector<2x1xf32>
    %772 = vector.broadcast %771 : vector<2x1xf32> to vector<2x64xf32>
    %773 = arith.mulf %772, %770 : vector<2x64xf32>
    %774 = arith.addf %762, %773 : vector<2x64xf32>
    %775 = vector.broadcast %87 : vector<1x64xf32> to vector<2x64xf32>
    %776 = arith.mulf %736, %775 : vector<2x64xf32>
    %777 = math.exp %776 : vector<2x64xf32>
    %778 = arith.mulf %777, %586 : vector<2x64xf32>
    %779 = vector.extract_strided_slice %103 {offsets = [6, 0], sizes = [2, 1], strides = [1, 1]} : vector<16x1xf32> to vector<2x1xf32>
    %780 = vector.broadcast %779 : vector<2x1xf32> to vector<2x64xf32>
    %781 = arith.mulf %780, %737 : vector<2x64xf32>
    %782 = arith.addf %778, %781 : vector<2x64xf32>
    %783 = vector.extract_strided_slice %119 {offsets = [6, 0], sizes = [2, 1], strides = [1, 1]} : vector<16x1xf32> to vector<2x1xf32>
    %784 = vector.broadcast %783 : vector<2x1xf32> to vector<2x64xf32>
    %785 = arith.mulf %784, %782 : vector<2x64xf32>
    %786 = arith.addf %774, %785 : vector<2x64xf32>
    %787 = vector.broadcast %88 : vector<1x64xf32> to vector<2x64xf32>
    %788 = arith.mulf %736, %787 : vector<2x64xf32>
    %789 = math.exp %788 : vector<2x64xf32>
    %790 = arith.mulf %789, %598 : vector<2x64xf32>
    %791 = vector.extract_strided_slice %104 {offsets = [6, 0], sizes = [2, 1], strides = [1, 1]} : vector<16x1xf32> to vector<2x1xf32>
    %792 = vector.broadcast %791 : vector<2x1xf32> to vector<2x64xf32>
    %793 = arith.mulf %792, %737 : vector<2x64xf32>
    %794 = arith.addf %790, %793 : vector<2x64xf32>
    %795 = vector.extract_strided_slice %120 {offsets = [6, 0], sizes = [2, 1], strides = [1, 1]} : vector<16x1xf32> to vector<2x1xf32>
    %796 = vector.broadcast %795 : vector<2x1xf32> to vector<2x64xf32>
    %797 = arith.mulf %796, %794 : vector<2x64xf32>
    %798 = arith.addf %786, %797 : vector<2x64xf32>
    %799 = vector.broadcast %89 : vector<1x64xf32> to vector<2x64xf32>
    %800 = arith.mulf %736, %799 : vector<2x64xf32>
    %801 = math.exp %800 : vector<2x64xf32>
    %802 = arith.mulf %801, %610 : vector<2x64xf32>
    %803 = vector.extract_strided_slice %105 {offsets = [6, 0], sizes = [2, 1], strides = [1, 1]} : vector<16x1xf32> to vector<2x1xf32>
    %804 = vector.broadcast %803 : vector<2x1xf32> to vector<2x64xf32>
    %805 = arith.mulf %804, %737 : vector<2x64xf32>
    %806 = arith.addf %802, %805 : vector<2x64xf32>
    %807 = vector.extract_strided_slice %121 {offsets = [6, 0], sizes = [2, 1], strides = [1, 1]} : vector<16x1xf32> to vector<2x1xf32>
    %808 = vector.broadcast %807 : vector<2x1xf32> to vector<2x64xf32>
    %809 = arith.mulf %808, %806 : vector<2x64xf32>
    %810 = arith.addf %798, %809 : vector<2x64xf32>
    %811 = vector.broadcast %90 : vector<1x64xf32> to vector<2x64xf32>
    %812 = arith.mulf %736, %811 : vector<2x64xf32>
    %813 = math.exp %812 : vector<2x64xf32>
    %814 = arith.mulf %813, %622 : vector<2x64xf32>
    %815 = vector.extract_strided_slice %106 {offsets = [6, 0], sizes = [2, 1], strides = [1, 1]} : vector<16x1xf32> to vector<2x1xf32>
    %816 = vector.broadcast %815 : vector<2x1xf32> to vector<2x64xf32>
    %817 = arith.mulf %816, %737 : vector<2x64xf32>
    %818 = arith.addf %814, %817 : vector<2x64xf32>
    %819 = vector.extract_strided_slice %122 {offsets = [6, 0], sizes = [2, 1], strides = [1, 1]} : vector<16x1xf32> to vector<2x1xf32>
    %820 = vector.broadcast %819 : vector<2x1xf32> to vector<2x64xf32>
    %821 = arith.mulf %820, %818 : vector<2x64xf32>
    %822 = arith.addf %810, %821 : vector<2x64xf32>
    %823 = vector.broadcast %91 : vector<1x64xf32> to vector<2x64xf32>
    %824 = arith.mulf %736, %823 : vector<2x64xf32>
    %825 = math.exp %824 : vector<2x64xf32>
    %826 = arith.mulf %825, %634 : vector<2x64xf32>
    %827 = vector.extract_strided_slice %107 {offsets = [6, 0], sizes = [2, 1], strides = [1, 1]} : vector<16x1xf32> to vector<2x1xf32>
    %828 = vector.broadcast %827 : vector<2x1xf32> to vector<2x64xf32>
    %829 = arith.mulf %828, %737 : vector<2x64xf32>
    %830 = arith.addf %826, %829 : vector<2x64xf32>
    %831 = vector.extract_strided_slice %123 {offsets = [6, 0], sizes = [2, 1], strides = [1, 1]} : vector<16x1xf32> to vector<2x1xf32>
    %832 = vector.broadcast %831 : vector<2x1xf32> to vector<2x64xf32>
    %833 = arith.mulf %832, %830 : vector<2x64xf32>
    %834 = arith.addf %822, %833 : vector<2x64xf32>
    %835 = vector.broadcast %92 : vector<1x64xf32> to vector<2x64xf32>
    %836 = arith.mulf %736, %835 : vector<2x64xf32>
    %837 = math.exp %836 : vector<2x64xf32>
    %838 = arith.mulf %837, %646 : vector<2x64xf32>
    %839 = vector.extract_strided_slice %108 {offsets = [6, 0], sizes = [2, 1], strides = [1, 1]} : vector<16x1xf32> to vector<2x1xf32>
    %840 = vector.broadcast %839 : vector<2x1xf32> to vector<2x64xf32>
    %841 = arith.mulf %840, %737 : vector<2x64xf32>
    %842 = arith.addf %838, %841 : vector<2x64xf32>
    %843 = vector.extract_strided_slice %124 {offsets = [6, 0], sizes = [2, 1], strides = [1, 1]} : vector<16x1xf32> to vector<2x1xf32>
    %844 = vector.broadcast %843 : vector<2x1xf32> to vector<2x64xf32>
    %845 = arith.mulf %844, %842 : vector<2x64xf32>
    %846 = arith.addf %834, %845 : vector<2x64xf32>
    %847 = vector.broadcast %93 : vector<1x64xf32> to vector<2x64xf32>
    %848 = arith.mulf %736, %847 : vector<2x64xf32>
    %849 = math.exp %848 : vector<2x64xf32>
    %850 = arith.mulf %849, %658 : vector<2x64xf32>
    %851 = vector.extract_strided_slice %109 {offsets = [6, 0], sizes = [2, 1], strides = [1, 1]} : vector<16x1xf32> to vector<2x1xf32>
    %852 = vector.broadcast %851 : vector<2x1xf32> to vector<2x64xf32>
    %853 = arith.mulf %852, %737 : vector<2x64xf32>
    %854 = arith.addf %850, %853 : vector<2x64xf32>
    %855 = vector.extract_strided_slice %125 {offsets = [6, 0], sizes = [2, 1], strides = [1, 1]} : vector<16x1xf32> to vector<2x1xf32>
    %856 = vector.broadcast %855 : vector<2x1xf32> to vector<2x64xf32>
    %857 = arith.mulf %856, %854 : vector<2x64xf32>
    %858 = arith.addf %846, %857 : vector<2x64xf32>
    %859 = vector.broadcast %94 : vector<1x64xf32> to vector<2x64xf32>
    %860 = arith.mulf %736, %859 : vector<2x64xf32>
    %861 = math.exp %860 : vector<2x64xf32>
    %862 = arith.mulf %861, %670 : vector<2x64xf32>
    %863 = vector.extract_strided_slice %110 {offsets = [6, 0], sizes = [2, 1], strides = [1, 1]} : vector<16x1xf32> to vector<2x1xf32>
    %864 = vector.broadcast %863 : vector<2x1xf32> to vector<2x64xf32>
    %865 = arith.mulf %864, %737 : vector<2x64xf32>
    %866 = arith.addf %862, %865 : vector<2x64xf32>
    %867 = vector.extract_strided_slice %126 {offsets = [6, 0], sizes = [2, 1], strides = [1, 1]} : vector<16x1xf32> to vector<2x1xf32>
    %868 = vector.broadcast %867 : vector<2x1xf32> to vector<2x64xf32>
    %869 = arith.mulf %868, %866 : vector<2x64xf32>
    %870 = arith.addf %858, %869 : vector<2x64xf32>
    %871 = vector.broadcast %95 : vector<1x64xf32> to vector<2x64xf32>
    %872 = arith.mulf %736, %871 : vector<2x64xf32>
    %873 = math.exp %872 : vector<2x64xf32>
    %874 = arith.mulf %873, %682 : vector<2x64xf32>
    %875 = vector.extract_strided_slice %111 {offsets = [6, 0], sizes = [2, 1], strides = [1, 1]} : vector<16x1xf32> to vector<2x1xf32>
    %876 = vector.broadcast %875 : vector<2x1xf32> to vector<2x64xf32>
    %877 = arith.mulf %876, %737 : vector<2x64xf32>
    %878 = arith.addf %874, %877 : vector<2x64xf32>
    %879 = vector.extract_strided_slice %127 {offsets = [6, 0], sizes = [2, 1], strides = [1, 1]} : vector<16x1xf32> to vector<2x1xf32>
    %880 = vector.broadcast %879 : vector<2x1xf32> to vector<2x64xf32>
    %881 = arith.mulf %880, %878 : vector<2x64xf32>
    %882 = arith.addf %870, %881 : vector<2x64xf32>
    %883 = vector.broadcast %96 : vector<1x64xf32> to vector<2x64xf32>
    %884 = arith.mulf %736, %883 : vector<2x64xf32>
    %885 = math.exp %884 : vector<2x64xf32>
    %886 = arith.mulf %885, %694 : vector<2x64xf32>
    %887 = vector.extract_strided_slice %112 {offsets = [6, 0], sizes = [2, 1], strides = [1, 1]} : vector<16x1xf32> to vector<2x1xf32>
    %888 = vector.broadcast %887 : vector<2x1xf32> to vector<2x64xf32>
    %889 = arith.mulf %888, %737 : vector<2x64xf32>
    %890 = arith.addf %886, %889 : vector<2x64xf32>
    %891 = vector.extract_strided_slice %128 {offsets = [6, 0], sizes = [2, 1], strides = [1, 1]} : vector<16x1xf32> to vector<2x1xf32>
    %892 = vector.broadcast %891 : vector<2x1xf32> to vector<2x64xf32>
    %893 = arith.mulf %892, %890 : vector<2x64xf32>
    %894 = arith.addf %882, %893 : vector<2x64xf32>
    %895 = vector.broadcast %97 : vector<1x64xf32> to vector<2x64xf32>
    %896 = arith.mulf %736, %895 : vector<2x64xf32>
    %897 = math.exp %896 : vector<2x64xf32>
    %898 = arith.mulf %897, %706 : vector<2x64xf32>
    %899 = vector.extract_strided_slice %113 {offsets = [6, 0], sizes = [2, 1], strides = [1, 1]} : vector<16x1xf32> to vector<2x1xf32>
    %900 = vector.broadcast %899 : vector<2x1xf32> to vector<2x64xf32>
    %901 = arith.mulf %900, %737 : vector<2x64xf32>
    %902 = arith.addf %898, %901 : vector<2x64xf32>
    %903 = vector.extract_strided_slice %129 {offsets = [6, 0], sizes = [2, 1], strides = [1, 1]} : vector<16x1xf32> to vector<2x1xf32>
    %904 = vector.broadcast %903 : vector<2x1xf32> to vector<2x64xf32>
    %905 = arith.mulf %904, %902 : vector<2x64xf32>
    %906 = arith.addf %894, %905 : vector<2x64xf32>
    %907 = vector.broadcast %98 : vector<1x64xf32> to vector<2x64xf32>
    %908 = arith.mulf %736, %907 : vector<2x64xf32>
    %909 = math.exp %908 : vector<2x64xf32>
    %910 = arith.mulf %909, %718 : vector<2x64xf32>
    %911 = vector.extract_strided_slice %114 {offsets = [6, 0], sizes = [2, 1], strides = [1, 1]} : vector<16x1xf32> to vector<2x1xf32>
    %912 = vector.broadcast %911 : vector<2x1xf32> to vector<2x64xf32>
    %913 = arith.mulf %912, %737 : vector<2x64xf32>
    %914 = arith.addf %910, %913 : vector<2x64xf32>
    %915 = vector.extract_strided_slice %130 {offsets = [6, 0], sizes = [2, 1], strides = [1, 1]} : vector<16x1xf32> to vector<2x1xf32>
    %916 = vector.broadcast %915 : vector<2x1xf32> to vector<2x64xf32>
    %917 = arith.mulf %916, %914 : vector<2x64xf32>
    %918 = arith.addf %906, %917 : vector<2x64xf32>
    %919 = vector.broadcast %99 : vector<1x64xf32> to vector<2x64xf32>
    %920 = arith.mulf %736, %919 : vector<2x64xf32>
    %921 = math.exp %920 : vector<2x64xf32>
    %922 = arith.mulf %921, %730 : vector<2x64xf32>
    %923 = vector.extract_strided_slice %115 {offsets = [6, 0], sizes = [2, 1], strides = [1, 1]} : vector<16x1xf32> to vector<2x1xf32>
    %924 = vector.broadcast %923 : vector<2x1xf32> to vector<2x64xf32>
    %925 = arith.mulf %924, %737 : vector<2x64xf32>
    %926 = arith.addf %922, %925 : vector<2x64xf32>
    %927 = vector.extract_strided_slice %131 {offsets = [6, 0], sizes = [2, 1], strides = [1, 1]} : vector<16x1xf32> to vector<2x1xf32>
    %928 = vector.broadcast %927 : vector<2x1xf32> to vector<2x64xf32>
    %929 = arith.mulf %928, %926 : vector<2x64xf32>
    %930 = arith.addf %918, %929 : vector<2x64xf32>
    %c6 = arith.constant 6 : index
    %c0_54 = arith.constant 0 : index
    %931 = vector.load %arg9[%c6, %c0_54] : memref<16x64xf32, #tpu.memory_space<vmem>>, vector<2x64xf32>
    tpu.vector_store %arg9[%c6, %c0_54], %930 {strides = array<i32>} : memref<16x64xf32, #tpu.memory_space<vmem>>, vector<2x64xf32>,
    %932 = vector.extract_strided_slice %80 {offsets = [8, 0], sizes = [2, 64], strides = [1, 1]} : vector<16x64xf32> to vector<2x64xf32>
    %933 = vector.extract_strided_slice %83 {offsets = [8, 0], sizes = [2, 64], strides = [1, 1]} : vector<16x64xf32> to vector<2x64xf32>
    %cst_55 = arith.constant 0.000000e+00 : f32
    %934 = vector.broadcast %cst_55 : f32 to vector<2x64xf32>
    %935 = vector.broadcast %84 : vector<1x64xf32> to vector<2x64xf32>
    %936 = arith.mulf %932, %935 : vector<2x64xf32>
    %937 = math.exp %936 : vector<2x64xf32>
    %938 = arith.mulf %937, %746 : vector<2x64xf32>
    %939 = vector.extract_strided_slice %100 {offsets = [8, 0], sizes = [2, 1], strides = [1, 1]} : vector<16x1xf32> to vector<2x1xf32>
    %940 = vector.broadcast %939 : vector<2x1xf32> to vector<2x64xf32>
    %941 = arith.mulf %940, %933 : vector<2x64xf32>
    %942 = arith.addf %938, %941 : vector<2x64xf32>
    %943 = vector.extract_strided_slice %116 {offsets = [8, 0], sizes = [2, 1], strides = [1, 1]} : vector<16x1xf32> to vector<2x1xf32>
    %944 = vector.broadcast %943 : vector<2x1xf32> to vector<2x64xf32>
    %945 = arith.mulf %944, %942 : vector<2x64xf32>
    %946 = arith.addf %934, %945 : vector<2x64xf32>
    %947 = vector.broadcast %85 : vector<1x64xf32> to vector<2x64xf32>
    %948 = arith.mulf %932, %947 : vector<2x64xf32>
    %949 = math.exp %948 : vector<2x64xf32>
    %950 = arith.mulf %949, %758 : vector<2x64xf32>
    %951 = vector.extract_strided_slice %101 {offsets = [8, 0], sizes = [2, 1], strides = [1, 1]} : vector<16x1xf32> to vector<2x1xf32>
    %952 = vector.broadcast %951 : vector<2x1xf32> to vector<2x64xf32>
    %953 = arith.mulf %952, %933 : vector<2x64xf32>
    %954 = arith.addf %950, %953 : vector<2x64xf32>
    %955 = vector.extract_strided_slice %117 {offsets = [8, 0], sizes = [2, 1], strides = [1, 1]} : vector<16x1xf32> to vector<2x1xf32>
    %956 = vector.broadcast %955 : vector<2x1xf32> to vector<2x64xf32>
    %957 = arith.mulf %956, %954 : vector<2x64xf32>
    %958 = arith.addf %946, %957 : vector<2x64xf32>
    %959 = vector.broadcast %86 : vector<1x64xf32> to vector<2x64xf32>
    %960 = arith.mulf %932, %959 : vector<2x64xf32>
    %961 = math.exp %960 : vector<2x64xf32>
    %962 = arith.mulf %961, %770 : vector<2x64xf32>
    %963 = vector.extract_strided_slice %102 {offsets = [8, 0], sizes = [2, 1], strides = [1, 1]} : vector<16x1xf32> to vector<2x1xf32>
    %964 = vector.broadcast %963 : vector<2x1xf32> to vector<2x64xf32>
    %965 = arith.mulf %964, %933 : vector<2x64xf32>
    %966 = arith.addf %962, %965 : vector<2x64xf32>
    %967 = vector.extract_strided_slice %118 {offsets = [8, 0], sizes = [2, 1], strides = [1, 1]} : vector<16x1xf32> to vector<2x1xf32>
    %968 = vector.broadcast %967 : vector<2x1xf32> to vector<2x64xf32>
    %969 = arith.mulf %968, %966 : vector<2x64xf32>
    %970 = arith.addf %958, %969 : vector<2x64xf32>
    %971 = vector.broadcast %87 : vector<1x64xf32> to vector<2x64xf32>
    %972 = arith.mulf %932, %971 : vector<2x64xf32>
    %973 = math.exp %972 : vector<2x64xf32>
    %974 = arith.mulf %973, %782 : vector<2x64xf32>
    %975 = vector.extract_strided_slice %103 {offsets = [8, 0], sizes = [2, 1], strides = [1, 1]} : vector<16x1xf32> to vector<2x1xf32>
    %976 = vector.broadcast %975 : vector<2x1xf32> to vector<2x64xf32>
    %977 = arith.mulf %976, %933 : vector<2x64xf32>
    %978 = arith.addf %974, %977 : vector<2x64xf32>
    %979 = vector.extract_strided_slice %119 {offsets = [8, 0], sizes = [2, 1], strides = [1, 1]} : vector<16x1xf32> to vector<2x1xf32>
    %980 = vector.broadcast %979 : vector<2x1xf32> to vector<2x64xf32>
    %981 = arith.mulf %980, %978 : vector<2x64xf32>
    %982 = arith.addf %970, %981 : vector<2x64xf32>
    %983 = vector.broadcast %88 : vector<1x64xf32> to vector<2x64xf32>
    %984 = arith.mulf %932, %983 : vector<2x64xf32>
    %985 = math.exp %984 : vector<2x64xf32>
    %986 = arith.mulf %985, %794 : vector<2x64xf32>
    %987 = vector.extract_strided_slice %104 {offsets = [8, 0], sizes = [2, 1], strides = [1, 1]} : vector<16x1xf32> to vector<2x1xf32>
    %988 = vector.broadcast %987 : vector<2x1xf32> to vector<2x64xf32>
    %989 = arith.mulf %988, %933 : vector<2x64xf32>
    %990 = arith.addf %986, %989 : vector<2x64xf32>
    %991 = vector.extract_strided_slice %120 {offsets = [8, 0], sizes = [2, 1], strides = [1, 1]} : vector<16x1xf32> to vector<2x1xf32>
    %992 = vector.broadcast %991 : vector<2x1xf32> to vector<2x64xf32>
    %993 = arith.mulf %992, %990 : vector<2x64xf32>
    %994 = arith.addf %982, %993 : vector<2x64xf32>
    %995 = vector.broadcast %89 : vector<1x64xf32> to vector<2x64xf32>
    %996 = arith.mulf %932, %995 : vector<2x64xf32>
    %997 = math.exp %996 : vector<2x64xf32>
    %998 = arith.mulf %997, %806 : vector<2x64xf32>
    %999 = vector.extract_strided_slice %105 {offsets = [8, 0], sizes = [2, 1], strides = [1, 1]} : vector<16x1xf32> to vector<2x1xf32>
    %1000 = vector.broadcast %999 : vector<2x1xf32> to vector<2x64xf32>
    %1001 = arith.mulf %1000, %933 : vector<2x64xf32>
    %1002 = arith.addf %998, %1001 : vector<2x64xf32>
    %1003 = vector.extract_strided_slice %121 {offsets = [8, 0], sizes = [2, 1], strides = [1, 1]} : vector<16x1xf32> to vector<2x1xf32>
    %1004 = vector.broadcast %1003 : vector<2x1xf32> to vector<2x64xf32>
    %1005 = arith.mulf %1004, %1002 : vector<2x64xf32>
    %1006 = arith.addf %994, %1005 : vector<2x64xf32>
    %1007 = vector.broadcast %90 : vector<1x64xf32> to vector<2x64xf32>
    %1008 = arith.mulf %932, %1007 : vector<2x64xf32>
    %1009 = math.exp %1008 : vector<2x64xf32>
    %1010 = arith.mulf %1009, %818 : vector<2x64xf32>
    %1011 = vector.extract_strided_slice %106 {offsets = [8, 0], sizes = [2, 1], strides = [1, 1]} : vector<16x1xf32> to vector<2x1xf32>
    %1012 = vector.broadcast %1011 : vector<2x1xf32> to vector<2x64xf32>
    %1013 = arith.mulf %1012, %933 : vector<2x64xf32>
    %1014 = arith.addf %1010, %1013 : vector<2x64xf32>
    %1015 = vector.extract_strided_slice %122 {offsets = [8, 0], sizes = [2, 1], strides = [1, 1]} : vector<16x1xf32> to vector<2x1xf32>
    %1016 = vector.broadcast %1015 : vector<2x1xf32> to vector<2x64xf32>
    %1017 = arith.mulf %1016, %1014 : vector<2x64xf32>
    %1018 = arith.addf %1006, %1017 : vector<2x64xf32>
    %1019 = vector.broadcast %91 : vector<1x64xf32> to vector<2x64xf32>
    %1020 = arith.mulf %932, %1019 : vector<2x64xf32>
    %1021 = math.exp %1020 : vector<2x64xf32>
    %1022 = arith.mulf %1021, %830 : vector<2x64xf32>
    %1023 = vector.extract_strided_slice %107 {offsets = [8, 0], sizes = [2, 1], strides = [1, 1]} : vector<16x1xf32> to vector<2x1xf32>
    %1024 = vector.broadcast %1023 : vector<2x1xf32> to vector<2x64xf32>
    %1025 = arith.mulf %1024, %933 : vector<2x64xf32>
    %1026 = arith.addf %1022, %1025 : vector<2x64xf32>
    %1027 = vector.extract_strided_slice %123 {offsets = [8, 0], sizes = [2, 1], strides = [1, 1]} : vector<16x1xf32> to vector<2x1xf32>
    %1028 = vector.broadcast %1027 : vector<2x1xf32> to vector<2x64xf32>
    %1029 = arith.mulf %1028, %1026 : vector<2x64xf32>
    %1030 = arith.addf %1018, %1029 : vector<2x64xf32>
    %1031 = vector.broadcast %92 : vector<1x64xf32> to vector<2x64xf32>
    %1032 = arith.mulf %932, %1031 : vector<2x64xf32>
    %1033 = math.exp %1032 : vector<2x64xf32>
    %1034 = arith.mulf %1033, %842 : vector<2x64xf32>
    %1035 = vector.extract_strided_slice %108 {offsets = [8, 0], sizes = [2, 1], strides = [1, 1]} : vector<16x1xf32> to vector<2x1xf32>
    %1036 = vector.broadcast %1035 : vector<2x1xf32> to vector<2x64xf32>
    %1037 = arith.mulf %1036, %933 : vector<2x64xf32>
    %1038 = arith.addf %1034, %1037 : vector<2x64xf32>
    %1039 = vector.extract_strided_slice %124 {offsets = [8, 0], sizes = [2, 1], strides = [1, 1]} : vector<16x1xf32> to vector<2x1xf32>
    %1040 = vector.broadcast %1039 : vector<2x1xf32> to vector<2x64xf32>
    %1041 = arith.mulf %1040, %1038 : vector<2x64xf32>
    %1042 = arith.addf %1030, %1041 : vector<2x64xf32>
    %1043 = vector.broadcast %93 : vector<1x64xf32> to vector<2x64xf32>
    %1044 = arith.mulf %932, %1043 : vector<2x64xf32>
    %1045 = math.exp %1044 : vector<2x64xf32>
    %1046 = arith.mulf %1045, %854 : vector<2x64xf32>
    %1047 = vector.extract_strided_slice %109 {offsets = [8, 0], sizes = [2, 1], strides = [1, 1]} : vector<16x1xf32> to vector<2x1xf32>
    %1048 = vector.broadcast %1047 : vector<2x1xf32> to vector<2x64xf32>
    %1049 = arith.mulf %1048, %933 : vector<2x64xf32>
    %1050 = arith.addf %1046, %1049 : vector<2x64xf32>
    %1051 = vector.extract_strided_slice %125 {offsets = [8, 0], sizes = [2, 1], strides = [1, 1]} : vector<16x1xf32> to vector<2x1xf32>
    %1052 = vector.broadcast %1051 : vector<2x1xf32> to vector<2x64xf32>
    %1053 = arith.mulf %1052, %1050 : vector<2x64xf32>
    %1054 = arith.addf %1042, %1053 : vector<2x64xf32>
    %1055 = vector.broadcast %94 : vector<1x64xf32> to vector<2x64xf32>
    %1056 = arith.mulf %932, %1055 : vector<2x64xf32>
    %1057 = math.exp %1056 : vector<2x64xf32>
    %1058 = arith.mulf %1057, %866 : vector<2x64xf32>
    %1059 = vector.extract_strided_slice %110 {offsets = [8, 0], sizes = [2, 1], strides = [1, 1]} : vector<16x1xf32> to vector<2x1xf32>
    %1060 = vector.broadcast %1059 : vector<2x1xf32> to vector<2x64xf32>
    %1061 = arith.mulf %1060, %933 : vector<2x64xf32>
    %1062 = arith.addf %1058, %1061 : vector<2x64xf32>
    %1063 = vector.extract_strided_slice %126 {offsets = [8, 0], sizes = [2, 1], strides = [1, 1]} : vector<16x1xf32> to vector<2x1xf32>
    %1064 = vector.broadcast %1063 : vector<2x1xf32> to vector<2x64xf32>
    %1065 = arith.mulf %1064, %1062 : vector<2x64xf32>
    %1066 = arith.addf %1054, %1065 : vector<2x64xf32>
    %1067 = vector.broadcast %95 : vector<1x64xf32> to vector<2x64xf32>
    %1068 = arith.mulf %932, %1067 : vector<2x64xf32>
    %1069 = math.exp %1068 : vector<2x64xf32>
    %1070 = arith.mulf %1069, %878 : vector<2x64xf32>
    %1071 = vector.extract_strided_slice %111 {offsets = [8, 0], sizes = [2, 1], strides = [1, 1]} : vector<16x1xf32> to vector<2x1xf32>
    %1072 = vector.broadcast %1071 : vector<2x1xf32> to vector<2x64xf32>
    %1073 = arith.mulf %1072, %933 : vector<2x64xf32>
    %1074 = arith.addf %1070, %1073 : vector<2x64xf32>
    %1075 = vector.extract_strided_slice %127 {offsets = [8, 0], sizes = [2, 1], strides = [1, 1]} : vector<16x1xf32> to vector<2x1xf32>
    %1076 = vector.broadcast %1075 : vector<2x1xf32> to vector<2x64xf32>
    %1077 = arith.mulf %1076, %1074 : vector<2x64xf32>
    %1078 = arith.addf %1066, %1077 : vector<2x64xf32>
    %1079 = vector.broadcast %96 : vector<1x64xf32> to vector<2x64xf32>
    %1080 = arith.mulf %932, %1079 : vector<2x64xf32>
    %1081 = math.exp %1080 : vector<2x64xf32>
    %1082 = arith.mulf %1081, %890 : vector<2x64xf32>
    %1083 = vector.extract_strided_slice %112 {offsets = [8, 0], sizes = [2, 1], strides = [1, 1]} : vector<16x1xf32> to vector<2x1xf32>
    %1084 = vector.broadcast %1083 : vector<2x1xf32> to vector<2x64xf32>
    %1085 = arith.mulf %1084, %933 : vector<2x64xf32>
    %1086 = arith.addf %1082, %1085 : vector<2x64xf32>
    %1087 = vector.extract_strided_slice %128 {offsets = [8, 0], sizes = [2, 1], strides = [1, 1]} : vector<16x1xf32> to vector<2x1xf32>
    %1088 = vector.broadcast %1087 : vector<2x1xf32> to vector<2x64xf32>
    %1089 = arith.mulf %1088, %1086 : vector<2x64xf32>
    %1090 = arith.addf %1078, %1089 : vector<2x64xf32>
    %1091 = vector.broadcast %97 : vector<1x64xf32> to vector<2x64xf32>
    %1092 = arith.mulf %932, %1091 : vector<2x64xf32>
    %1093 = math.exp %1092 : vector<2x64xf32>
    %1094 = arith.mulf %1093, %902 : vector<2x64xf32>
    %1095 = vector.extract_strided_slice %113 {offsets = [8, 0], sizes = [2, 1], strides = [1, 1]} : vector<16x1xf32> to vector<2x1xf32>
    %1096 = vector.broadcast %1095 : vector<2x1xf32> to vector<2x64xf32>
    %1097 = arith.mulf %1096, %933 : vector<2x64xf32>
    %1098 = arith.addf %1094, %1097 : vector<2x64xf32>
    %1099 = vector.extract_strided_slice %129 {offsets = [8, 0], sizes = [2, 1], strides = [1, 1]} : vector<16x1xf32> to vector<2x1xf32>
    %1100 = vector.broadcast %1099 : vector<2x1xf32> to vector<2x64xf32>
    %1101 = arith.mulf %1100, %1098 : vector<2x64xf32>
    %1102 = arith.addf %1090, %1101 : vector<2x64xf32>
    %1103 = vector.broadcast %98 : vector<1x64xf32> to vector<2x64xf32>
    %1104 = arith.mulf %932, %1103 : vector<2x64xf32>
    %1105 = math.exp %1104 : vector<2x64xf32>
    %1106 = arith.mulf %1105, %914 : vector<2x64xf32>
    %1107 = vector.extract_strided_slice %114 {offsets = [8, 0], sizes = [2, 1], strides = [1, 1]} : vector<16x1xf32> to vector<2x1xf32>
    %1108 = vector.broadcast %1107 : vector<2x1xf32> to vector<2x64xf32>
    %1109 = arith.mulf %1108, %933 : vector<2x64xf32>
    %1110 = arith.addf %1106, %1109 : vector<2x64xf32>
    %1111 = vector.extract_strided_slice %130 {offsets = [8, 0], sizes = [2, 1], strides = [1, 1]} : vector<16x1xf32> to vector<2x1xf32>
    %1112 = vector.broadcast %1111 : vector<2x1xf32> to vector<2x64xf32>
    %1113 = arith.mulf %1112, %1110 : vector<2x64xf32>
    %1114 = arith.addf %1102, %1113 : vector<2x64xf32>
    %1115 = vector.broadcast %99 : vector<1x64xf32> to vector<2x64xf32>
    %1116 = arith.mulf %932, %1115 : vector<2x64xf32>
    %1117 = math.exp %1116 : vector<2x64xf32>
    %1118 = arith.mulf %1117, %926 : vector<2x64xf32>
    %1119 = vector.extract_strided_slice %115 {offsets = [8, 0], sizes = [2, 1], strides = [1, 1]} : vector<16x1xf32> to vector<2x1xf32>
    %1120 = vector.broadcast %1119 : vector<2x1xf32> to vector<2x64xf32>
    %1121 = arith.mulf %1120, %933 : vector<2x64xf32>
    %1122 = arith.addf %1118, %1121 : vector<2x64xf32>
    %1123 = vector.extract_strided_slice %131 {offsets = [8, 0], sizes = [2, 1], strides = [1, 1]} : vector<16x1xf32> to vector<2x1xf32>
    %1124 = vector.broadcast %1123 : vector<2x1xf32> to vector<2x64xf32>
    %1125 = arith.mulf %1124, %1122 : vector<2x64xf32>
    %1126 = arith.addf %1114, %1125 : vector<2x64xf32>
    %c8 = arith.constant 8 : index
    %c0_56 = arith.constant 0 : index
    %1127 = vector.load %arg9[%c8, %c0_56] : memref<16x64xf32, #tpu.memory_space<vmem>>, vector<2x64xf32>
    tpu.vector_store %arg9[%c8, %c0_56], %1126 {strides = array<i32>} : memref<16x64xf32, #tpu.memory_space<vmem>>, vector<2x64xf32>,
    %1128 = vector.extract_strided_slice %80 {offsets = [10, 0], sizes = [2, 64], strides = [1, 1]} : vector<16x64xf32> to vector<2x64xf32>
    %1129 = vector.extract_strided_slice %83 {offsets = [10, 0], sizes = [2, 64], strides = [1, 1]} : vector<16x64xf32> to vector<2x64xf32>
    %cst_57 = arith.constant 0.000000e+00 : f32
    %1130 = vector.broadcast %cst_57 : f32 to vector<2x64xf32>
    %1131 = vector.broadcast %84 : vector<1x64xf32> to vector<2x64xf32>
    %1132 = arith.mulf %1128, %1131 : vector<2x64xf32>
    %1133 = math.exp %1132 : vector<2x64xf32>
    %1134 = arith.mulf %1133, %942 : vector<2x64xf32>
    %1135 = vector.extract_strided_slice %100 {offsets = [10, 0], sizes = [2, 1], strides = [1, 1]} : vector<16x1xf32> to vector<2x1xf32>
    %1136 = vector.broadcast %1135 : vector<2x1xf32> to vector<2x64xf32>
    %1137 = arith.mulf %1136, %1129 : vector<2x64xf32>
    %1138 = arith.addf %1134, %1137 : vector<2x64xf32>
    %1139 = vector.extract_strided_slice %116 {offsets = [10, 0], sizes = [2, 1], strides = [1, 1]} : vector<16x1xf32> to vector<2x1xf32>
    %1140 = vector.broadcast %1139 : vector<2x1xf32> to vector<2x64xf32>
    %1141 = arith.mulf %1140, %1138 : vector<2x64xf32>
    %1142 = arith.addf %1130, %1141 : vector<2x64xf32>
    %1143 = vector.broadcast %85 : vector<1x64xf32> to vector<2x64xf32>
    %1144 = arith.mulf %1128, %1143 : vector<2x64xf32>
    %1145 = math.exp %1144 : vector<2x64xf32>
    %1146 = arith.mulf %1145, %954 : vector<2x64xf32>
    %1147 = vector.extract_strided_slice %101 {offsets = [10, 0], sizes = [2, 1], strides = [1, 1]} : vector<16x1xf32> to vector<2x1xf32>
    %1148 = vector.broadcast %1147 : vector<2x1xf32> to vector<2x64xf32>
    %1149 = arith.mulf %1148, %1129 : vector<2x64xf32>
    %1150 = arith.addf %1146, %1149 : vector<2x64xf32>
    %1151 = vector.extract_strided_slice %117 {offsets = [10, 0], sizes = [2, 1], strides = [1, 1]} : vector<16x1xf32> to vector<2x1xf32>
    %1152 = vector.broadcast %1151 : vector<2x1xf32> to vector<2x64xf32>
    %1153 = arith.mulf %1152, %1150 : vector<2x64xf32>
    %1154 = arith.addf %1142, %1153 : vector<2x64xf32>
    %1155 = vector.broadcast %86 : vector<1x64xf32> to vector<2x64xf32>
    %1156 = arith.mulf %1128, %1155 : vector<2x64xf32>
    %1157 = math.exp %1156 : vector<2x64xf32>
    %1158 = arith.mulf %1157, %966 : vector<2x64xf32>
    %1159 = vector.extract_strided_slice %102 {offsets = [10, 0], sizes = [2, 1], strides = [1, 1]} : vector<16x1xf32> to vector<2x1xf32>
    %1160 = vector.broadcast %1159 : vector<2x1xf32> to vector<2x64xf32>
    %1161 = arith.mulf %1160, %1129 : vector<2x64xf32>
    %1162 = arith.addf %1158, %1161 : vector<2x64xf32>
    %1163 = vector.extract_strided_slice %118 {offsets = [10, 0], sizes = [2, 1], strides = [1, 1]} : vector<16x1xf32> to vector<2x1xf32>
    %1164 = vector.broadcast %1163 : vector<2x1xf32> to vector<2x64xf32>
    %1165 = arith.mulf %1164, %1162 : vector<2x64xf32>
    %1166 = arith.addf %1154, %1165 : vector<2x64xf32>
    %1167 = vector.broadcast %87 : vector<1x64xf32> to vector<2x64xf32>
    %1168 = arith.mulf %1128, %1167 : vector<2x64xf32>
    %1169 = math.exp %1168 : vector<2x64xf32>
    %1170 = arith.mulf %1169, %978 : vector<2x64xf32>
    %1171 = vector.extract_strided_slice %103 {offsets = [10, 0], sizes = [2, 1], strides = [1, 1]} : vector<16x1xf32> to vector<2x1xf32>
    %1172 = vector.broadcast %1171 : vector<2x1xf32> to vector<2x64xf32>
    %1173 = arith.mulf %1172, %1129 : vector<2x64xf32>
    %1174 = arith.addf %1170, %1173 : vector<2x64xf32>
    %1175 = vector.extract_strided_slice %119 {offsets = [10, 0], sizes = [2, 1], strides = [1, 1]} : vector<16x1xf32> to vector<2x1xf32>
    %1176 = vector.broadcast %1175 : vector<2x1xf32> to vector<2x64xf32>
    %1177 = arith.mulf %1176, %1174 : vector<2x64xf32>
    %1178 = arith.addf %1166, %1177 : vector<2x64xf32>
    %1179 = vector.broadcast %88 : vector<1x64xf32> to vector<2x64xf32>
    %1180 = arith.mulf %1128, %1179 : vector<2x64xf32>
    %1181 = math.exp %1180 : vector<2x64xf32>
    %1182 = arith.mulf %1181, %990 : vector<2x64xf32>
    %1183 = vector.extract_strided_slice %104 {offsets = [10, 0], sizes = [2, 1], strides = [1, 1]} : vector<16x1xf32> to vector<2x1xf32>
    %1184 = vector.broadcast %1183 : vector<2x1xf32> to vector<2x64xf32>
    %1185 = arith.mulf %1184, %1129 : vector<2x64xf32>
    %1186 = arith.addf %1182, %1185 : vector<2x64xf32>
    %1187 = vector.extract_strided_slice %120 {offsets = [10, 0], sizes = [2, 1], strides = [1, 1]} : vector<16x1xf32> to vector<2x1xf32>
    %1188 = vector.broadcast %1187 : vector<2x1xf32> to vector<2x64xf32>
    %1189 = arith.mulf %1188, %1186 : vector<2x64xf32>
    %1190 = arith.addf %1178, %1189 : vector<2x64xf32>
    %1191 = vector.broadcast %89 : vector<1x64xf32> to vector<2x64xf32>
    %1192 = arith.mulf %1128, %1191 : vector<2x64xf32>
    %1193 = math.exp %1192 : vector<2x64xf32>
    %1194 = arith.mulf %1193, %1002 : vector<2x64xf32>
    %1195 = vector.extract_strided_slice %105 {offsets = [10, 0], sizes = [2, 1], strides = [1, 1]} : vector<16x1xf32> to vector<2x1xf32>
    %1196 = vector.broadcast %1195 : vector<2x1xf32> to vector<2x64xf32>
    %1197 = arith.mulf %1196, %1129 : vector<2x64xf32>
    %1198 = arith.addf %1194, %1197 : vector<2x64xf32>
    %1199 = vector.extract_strided_slice %121 {offsets = [10, 0], sizes = [2, 1], strides = [1, 1]} : vector<16x1xf32> to vector<2x1xf32>
    %1200 = vector.broadcast %1199 : vector<2x1xf32> to vector<2x64xf32>
    %1201 = arith.mulf %1200, %1198 : vector<2x64xf32>
    %1202 = arith.addf %1190, %1201 : vector<2x64xf32>
    %1203 = vector.broadcast %90 : vector<1x64xf32> to vector<2x64xf32>
    %1204 = arith.mulf %1128, %1203 : vector<2x64xf32>
    %1205 = math.exp %1204 : vector<2x64xf32>
    %1206 = arith.mulf %1205, %1014 : vector<2x64xf32>
    %1207 = vector.extract_strided_slice %106 {offsets = [10, 0], sizes = [2, 1], strides = [1, 1]} : vector<16x1xf32> to vector<2x1xf32>
    %1208 = vector.broadcast %1207 : vector<2x1xf32> to vector<2x64xf32>
    %1209 = arith.mulf %1208, %1129 : vector<2x64xf32>
    %1210 = arith.addf %1206, %1209 : vector<2x64xf32>
    %1211 = vector.extract_strided_slice %122 {offsets = [10, 0], sizes = [2, 1], strides = [1, 1]} : vector<16x1xf32> to vector<2x1xf32>
    %1212 = vector.broadcast %1211 : vector<2x1xf32> to vector<2x64xf32>
    %1213 = arith.mulf %1212, %1210 : vector<2x64xf32>
    %1214 = arith.addf %1202, %1213 : vector<2x64xf32>
    %1215 = vector.broadcast %91 : vector<1x64xf32> to vector<2x64xf32>
    %1216 = arith.mulf %1128, %1215 : vector<2x64xf32>
    %1217 = math.exp %1216 : vector<2x64xf32>
    %1218 = arith.mulf %1217, %1026 : vector<2x64xf32>
    %1219 = vector.extract_strided_slice %107 {offsets = [10, 0], sizes = [2, 1], strides = [1, 1]} : vector<16x1xf32> to vector<2x1xf32>
    %1220 = vector.broadcast %1219 : vector<2x1xf32> to vector<2x64xf32>
    %1221 = arith.mulf %1220, %1129 : vector<2x64xf32>
    %1222 = arith.addf %1218, %1221 : vector<2x64xf32>
    %1223 = vector.extract_strided_slice %123 {offsets = [10, 0], sizes = [2, 1], strides = [1, 1]} : vector<16x1xf32> to vector<2x1xf32>
    %1224 = vector.broadcast %1223 : vector<2x1xf32> to vector<2x64xf32>
    %1225 = arith.mulf %1224, %1222 : vector<2x64xf32>
    %1226 = arith.addf %1214, %1225 : vector<2x64xf32>
    %1227 = vector.broadcast %92 : vector<1x64xf32> to vector<2x64xf32>
    %1228 = arith.mulf %1128, %1227 : vector<2x64xf32>
    %1229 = math.exp %1228 : vector<2x64xf32>
    %1230 = arith.mulf %1229, %1038 : vector<2x64xf32>
    %1231 = vector.extract_strided_slice %108 {offsets = [10, 0], sizes = [2, 1], strides = [1, 1]} : vector<16x1xf32> to vector<2x1xf32>
    %1232 = vector.broadcast %1231 : vector<2x1xf32> to vector<2x64xf32>
    %1233 = arith.mulf %1232, %1129 : vector<2x64xf32>
    %1234 = arith.addf %1230, %1233 : vector<2x64xf32>
    %1235 = vector.extract_strided_slice %124 {offsets = [10, 0], sizes = [2, 1], strides = [1, 1]} : vector<16x1xf32> to vector<2x1xf32>
    %1236 = vector.broadcast %1235 : vector<2x1xf32> to vector<2x64xf32>
    %1237 = arith.mulf %1236, %1234 : vector<2x64xf32>
    %1238 = arith.addf %1226, %1237 : vector<2x64xf32>
    %1239 = vector.broadcast %93 : vector<1x64xf32> to vector<2x64xf32>
    %1240 = arith.mulf %1128, %1239 : vector<2x64xf32>
    %1241 = math.exp %1240 : vector<2x64xf32>
    %1242 = arith.mulf %1241, %1050 : vector<2x64xf32>
    %1243 = vector.extract_strided_slice %109 {offsets = [10, 0], sizes = [2, 1], strides = [1, 1]} : vector<16x1xf32> to vector<2x1xf32>
    %1244 = vector.broadcast %1243 : vector<2x1xf32> to vector<2x64xf32>
    %1245 = arith.mulf %1244, %1129 : vector<2x64xf32>
    %1246 = arith.addf %1242, %1245 : vector<2x64xf32>
    %1247 = vector.extract_strided_slice %125 {offsets = [10, 0], sizes = [2, 1], strides = [1, 1]} : vector<16x1xf32> to vector<2x1xf32>
    %1248 = vector.broadcast %1247 : vector<2x1xf32> to vector<2x64xf32>
    %1249 = arith.mulf %1248, %1246 : vector<2x64xf32>
    %1250 = arith.addf %1238, %1249 : vector<2x64xf32>
    %1251 = vector.broadcast %94 : vector<1x64xf32> to vector<2x64xf32>
    %1252 = arith.mulf %1128, %1251 : vector<2x64xf32>
    %1253 = math.exp %1252 : vector<2x64xf32>
    %1254 = arith.mulf %1253, %1062 : vector<2x64xf32>
    %1255 = vector.extract_strided_slice %110 {offsets = [10, 0], sizes = [2, 1], strides = [1, 1]} : vector<16x1xf32> to vector<2x1xf32>
    %1256 = vector.broadcast %1255 : vector<2x1xf32> to vector<2x64xf32>
    %1257 = arith.mulf %1256, %1129 : vector<2x64xf32>
    %1258 = arith.addf %1254, %1257 : vector<2x64xf32>
    %1259 = vector.extract_strided_slice %126 {offsets = [10, 0], sizes = [2, 1], strides = [1, 1]} : vector<16x1xf32> to vector<2x1xf32>
    %1260 = vector.broadcast %1259 : vector<2x1xf32> to vector<2x64xf32>
    %1261 = arith.mulf %1260, %1258 : vector<2x64xf32>
    %1262 = arith.addf %1250, %1261 : vector<2x64xf32>
    %1263 = vector.broadcast %95 : vector<1x64xf32> to vector<2x64xf32>
    %1264 = arith.mulf %1128, %1263 : vector<2x64xf32>
    %1265 = math.exp %1264 : vector<2x64xf32>
    %1266 = arith.mulf %1265, %1074 : vector<2x64xf32>
    %1267 = vector.extract_strided_slice %111 {offsets = [10, 0], sizes = [2, 1], strides = [1, 1]} : vector<16x1xf32> to vector<2x1xf32>
    %1268 = vector.broadcast %1267 : vector<2x1xf32> to vector<2x64xf32>
    %1269 = arith.mulf %1268, %1129 : vector<2x64xf32>
    %1270 = arith.addf %1266, %1269 : vector<2x64xf32>
    %1271 = vector.extract_strided_slice %127 {offsets = [10, 0], sizes = [2, 1], strides = [1, 1]} : vector<16x1xf32> to vector<2x1xf32>
    %1272 = vector.broadcast %1271 : vector<2x1xf32> to vector<2x64xf32>
    %1273 = arith.mulf %1272, %1270 : vector<2x64xf32>
    %1274 = arith.addf %1262, %1273 : vector<2x64xf32>
    %1275 = vector.broadcast %96 : vector<1x64xf32> to vector<2x64xf32>
    %1276 = arith.mulf %1128, %1275 : vector<2x64xf32>
    %1277 = math.exp %1276 : vector<2x64xf32>
    %1278 = arith.mulf %1277, %1086 : vector<2x64xf32>
    %1279 = vector.extract_strided_slice %112 {offsets = [10, 0], sizes = [2, 1], strides = [1, 1]} : vector<16x1xf32> to vector<2x1xf32>
    %1280 = vector.broadcast %1279 : vector<2x1xf32> to vector<2x64xf32>
    %1281 = arith.mulf %1280, %1129 : vector<2x64xf32>
    %1282 = arith.addf %1278, %1281 : vector<2x64xf32>
    %1283 = vector.extract_strided_slice %128 {offsets = [10, 0], sizes = [2, 1], strides = [1, 1]} : vector<16x1xf32> to vector<2x1xf32>
    %1284 = vector.broadcast %1283 : vector<2x1xf32> to vector<2x64xf32>
    %1285 = arith.mulf %1284, %1282 : vector<2x64xf32>
    %1286 = arith.addf %1274, %1285 : vector<2x64xf32>
    %1287 = vector.broadcast %97 : vector<1x64xf32> to vector<2x64xf32>
    %1288 = arith.mulf %1128, %1287 : vector<2x64xf32>
    %1289 = math.exp %1288 : vector<2x64xf32>
    %1290 = arith.mulf %1289, %1098 : vector<2x64xf32>
    %1291 = vector.extract_strided_slice %113 {offsets = [10, 0], sizes = [2, 1], strides = [1, 1]} : vector<16x1xf32> to vector<2x1xf32>
    %1292 = vector.broadcast %1291 : vector<2x1xf32> to vector<2x64xf32>
    %1293 = arith.mulf %1292, %1129 : vector<2x64xf32>
    %1294 = arith.addf %1290, %1293 : vector<2x64xf32>
    %1295 = vector.extract_strided_slice %129 {offsets = [10, 0], sizes = [2, 1], strides = [1, 1]} : vector<16x1xf32> to vector<2x1xf32>
    %1296 = vector.broadcast %1295 : vector<2x1xf32> to vector<2x64xf32>
    %1297 = arith.mulf %1296, %1294 : vector<2x64xf32>
    %1298 = arith.addf %1286, %1297 : vector<2x64xf32>
    %1299 = vector.broadcast %98 : vector<1x64xf32> to vector<2x64xf32>
    %1300 = arith.mulf %1128, %1299 : vector<2x64xf32>
    %1301 = math.exp %1300 : vector<2x64xf32>
    %1302 = arith.mulf %1301, %1110 : vector<2x64xf32>
    %1303 = vector.extract_strided_slice %114 {offsets = [10, 0], sizes = [2, 1], strides = [1, 1]} : vector<16x1xf32> to vector<2x1xf32>
    %1304 = vector.broadcast %1303 : vector<2x1xf32> to vector<2x64xf32>
    %1305 = arith.mulf %1304, %1129 : vector<2x64xf32>
    %1306 = arith.addf %1302, %1305 : vector<2x64xf32>
    %1307 = vector.extract_strided_slice %130 {offsets = [10, 0], sizes = [2, 1], strides = [1, 1]} : vector<16x1xf32> to vector<2x1xf32>
    %1308 = vector.broadcast %1307 : vector<2x1xf32> to vector<2x64xf32>
    %1309 = arith.mulf %1308, %1306 : vector<2x64xf32>
    %1310 = arith.addf %1298, %1309 : vector<2x64xf32>
    %1311 = vector.broadcast %99 : vector<1x64xf32> to vector<2x64xf32>
    %1312 = arith.mulf %1128, %1311 : vector<2x64xf32>
    %1313 = math.exp %1312 : vector<2x64xf32>
    %1314 = arith.mulf %1313, %1122 : vector<2x64xf32>
    %1315 = vector.extract_strided_slice %115 {offsets = [10, 0], sizes = [2, 1], strides = [1, 1]} : vector<16x1xf32> to vector<2x1xf32>
    %1316 = vector.broadcast %1315 : vector<2x1xf32> to vector<2x64xf32>
    %1317 = arith.mulf %1316, %1129 : vector<2x64xf32>
    %1318 = arith.addf %1314, %1317 : vector<2x64xf32>
    %1319 = vector.extract_strided_slice %131 {offsets = [10, 0], sizes = [2, 1], strides = [1, 1]} : vector<16x1xf32> to vector<2x1xf32>
    %1320 = vector.broadcast %1319 : vector<2x1xf32> to vector<2x64xf32>
    %1321 = arith.mulf %1320, %1318 : vector<2x64xf32>
    %1322 = arith.addf %1310, %1321 : vector<2x64xf32>
    %c10 = arith.constant 10 : index
    %c0_58 = arith.constant 0 : index
    %1323 = vector.load %arg9[%c10, %c0_58] : memref<16x64xf32, #tpu.memory_space<vmem>>, vector<2x64xf32>
    tpu.vector_store %arg9[%c10, %c0_58], %1322 {strides = array<i32>} : memref<16x64xf32, #tpu.memory_space<vmem>>, vector<2x64xf32>,
    %1324 = vector.extract_strided_slice %80 {offsets = [12, 0], sizes = [2, 64], strides = [1, 1]} : vector<16x64xf32> to vector<2x64xf32>
    %1325 = vector.extract_strided_slice %83 {offsets = [12, 0], sizes = [2, 64], strides = [1, 1]} : vector<16x64xf32> to vector<2x64xf32>
    %cst_59 = arith.constant 0.000000e+00 : f32
    %1326 = vector.broadcast %cst_59 : f32 to vector<2x64xf32>
    %1327 = vector.broadcast %84 : vector<1x64xf32> to vector<2x64xf32>
    %1328 = arith.mulf %1324, %1327 : vector<2x64xf32>
    %1329 = math.exp %1328 : vector<2x64xf32>
    %1330 = arith.mulf %1329, %1138 : vector<2x64xf32>
    %1331 = vector.extract_strided_slice %100 {offsets = [12, 0], sizes = [2, 1], strides = [1, 1]} : vector<16x1xf32> to vector<2x1xf32>
    %1332 = vector.broadcast %1331 : vector<2x1xf32> to vector<2x64xf32>
    %1333 = arith.mulf %1332, %1325 : vector<2x64xf32>
    %1334 = arith.addf %1330, %1333 : vector<2x64xf32>
    %1335 = vector.extract_strided_slice %116 {offsets = [12, 0], sizes = [2, 1], strides = [1, 1]} : vector<16x1xf32> to vector<2x1xf32>
    %1336 = vector.broadcast %1335 : vector<2x1xf32> to vector<2x64xf32>
    %1337 = arith.mulf %1336, %1334 : vector<2x64xf32>
    %1338 = arith.addf %1326, %1337 : vector<2x64xf32>
    %1339 = vector.broadcast %85 : vector<1x64xf32> to vector<2x64xf32>
    %1340 = arith.mulf %1324, %1339 : vector<2x64xf32>
    %1341 = math.exp %1340 : vector<2x64xf32>
    %1342 = arith.mulf %1341, %1150 : vector<2x64xf32>
    %1343 = vector.extract_strided_slice %101 {offsets = [12, 0], sizes = [2, 1], strides = [1, 1]} : vector<16x1xf32> to vector<2x1xf32>
    %1344 = vector.broadcast %1343 : vector<2x1xf32> to vector<2x64xf32>
    %1345 = arith.mulf %1344, %1325 : vector<2x64xf32>
    %1346 = arith.addf %1342, %1345 : vector<2x64xf32>
    %1347 = vector.extract_strided_slice %117 {offsets = [12, 0], sizes = [2, 1], strides = [1, 1]} : vector<16x1xf32> to vector<2x1xf32>
    %1348 = vector.broadcast %1347 : vector<2x1xf32> to vector<2x64xf32>
    %1349 = arith.mulf %1348, %1346 : vector<2x64xf32>
    %1350 = arith.addf %1338, %1349 : vector<2x64xf32>
    %1351 = vector.broadcast %86 : vector<1x64xf32> to vector<2x64xf32>
    %1352 = arith.mulf %1324, %1351 : vector<2x64xf32>
    %1353 = math.exp %1352 : vector<2x64xf32>
    %1354 = arith.mulf %1353, %1162 : vector<2x64xf32>
    %1355 = vector.extract_strided_slice %102 {offsets = [12, 0], sizes = [2, 1], strides = [1, 1]} : vector<16x1xf32> to vector<2x1xf32>
    %1356 = vector.broadcast %1355 : vector<2x1xf32> to vector<2x64xf32>
    %1357 = arith.mulf %1356, %1325 : vector<2x64xf32>
    %1358 = arith.addf %1354, %1357 : vector<2x64xf32>
    %1359 = vector.extract_strided_slice %118 {offsets = [12, 0], sizes = [2, 1], strides = [1, 1]} : vector<16x1xf32> to vector<2x1xf32>
    %1360 = vector.broadcast %1359 : vector<2x1xf32> to vector<2x64xf32>
    %1361 = arith.mulf %1360, %1358 : vector<2x64xf32>
    %1362 = arith.addf %1350, %1361 : vector<2x64xf32>
    %1363 = vector.broadcast %87 : vector<1x64xf32> to vector<2x64xf32>
    %1364 = arith.mulf %1324, %1363 : vector<2x64xf32>
    %1365 = math.exp %1364 : vector<2x64xf32>
    %1366 = arith.mulf %1365, %1174 : vector<2x64xf32>
    %1367 = vector.extract_strided_slice %103 {offsets = [12, 0], sizes = [2, 1], strides = [1, 1]} : vector<16x1xf32> to vector<2x1xf32>
    %1368 = vector.broadcast %1367 : vector<2x1xf32> to vector<2x64xf32>
    %1369 = arith.mulf %1368, %1325 : vector<2x64xf32>
    %1370 = arith.addf %1366, %1369 : vector<2x64xf32>
    %1371 = vector.extract_strided_slice %119 {offsets = [12, 0], sizes = [2, 1], strides = [1, 1]} : vector<16x1xf32> to vector<2x1xf32>
    %1372 = vector.broadcast %1371 : vector<2x1xf32> to vector<2x64xf32>
    %1373 = arith.mulf %1372, %1370 : vector<2x64xf32>
    %1374 = arith.addf %1362, %1373 : vector<2x64xf32>
    %1375 = vector.broadcast %88 : vector<1x64xf32> to vector<2x64xf32>
    %1376 = arith.mulf %1324, %1375 : vector<2x64xf32>
    %1377 = math.exp %1376 : vector<2x64xf32>
    %1378 = arith.mulf %1377, %1186 : vector<2x64xf32>
    %1379 = vector.extract_strided_slice %104 {offsets = [12, 0], sizes = [2, 1], strides = [1, 1]} : vector<16x1xf32> to vector<2x1xf32>
    %1380 = vector.broadcast %1379 : vector<2x1xf32> to vector<2x64xf32>
    %1381 = arith.mulf %1380, %1325 : vector<2x64xf32>
    %1382 = arith.addf %1378, %1381 : vector<2x64xf32>
    %1383 = vector.extract_strided_slice %120 {offsets = [12, 0], sizes = [2, 1], strides = [1, 1]} : vector<16x1xf32> to vector<2x1xf32>
    %1384 = vector.broadcast %1383 : vector<2x1xf32> to vector<2x64xf32>
    %1385 = arith.mulf %1384, %1382 : vector<2x64xf32>
    %1386 = arith.addf %1374, %1385 : vector<2x64xf32>
    %1387 = vector.broadcast %89 : vector<1x64xf32> to vector<2x64xf32>
    %1388 = arith.mulf %1324, %1387 : vector<2x64xf32>
    %1389 = math.exp %1388 : vector<2x64xf32>
    %1390 = arith.mulf %1389, %1198 : vector<2x64xf32>
    %1391 = vector.extract_strided_slice %105 {offsets = [12, 0], sizes = [2, 1], strides = [1, 1]} : vector<16x1xf32> to vector<2x1xf32>
    %1392 = vector.broadcast %1391 : vector<2x1xf32> to vector<2x64xf32>
    %1393 = arith.mulf %1392, %1325 : vector<2x64xf32>
    %1394 = arith.addf %1390, %1393 : vector<2x64xf32>
    %1395 = vector.extract_strided_slice %121 {offsets = [12, 0], sizes = [2, 1], strides = [1, 1]} : vector<16x1xf32> to vector<2x1xf32>
    %1396 = vector.broadcast %1395 : vector<2x1xf32> to vector<2x64xf32>
    %1397 = arith.mulf %1396, %1394 : vector<2x64xf32>
    %1398 = arith.addf %1386, %1397 : vector<2x64xf32>
    %1399 = vector.broadcast %90 : vector<1x64xf32> to vector<2x64xf32>
    %1400 = arith.mulf %1324, %1399 : vector<2x64xf32>
    %1401 = math.exp %1400 : vector<2x64xf32>
    %1402 = arith.mulf %1401, %1210 : vector<2x64xf32>
    %1403 = vector.extract_strided_slice %106 {offsets = [12, 0], sizes = [2, 1], strides = [1, 1]} : vector<16x1xf32> to vector<2x1xf32>
    %1404 = vector.broadcast %1403 : vector<2x1xf32> to vector<2x64xf32>
    %1405 = arith.mulf %1404, %1325 : vector<2x64xf32>
    %1406 = arith.addf %1402, %1405 : vector<2x64xf32>
    %1407 = vector.extract_strided_slice %122 {offsets = [12, 0], sizes = [2, 1], strides = [1, 1]} : vector<16x1xf32> to vector<2x1xf32>
    %1408 = vector.broadcast %1407 : vector<2x1xf32> to vector<2x64xf32>
    %1409 = arith.mulf %1408, %1406 : vector<2x64xf32>
    %1410 = arith.addf %1398, %1409 : vector<2x64xf32>
    %1411 = vector.broadcast %91 : vector<1x64xf32> to vector<2x64xf32>
    %1412 = arith.mulf %1324, %1411 : vector<2x64xf32>
    %1413 = math.exp %1412 : vector<2x64xf32>
    %1414 = arith.mulf %1413, %1222 : vector<2x64xf32>
    %1415 = vector.extract_strided_slice %107 {offsets = [12, 0], sizes = [2, 1], strides = [1, 1]} : vector<16x1xf32> to vector<2x1xf32>
    %1416 = vector.broadcast %1415 : vector<2x1xf32> to vector<2x64xf32>
    %1417 = arith.mulf %1416, %1325 : vector<2x64xf32>
    %1418 = arith.addf %1414, %1417 : vector<2x64xf32>
    %1419 = vector.extract_strided_slice %123 {offsets = [12, 0], sizes = [2, 1], strides = [1, 1]} : vector<16x1xf32> to vector<2x1xf32>
    %1420 = vector.broadcast %1419 : vector<2x1xf32> to vector<2x64xf32>
    %1421 = arith.mulf %1420, %1418 : vector<2x64xf32>
    %1422 = arith.addf %1410, %1421 : vector<2x64xf32>
    %1423 = vector.broadcast %92 : vector<1x64xf32> to vector<2x64xf32>
    %1424 = arith.mulf %1324, %1423 : vector<2x64xf32>
    %1425 = math.exp %1424 : vector<2x64xf32>
    %1426 = arith.mulf %1425, %1234 : vector<2x64xf32>
    %1427 = vector.extract_strided_slice %108 {offsets = [12, 0], sizes = [2, 1], strides = [1, 1]} : vector<16x1xf32> to vector<2x1xf32>
    %1428 = vector.broadcast %1427 : vector<2x1xf32> to vector<2x64xf32>
    %1429 = arith.mulf %1428, %1325 : vector<2x64xf32>
    %1430 = arith.addf %1426, %1429 : vector<2x64xf32>
    %1431 = vector.extract_strided_slice %124 {offsets = [12, 0], sizes = [2, 1], strides = [1, 1]} : vector<16x1xf32> to vector<2x1xf32>
    %1432 = vector.broadcast %1431 : vector<2x1xf32> to vector<2x64xf32>
    %1433 = arith.mulf %1432, %1430 : vector<2x64xf32>
    %1434 = arith.addf %1422, %1433 : vector<2x64xf32>
    %1435 = vector.broadcast %93 : vector<1x64xf32> to vector<2x64xf32>
    %1436 = arith.mulf %1324, %1435 : vector<2x64xf32>
    %1437 = math.exp %1436 : vector<2x64xf32>
    %1438 = arith.mulf %1437, %1246 : vector<2x64xf32>
    %1439 = vector.extract_strided_slice %109 {offsets = [12, 0], sizes = [2, 1], strides = [1, 1]} : vector<16x1xf32> to vector<2x1xf32>
    %1440 = vector.broadcast %1439 : vector<2x1xf32> to vector<2x64xf32>
    %1441 = arith.mulf %1440, %1325 : vector<2x64xf32>
    %1442 = arith.addf %1438, %1441 : vector<2x64xf32>
    %1443 = vector.extract_strided_slice %125 {offsets = [12, 0], sizes = [2, 1], strides = [1, 1]} : vector<16x1xf32> to vector<2x1xf32>
    %1444 = vector.broadcast %1443 : vector<2x1xf32> to vector<2x64xf32>
    %1445 = arith.mulf %1444, %1442 : vector<2x64xf32>
    %1446 = arith.addf %1434, %1445 : vector<2x64xf32>
    %1447 = vector.broadcast %94 : vector<1x64xf32> to vector<2x64xf32>
    %1448 = arith.mulf %1324, %1447 : vector<2x64xf32>
    %1449 = math.exp %1448 : vector<2x64xf32>
    %1450 = arith.mulf %1449, %1258 : vector<2x64xf32>
    %1451 = vector.extract_strided_slice %110 {offsets = [12, 0], sizes = [2, 1], strides = [1, 1]} : vector<16x1xf32> to vector<2x1xf32>
    %1452 = vector.broadcast %1451 : vector<2x1xf32> to vector<2x64xf32>
    %1453 = arith.mulf %1452, %1325 : vector<2x64xf32>
    %1454 = arith.addf %1450, %1453 : vector<2x64xf32>
    %1455 = vector.extract_strided_slice %126 {offsets = [12, 0], sizes = [2, 1], strides = [1, 1]} : vector<16x1xf32> to vector<2x1xf32>
    %1456 = vector.broadcast %1455 : vector<2x1xf32> to vector<2x64xf32>
    %1457 = arith.mulf %1456, %1454 : vector<2x64xf32>
    %1458 = arith.addf %1446, %1457 : vector<2x64xf32>
    %1459 = vector.broadcast %95 : vector<1x64xf32> to vector<2x64xf32>
    %1460 = arith.mulf %1324, %1459 : vector<2x64xf32>
    %1461 = math.exp %1460 : vector<2x64xf32>
    %1462 = arith.mulf %1461, %1270 : vector<2x64xf32>
    %1463 = vector.extract_strided_slice %111 {offsets = [12, 0], sizes = [2, 1], strides = [1, 1]} : vector<16x1xf32> to vector<2x1xf32>
    %1464 = vector.broadcast %1463 : vector<2x1xf32> to vector<2x64xf32>
    %1465 = arith.mulf %1464, %1325 : vector<2x64xf32>
    %1466 = arith.addf %1462, %1465 : vector<2x64xf32>
    %1467 = vector.extract_strided_slice %127 {offsets = [12, 0], sizes = [2, 1], strides = [1, 1]} : vector<16x1xf32> to vector<2x1xf32>
    %1468 = vector.broadcast %1467 : vector<2x1xf32> to vector<2x64xf32>
    %1469 = arith.mulf %1468, %1466 : vector<2x64xf32>
    %1470 = arith.addf %1458, %1469 : vector<2x64xf32>
    %1471 = vector.broadcast %96 : vector<1x64xf32> to vector<2x64xf32>
    %1472 = arith.mulf %1324, %1471 : vector<2x64xf32>
    %1473 = math.exp %1472 : vector<2x64xf32>
    %1474 = arith.mulf %1473, %1282 : vector<2x64xf32>
    %1475 = vector.extract_strided_slice %112 {offsets = [12, 0], sizes = [2, 1], strides = [1, 1]} : vector<16x1xf32> to vector<2x1xf32>
    %1476 = vector.broadcast %1475 : vector<2x1xf32> to vector<2x64xf32>
    %1477 = arith.mulf %1476, %1325 : vector<2x64xf32>
    %1478 = arith.addf %1474, %1477 : vector<2x64xf32>
    %1479 = vector.extract_strided_slice %128 {offsets = [12, 0], sizes = [2, 1], strides = [1, 1]} : vector<16x1xf32> to vector<2x1xf32>
    %1480 = vector.broadcast %1479 : vector<2x1xf32> to vector<2x64xf32>
    %1481 = arith.mulf %1480, %1478 : vector<2x64xf32>
    %1482 = arith.addf %1470, %1481 : vector<2x64xf32>
    %1483 = vector.broadcast %97 : vector<1x64xf32> to vector<2x64xf32>
    %1484 = arith.mulf %1324, %1483 : vector<2x64xf32>
    %1485 = math.exp %1484 : vector<2x64xf32>
    %1486 = arith.mulf %1485, %1294 : vector<2x64xf32>
    %1487 = vector.extract_strided_slice %113 {offsets = [12, 0], sizes = [2, 1], strides = [1, 1]} : vector<16x1xf32> to vector<2x1xf32>
    %1488 = vector.broadcast %1487 : vector<2x1xf32> to vector<2x64xf32>
    %1489 = arith.mulf %1488, %1325 : vector<2x64xf32>
    %1490 = arith.addf %1486, %1489 : vector<2x64xf32>
    %1491 = vector.extract_strided_slice %129 {offsets = [12, 0], sizes = [2, 1], strides = [1, 1]} : vector<16x1xf32> to vector<2x1xf32>
    %1492 = vector.broadcast %1491 : vector<2x1xf32> to vector<2x64xf32>
    %1493 = arith.mulf %1492, %1490 : vector<2x64xf32>
    %1494 = arith.addf %1482, %1493 : vector<2x64xf32>
    %1495 = vector.broadcast %98 : vector<1x64xf32> to vector<2x64xf32>
    %1496 = arith.mulf %1324, %1495 : vector<2x64xf32>
    %1497 = math.exp %1496 : vector<2x64xf32>
    %1498 = arith.mulf %1497, %1306 : vector<2x64xf32>
    %1499 = vector.extract_strided_slice %114 {offsets = [12, 0], sizes = [2, 1], strides = [1, 1]} : vector<16x1xf32> to vector<2x1xf32>
    %1500 = vector.broadcast %1499 : vector<2x1xf32> to vector<2x64xf32>
    %1501 = arith.mulf %1500, %1325 : vector<2x64xf32>
    %1502 = arith.addf %1498, %1501 : vector<2x64xf32>
    %1503 = vector.extract_strided_slice %130 {offsets = [12, 0], sizes = [2, 1], strides = [1, 1]} : vector<16x1xf32> to vector<2x1xf32>
    %1504 = vector.broadcast %1503 : vector<2x1xf32> to vector<2x64xf32>
    %1505 = arith.mulf %1504, %1502 : vector<2x64xf32>
    %1506 = arith.addf %1494, %1505 : vector<2x64xf32>
    %1507 = vector.broadcast %99 : vector<1x64xf32> to vector<2x64xf32>
    %1508 = arith.mulf %1324, %1507 : vector<2x64xf32>
    %1509 = math.exp %1508 : vector<2x64xf32>
    %1510 = arith.mulf %1509, %1318 : vector<2x64xf32>
    %1511 = vector.extract_strided_slice %115 {offsets = [12, 0], sizes = [2, 1], strides = [1, 1]} : vector<16x1xf32> to vector<2x1xf32>
    %1512 = vector.broadcast %1511 : vector<2x1xf32> to vector<2x64xf32>
    %1513 = arith.mulf %1512, %1325 : vector<2x64xf32>
    %1514 = arith.addf %1510, %1513 : vector<2x64xf32>
    %1515 = vector.extract_strided_slice %131 {offsets = [12, 0], sizes = [2, 1], strides = [1, 1]} : vector<16x1xf32> to vector<2x1xf32>
    %1516 = vector.broadcast %1515 : vector<2x1xf32> to vector<2x64xf32>
    %1517 = arith.mulf %1516, %1514 : vector<2x64xf32>
    %1518 = arith.addf %1506, %1517 : vector<2x64xf32>
    %c12 = arith.constant 12 : index
    %c0_60 = arith.constant 0 : index
    %1519 = vector.load %arg9[%c12, %c0_60] : memref<16x64xf32, #tpu.memory_space<vmem>>, vector<2x64xf32>
    tpu.vector_store %arg9[%c12, %c0_60], %1518 {strides = array<i32>} : memref<16x64xf32, #tpu.memory_space<vmem>>, vector<2x64xf32>,
    %1520 = vector.extract_strided_slice %80 {offsets = [14, 0], sizes = [2, 64], strides = [1, 1]} : vector<16x64xf32> to vector<2x64xf32>
    %1521 = vector.extract_strided_slice %83 {offsets = [14, 0], sizes = [2, 64], strides = [1, 1]} : vector<16x64xf32> to vector<2x64xf32>
    %cst_61 = arith.constant 0.000000e+00 : f32
    %1522 = vector.broadcast %cst_61 : f32 to vector<2x64xf32>
    %1523 = vector.broadcast %84 : vector<1x64xf32> to vector<2x64xf32>
    %1524 = arith.mulf %1520, %1523 : vector<2x64xf32>
    %1525 = math.exp %1524 : vector<2x64xf32>
    %1526 = arith.mulf %1525, %1334 : vector<2x64xf32>
    %1527 = vector.extract_strided_slice %100 {offsets = [14, 0], sizes = [2, 1], strides = [1, 1]} : vector<16x1xf32> to vector<2x1xf32>
    %1528 = vector.broadcast %1527 : vector<2x1xf32> to vector<2x64xf32>
    %1529 = arith.mulf %1528, %1521 : vector<2x64xf32>
    %1530 = arith.addf %1526, %1529 : vector<2x64xf32>
    %1531 = vector.extract_strided_slice %116 {offsets = [14, 0], sizes = [2, 1], strides = [1, 1]} : vector<16x1xf32> to vector<2x1xf32>
    %1532 = vector.broadcast %1531 : vector<2x1xf32> to vector<2x64xf32>
    %1533 = arith.mulf %1532, %1530 : vector<2x64xf32>
    %1534 = arith.addf %1522, %1533 : vector<2x64xf32>
    %1535 = vector.broadcast %85 : vector<1x64xf32> to vector<2x64xf32>
    %1536 = arith.mulf %1520, %1535 : vector<2x64xf32>
    %1537 = math.exp %1536 : vector<2x64xf32>
    %1538 = arith.mulf %1537, %1346 : vector<2x64xf32>
    %1539 = vector.extract_strided_slice %101 {offsets = [14, 0], sizes = [2, 1], strides = [1, 1]} : vector<16x1xf32> to vector<2x1xf32>
    %1540 = vector.broadcast %1539 : vector<2x1xf32> to vector<2x64xf32>
    %1541 = arith.mulf %1540, %1521 : vector<2x64xf32>
    %1542 = arith.addf %1538, %1541 : vector<2x64xf32>
    %1543 = vector.extract_strided_slice %117 {offsets = [14, 0], sizes = [2, 1], strides = [1, 1]} : vector<16x1xf32> to vector<2x1xf32>
    %1544 = vector.broadcast %1543 : vector<2x1xf32> to vector<2x64xf32>
    %1545 = arith.mulf %1544, %1542 : vector<2x64xf32>
    %1546 = arith.addf %1534, %1545 : vector<2x64xf32>
    %1547 = vector.broadcast %86 : vector<1x64xf32> to vector<2x64xf32>
    %1548 = arith.mulf %1520, %1547 : vector<2x64xf32>
    %1549 = math.exp %1548 : vector<2x64xf32>
    %1550 = arith.mulf %1549, %1358 : vector<2x64xf32>
    %1551 = vector.extract_strided_slice %102 {offsets = [14, 0], sizes = [2, 1], strides = [1, 1]} : vector<16x1xf32> to vector<2x1xf32>
    %1552 = vector.broadcast %1551 : vector<2x1xf32> to vector<2x64xf32>
    %1553 = arith.mulf %1552, %1521 : vector<2x64xf32>
    %1554 = arith.addf %1550, %1553 : vector<2x64xf32>
    %1555 = vector.extract_strided_slice %118 {offsets = [14, 0], sizes = [2, 1], strides = [1, 1]} : vector<16x1xf32> to vector<2x1xf32>
    %1556 = vector.broadcast %1555 : vector<2x1xf32> to vector<2x64xf32>
    %1557 = arith.mulf %1556, %1554 : vector<2x64xf32>
    %1558 = arith.addf %1546, %1557 : vector<2x64xf32>
    %1559 = vector.broadcast %87 : vector<1x64xf32> to vector<2x64xf32>
    %1560 = arith.mulf %1520, %1559 : vector<2x64xf32>
    %1561 = math.exp %1560 : vector<2x64xf32>
    %1562 = arith.mulf %1561, %1370 : vector<2x64xf32>
    %1563 = vector.extract_strided_slice %103 {offsets = [14, 0], sizes = [2, 1], strides = [1, 1]} : vector<16x1xf32> to vector<2x1xf32>
    %1564 = vector.broadcast %1563 : vector<2x1xf32> to vector<2x64xf32>
    %1565 = arith.mulf %1564, %1521 : vector<2x64xf32>
    %1566 = arith.addf %1562, %1565 : vector<2x64xf32>
    %1567 = vector.extract_strided_slice %119 {offsets = [14, 0], sizes = [2, 1], strides = [1, 1]} : vector<16x1xf32> to vector<2x1xf32>
    %1568 = vector.broadcast %1567 : vector<2x1xf32> to vector<2x64xf32>
    %1569 = arith.mulf %1568, %1566 : vector<2x64xf32>
    %1570 = arith.addf %1558, %1569 : vector<2x64xf32>
    %1571 = vector.broadcast %88 : vector<1x64xf32> to vector<2x64xf32>
    %1572 = arith.mulf %1520, %1571 : vector<2x64xf32>
    %1573 = math.exp %1572 : vector<2x64xf32>
    %1574 = arith.mulf %1573, %1382 : vector<2x64xf32>
    %1575 = vector.extract_strided_slice %104 {offsets = [14, 0], sizes = [2, 1], strides = [1, 1]} : vector<16x1xf32> to vector<2x1xf32>
    %1576 = vector.broadcast %1575 : vector<2x1xf32> to vector<2x64xf32>
    %1577 = arith.mulf %1576, %1521 : vector<2x64xf32>
    %1578 = arith.addf %1574, %1577 : vector<2x64xf32>
    %1579 = vector.extract_strided_slice %120 {offsets = [14, 0], sizes = [2, 1], strides = [1, 1]} : vector<16x1xf32> to vector<2x1xf32>
    %1580 = vector.broadcast %1579 : vector<2x1xf32> to vector<2x64xf32>
    %1581 = arith.mulf %1580, %1578 : vector<2x64xf32>
    %1582 = arith.addf %1570, %1581 : vector<2x64xf32>
    %1583 = vector.broadcast %89 : vector<1x64xf32> to vector<2x64xf32>
    %1584 = arith.mulf %1520, %1583 : vector<2x64xf32>
    %1585 = math.exp %1584 : vector<2x64xf32>
    %1586 = arith.mulf %1585, %1394 : vector<2x64xf32>
    %1587 = vector.extract_strided_slice %105 {offsets = [14, 0], sizes = [2, 1], strides = [1, 1]} : vector<16x1xf32> to vector<2x1xf32>
    %1588 = vector.broadcast %1587 : vector<2x1xf32> to vector<2x64xf32>
    %1589 = arith.mulf %1588, %1521 : vector<2x64xf32>
    %1590 = arith.addf %1586, %1589 : vector<2x64xf32>
    %1591 = vector.extract_strided_slice %121 {offsets = [14, 0], sizes = [2, 1], strides = [1, 1]} : vector<16x1xf32> to vector<2x1xf32>
    %1592 = vector.broadcast %1591 : vector<2x1xf32> to vector<2x64xf32>
    %1593 = arith.mulf %1592, %1590 : vector<2x64xf32>
    %1594 = arith.addf %1582, %1593 : vector<2x64xf32>
    %1595 = vector.broadcast %90 : vector<1x64xf32> to vector<2x64xf32>
    %1596 = arith.mulf %1520, %1595 : vector<2x64xf32>
    %1597 = math.exp %1596 : vector<2x64xf32>
    %1598 = arith.mulf %1597, %1406 : vector<2x64xf32>
    %1599 = vector.extract_strided_slice %106 {offsets = [14, 0], sizes = [2, 1], strides = [1, 1]} : vector<16x1xf32> to vector<2x1xf32>
    %1600 = vector.broadcast %1599 : vector<2x1xf32> to vector<2x64xf32>
    %1601 = arith.mulf %1600, %1521 : vector<2x64xf32>
    %1602 = arith.addf %1598, %1601 : vector<2x64xf32>
    %1603 = vector.extract_strided_slice %122 {offsets = [14, 0], sizes = [2, 1], strides = [1, 1]} : vector<16x1xf32> to vector<2x1xf32>
    %1604 = vector.broadcast %1603 : vector<2x1xf32> to vector<2x64xf32>
    %1605 = arith.mulf %1604, %1602 : vector<2x64xf32>
    %1606 = arith.addf %1594, %1605 : vector<2x64xf32>
    %1607 = vector.broadcast %91 : vector<1x64xf32> to vector<2x64xf32>
    %1608 = arith.mulf %1520, %1607 : vector<2x64xf32>
    %1609 = math.exp %1608 : vector<2x64xf32>
    %1610 = arith.mulf %1609, %1418 : vector<2x64xf32>
    %1611 = vector.extract_strided_slice %107 {offsets = [14, 0], sizes = [2, 1], strides = [1, 1]} : vector<16x1xf32> to vector<2x1xf32>
    %1612 = vector.broadcast %1611 : vector<2x1xf32> to vector<2x64xf32>
    %1613 = arith.mulf %1612, %1521 : vector<2x64xf32>
    %1614 = arith.addf %1610, %1613 : vector<2x64xf32>
    %1615 = vector.extract_strided_slice %123 {offsets = [14, 0], sizes = [2, 1], strides = [1, 1]} : vector<16x1xf32> to vector<2x1xf32>
    %1616 = vector.broadcast %1615 : vector<2x1xf32> to vector<2x64xf32>
    %1617 = arith.mulf %1616, %1614 : vector<2x64xf32>
    %1618 = arith.addf %1606, %1617 : vector<2x64xf32>
    %1619 = vector.broadcast %92 : vector<1x64xf32> to vector<2x64xf32>
    %1620 = arith.mulf %1520, %1619 : vector<2x64xf32>
    %1621 = math.exp %1620 : vector<2x64xf32>
    %1622 = arith.mulf %1621, %1430 : vector<2x64xf32>
    %1623 = vector.extract_strided_slice %108 {offsets = [14, 0], sizes = [2, 1], strides = [1, 1]} : vector<16x1xf32> to vector<2x1xf32>
    %1624 = vector.broadcast %1623 : vector<2x1xf32> to vector<2x64xf32>
    %1625 = arith.mulf %1624, %1521 : vector<2x64xf32>
    %1626 = arith.addf %1622, %1625 : vector<2x64xf32>
    %1627 = vector.extract_strided_slice %124 {offsets = [14, 0], sizes = [2, 1], strides = [1, 1]} : vector<16x1xf32> to vector<2x1xf32>
    %1628 = vector.broadcast %1627 : vector<2x1xf32> to vector<2x64xf32>
    %1629 = arith.mulf %1628, %1626 : vector<2x64xf32>
    %1630 = arith.addf %1618, %1629 : vector<2x64xf32>
    %1631 = vector.broadcast %93 : vector<1x64xf32> to vector<2x64xf32>
    %1632 = arith.mulf %1520, %1631 : vector<2x64xf32>
    %1633 = math.exp %1632 : vector<2x64xf32>
    %1634 = arith.mulf %1633, %1442 : vector<2x64xf32>
    %1635 = vector.extract_strided_slice %109 {offsets = [14, 0], sizes = [2, 1], strides = [1, 1]} : vector<16x1xf32> to vector<2x1xf32>
    %1636 = vector.broadcast %1635 : vector<2x1xf32> to vector<2x64xf32>
    %1637 = arith.mulf %1636, %1521 : vector<2x64xf32>
    %1638 = arith.addf %1634, %1637 : vector<2x64xf32>
    %1639 = vector.extract_strided_slice %125 {offsets = [14, 0], sizes = [2, 1], strides = [1, 1]} : vector<16x1xf32> to vector<2x1xf32>
    %1640 = vector.broadcast %1639 : vector<2x1xf32> to vector<2x64xf32>
    %1641 = arith.mulf %1640, %1638 : vector<2x64xf32>
    %1642 = arith.addf %1630, %1641 : vector<2x64xf32>
    %1643 = vector.broadcast %94 : vector<1x64xf32> to vector<2x64xf32>
    %1644 = arith.mulf %1520, %1643 : vector<2x64xf32>
    %1645 = math.exp %1644 : vector<2x64xf32>
    %1646 = arith.mulf %1645, %1454 : vector<2x64xf32>
    %1647 = vector.extract_strided_slice %110 {offsets = [14, 0], sizes = [2, 1], strides = [1, 1]} : vector<16x1xf32> to vector<2x1xf32>
    %1648 = vector.broadcast %1647 : vector<2x1xf32> to vector<2x64xf32>
    %1649 = arith.mulf %1648, %1521 : vector<2x64xf32>
    %1650 = arith.addf %1646, %1649 : vector<2x64xf32>
    %1651 = vector.extract_strided_slice %126 {offsets = [14, 0], sizes = [2, 1], strides = [1, 1]} : vector<16x1xf32> to vector<2x1xf32>
    %1652 = vector.broadcast %1651 : vector<2x1xf32> to vector<2x64xf32>
    %1653 = arith.mulf %1652, %1650 : vector<2x64xf32>
    %1654 = arith.addf %1642, %1653 : vector<2x64xf32>
    %1655 = vector.broadcast %95 : vector<1x64xf32> to vector<2x64xf32>
    %1656 = arith.mulf %1520, %1655 : vector<2x64xf32>
    %1657 = math.exp %1656 : vector<2x64xf32>
    %1658 = arith.mulf %1657, %1466 : vector<2x64xf32>
    %1659 = vector.extract_strided_slice %111 {offsets = [14, 0], sizes = [2, 1], strides = [1, 1]} : vector<16x1xf32> to vector<2x1xf32>
    %1660 = vector.broadcast %1659 : vector<2x1xf32> to vector<2x64xf32>
    %1661 = arith.mulf %1660, %1521 : vector<2x64xf32>
    %1662 = arith.addf %1658, %1661 : vector<2x64xf32>
    %1663 = vector.extract_strided_slice %127 {offsets = [14, 0], sizes = [2, 1], strides = [1, 1]} : vector<16x1xf32> to vector<2x1xf32>
    %1664 = vector.broadcast %1663 : vector<2x1xf32> to vector<2x64xf32>
    %1665 = arith.mulf %1664, %1662 : vector<2x64xf32>
    %1666 = arith.addf %1654, %1665 : vector<2x64xf32>
    %1667 = vector.broadcast %96 : vector<1x64xf32> to vector<2x64xf32>
    %1668 = arith.mulf %1520, %1667 : vector<2x64xf32>
    %1669 = math.exp %1668 : vector<2x64xf32>
    %1670 = arith.mulf %1669, %1478 : vector<2x64xf32>
    %1671 = vector.extract_strided_slice %112 {offsets = [14, 0], sizes = [2, 1], strides = [1, 1]} : vector<16x1xf32> to vector<2x1xf32>
    %1672 = vector.broadcast %1671 : vector<2x1xf32> to vector<2x64xf32>
    %1673 = arith.mulf %1672, %1521 : vector<2x64xf32>
    %1674 = arith.addf %1670, %1673 : vector<2x64xf32>
    %1675 = vector.extract_strided_slice %128 {offsets = [14, 0], sizes = [2, 1], strides = [1, 1]} : vector<16x1xf32> to vector<2x1xf32>
    %1676 = vector.broadcast %1675 : vector<2x1xf32> to vector<2x64xf32>
    %1677 = arith.mulf %1676, %1674 : vector<2x64xf32>
    %1678 = arith.addf %1666, %1677 : vector<2x64xf32>
    %1679 = vector.broadcast %97 : vector<1x64xf32> to vector<2x64xf32>
    %1680 = arith.mulf %1520, %1679 : vector<2x64xf32>
    %1681 = math.exp %1680 : vector<2x64xf32>
    %1682 = arith.mulf %1681, %1490 : vector<2x64xf32>
    %1683 = vector.extract_strided_slice %113 {offsets = [14, 0], sizes = [2, 1], strides = [1, 1]} : vector<16x1xf32> to vector<2x1xf32>
    %1684 = vector.broadcast %1683 : vector<2x1xf32> to vector<2x64xf32>
    %1685 = arith.mulf %1684, %1521 : vector<2x64xf32>
    %1686 = arith.addf %1682, %1685 : vector<2x64xf32>
    %1687 = vector.extract_strided_slice %129 {offsets = [14, 0], sizes = [2, 1], strides = [1, 1]} : vector<16x1xf32> to vector<2x1xf32>
    %1688 = vector.broadcast %1687 : vector<2x1xf32> to vector<2x64xf32>
    %1689 = arith.mulf %1688, %1686 : vector<2x64xf32>
    %1690 = arith.addf %1678, %1689 : vector<2x64xf32>
    %1691 = vector.broadcast %98 : vector<1x64xf32> to vector<2x64xf32>
    %1692 = arith.mulf %1520, %1691 : vector<2x64xf32>
    %1693 = math.exp %1692 : vector<2x64xf32>
    %1694 = arith.mulf %1693, %1502 : vector<2x64xf32>
    %1695 = vector.extract_strided_slice %114 {offsets = [14, 0], sizes = [2, 1], strides = [1, 1]} : vector<16x1xf32> to vector<2x1xf32>
    %1696 = vector.broadcast %1695 : vector<2x1xf32> to vector<2x64xf32>
    %1697 = arith.mulf %1696, %1521 : vector<2x64xf32>
    %1698 = arith.addf %1694, %1697 : vector<2x64xf32>
    %1699 = vector.extract_strided_slice %130 {offsets = [14, 0], sizes = [2, 1], strides = [1, 1]} : vector<16x1xf32> to vector<2x1xf32>
    %1700 = vector.broadcast %1699 : vector<2x1xf32> to vector<2x64xf32>
    %1701 = arith.mulf %1700, %1698 : vector<2x64xf32>
    %1702 = arith.addf %1690, %1701 : vector<2x64xf32>
    %1703 = vector.broadcast %99 : vector<1x64xf32> to vector<2x64xf32>
    %1704 = arith.mulf %1520, %1703 : vector<2x64xf32>
    %1705 = math.exp %1704 : vector<2x64xf32>
    %1706 = arith.mulf %1705, %1514 : vector<2x64xf32>
    %1707 = vector.extract_strided_slice %115 {offsets = [14, 0], sizes = [2, 1], strides = [1, 1]} : vector<16x1xf32> to vector<2x1xf32>
    %1708 = vector.broadcast %1707 : vector<2x1xf32> to vector<2x64xf32>
    %1709 = arith.mulf %1708, %1521 : vector<2x64xf32>
    %1710 = arith.addf %1706, %1709 : vector<2x64xf32>
    %1711 = vector.extract_strided_slice %131 {offsets = [14, 0], sizes = [2, 1], strides = [1, 1]} : vector<16x1xf32> to vector<2x1xf32>
    %1712 = vector.broadcast %1711 : vector<2x1xf32> to vector<2x64xf32>
    %1713 = arith.mulf %1712, %1710 : vector<2x64xf32>
    %1714 = arith.addf %1702, %1713 : vector<2x64xf32>
    %c14 = arith.constant 14 : index
    %c0_62 = arith.constant 0 : index
    %1715 = vector.load %arg9[%c14, %c0_62] : memref<16x64xf32, #tpu.memory_space<vmem>>, vector<2x64xf32>
    tpu.vector_store %arg9[%c14, %c0_62], %1714 {strides = array<i32>} : memref<16x64xf32, #tpu.memory_space<vmem>>, vector<2x64xf32>,
    %c0_63 = arith.constant 0 : index
    %c0_64 = arith.constant 0 : index
    %1716 = vector.load %arg9[%c0_63, %c0_64] : memref<16x64xf32, #tpu.memory_space<vmem>>, vector<16x64xf32>
    %1717 = vector.broadcast %14 : vector<1x64xf32> to vector<16x64xf32>
    %1718 = arith.mulf %64, %1717 : vector<16x64xf32>
    %1719 = arith.addf %1716, %1718 : vector<16x64xf32>
    %cst_65 = arith.constant 0.000000e+00 : f32
    %1720 = vector.broadcast %cst_65 : f32 to vector<16x64xf32>
    %1721 = arith.subf %1720, %30 : vector<16x64xf32>
    %1722 = math.exp %1721 : vector<16x64xf32>
    %cst_66 = arith.constant 1.000000e+00 : f32
    %1723 = vector.broadcast %cst_66 : f32 to vector<16x64xf32>
    %1724 = arith.addf %1723, %1722 : vector<16x64xf32>
    %cst_67 = arith.constant 1.000000e+00 : f32
    %1725 = vector.broadcast %cst_67 : f32 to vector<16x64xf32>
    %1726 = arith.divf %1725, %1724 : vector<16x64xf32>
    %1727 = arith.mulf %30, %1726 : vector<16x64xf32>
    %1728 = arith.mulf %1719, %1727 : vector<16x64xf32>
    %1729 = arith.truncf %1728 : vector<16x64xf32> to vector<16x64xbf16>
    %1730 = vector.extract_strided_slice %9 {offsets = [0, 96], sizes = [64, 32], strides = [1, 1]} : vector<64x128xbf16> to vector<64x32xbf16>
    %cst_68 = arith.constant dense<0.000000e+00> : vector<16x32xf32>
    %1731 = tpu.matmul %1729, %1730, %cst_68 {dimension_numbers = #tpu.dot_dimension_numbers<[1], [0], [0], [1], [0, 0, 1, 1], [], []>} : vector<16x64xbf16>, vector<64x32xbf16>, vector<16x32xf32> -> vector<16x32xf32>
    %1732 = arith.addf %1, %1731 : vector<16x32xf32>
    %c1 = arith.constant 1 : index
    %c0_69 = arith.constant 0 : index
    %c0_70 = arith.constant 0 : index
    %1733 = vector.load %arg2[%c1, %c0_69, %c0_70] : memref<2x1x32xf32, #tpu.memory_space<vmem>>, vector<1x1x32xf32>
    %1734 = vector.shape_cast %1733 : vector<1x1x32xf32> to vector<1x32xf32>
    %c1_71 = arith.constant 1 : index
    %c0_72 = arith.constant 0 : index
    %c0_73 = arith.constant 0 : index
    %1735 = vector.load %arg3[%c1_71, %c0_72, %c0_73] : memref<2x32x128xbf16, #tpu.memory_space<vmem>>, vector<1x32x128xbf16>
    %1736 = vector.shape_cast %1735 : vector<1x32x128xbf16> to vector<32x128xbf16>
    %c1_74 = arith.constant 1 : index
    %c0_75 = arith.constant 0 : index
    %c0_76 = arith.constant 0 : index
    %1737 = vector.load %arg4[%c1_74, %c0_75, %c0_76] : memref<2x8x64xf32, #tpu.memory_space<vmem>>, vector<1x8x64xf32>
    %1738 = vector.shape_cast %1737 : vector<1x8x64xf32> to vector<8x64xf32>
    %c1_77 = arith.constant 1 : index
    %c0_78 = arith.constant 0 : index
    %c0_79 = arith.constant 0 : index
    %1739 = vector.load %arg5[%c1_77, %c0_78, %c0_79] : memref<2x64x128xbf16, #tpu.memory_space<vmem>>, vector<1x64x128xbf16>
    %1740 = vector.shape_cast %1739 : vector<1x64x128xbf16> to vector<64x128xbf16>
    %c1_80 = arith.constant 1 : index
    %c0_81 = arith.constant 0 : index
    %c0_82 = arith.constant 0 : index
    %1741 = vector.load %arg6[%c1_80, %c0_81, %c0_82] : memref<2x16x64xf32, #tpu.memory_space<vmem>>, vector<1x16x64xf32>
    %1742 = vector.shape_cast %1741 : vector<1x16x64xf32> to vector<16x64xf32>
    %1743 = vector.extract_strided_slice %1738 {offsets = [4, 0], sizes = [1, 64], strides = [1, 1]} : vector<8x64xf32> to vector<1x64xf32>
    %1744 = vector.extract_strided_slice %1738 {offsets = [5, 0], sizes = [1, 64], strides = [1, 1]} : vector<8x64xf32> to vector<1x64xf32>
    %1745 = vector.extract_strided_slice %1738 {offsets = [6, 0], sizes = [1, 64], strides = [1, 1]} : vector<8x64xf32> to vector<1x64xf32>
    %1746 = arith.mulf %1732, %1732 : vector<16x32xf32>
    %cst_83 = arith.constant dense<0.000000e+00> : vector<16xf32>
    %1747 = vector.multi_reduction <add>, %1746, %cst_83 [1] : vector<16x32xf32> to vector<16xf32>
    %1748 = vector.shape_cast %1747 : vector<16xf32> to vector<16x1xf32>
    %cst_84 = arith.constant 3.200000e+01 : f32
    %1749 = vector.broadcast %cst_84 : f32 to vector<16x1xf32>
    %1750 = arith.divf %1748, %1749 : vector<16x1xf32>
    %cst_85 = arith.constant 9.99999974E-6 : f32
    %1751 = vector.broadcast %cst_85 : f32 to vector<16x1xf32>
    %1752 = arith.addf %1750, %1751 : vector<16x1xf32>
    %1753 = math.rsqrt %1752 : vector<16x1xf32>
    %1754 = vector.broadcast %1753 : vector<16x1xf32> to vector<16x32xf32>
    %1755 = arith.mulf %1732, %1754 : vector<16x32xf32>
    %1756 = vector.broadcast %1734 : vector<1x32xf32> to vector<16x32xf32>
    %1757 = arith.mulf %1755, %1756 : vector<16x32xf32>
    %1758 = arith.truncf %1757 : vector<16x32xf32> to vector<16x32xbf16>
    %cst_86 = arith.constant dense<0.000000e+00> : vector<16x128xf32>
    %1759 = tpu.matmul %1758, %1736, %cst_86 {dimension_numbers = #tpu.dot_dimension_numbers<[1], [0], [0], [1], [0, 0, 1, 1], [], []>} : vector<16x32xbf16>, vector<32x128xbf16>, vector<16x128xf32> -> vector<16x128xf32>
    %1760 = vector.extract_strided_slice %1759 {offsets = [0, 0], sizes = [16, 64], strides = [1, 1]} : vector<16x128xf32> to vector<16x64xf32>
    %1761 = vector.extract_strided_slice %1759 {offsets = [0, 64], sizes = [16, 64], strides = [1, 1]} : vector<16x128xf32> to vector<16x64xf32>
    %1762 = vector.extract_strided_slice %1738 {offsets = [3, 0], sizes = [1, 64], strides = [1, 1]} : vector<8x64xf32> to vector<1x64xf32>
    %1763 = vector.broadcast %1762 : vector<1x64xf32> to vector<16x64xf32>
    %1764 = arith.mulf %1760, %1763 : vector<16x64xf32>
    %cst_87 = arith.constant 0.000000e+00 : f32
    %1765 = vector.broadcast %cst_87 : f32 to vector<2x64xf32>
    %1766 = vector.extract_strided_slice %1760 {offsets = [0, 0], sizes = [14, 64], strides = [1, 1]} : vector<16x64xf32> to vector<14x64xf32>
    %1767 = tpu.concatenate %1765, %1766 in 0 : vector<2x64xf32>, vector<14x64xf32> -> vector<16x64xf32>
    %1768 = vector.extract_strided_slice %1738 {offsets = [2, 0], sizes = [1, 64], strides = [1, 1]} : vector<8x64xf32> to vector<1x64xf32>
    %1769 = vector.broadcast %1768 : vector<1x64xf32> to vector<16x64xf32>
    %1770 = arith.mulf %1767, %1769 : vector<16x64xf32>
    %1771 = arith.addf %1764, %1770 : vector<16x64xf32>
    %cst_88 = arith.constant 0.000000e+00 : f32
    %1772 = vector.broadcast %cst_88 : f32 to vector<4x64xf32>
    %1773 = vector.extract_strided_slice %1760 {offsets = [0, 0], sizes = [12, 64], strides = [1, 1]} : vector<16x64xf32> to vector<12x64xf32>
    %1774 = tpu.concatenate %1772, %1773 in 0 : vector<4x64xf32>, vector<12x64xf32> -> vector<16x64xf32>
    %1775 = vector.extract_strided_slice %1738 {offsets = [1, 0], sizes = [1, 64], strides = [1, 1]} : vector<8x64xf32> to vector<1x64xf32>
    %1776 = vector.broadcast %1775 : vector<1x64xf32> to vector<16x64xf32>
    %1777 = arith.mulf %1774, %1776 : vector<16x64xf32>
    %1778 = arith.addf %1771, %1777 : vector<16x64xf32>
    %cst_89 = arith.constant 0.000000e+00 : f32
    %1779 = vector.broadcast %cst_89 : f32 to vector<6x64xf32>
    %1780 = vector.extract_strided_slice %1760 {offsets = [0, 0], sizes = [10, 64], strides = [1, 1]} : vector<16x64xf32> to vector<10x64xf32>
    %1781 = tpu.concatenate %1779, %1780 in 0 : vector<6x64xf32>, vector<10x64xf32> -> vector<16x64xf32>
    %1782 = vector.extract_strided_slice %1738 {offsets = [0, 0], sizes = [1, 64], strides = [1, 1]} : vector<8x64xf32> to vector<1x64xf32>
    %1783 = vector.broadcast %1782 : vector<1x64xf32> to vector<16x64xf32>
    %1784 = arith.mulf %1781, %1783 : vector<16x64xf32>
    %1785 = arith.addf %1778, %1784 : vector<16x64xf32>
    %1786 = vector.broadcast %1743 : vector<1x64xf32> to vector<16x64xf32>
    %1787 = arith.addf %1785, %1786 : vector<16x64xf32>
    %cst_90 = arith.constant 0.000000e+00 : f32
    %1788 = vector.broadcast %cst_90 : f32 to vector<16x64xf32>
    %1789 = arith.subf %1788, %1787 : vector<16x64xf32>
    %1790 = math.exp %1789 : vector<16x64xf32>
    %cst_91 = arith.constant 1.000000e+00 : f32
    %1791 = vector.broadcast %cst_91 : f32 to vector<16x64xf32>
    %1792 = arith.addf %1791, %1790 : vector<16x64xf32>
    %cst_92 = arith.constant 1.000000e+00 : f32
    %1793 = vector.broadcast %cst_92 : f32 to vector<16x64xf32>
    %1794 = arith.divf %1793, %1792 : vector<16x64xf32>
    %1795 = arith.mulf %1787, %1794 : vector<16x64xf32>
    %1796 = arith.truncf %1795 : vector<16x64xf32> to vector<16x64xbf16>
    %1797 = vector.extract_strided_slice %1740 {offsets = [0, 0], sizes = [64, 96], strides = [1, 1]} : vector<64x128xbf16> to vector<64x96xbf16>
    %cst_93 = arith.constant dense<0.000000e+00> : vector<16x96xf32>
    %1798 = tpu.matmul %1796, %1797, %cst_93 {dimension_numbers = #tpu.dot_dimension_numbers<[1], [0], [0], [1], [0, 0, 1, 1], [], []>} : vector<16x64xbf16>, vector<64x96xbf16>, vector<16x96xf32> -> vector<16x96xf32>
    %1799 = vector.extract_strided_slice %1798 {offsets = [0, 0], sizes = [16, 64], strides = [1, 1]} : vector<16x96xf32> to vector<16x64xf32>
    %1800 = vector.broadcast %1744 : vector<1x64xf32> to vector<16x64xf32>
    %1801 = arith.addf %1799, %1800 : vector<16x64xf32>
    %cst_94 = arith.constant 0.000000e+00 : f32
    %1802 = vector.broadcast %cst_94 : f32 to vector<16x64xf32>
    %1803 = arith.maximumf %1801, %1802 : vector<16x64xf32>
    %1804 = math.absf %1801 : vector<16x64xf32>
    %cst_95 = arith.constant 0.000000e+00 : f32
    %1805 = vector.broadcast %cst_95 : f32 to vector<16x64xf32>
    %1806 = arith.subf %1805, %1804 : vector<16x64xf32>
    %1807 = math.exp %1806 : vector<16x64xf32>
    %cst_96 = arith.constant 1.000000e+00 : f32
    %1808 = vector.broadcast %cst_96 : f32 to vector<16x64xf32>
    %1809 = arith.addf %1808, %1807 : vector<16x64xf32>
    %1810 = math.log %1809 : vector<16x64xf32>
    %1811 = arith.addf %1803, %1810 : vector<16x64xf32>
    %1812 = vector.extract_strided_slice %1798 {offsets = [0, 64], sizes = [16, 16], strides = [1, 1]} : vector<16x96xf32> to vector<16x16xf32>
    %1813 = vector.extract_strided_slice %1798 {offsets = [0, 80], sizes = [16, 16], strides = [1, 1]} : vector<16x96xf32> to vector<16x16xf32>
    %1814 = arith.mulf %1811, %1795 : vector<16x64xf32>
    %1815 = vector.extract_strided_slice %1742 {offsets = [0, 0], sizes = [1, 64], strides = [1, 1]} : vector<16x64xf32> to vector<1x64xf32>
    %1816 = vector.extract_strided_slice %1742 {offsets = [1, 0], sizes = [1, 64], strides = [1, 1]} : vector<16x64xf32> to vector<1x64xf32>
    %1817 = vector.extract_strided_slice %1742 {offsets = [2, 0], sizes = [1, 64], strides = [1, 1]} : vector<16x64xf32> to vector<1x64xf32>
    %1818 = vector.extract_strided_slice %1742 {offsets = [3, 0], sizes = [1, 64], strides = [1, 1]} : vector<16x64xf32> to vector<1x64xf32>
    %1819 = vector.extract_strided_slice %1742 {offsets = [4, 0], sizes = [1, 64], strides = [1, 1]} : vector<16x64xf32> to vector<1x64xf32>
    %1820 = vector.extract_strided_slice %1742 {offsets = [5, 0], sizes = [1, 64], strides = [1, 1]} : vector<16x64xf32> to vector<1x64xf32>
    %1821 = vector.extract_strided_slice %1742 {offsets = [6, 0], sizes = [1, 64], strides = [1, 1]} : vector<16x64xf32> to vector<1x64xf32>
    %1822 = vector.extract_strided_slice %1742 {offsets = [7, 0], sizes = [1, 64], strides = [1, 1]} : vector<16x64xf32> to vector<1x64xf32>
    %1823 = vector.extract_strided_slice %1742 {offsets = [8, 0], sizes = [1, 64], strides = [1, 1]} : vector<16x64xf32> to vector<1x64xf32>
    %1824 = vector.extract_strided_slice %1742 {offsets = [9, 0], sizes = [1, 64], strides = [1, 1]} : vector<16x64xf32> to vector<1x64xf32>
    %1825 = vector.extract_strided_slice %1742 {offsets = [10, 0], sizes = [1, 64], strides = [1, 1]} : vector<16x64xf32> to vector<1x64xf32>
    %1826 = vector.extract_strided_slice %1742 {offsets = [11, 0], sizes = [1, 64], strides = [1, 1]} : vector<16x64xf32> to vector<1x64xf32>
    %1827 = vector.extract_strided_slice %1742 {offsets = [12, 0], sizes = [1, 64], strides = [1, 1]} : vector<16x64xf32> to vector<1x64xf32>
    %1828 = vector.extract_strided_slice %1742 {offsets = [13, 0], sizes = [1, 64], strides = [1, 1]} : vector<16x64xf32> to vector<1x64xf32>
    %1829 = vector.extract_strided_slice %1742 {offsets = [14, 0], sizes = [1, 64], strides = [1, 1]} : vector<16x64xf32> to vector<1x64xf32>
    %1830 = vector.extract_strided_slice %1742 {offsets = [15, 0], sizes = [1, 64], strides = [1, 1]} : vector<16x64xf32> to vector<1x64xf32>
    %1831 = vector.extract_strided_slice %1812 {offsets = [0, 0], sizes = [16, 1], strides = [1, 1]} : vector<16x16xf32> to vector<16x1xf32>
    %1832 = vector.extract_strided_slice %1812 {offsets = [0, 1], sizes = [16, 1], strides = [1, 1]} : vector<16x16xf32> to vector<16x1xf32>
    %1833 = vector.extract_strided_slice %1812 {offsets = [0, 2], sizes = [16, 1], strides = [1, 1]} : vector<16x16xf32> to vector<16x1xf32>
    %1834 = vector.extract_strided_slice %1812 {offsets = [0, 3], sizes = [16, 1], strides = [1, 1]} : vector<16x16xf32> to vector<16x1xf32>
    %1835 = vector.extract_strided_slice %1812 {offsets = [0, 4], sizes = [16, 1], strides = [1, 1]} : vector<16x16xf32> to vector<16x1xf32>
    %1836 = vector.extract_strided_slice %1812 {offsets = [0, 5], sizes = [16, 1], strides = [1, 1]} : vector<16x16xf32> to vector<16x1xf32>
    %1837 = vector.extract_strided_slice %1812 {offsets = [0, 6], sizes = [16, 1], strides = [1, 1]} : vector<16x16xf32> to vector<16x1xf32>
    %1838 = vector.extract_strided_slice %1812 {offsets = [0, 7], sizes = [16, 1], strides = [1, 1]} : vector<16x16xf32> to vector<16x1xf32>
    %1839 = vector.extract_strided_slice %1812 {offsets = [0, 8], sizes = [16, 1], strides = [1, 1]} : vector<16x16xf32> to vector<16x1xf32>
    %1840 = vector.extract_strided_slice %1812 {offsets = [0, 9], sizes = [16, 1], strides = [1, 1]} : vector<16x16xf32> to vector<16x1xf32>
    %1841 = vector.extract_strided_slice %1812 {offsets = [0, 10], sizes = [16, 1], strides = [1, 1]} : vector<16x16xf32> to vector<16x1xf32>
    %1842 = vector.extract_strided_slice %1812 {offsets = [0, 11], sizes = [16, 1], strides = [1, 1]} : vector<16x16xf32> to vector<16x1xf32>
    %1843 = vector.extract_strided_slice %1812 {offsets = [0, 12], sizes = [16, 1], strides = [1, 1]} : vector<16x16xf32> to vector<16x1xf32>
    %1844 = vector.extract_strided_slice %1812 {offsets = [0, 13], sizes = [16, 1], strides = [1, 1]} : vector<16x16xf32> to vector<16x1xf32>
    %1845 = vector.extract_strided_slice %1812 {offsets = [0, 14], sizes = [16, 1], strides = [1, 1]} : vector<16x16xf32> to vector<16x1xf32>
    %1846 = vector.extract_strided_slice %1812 {offsets = [0, 15], sizes = [16, 1], strides = [1, 1]} : vector<16x16xf32> to vector<16x1xf32>
    %1847 = vector.extract_strided_slice %1813 {offsets = [0, 0], sizes = [16, 1], strides = [1, 1]} : vector<16x16xf32> to vector<16x1xf32>
    %1848 = vector.extract_strided_slice %1813 {offsets = [0, 1], sizes = [16, 1], strides = [1, 1]} : vector<16x16xf32> to vector<16x1xf32>
    %1849 = vector.extract_strided_slice %1813 {offsets = [0, 2], sizes = [16, 1], strides = [1, 1]} : vector<16x16xf32> to vector<16x1xf32>
    %1850 = vector.extract_strided_slice %1813 {offsets = [0, 3], sizes = [16, 1], strides = [1, 1]} : vector<16x16xf32> to vector<16x1xf32>
    %1851 = vector.extract_strided_slice %1813 {offsets = [0, 4], sizes = [16, 1], strides = [1, 1]} : vector<16x16xf32> to vector<16x1xf32>
    %1852 = vector.extract_strided_slice %1813 {offsets = [0, 5], sizes = [16, 1], strides = [1, 1]} : vector<16x16xf32> to vector<16x1xf32>
    %1853 = vector.extract_strided_slice %1813 {offsets = [0, 6], sizes = [16, 1], strides = [1, 1]} : vector<16x16xf32> to vector<16x1xf32>
    %1854 = vector.extract_strided_slice %1813 {offsets = [0, 7], sizes = [16, 1], strides = [1, 1]} : vector<16x16xf32> to vector<16x1xf32>
    %1855 = vector.extract_strided_slice %1813 {offsets = [0, 8], sizes = [16, 1], strides = [1, 1]} : vector<16x16xf32> to vector<16x1xf32>
    %1856 = vector.extract_strided_slice %1813 {offsets = [0, 9], sizes = [16, 1], strides = [1, 1]} : vector<16x16xf32> to vector<16x1xf32>
    %1857 = vector.extract_strided_slice %1813 {offsets = [0, 10], sizes = [16, 1], strides = [1, 1]} : vector<16x16xf32> to vector<16x1xf32>
    %1858 = vector.extract_strided_slice %1813 {offsets = [0, 11], sizes = [16, 1], strides = [1, 1]} : vector<16x16xf32> to vector<16x1xf32>
    %1859 = vector.extract_strided_slice %1813 {offsets = [0, 12], sizes = [16, 1], strides = [1, 1]} : vector<16x16xf32> to vector<16x1xf32>
    %1860 = vector.extract_strided_slice %1813 {offsets = [0, 13], sizes = [16, 1], strides = [1, 1]} : vector<16x16xf32> to vector<16x1xf32>
    %1861 = vector.extract_strided_slice %1813 {offsets = [0, 14], sizes = [16, 1], strides = [1, 1]} : vector<16x16xf32> to vector<16x1xf32>
    %1862 = vector.extract_strided_slice %1813 {offsets = [0, 15], sizes = [16, 1], strides = [1, 1]} : vector<16x16xf32> to vector<16x1xf32>
    %cst_97 = arith.constant 0.000000e+00 : f32
    %1863 = vector.broadcast %cst_97 : f32 to vector<2x64xf32>
    %cst_98 = arith.constant 0.000000e+00 : f32
    %1864 = vector.broadcast %cst_98 : f32 to vector<2x64xf32>
    %cst_99 = arith.constant 0.000000e+00 : f32
    %1865 = vector.broadcast %cst_99 : f32 to vector<2x64xf32>
    %cst_100 = arith.constant 0.000000e+00 : f32
    %1866 = vector.broadcast %cst_100 : f32 to vector<2x64xf32>
    %cst_101 = arith.constant 0.000000e+00 : f32
    %1867 = vector.broadcast %cst_101 : f32 to vector<2x64xf32>
    %cst_102 = arith.constant 0.000000e+00 : f32
    %1868 = vector.broadcast %cst_102 : f32 to vector<2x64xf32>
    %cst_103 = arith.constant 0.000000e+00 : f32
    %1869 = vector.broadcast %cst_103 : f32 to vector<2x64xf32>
    %cst_104 = arith.constant 0.000000e+00 : f32
    %1870 = vector.broadcast %cst_104 : f32 to vector<2x64xf32>
    %cst_105 = arith.constant 0.000000e+00 : f32
    %1871 = vector.broadcast %cst_105 : f32 to vector<2x64xf32>
    %cst_106 = arith.constant 0.000000e+00 : f32
    %1872 = vector.broadcast %cst_106 : f32 to vector<2x64xf32>
    %cst_107 = arith.constant 0.000000e+00 : f32
    %1873 = vector.broadcast %cst_107 : f32 to vector<2x64xf32>
    %cst_108 = arith.constant 0.000000e+00 : f32
    %1874 = vector.broadcast %cst_108 : f32 to vector<2x64xf32>
    %cst_109 = arith.constant 0.000000e+00 : f32
    %1875 = vector.broadcast %cst_109 : f32 to vector<2x64xf32>
    %cst_110 = arith.constant 0.000000e+00 : f32
    %1876 = vector.broadcast %cst_110 : f32 to vector<2x64xf32>
    %cst_111 = arith.constant 0.000000e+00 : f32
    %1877 = vector.broadcast %cst_111 : f32 to vector<2x64xf32>
    %cst_112 = arith.constant 0.000000e+00 : f32
    %1878 = vector.broadcast %cst_112 : f32 to vector<2x64xf32>
    %1879 = vector.extract_strided_slice %1811 {offsets = [0, 0], sizes = [2, 64], strides = [1, 1]} : vector<16x64xf32> to vector<2x64xf32>
    %1880 = vector.extract_strided_slice %1814 {offsets = [0, 0], sizes = [2, 64], strides = [1, 1]} : vector<16x64xf32> to vector<2x64xf32>
    %cst_113 = arith.constant 0.000000e+00 : f32
    %1881 = vector.broadcast %cst_113 : f32 to vector<2x64xf32>
    %1882 = vector.broadcast %1815 : vector<1x64xf32> to vector<2x64xf32>
    %1883 = arith.mulf %1879, %1882 : vector<2x64xf32>
    %1884 = math.exp %1883 : vector<2x64xf32>
    %1885 = arith.mulf %1884, %1863 : vector<2x64xf32>
    %1886 = vector.extract_strided_slice %1831 {offsets = [0, 0], sizes = [2, 1], strides = [1, 1]} : vector<16x1xf32> to vector<2x1xf32>
    %1887 = vector.broadcast %1886 : vector<2x1xf32> to vector<2x64xf32>
    %1888 = arith.mulf %1887, %1880 : vector<2x64xf32>
    %1889 = arith.addf %1885, %1888 : vector<2x64xf32>
    %1890 = vector.extract_strided_slice %1847 {offsets = [0, 0], sizes = [2, 1], strides = [1, 1]} : vector<16x1xf32> to vector<2x1xf32>
    %1891 = vector.broadcast %1890 : vector<2x1xf32> to vector<2x64xf32>
    %1892 = arith.mulf %1891, %1889 : vector<2x64xf32>
    %1893 = arith.addf %1881, %1892 : vector<2x64xf32>
    %1894 = vector.broadcast %1816 : vector<1x64xf32> to vector<2x64xf32>
    %1895 = arith.mulf %1879, %1894 : vector<2x64xf32>
    %1896 = math.exp %1895 : vector<2x64xf32>
    %1897 = arith.mulf %1896, %1864 : vector<2x64xf32>
    %1898 = vector.extract_strided_slice %1832 {offsets = [0, 0], sizes = [2, 1], strides = [1, 1]} : vector<16x1xf32> to vector<2x1xf32>
    %1899 = vector.broadcast %1898 : vector<2x1xf32> to vector<2x64xf32>
    %1900 = arith.mulf %1899, %1880 : vector<2x64xf32>
    %1901 = arith.addf %1897, %1900 : vector<2x64xf32>
    %1902 = vector.extract_strided_slice %1848 {offsets = [0, 0], sizes = [2, 1], strides = [1, 1]} : vector<16x1xf32> to vector<2x1xf32>
    %1903 = vector.broadcast %1902 : vector<2x1xf32> to vector<2x64xf32>
    %1904 = arith.mulf %1903, %1901 : vector<2x64xf32>
    %1905 = arith.addf %1893, %1904 : vector<2x64xf32>
    %1906 = vector.broadcast %1817 : vector<1x64xf32> to vector<2x64xf32>
    %1907 = arith.mulf %1879, %1906 : vector<2x64xf32>
    %1908 = math.exp %1907 : vector<2x64xf32>
    %1909 = arith.mulf %1908, %1865 : vector<2x64xf32>
    %1910 = vector.extract_strided_slice %1833 {offsets = [0, 0], sizes = [2, 1], strides = [1, 1]} : vector<16x1xf32> to vector<2x1xf32>
    %1911 = vector.broadcast %1910 : vector<2x1xf32> to vector<2x64xf32>
    %1912 = arith.mulf %1911, %1880 : vector<2x64xf32>
    %1913 = arith.addf %1909, %1912 : vector<2x64xf32>
    %1914 = vector.extract_strided_slice %1849 {offsets = [0, 0], sizes = [2, 1], strides = [1, 1]} : vector<16x1xf32> to vector<2x1xf32>
    %1915 = vector.broadcast %1914 : vector<2x1xf32> to vector<2x64xf32>
    %1916 = arith.mulf %1915, %1913 : vector<2x64xf32>
    %1917 = arith.addf %1905, %1916 : vector<2x64xf32>
    %1918 = vector.broadcast %1818 : vector<1x64xf32> to vector<2x64xf32>
    %1919 = arith.mulf %1879, %1918 : vector<2x64xf32>
    %1920 = math.exp %1919 : vector<2x64xf32>
    %1921 = arith.mulf %1920, %1866 : vector<2x64xf32>
    %1922 = vector.extract_strided_slice %1834 {offsets = [0, 0], sizes = [2, 1], strides = [1, 1]} : vector<16x1xf32> to vector<2x1xf32>
    %1923 = vector.broadcast %1922 : vector<2x1xf32> to vector<2x64xf32>
    %1924 = arith.mulf %1923, %1880 : vector<2x64xf32>
    %1925 = arith.addf %1921, %1924 : vector<2x64xf32>
    %1926 = vector.extract_strided_slice %1850 {offsets = [0, 0], sizes = [2, 1], strides = [1, 1]} : vector<16x1xf32> to vector<2x1xf32>
    %1927 = vector.broadcast %1926 : vector<2x1xf32> to vector<2x64xf32>
    %1928 = arith.mulf %1927, %1925 : vector<2x64xf32>
    %1929 = arith.addf %1917, %1928 : vector<2x64xf32>
    %1930 = vector.broadcast %1819 : vector<1x64xf32> to vector<2x64xf32>
    %1931 = arith.mulf %1879, %1930 : vector<2x64xf32>
    %1932 = math.exp %1931 : vector<2x64xf32>
    %1933 = arith.mulf %1932, %1867 : vector<2x64xf32>
    %1934 = vector.extract_strided_slice %1835 {offsets = [0, 0], sizes = [2, 1], strides = [1, 1]} : vector<16x1xf32> to vector<2x1xf32>
    %1935 = vector.broadcast %1934 : vector<2x1xf32> to vector<2x64xf32>
    %1936 = arith.mulf %1935, %1880 : vector<2x64xf32>
    %1937 = arith.addf %1933, %1936 : vector<2x64xf32>
    %1938 = vector.extract_strided_slice %1851 {offsets = [0, 0], sizes = [2, 1], strides = [1, 1]} : vector<16x1xf32> to vector<2x1xf32>
    %1939 = vector.broadcast %1938 : vector<2x1xf32> to vector<2x64xf32>
    %1940 = arith.mulf %1939, %1937 : vector<2x64xf32>
    %1941 = arith.addf %1929, %1940 : vector<2x64xf32>
    %1942 = vector.broadcast %1820 : vector<1x64xf32> to vector<2x64xf32>
    %1943 = arith.mulf %1879, %1942 : vector<2x64xf32>
    %1944 = math.exp %1943 : vector<2x64xf32>
    %1945 = arith.mulf %1944, %1868 : vector<2x64xf32>
    %1946 = vector.extract_strided_slice %1836 {offsets = [0, 0], sizes = [2, 1], strides = [1, 1]} : vector<16x1xf32> to vector<2x1xf32>
    %1947 = vector.broadcast %1946 : vector<2x1xf32> to vector<2x64xf32>
    %1948 = arith.mulf %1947, %1880 : vector<2x64xf32>
    %1949 = arith.addf %1945, %1948 : vector<2x64xf32>
    %1950 = vector.extract_strided_slice %1852 {offsets = [0, 0], sizes = [2, 1], strides = [1, 1]} : vector<16x1xf32> to vector<2x1xf32>
    %1951 = vector.broadcast %1950 : vector<2x1xf32> to vector<2x64xf32>
    %1952 = arith.mulf %1951, %1949 : vector<2x64xf32>
    %1953 = arith.addf %1941, %1952 : vector<2x64xf32>
    %1954 = vector.broadcast %1821 : vector<1x64xf32> to vector<2x64xf32>
    %1955 = arith.mulf %1879, %1954 : vector<2x64xf32>
    %1956 = math.exp %1955 : vector<2x64xf32>
    %1957 = arith.mulf %1956, %1869 : vector<2x64xf32>
    %1958 = vector.extract_strided_slice %1837 {offsets = [0, 0], sizes = [2, 1], strides = [1, 1]} : vector<16x1xf32> to vector<2x1xf32>
    %1959 = vector.broadcast %1958 : vector<2x1xf32> to vector<2x64xf32>
    %1960 = arith.mulf %1959, %1880 : vector<2x64xf32>
    %1961 = arith.addf %1957, %1960 : vector<2x64xf32>
    %1962 = vector.extract_strided_slice %1853 {offsets = [0, 0], sizes = [2, 1], strides = [1, 1]} : vector<16x1xf32> to vector<2x1xf32>
    %1963 = vector.broadcast %1962 : vector<2x1xf32> to vector<2x64xf32>
    %1964 = arith.mulf %1963, %1961 : vector<2x64xf32>
    %1965 = arith.addf %1953, %1964 : vector<2x64xf32>
    %1966 = vector.broadcast %1822 : vector<1x64xf32> to vector<2x64xf32>
    %1967 = arith.mulf %1879, %1966 : vector<2x64xf32>
    %1968 = math.exp %1967 : vector<2x64xf32>
    %1969 = arith.mulf %1968, %1870 : vector<2x64xf32>
    %1970 = vector.extract_strided_slice %1838 {offsets = [0, 0], sizes = [2, 1], strides = [1, 1]} : vector<16x1xf32> to vector<2x1xf32>
    %1971 = vector.broadcast %1970 : vector<2x1xf32> to vector<2x64xf32>
    %1972 = arith.mulf %1971, %1880 : vector<2x64xf32>
    %1973 = arith.addf %1969, %1972 : vector<2x64xf32>
    %1974 = vector.extract_strided_slice %1854 {offsets = [0, 0], sizes = [2, 1], strides = [1, 1]} : vector<16x1xf32> to vector<2x1xf32>
    %1975 = vector.broadcast %1974 : vector<2x1xf32> to vector<2x64xf32>
    %1976 = arith.mulf %1975, %1973 : vector<2x64xf32>
    %1977 = arith.addf %1965, %1976 : vector<2x64xf32>
    %1978 = vector.broadcast %1823 : vector<1x64xf32> to vector<2x64xf32>
    %1979 = arith.mulf %1879, %1978 : vector<2x64xf32>
    %1980 = math.exp %1979 : vector<2x64xf32>
    %1981 = arith.mulf %1980, %1871 : vector<2x64xf32>
    %1982 = vector.extract_strided_slice %1839 {offsets = [0, 0], sizes = [2, 1], strides = [1, 1]} : vector<16x1xf32> to vector<2x1xf32>
    %1983 = vector.broadcast %1982 : vector<2x1xf32> to vector<2x64xf32>
    %1984 = arith.mulf %1983, %1880 : vector<2x64xf32>
    %1985 = arith.addf %1981, %1984 : vector<2x64xf32>
    %1986 = vector.extract_strided_slice %1855 {offsets = [0, 0], sizes = [2, 1], strides = [1, 1]} : vector<16x1xf32> to vector<2x1xf32>
    %1987 = vector.broadcast %1986 : vector<2x1xf32> to vector<2x64xf32>
    %1988 = arith.mulf %1987, %1985 : vector<2x64xf32>
    %1989 = arith.addf %1977, %1988 : vector<2x64xf32>
    %1990 = vector.broadcast %1824 : vector<1x64xf32> to vector<2x64xf32>
    %1991 = arith.mulf %1879, %1990 : vector<2x64xf32>
    %1992 = math.exp %1991 : vector<2x64xf32>
    %1993 = arith.mulf %1992, %1872 : vector<2x64xf32>
    %1994 = vector.extract_strided_slice %1840 {offsets = [0, 0], sizes = [2, 1], strides = [1, 1]} : vector<16x1xf32> to vector<2x1xf32>
    %1995 = vector.broadcast %1994 : vector<2x1xf32> to vector<2x64xf32>
    %1996 = arith.mulf %1995, %1880 : vector<2x64xf32>
    %1997 = arith.addf %1993, %1996 : vector<2x64xf32>
    %1998 = vector.extract_strided_slice %1856 {offsets = [0, 0], sizes = [2, 1], strides = [1, 1]} : vector<16x1xf32> to vector<2x1xf32>
    %1999 = vector.broadcast %1998 : vector<2x1xf32> to vector<2x64xf32>
    %2000 = arith.mulf %1999, %1997 : vector<2x64xf32>
    %2001 = arith.addf %1989, %2000 : vector<2x64xf32>
    %2002 = vector.broadcast %1825 : vector<1x64xf32> to vector<2x64xf32>
    %2003 = arith.mulf %1879, %2002 : vector<2x64xf32>
    %2004 = math.exp %2003 : vector<2x64xf32>
    %2005 = arith.mulf %2004, %1873 : vector<2x64xf32>
    %2006 = vector.extract_strided_slice %1841 {offsets = [0, 0], sizes = [2, 1], strides = [1, 1]} : vector<16x1xf32> to vector<2x1xf32>
    %2007 = vector.broadcast %2006 : vector<2x1xf32> to vector<2x64xf32>
    %2008 = arith.mulf %2007, %1880 : vector<2x64xf32>
    %2009 = arith.addf %2005, %2008 : vector<2x64xf32>
    %2010 = vector.extract_strided_slice %1857 {offsets = [0, 0], sizes = [2, 1], strides = [1, 1]} : vector<16x1xf32> to vector<2x1xf32>
    %2011 = vector.broadcast %2010 : vector<2x1xf32> to vector<2x64xf32>
    %2012 = arith.mulf %2011, %2009 : vector<2x64xf32>
    %2013 = arith.addf %2001, %2012 : vector<2x64xf32>
    %2014 = vector.broadcast %1826 : vector<1x64xf32> to vector<2x64xf32>
    %2015 = arith.mulf %1879, %2014 : vector<2x64xf32>
    %2016 = math.exp %2015 : vector<2x64xf32>
    %2017 = arith.mulf %2016, %1874 : vector<2x64xf32>
    %2018 = vector.extract_strided_slice %1842 {offsets = [0, 0], sizes = [2, 1], strides = [1, 1]} : vector<16x1xf32> to vector<2x1xf32>
    %2019 = vector.broadcast %2018 : vector<2x1xf32> to vector<2x64xf32>
    %2020 = arith.mulf %2019, %1880 : vector<2x64xf32>
    %2021 = arith.addf %2017, %2020 : vector<2x64xf32>
    %2022 = vector.extract_strided_slice %1858 {offsets = [0, 0], sizes = [2, 1], strides = [1, 1]} : vector<16x1xf32> to vector<2x1xf32>
    %2023 = vector.broadcast %2022 : vector<2x1xf32> to vector<2x64xf32>
    %2024 = arith.mulf %2023, %2021 : vector<2x64xf32>
    %2025 = arith.addf %2013, %2024 : vector<2x64xf32>
    %2026 = vector.broadcast %1827 : vector<1x64xf32> to vector<2x64xf32>
    %2027 = arith.mulf %1879, %2026 : vector<2x64xf32>
    %2028 = math.exp %2027 : vector<2x64xf32>
    %2029 = arith.mulf %2028, %1875 : vector<2x64xf32>
    %2030 = vector.extract_strided_slice %1843 {offsets = [0, 0], sizes = [2, 1], strides = [1, 1]} : vector<16x1xf32> to vector<2x1xf32>
    %2031 = vector.broadcast %2030 : vector<2x1xf32> to vector<2x64xf32>
    %2032 = arith.mulf %2031, %1880 : vector<2x64xf32>
    %2033 = arith.addf %2029, %2032 : vector<2x64xf32>
    %2034 = vector.extract_strided_slice %1859 {offsets = [0, 0], sizes = [2, 1], strides = [1, 1]} : vector<16x1xf32> to vector<2x1xf32>
    %2035 = vector.broadcast %2034 : vector<2x1xf32> to vector<2x64xf32>
    %2036 = arith.mulf %2035, %2033 : vector<2x64xf32>
    %2037 = arith.addf %2025, %2036 : vector<2x64xf32>
    %2038 = vector.broadcast %1828 : vector<1x64xf32> to vector<2x64xf32>
    %2039 = arith.mulf %1879, %2038 : vector<2x64xf32>
    %2040 = math.exp %2039 : vector<2x64xf32>
    %2041 = arith.mulf %2040, %1876 : vector<2x64xf32>
    %2042 = vector.extract_strided_slice %1844 {offsets = [0, 0], sizes = [2, 1], strides = [1, 1]} : vector<16x1xf32> to vector<2x1xf32>
    %2043 = vector.broadcast %2042 : vector<2x1xf32> to vector<2x64xf32>
    %2044 = arith.mulf %2043, %1880 : vector<2x64xf32>
    %2045 = arith.addf %2041, %2044 : vector<2x64xf32>
    %2046 = vector.extract_strided_slice %1860 {offsets = [0, 0], sizes = [2, 1], strides = [1, 1]} : vector<16x1xf32> to vector<2x1xf32>
    %2047 = vector.broadcast %2046 : vector<2x1xf32> to vector<2x64xf32>
    %2048 = arith.mulf %2047, %2045 : vector<2x64xf32>
    %2049 = arith.addf %2037, %2048 : vector<2x64xf32>
    %2050 = vector.broadcast %1829 : vector<1x64xf32> to vector<2x64xf32>
    %2051 = arith.mulf %1879, %2050 : vector<2x64xf32>
    %2052 = math.exp %2051 : vector<2x64xf32>
    %2053 = arith.mulf %2052, %1877 : vector<2x64xf32>
    %2054 = vector.extract_strided_slice %1845 {offsets = [0, 0], sizes = [2, 1], strides = [1, 1]} : vector<16x1xf32> to vector<2x1xf32>
    %2055 = vector.broadcast %2054 : vector<2x1xf32> to vector<2x64xf32>
    %2056 = arith.mulf %2055, %1880 : vector<2x64xf32>
    %2057 = arith.addf %2053, %2056 : vector<2x64xf32>
    %2058 = vector.extract_strided_slice %1861 {offsets = [0, 0], sizes = [2, 1], strides = [1, 1]} : vector<16x1xf32> to vector<2x1xf32>
    %2059 = vector.broadcast %2058 : vector<2x1xf32> to vector<2x64xf32>
    %2060 = arith.mulf %2059, %2057 : vector<2x64xf32>
    %2061 = arith.addf %2049, %2060 : vector<2x64xf32>
    %2062 = vector.broadcast %1830 : vector<1x64xf32> to vector<2x64xf32>
    %2063 = arith.mulf %1879, %2062 : vector<2x64xf32>
    %2064 = math.exp %2063 : vector<2x64xf32>
    %2065 = arith.mulf %2064, %1878 : vector<2x64xf32>
    %2066 = vector.extract_strided_slice %1846 {offsets = [0, 0], sizes = [2, 1], strides = [1, 1]} : vector<16x1xf32> to vector<2x1xf32>
    %2067 = vector.broadcast %2066 : vector<2x1xf32> to vector<2x64xf32>
    %2068 = arith.mulf %2067, %1880 : vector<2x64xf32>
    %2069 = arith.addf %2065, %2068 : vector<2x64xf32>
    %2070 = vector.extract_strided_slice %1862 {offsets = [0, 0], sizes = [2, 1], strides = [1, 1]} : vector<16x1xf32> to vector<2x1xf32>
    %2071 = vector.broadcast %2070 : vector<2x1xf32> to vector<2x64xf32>
    %2072 = arith.mulf %2071, %2069 : vector<2x64xf32>
    %2073 = arith.addf %2061, %2072 : vector<2x64xf32>
    %c0_114 = arith.constant 0 : index
    %c0_115 = arith.constant 0 : index
    %2074 = vector.load %arg9[%c0_114, %c0_115] : memref<16x64xf32, #tpu.memory_space<vmem>>, vector<2x64xf32>
    tpu.vector_store %arg9[%c0_114, %c0_115], %2073 {strides = array<i32>} : memref<16x64xf32, #tpu.memory_space<vmem>>, vector<2x64xf32>,
    %2075 = vector.extract_strided_slice %1811 {offsets = [2, 0], sizes = [2, 64], strides = [1, 1]} : vector<16x64xf32> to vector<2x64xf32>
    %2076 = vector.extract_strided_slice %1814 {offsets = [2, 0], sizes = [2, 64], strides = [1, 1]} : vector<16x64xf32> to vector<2x64xf32>
    %cst_116 = arith.constant 0.000000e+00 : f32
    %2077 = vector.broadcast %cst_116 : f32 to vector<2x64xf32>
    %2078 = vector.broadcast %1815 : vector<1x64xf32> to vector<2x64xf32>
    %2079 = arith.mulf %2075, %2078 : vector<2x64xf32>
    %2080 = math.exp %2079 : vector<2x64xf32>
    %2081 = arith.mulf %2080, %1889 : vector<2x64xf32>
    %2082 = vector.extract_strided_slice %1831 {offsets = [2, 0], sizes = [2, 1], strides = [1, 1]} : vector<16x1xf32> to vector<2x1xf32>
    %2083 = vector.broadcast %2082 : vector<2x1xf32> to vector<2x64xf32>
    %2084 = arith.mulf %2083, %2076 : vector<2x64xf32>
    %2085 = arith.addf %2081, %2084 : vector<2x64xf32>
    %2086 = vector.extract_strided_slice %1847 {offsets = [2, 0], sizes = [2, 1], strides = [1, 1]} : vector<16x1xf32> to vector<2x1xf32>
    %2087 = vector.broadcast %2086 : vector<2x1xf32> to vector<2x64xf32>
    %2088 = arith.mulf %2087, %2085 : vector<2x64xf32>
    %2089 = arith.addf %2077, %2088 : vector<2x64xf32>
    %2090 = vector.broadcast %1816 : vector<1x64xf32> to vector<2x64xf32>
    %2091 = arith.mulf %2075, %2090 : vector<2x64xf32>
    %2092 = math.exp %2091 : vector<2x64xf32>
    %2093 = arith.mulf %2092, %1901 : vector<2x64xf32>
    %2094 = vector.extract_strided_slice %1832 {offsets = [2, 0], sizes = [2, 1], strides = [1, 1]} : vector<16x1xf32> to vector<2x1xf32>
    %2095 = vector.broadcast %2094 : vector<2x1xf32> to vector<2x64xf32>
    %2096 = arith.mulf %2095, %2076 : vector<2x64xf32>
    %2097 = arith.addf %2093, %2096 : vector<2x64xf32>
    %2098 = vector.extract_strided_slice %1848 {offsets = [2, 0], sizes = [2, 1], strides = [1, 1]} : vector<16x1xf32> to vector<2x1xf32>
    %2099 = vector.broadcast %2098 : vector<2x1xf32> to vector<2x64xf32>
    %2100 = arith.mulf %2099, %2097 : vector<2x64xf32>
    %2101 = arith.addf %2089, %2100 : vector<2x64xf32>
    %2102 = vector.broadcast %1817 : vector<1x64xf32> to vector<2x64xf32>
    %2103 = arith.mulf %2075, %2102 : vector<2x64xf32>
    %2104 = math.exp %2103 : vector<2x64xf32>
    %2105 = arith.mulf %2104, %1913 : vector<2x64xf32>
    %2106 = vector.extract_strided_slice %1833 {offsets = [2, 0], sizes = [2, 1], strides = [1, 1]} : vector<16x1xf32> to vector<2x1xf32>
    %2107 = vector.broadcast %2106 : vector<2x1xf32> to vector<2x64xf32>
    %2108 = arith.mulf %2107, %2076 : vector<2x64xf32>
    %2109 = arith.addf %2105, %2108 : vector<2x64xf32>
    %2110 = vector.extract_strided_slice %1849 {offsets = [2, 0], sizes = [2, 1], strides = [1, 1]} : vector<16x1xf32> to vector<2x1xf32>
    %2111 = vector.broadcast %2110 : vector<2x1xf32> to vector<2x64xf32>
    %2112 = arith.mulf %2111, %2109 : vector<2x64xf32>
    %2113 = arith.addf %2101, %2112 : vector<2x64xf32>
    %2114 = vector.broadcast %1818 : vector<1x64xf32> to vector<2x64xf32>
    %2115 = arith.mulf %2075, %2114 : vector<2x64xf32>
    %2116 = math.exp %2115 : vector<2x64xf32>
    %2117 = arith.mulf %2116, %1925 : vector<2x64xf32>
    %2118 = vector.extract_strided_slice %1834 {offsets = [2, 0], sizes = [2, 1], strides = [1, 1]} : vector<16x1xf32> to vector<2x1xf32>
    %2119 = vector.broadcast %2118 : vector<2x1xf32> to vector<2x64xf32>
    %2120 = arith.mulf %2119, %2076 : vector<2x64xf32>
    %2121 = arith.addf %2117, %2120 : vector<2x64xf32>
    %2122 = vector.extract_strided_slice %1850 {offsets = [2, 0], sizes = [2, 1], strides = [1, 1]} : vector<16x1xf32> to vector<2x1xf32>
    %2123 = vector.broadcast %2122 : vector<2x1xf32> to vector<2x64xf32>
    %2124 = arith.mulf %2123, %2121 : vector<2x64xf32>
    %2125 = arith.addf %2113, %2124 : vector<2x64xf32>
    %2126 = vector.broadcast %1819 : vector<1x64xf32> to vector<2x64xf32>
    %2127 = arith.mulf %2075, %2126 : vector<2x64xf32>
    %2128 = math.exp %2127 : vector<2x64xf32>
    %2129 = arith.mulf %2128, %1937 : vector<2x64xf32>
    %2130 = vector.extract_strided_slice %1835 {offsets = [2, 0], sizes = [2, 1], strides = [1, 1]} : vector<16x1xf32> to vector<2x1xf32>
    %2131 = vector.broadcast %2130 : vector<2x1xf32> to vector<2x64xf32>
    %2132 = arith.mulf %2131, %2076 : vector<2x64xf32>
    %2133 = arith.addf %2129, %2132 : vector<2x64xf32>
    %2134 = vector.extract_strided_slice %1851 {offsets = [2, 0], sizes = [2, 1], strides = [1, 1]} : vector<16x1xf32> to vector<2x1xf32>
    %2135 = vector.broadcast %2134 : vector<2x1xf32> to vector<2x64xf32>
    %2136 = arith.mulf %2135, %2133 : vector<2x64xf32>
    %2137 = arith.addf %2125, %2136 : vector<2x64xf32>
    %2138 = vector.broadcast %1820 : vector<1x64xf32> to vector<2x64xf32>
    %2139 = arith.mulf %2075, %2138 : vector<2x64xf32>
    %2140 = math.exp %2139 : vector<2x64xf32>
    %2141 = arith.mulf %2140, %1949 : vector<2x64xf32>
    %2142 = vector.extract_strided_slice %1836 {offsets = [2, 0], sizes = [2, 1], strides = [1, 1]} : vector<16x1xf32> to vector<2x1xf32>
    %2143 = vector.broadcast %2142 : vector<2x1xf32> to vector<2x64xf32>
    %2144 = arith.mulf %2143, %2076 : vector<2x64xf32>
    %2145 = arith.addf %2141, %2144 : vector<2x64xf32>
    %2146 = vector.extract_strided_slice %1852 {offsets = [2, 0], sizes = [2, 1], strides = [1, 1]} : vector<16x1xf32> to vector<2x1xf32>
    %2147 = vector.broadcast %2146 : vector<2x1xf32> to vector<2x64xf32>
    %2148 = arith.mulf %2147, %2145 : vector<2x64xf32>
    %2149 = arith.addf %2137, %2148 : vector<2x64xf32>
    %2150 = vector.broadcast %1821 : vector<1x64xf32> to vector<2x64xf32>
    %2151 = arith.mulf %2075, %2150 : vector<2x64xf32>
    %2152 = math.exp %2151 : vector<2x64xf32>
    %2153 = arith.mulf %2152, %1961 : vector<2x64xf32>
    %2154 = vector.extract_strided_slice %1837 {offsets = [2, 0], sizes = [2, 1], strides = [1, 1]} : vector<16x1xf32> to vector<2x1xf32>
    %2155 = vector.broadcast %2154 : vector<2x1xf32> to vector<2x64xf32>
    %2156 = arith.mulf %2155, %2076 : vector<2x64xf32>
    %2157 = arith.addf %2153, %2156 : vector<2x64xf32>
    %2158 = vector.extract_strided_slice %1853 {offsets = [2, 0], sizes = [2, 1], strides = [1, 1]} : vector<16x1xf32> to vector<2x1xf32>
    %2159 = vector.broadcast %2158 : vector<2x1xf32> to vector<2x64xf32>
    %2160 = arith.mulf %2159, %2157 : vector<2x64xf32>
    %2161 = arith.addf %2149, %2160 : vector<2x64xf32>
    %2162 = vector.broadcast %1822 : vector<1x64xf32> to vector<2x64xf32>
    %2163 = arith.mulf %2075, %2162 : vector<2x64xf32>
    %2164 = math.exp %2163 : vector<2x64xf32>
    %2165 = arith.mulf %2164, %1973 : vector<2x64xf32>
    %2166 = vector.extract_strided_slice %1838 {offsets = [2, 0], sizes = [2, 1], strides = [1, 1]} : vector<16x1xf32> to vector<2x1xf32>
    %2167 = vector.broadcast %2166 : vector<2x1xf32> to vector<2x64xf32>
    %2168 = arith.mulf %2167, %2076 : vector<2x64xf32>
    %2169 = arith.addf %2165, %2168 : vector<2x64xf32>
    %2170 = vector.extract_strided_slice %1854 {offsets = [2, 0], sizes = [2, 1], strides = [1, 1]} : vector<16x1xf32> to vector<2x1xf32>
    %2171 = vector.broadcast %2170 : vector<2x1xf32> to vector<2x64xf32>
    %2172 = arith.mulf %2171, %2169 : vector<2x64xf32>
    %2173 = arith.addf %2161, %2172 : vector<2x64xf32>
    %2174 = vector.broadcast %1823 : vector<1x64xf32> to vector<2x64xf32>
    %2175 = arith.mulf %2075, %2174 : vector<2x64xf32>
    %2176 = math.exp %2175 : vector<2x64xf32>
    %2177 = arith.mulf %2176, %1985 : vector<2x64xf32>
    %2178 = vector.extract_strided_slice %1839 {offsets = [2, 0], sizes = [2, 1], strides = [1, 1]} : vector<16x1xf32> to vector<2x1xf32>
    %2179 = vector.broadcast %2178 : vector<2x1xf32> to vector<2x64xf32>
    %2180 = arith.mulf %2179, %2076 : vector<2x64xf32>
    %2181 = arith.addf %2177, %2180 : vector<2x64xf32>
    %2182 = vector.extract_strided_slice %1855 {offsets = [2, 0], sizes = [2, 1], strides = [1, 1]} : vector<16x1xf32> to vector<2x1xf32>
    %2183 = vector.broadcast %2182 : vector<2x1xf32> to vector<2x64xf32>
    %2184 = arith.mulf %2183, %2181 : vector<2x64xf32>
    %2185 = arith.addf %2173, %2184 : vector<2x64xf32>
    %2186 = vector.broadcast %1824 : vector<1x64xf32> to vector<2x64xf32>
    %2187 = arith.mulf %2075, %2186 : vector<2x64xf32>
    %2188 = math.exp %2187 : vector<2x64xf32>
    %2189 = arith.mulf %2188, %1997 : vector<2x64xf32>
    %2190 = vector.extract_strided_slice %1840 {offsets = [2, 0], sizes = [2, 1], strides = [1, 1]} : vector<16x1xf32> to vector<2x1xf32>
    %2191 = vector.broadcast %2190 : vector<2x1xf32> to vector<2x64xf32>
    %2192 = arith.mulf %2191, %2076 : vector<2x64xf32>
    %2193 = arith.addf %2189, %2192 : vector<2x64xf32>
    %2194 = vector.extract_strided_slice %1856 {offsets = [2, 0], sizes = [2, 1], strides = [1, 1]} : vector<16x1xf32> to vector<2x1xf32>
    %2195 = vector.broadcast %2194 : vector<2x1xf32> to vector<2x64xf32>
    %2196 = arith.mulf %2195, %2193 : vector<2x64xf32>
    %2197 = arith.addf %2185, %2196 : vector<2x64xf32>
    %2198 = vector.broadcast %1825 : vector<1x64xf32> to vector<2x64xf32>
    %2199 = arith.mulf %2075, %2198 : vector<2x64xf32>
    %2200 = math.exp %2199 : vector<2x64xf32>
    %2201 = arith.mulf %2200, %2009 : vector<2x64xf32>
    %2202 = vector.extract_strided_slice %1841 {offsets = [2, 0], sizes = [2, 1], strides = [1, 1]} : vector<16x1xf32> to vector<2x1xf32>
    %2203 = vector.broadcast %2202 : vector<2x1xf32> to vector<2x64xf32>
    %2204 = arith.mulf %2203, %2076 : vector<2x64xf32>
    %2205 = arith.addf %2201, %2204 : vector<2x64xf32>
    %2206 = vector.extract_strided_slice %1857 {offsets = [2, 0], sizes = [2, 1], strides = [1, 1]} : vector<16x1xf32> to vector<2x1xf32>
    %2207 = vector.broadcast %2206 : vector<2x1xf32> to vector<2x64xf32>
    %2208 = arith.mulf %2207, %2205 : vector<2x64xf32>
    %2209 = arith.addf %2197, %2208 : vector<2x64xf32>
    %2210 = vector.broadcast %1826 : vector<1x64xf32> to vector<2x64xf32>
    %2211 = arith.mulf %2075, %2210 : vector<2x64xf32>
    %2212 = math.exp %2211 : vector<2x64xf32>
    %2213 = arith.mulf %2212, %2021 : vector<2x64xf32>
    %2214 = vector.extract_strided_slice %1842 {offsets = [2, 0], sizes = [2, 1], strides = [1, 1]} : vector<16x1xf32> to vector<2x1xf32>
    %2215 = vector.broadcast %2214 : vector<2x1xf32> to vector<2x64xf32>
    %2216 = arith.mulf %2215, %2076 : vector<2x64xf32>
    %2217 = arith.addf %2213, %2216 : vector<2x64xf32>
    %2218 = vector.extract_strided_slice %1858 {offsets = [2, 0], sizes = [2, 1], strides = [1, 1]} : vector<16x1xf32> to vector<2x1xf32>
    %2219 = vector.broadcast %2218 : vector<2x1xf32> to vector<2x64xf32>
    %2220 = arith.mulf %2219, %2217 : vector<2x64xf32>
    %2221 = arith.addf %2209, %2220 : vector<2x64xf32>
    %2222 = vector.broadcast %1827 : vector<1x64xf32> to vector<2x64xf32>
    %2223 = arith.mulf %2075, %2222 : vector<2x64xf32>
    %2224 = math.exp %2223 : vector<2x64xf32>
    %2225 = arith.mulf %2224, %2033 : vector<2x64xf32>
    %2226 = vector.extract_strided_slice %1843 {offsets = [2, 0], sizes = [2, 1], strides = [1, 1]} : vector<16x1xf32> to vector<2x1xf32>
    %2227 = vector.broadcast %2226 : vector<2x1xf32> to vector<2x64xf32>
    %2228 = arith.mulf %2227, %2076 : vector<2x64xf32>
    %2229 = arith.addf %2225, %2228 : vector<2x64xf32>
    %2230 = vector.extract_strided_slice %1859 {offsets = [2, 0], sizes = [2, 1], strides = [1, 1]} : vector<16x1xf32> to vector<2x1xf32>
    %2231 = vector.broadcast %2230 : vector<2x1xf32> to vector<2x64xf32>
    %2232 = arith.mulf %2231, %2229 : vector<2x64xf32>
    %2233 = arith.addf %2221, %2232 : vector<2x64xf32>
    %2234 = vector.broadcast %1828 : vector<1x64xf32> to vector<2x64xf32>
    %2235 = arith.mulf %2075, %2234 : vector<2x64xf32>
    %2236 = math.exp %2235 : vector<2x64xf32>
    %2237 = arith.mulf %2236, %2045 : vector<2x64xf32>
    %2238 = vector.extract_strided_slice %1844 {offsets = [2, 0], sizes = [2, 1], strides = [1, 1]} : vector<16x1xf32> to vector<2x1xf32>
    %2239 = vector.broadcast %2238 : vector<2x1xf32> to vector<2x64xf32>
    %2240 = arith.mulf %2239, %2076 : vector<2x64xf32>
    %2241 = arith.addf %2237, %2240 : vector<2x64xf32>
    %2242 = vector.extract_strided_slice %1860 {offsets = [2, 0], sizes = [2, 1], strides = [1, 1]} : vector<16x1xf32> to vector<2x1xf32>
    %2243 = vector.broadcast %2242 : vector<2x1xf32> to vector<2x64xf32>
    %2244 = arith.mulf %2243, %2241 : vector<2x64xf32>
    %2245 = arith.addf %2233, %2244 : vector<2x64xf32>
    %2246 = vector.broadcast %1829 : vector<1x64xf32> to vector<2x64xf32>
    %2247 = arith.mulf %2075, %2246 : vector<2x64xf32>
    %2248 = math.exp %2247 : vector<2x64xf32>
    %2249 = arith.mulf %2248, %2057 : vector<2x64xf32>
    %2250 = vector.extract_strided_slice %1845 {offsets = [2, 0], sizes = [2, 1], strides = [1, 1]} : vector<16x1xf32> to vector<2x1xf32>
    %2251 = vector.broadcast %2250 : vector<2x1xf32> to vector<2x64xf32>
    %2252 = arith.mulf %2251, %2076 : vector<2x64xf32>
    %2253 = arith.addf %2249, %2252 : vector<2x64xf32>
    %2254 = vector.extract_strided_slice %1861 {offsets = [2, 0], sizes = [2, 1], strides = [1, 1]} : vector<16x1xf32> to vector<2x1xf32>
    %2255 = vector.broadcast %2254 : vector<2x1xf32> to vector<2x64xf32>
    %2256 = arith.mulf %2255, %2253 : vector<2x64xf32>
    %2257 = arith.addf %2245, %2256 : vector<2x64xf32>
    %2258 = vector.broadcast %1830 : vector<1x64xf32> to vector<2x64xf32>
    %2259 = arith.mulf %2075, %2258 : vector<2x64xf32>
    %2260 = math.exp %2259 : vector<2x64xf32>
    %2261 = arith.mulf %2260, %2069 : vector<2x64xf32>
    %2262 = vector.extract_strided_slice %1846 {offsets = [2, 0], sizes = [2, 1], strides = [1, 1]} : vector<16x1xf32> to vector<2x1xf32>
    %2263 = vector.broadcast %2262 : vector<2x1xf32> to vector<2x64xf32>
    %2264 = arith.mulf %2263, %2076 : vector<2x64xf32>
    %2265 = arith.addf %2261, %2264 : vector<2x64xf32>
    %2266 = vector.extract_strided_slice %1862 {offsets = [2, 0], sizes = [2, 1], strides = [1, 1]} : vector<16x1xf32> to vector<2x1xf32>
    %2267 = vector.broadcast %2266 : vector<2x1xf32> to vector<2x64xf32>
    %2268 = arith.mulf %2267, %2265 : vector<2x64xf32>
    %2269 = arith.addf %2257, %2268 : vector<2x64xf32>
    %c2_117 = arith.constant 2 : index
    %c0_118 = arith.constant 0 : index
    %2270 = vector.load %arg9[%c2_117, %c0_118] : memref<16x64xf32, #tpu.memory_space<vmem>>, vector<2x64xf32>
    tpu.vector_store %arg9[%c2_117, %c0_118], %2269 {strides = array<i32>} : memref<16x64xf32, #tpu.memory_space<vmem>>, vector<2x64xf32>,
    %2271 = vector.extract_strided_slice %1811 {offsets = [4, 0], sizes = [2, 64], strides = [1, 1]} : vector<16x64xf32> to vector<2x64xf32>
    %2272 = vector.extract_strided_slice %1814 {offsets = [4, 0], sizes = [2, 64], strides = [1, 1]} : vector<16x64xf32> to vector<2x64xf32>
    %cst_119 = arith.constant 0.000000e+00 : f32
    %2273 = vector.broadcast %cst_119 : f32 to vector<2x64xf32>
    %2274 = vector.broadcast %1815 : vector<1x64xf32> to vector<2x64xf32>
    %2275 = arith.mulf %2271, %2274 : vector<2x64xf32>
    %2276 = math.exp %2275 : vector<2x64xf32>
    %2277 = arith.mulf %2276, %2085 : vector<2x64xf32>
    %2278 = vector.extract_strided_slice %1831 {offsets = [4, 0], sizes = [2, 1], strides = [1, 1]} : vector<16x1xf32> to vector<2x1xf32>
    %2279 = vector.broadcast %2278 : vector<2x1xf32> to vector<2x64xf32>
    %2280 = arith.mulf %2279, %2272 : vector<2x64xf32>
    %2281 = arith.addf %2277, %2280 : vector<2x64xf32>
    %2282 = vector.extract_strided_slice %1847 {offsets = [4, 0], sizes = [2, 1], strides = [1, 1]} : vector<16x1xf32> to vector<2x1xf32>
    %2283 = vector.broadcast %2282 : vector<2x1xf32> to vector<2x64xf32>
    %2284 = arith.mulf %2283, %2281 : vector<2x64xf32>
    %2285 = arith.addf %2273, %2284 : vector<2x64xf32>
    %2286 = vector.broadcast %1816 : vector<1x64xf32> to vector<2x64xf32>
    %2287 = arith.mulf %2271, %2286 : vector<2x64xf32>
    %2288 = math.exp %2287 : vector<2x64xf32>
    %2289 = arith.mulf %2288, %2097 : vector<2x64xf32>
    %2290 = vector.extract_strided_slice %1832 {offsets = [4, 0], sizes = [2, 1], strides = [1, 1]} : vector<16x1xf32> to vector<2x1xf32>
    %2291 = vector.broadcast %2290 : vector<2x1xf32> to vector<2x64xf32>
    %2292 = arith.mulf %2291, %2272 : vector<2x64xf32>
    %2293 = arith.addf %2289, %2292 : vector<2x64xf32>
    %2294 = vector.extract_strided_slice %1848 {offsets = [4, 0], sizes = [2, 1], strides = [1, 1]} : vector<16x1xf32> to vector<2x1xf32>
    %2295 = vector.broadcast %2294 : vector<2x1xf32> to vector<2x64xf32>
    %2296 = arith.mulf %2295, %2293 : vector<2x64xf32>
    %2297 = arith.addf %2285, %2296 : vector<2x64xf32>
    %2298 = vector.broadcast %1817 : vector<1x64xf32> to vector<2x64xf32>
    %2299 = arith.mulf %2271, %2298 : vector<2x64xf32>
    %2300 = math.exp %2299 : vector<2x64xf32>
    %2301 = arith.mulf %2300, %2109 : vector<2x64xf32>
    %2302 = vector.extract_strided_slice %1833 {offsets = [4, 0], sizes = [2, 1], strides = [1, 1]} : vector<16x1xf32> to vector<2x1xf32>
    %2303 = vector.broadcast %2302 : vector<2x1xf32> to vector<2x64xf32>
    %2304 = arith.mulf %2303, %2272 : vector<2x64xf32>
    %2305 = arith.addf %2301, %2304 : vector<2x64xf32>
    %2306 = vector.extract_strided_slice %1849 {offsets = [4, 0], sizes = [2, 1], strides = [1, 1]} : vector<16x1xf32> to vector<2x1xf32>
    %2307 = vector.broadcast %2306 : vector<2x1xf32> to vector<2x64xf32>
    %2308 = arith.mulf %2307, %2305 : vector<2x64xf32>
    %2309 = arith.addf %2297, %2308 : vector<2x64xf32>
    %2310 = vector.broadcast %1818 : vector<1x64xf32> to vector<2x64xf32>
    %2311 = arith.mulf %2271, %2310 : vector<2x64xf32>
    %2312 = math.exp %2311 : vector<2x64xf32>
    %2313 = arith.mulf %2312, %2121 : vector<2x64xf32>
    %2314 = vector.extract_strided_slice %1834 {offsets = [4, 0], sizes = [2, 1], strides = [1, 1]} : vector<16x1xf32> to vector<2x1xf32>
    %2315 = vector.broadcast %2314 : vector<2x1xf32> to vector<2x64xf32>
    %2316 = arith.mulf %2315, %2272 : vector<2x64xf32>
    %2317 = arith.addf %2313, %2316 : vector<2x64xf32>
    %2318 = vector.extract_strided_slice %1850 {offsets = [4, 0], sizes = [2, 1], strides = [1, 1]} : vector<16x1xf32> to vector<2x1xf32>
    %2319 = vector.broadcast %2318 : vector<2x1xf32> to vector<2x64xf32>
    %2320 = arith.mulf %2319, %2317 : vector<2x64xf32>
    %2321 = arith.addf %2309, %2320 : vector<2x64xf32>
    %2322 = vector.broadcast %1819 : vector<1x64xf32> to vector<2x64xf32>
    %2323 = arith.mulf %2271, %2322 : vector<2x64xf32>
    %2324 = math.exp %2323 : vector<2x64xf32>
    %2325 = arith.mulf %2324, %2133 : vector<2x64xf32>
    %2326 = vector.extract_strided_slice %1835 {offsets = [4, 0], sizes = [2, 1], strides = [1, 1]} : vector<16x1xf32> to vector<2x1xf32>
    %2327 = vector.broadcast %2326 : vector<2x1xf32> to vector<2x64xf32>
    %2328 = arith.mulf %2327, %2272 : vector<2x64xf32>
    %2329 = arith.addf %2325, %2328 : vector<2x64xf32>
    %2330 = vector.extract_strided_slice %1851 {offsets = [4, 0], sizes = [2, 1], strides = [1, 1]} : vector<16x1xf32> to vector<2x1xf32>
    %2331 = vector.broadcast %2330 : vector<2x1xf32> to vector<2x64xf32>
    %2332 = arith.mulf %2331, %2329 : vector<2x64xf32>
    %2333 = arith.addf %2321, %2332 : vector<2x64xf32>
    %2334 = vector.broadcast %1820 : vector<1x64xf32> to vector<2x64xf32>
    %2335 = arith.mulf %2271, %2334 : vector<2x64xf32>
    %2336 = math.exp %2335 : vector<2x64xf32>
    %2337 = arith.mulf %2336, %2145 : vector<2x64xf32>
    %2338 = vector.extract_strided_slice %1836 {offsets = [4, 0], sizes = [2, 1], strides = [1, 1]} : vector<16x1xf32> to vector<2x1xf32>
    %2339 = vector.broadcast %2338 : vector<2x1xf32> to vector<2x64xf32>
    %2340 = arith.mulf %2339, %2272 : vector<2x64xf32>
    %2341 = arith.addf %2337, %2340 : vector<2x64xf32>
    %2342 = vector.extract_strided_slice %1852 {offsets = [4, 0], sizes = [2, 1], strides = [1, 1]} : vector<16x1xf32> to vector<2x1xf32>
    %2343 = vector.broadcast %2342 : vector<2x1xf32> to vector<2x64xf32>
    %2344 = arith.mulf %2343, %2341 : vector<2x64xf32>
    %2345 = arith.addf %2333, %2344 : vector<2x64xf32>
    %2346 = vector.broadcast %1821 : vector<1x64xf32> to vector<2x64xf32>
    %2347 = arith.mulf %2271, %2346 : vector<2x64xf32>
    %2348 = math.exp %2347 : vector<2x64xf32>
    %2349 = arith.mulf %2348, %2157 : vector<2x64xf32>
    %2350 = vector.extract_strided_slice %1837 {offsets = [4, 0], sizes = [2, 1], strides = [1, 1]} : vector<16x1xf32> to vector<2x1xf32>
    %2351 = vector.broadcast %2350 : vector<2x1xf32> to vector<2x64xf32>
    %2352 = arith.mulf %2351, %2272 : vector<2x64xf32>
    %2353 = arith.addf %2349, %2352 : vector<2x64xf32>
    %2354 = vector.extract_strided_slice %1853 {offsets = [4, 0], sizes = [2, 1], strides = [1, 1]} : vector<16x1xf32> to vector<2x1xf32>
    %2355 = vector.broadcast %2354 : vector<2x1xf32> to vector<2x64xf32>
    %2356 = arith.mulf %2355, %2353 : vector<2x64xf32>
    %2357 = arith.addf %2345, %2356 : vector<2x64xf32>
    %2358 = vector.broadcast %1822 : vector<1x64xf32> to vector<2x64xf32>
    %2359 = arith.mulf %2271, %2358 : vector<2x64xf32>
    %2360 = math.exp %2359 : vector<2x64xf32>
    %2361 = arith.mulf %2360, %2169 : vector<2x64xf32>
    %2362 = vector.extract_strided_slice %1838 {offsets = [4, 0], sizes = [2, 1], strides = [1, 1]} : vector<16x1xf32> to vector<2x1xf32>
    %2363 = vector.broadcast %2362 : vector<2x1xf32> to vector<2x64xf32>
    %2364 = arith.mulf %2363, %2272 : vector<2x64xf32>
    %2365 = arith.addf %2361, %2364 : vector<2x64xf32>
    %2366 = vector.extract_strided_slice %1854 {offsets = [4, 0], sizes = [2, 1], strides = [1, 1]} : vector<16x1xf32> to vector<2x1xf32>
    %2367 = vector.broadcast %2366 : vector<2x1xf32> to vector<2x64xf32>
    %2368 = arith.mulf %2367, %2365 : vector<2x64xf32>
    %2369 = arith.addf %2357, %2368 : vector<2x64xf32>
    %2370 = vector.broadcast %1823 : vector<1x64xf32> to vector<2x64xf32>
    %2371 = arith.mulf %2271, %2370 : vector<2x64xf32>
    %2372 = math.exp %2371 : vector<2x64xf32>
    %2373 = arith.mulf %2372, %2181 : vector<2x64xf32>
    %2374 = vector.extract_strided_slice %1839 {offsets = [4, 0], sizes = [2, 1], strides = [1, 1]} : vector<16x1xf32> to vector<2x1xf32>
    %2375 = vector.broadcast %2374 : vector<2x1xf32> to vector<2x64xf32>
    %2376 = arith.mulf %2375, %2272 : vector<2x64xf32>
    %2377 = arith.addf %2373, %2376 : vector<2x64xf32>
    %2378 = vector.extract_strided_slice %1855 {offsets = [4, 0], sizes = [2, 1], strides = [1, 1]} : vector<16x1xf32> to vector<2x1xf32>
    %2379 = vector.broadcast %2378 : vector<2x1xf32> to vector<2x64xf32>
    %2380 = arith.mulf %2379, %2377 : vector<2x64xf32>
    %2381 = arith.addf %2369, %2380 : vector<2x64xf32>
    %2382 = vector.broadcast %1824 : vector<1x64xf32> to vector<2x64xf32>
    %2383 = arith.mulf %2271, %2382 : vector<2x64xf32>
    %2384 = math.exp %2383 : vector<2x64xf32>
    %2385 = arith.mulf %2384, %2193 : vector<2x64xf32>
    %2386 = vector.extract_strided_slice %1840 {offsets = [4, 0], sizes = [2, 1], strides = [1, 1]} : vector<16x1xf32> to vector<2x1xf32>
    %2387 = vector.broadcast %2386 : vector<2x1xf32> to vector<2x64xf32>
    %2388 = arith.mulf %2387, %2272 : vector<2x64xf32>
    %2389 = arith.addf %2385, %2388 : vector<2x64xf32>
    %2390 = vector.extract_strided_slice %1856 {offsets = [4, 0], sizes = [2, 1], strides = [1, 1]} : vector<16x1xf32> to vector<2x1xf32>
    %2391 = vector.broadcast %2390 : vector<2x1xf32> to vector<2x64xf32>
    %2392 = arith.mulf %2391, %2389 : vector<2x64xf32>
    %2393 = arith.addf %2381, %2392 : vector<2x64xf32>
    %2394 = vector.broadcast %1825 : vector<1x64xf32> to vector<2x64xf32>
    %2395 = arith.mulf %2271, %2394 : vector<2x64xf32>
    %2396 = math.exp %2395 : vector<2x64xf32>
    %2397 = arith.mulf %2396, %2205 : vector<2x64xf32>
    %2398 = vector.extract_strided_slice %1841 {offsets = [4, 0], sizes = [2, 1], strides = [1, 1]} : vector<16x1xf32> to vector<2x1xf32>
    %2399 = vector.broadcast %2398 : vector<2x1xf32> to vector<2x64xf32>
    %2400 = arith.mulf %2399, %2272 : vector<2x64xf32>
    %2401 = arith.addf %2397, %2400 : vector<2x64xf32>
    %2402 = vector.extract_strided_slice %1857 {offsets = [4, 0], sizes = [2, 1], strides = [1, 1]} : vector<16x1xf32> to vector<2x1xf32>
    %2403 = vector.broadcast %2402 : vector<2x1xf32> to vector<2x64xf32>
    %2404 = arith.mulf %2403, %2401 : vector<2x64xf32>
    %2405 = arith.addf %2393, %2404 : vector<2x64xf32>
    %2406 = vector.broadcast %1826 : vector<1x64xf32> to vector<2x64xf32>
    %2407 = arith.mulf %2271, %2406 : vector<2x64xf32>
    %2408 = math.exp %2407 : vector<2x64xf32>
    %2409 = arith.mulf %2408, %2217 : vector<2x64xf32>
    %2410 = vector.extract_strided_slice %1842 {offsets = [4, 0], sizes = [2, 1], strides = [1, 1]} : vector<16x1xf32> to vector<2x1xf32>
    %2411 = vector.broadcast %2410 : vector<2x1xf32> to vector<2x64xf32>
    %2412 = arith.mulf %2411, %2272 : vector<2x64xf32>
    %2413 = arith.addf %2409, %2412 : vector<2x64xf32>
    %2414 = vector.extract_strided_slice %1858 {offsets = [4, 0], sizes = [2, 1], strides = [1, 1]} : vector<16x1xf32> to vector<2x1xf32>
    %2415 = vector.broadcast %2414 : vector<2x1xf32> to vector<2x64xf32>
    %2416 = arith.mulf %2415, %2413 : vector<2x64xf32>
    %2417 = arith.addf %2405, %2416 : vector<2x64xf32>
    %2418 = vector.broadcast %1827 : vector<1x64xf32> to vector<2x64xf32>
    %2419 = arith.mulf %2271, %2418 : vector<2x64xf32>
    %2420 = math.exp %2419 : vector<2x64xf32>
    %2421 = arith.mulf %2420, %2229 : vector<2x64xf32>
    %2422 = vector.extract_strided_slice %1843 {offsets = [4, 0], sizes = [2, 1], strides = [1, 1]} : vector<16x1xf32> to vector<2x1xf32>
    %2423 = vector.broadcast %2422 : vector<2x1xf32> to vector<2x64xf32>
    %2424 = arith.mulf %2423, %2272 : vector<2x64xf32>
    %2425 = arith.addf %2421, %2424 : vector<2x64xf32>
    %2426 = vector.extract_strided_slice %1859 {offsets = [4, 0], sizes = [2, 1], strides = [1, 1]} : vector<16x1xf32> to vector<2x1xf32>
    %2427 = vector.broadcast %2426 : vector<2x1xf32> to vector<2x64xf32>
    %2428 = arith.mulf %2427, %2425 : vector<2x64xf32>
    %2429 = arith.addf %2417, %2428 : vector<2x64xf32>
    %2430 = vector.broadcast %1828 : vector<1x64xf32> to vector<2x64xf32>
    %2431 = arith.mulf %2271, %2430 : vector<2x64xf32>
    %2432 = math.exp %2431 : vector<2x64xf32>
    %2433 = arith.mulf %2432, %2241 : vector<2x64xf32>
    %2434 = vector.extract_strided_slice %1844 {offsets = [4, 0], sizes = [2, 1], strides = [1, 1]} : vector<16x1xf32> to vector<2x1xf32>
    %2435 = vector.broadcast %2434 : vector<2x1xf32> to vector<2x64xf32>
    %2436 = arith.mulf %2435, %2272 : vector<2x64xf32>
    %2437 = arith.addf %2433, %2436 : vector<2x64xf32>
    %2438 = vector.extract_strided_slice %1860 {offsets = [4, 0], sizes = [2, 1], strides = [1, 1]} : vector<16x1xf32> to vector<2x1xf32>
    %2439 = vector.broadcast %2438 : vector<2x1xf32> to vector<2x64xf32>
    %2440 = arith.mulf %2439, %2437 : vector<2x64xf32>
    %2441 = arith.addf %2429, %2440 : vector<2x64xf32>
    %2442 = vector.broadcast %1829 : vector<1x64xf32> to vector<2x64xf32>
    %2443 = arith.mulf %2271, %2442 : vector<2x64xf32>
    %2444 = math.exp %2443 : vector<2x64xf32>
    %2445 = arith.mulf %2444, %2253 : vector<2x64xf32>
    %2446 = vector.extract_strided_slice %1845 {offsets = [4, 0], sizes = [2, 1], strides = [1, 1]} : vector<16x1xf32> to vector<2x1xf32>
    %2447 = vector.broadcast %2446 : vector<2x1xf32> to vector<2x64xf32>
    %2448 = arith.mulf %2447, %2272 : vector<2x64xf32>
    %2449 = arith.addf %2445, %2448 : vector<2x64xf32>
    %2450 = vector.extract_strided_slice %1861 {offsets = [4, 0], sizes = [2, 1], strides = [1, 1]} : vector<16x1xf32> to vector<2x1xf32>
    %2451 = vector.broadcast %2450 : vector<2x1xf32> to vector<2x64xf32>
    %2452 = arith.mulf %2451, %2449 : vector<2x64xf32>
    %2453 = arith.addf %2441, %2452 : vector<2x64xf32>
    %2454 = vector.broadcast %1830 : vector<1x64xf32> to vector<2x64xf32>
    %2455 = arith.mulf %2271, %2454 : vector<2x64xf32>
    %2456 = math.exp %2455 : vector<2x64xf32>
    %2457 = arith.mulf %2456, %2265 : vector<2x64xf32>
    %2458 = vector.extract_strided_slice %1846 {offsets = [4, 0], sizes = [2, 1], strides = [1, 1]} : vector<16x1xf32> to vector<2x1xf32>
    %2459 = vector.broadcast %2458 : vector<2x1xf32> to vector<2x64xf32>
    %2460 = arith.mulf %2459, %2272 : vector<2x64xf32>
    %2461 = arith.addf %2457, %2460 : vector<2x64xf32>
    %2462 = vector.extract_strided_slice %1862 {offsets = [4, 0], sizes = [2, 1], strides = [1, 1]} : vector<16x1xf32> to vector<2x1xf32>
    %2463 = vector.broadcast %2462 : vector<2x1xf32> to vector<2x64xf32>
    %2464 = arith.mulf %2463, %2461 : vector<2x64xf32>
    %2465 = arith.addf %2453, %2464 : vector<2x64xf32>
    %c4_120 = arith.constant 4 : index
    %c0_121 = arith.constant 0 : index
    %2466 = vector.load %arg9[%c4_120, %c0_121] : memref<16x64xf32, #tpu.memory_space<vmem>>, vector<2x64xf32>
    tpu.vector_store %arg9[%c4_120, %c0_121], %2465 {strides = array<i32>} : memref<16x64xf32, #tpu.memory_space<vmem>>, vector<2x64xf32>,
    %2467 = vector.extract_strided_slice %1811 {offsets = [6, 0], sizes = [2, 64], strides = [1, 1]} : vector<16x64xf32> to vector<2x64xf32>
    %2468 = vector.extract_strided_slice %1814 {offsets = [6, 0], sizes = [2, 64], strides = [1, 1]} : vector<16x64xf32> to vector<2x64xf32>
    %cst_122 = arith.constant 0.000000e+00 : f32
    %2469 = vector.broadcast %cst_122 : f32 to vector<2x64xf32>
    %2470 = vector.broadcast %1815 : vector<1x64xf32> to vector<2x64xf32>
    %2471 = arith.mulf %2467, %2470 : vector<2x64xf32>
    %2472 = math.exp %2471 : vector<2x64xf32>
    %2473 = arith.mulf %2472, %2281 : vector<2x64xf32>
    %2474 = vector.extract_strided_slice %1831 {offsets = [6, 0], sizes = [2, 1], strides = [1, 1]} : vector<16x1xf32> to vector<2x1xf32>
    %2475 = vector.broadcast %2474 : vector<2x1xf32> to vector<2x64xf32>
    %2476 = arith.mulf %2475, %2468 : vector<2x64xf32>
    %2477 = arith.addf %2473, %2476 : vector<2x64xf32>
    %2478 = vector.extract_strided_slice %1847 {offsets = [6, 0], sizes = [2, 1], strides = [1, 1]} : vector<16x1xf32> to vector<2x1xf32>
    %2479 = vector.broadcast %2478 : vector<2x1xf32> to vector<2x64xf32>
    %2480 = arith.mulf %2479, %2477 : vector<2x64xf32>
    %2481 = arith.addf %2469, %2480 : vector<2x64xf32>
    %2482 = vector.broadcast %1816 : vector<1x64xf32> to vector<2x64xf32>
    %2483 = arith.mulf %2467, %2482 : vector<2x64xf32>
    %2484 = math.exp %2483 : vector<2x64xf32>
    %2485 = arith.mulf %2484, %2293 : vector<2x64xf32>
    %2486 = vector.extract_strided_slice %1832 {offsets = [6, 0], sizes = [2, 1], strides = [1, 1]} : vector<16x1xf32> to vector<2x1xf32>
    %2487 = vector.broadcast %2486 : vector<2x1xf32> to vector<2x64xf32>
    %2488 = arith.mulf %2487, %2468 : vector<2x64xf32>
    %2489 = arith.addf %2485, %2488 : vector<2x64xf32>
    %2490 = vector.extract_strided_slice %1848 {offsets = [6, 0], sizes = [2, 1], strides = [1, 1]} : vector<16x1xf32> to vector<2x1xf32>
    %2491 = vector.broadcast %2490 : vector<2x1xf32> to vector<2x64xf32>
    %2492 = arith.mulf %2491, %2489 : vector<2x64xf32>
    %2493 = arith.addf %2481, %2492 : vector<2x64xf32>
    %2494 = vector.broadcast %1817 : vector<1x64xf32> to vector<2x64xf32>
    %2495 = arith.mulf %2467, %2494 : vector<2x64xf32>
    %2496 = math.exp %2495 : vector<2x64xf32>
    %2497 = arith.mulf %2496, %2305 : vector<2x64xf32>
    %2498 = vector.extract_strided_slice %1833 {offsets = [6, 0], sizes = [2, 1], strides = [1, 1]} : vector<16x1xf32> to vector<2x1xf32>
    %2499 = vector.broadcast %2498 : vector<2x1xf32> to vector<2x64xf32>
    %2500 = arith.mulf %2499, %2468 : vector<2x64xf32>
    %2501 = arith.addf %2497, %2500 : vector<2x64xf32>
    %2502 = vector.extract_strided_slice %1849 {offsets = [6, 0], sizes = [2, 1], strides = [1, 1]} : vector<16x1xf32> to vector<2x1xf32>
    %2503 = vector.broadcast %2502 : vector<2x1xf32> to vector<2x64xf32>
    %2504 = arith.mulf %2503, %2501 : vector<2x64xf32>
    %2505 = arith.addf %2493, %2504 : vector<2x64xf32>
    %2506 = vector.broadcast %1818 : vector<1x64xf32> to vector<2x64xf32>
    %2507 = arith.mulf %2467, %2506 : vector<2x64xf32>
    %2508 = math.exp %2507 : vector<2x64xf32>
    %2509 = arith.mulf %2508, %2317 : vector<2x64xf32>
    %2510 = vector.extract_strided_slice %1834 {offsets = [6, 0], sizes = [2, 1], strides = [1, 1]} : vector<16x1xf32> to vector<2x1xf32>
    %2511 = vector.broadcast %2510 : vector<2x1xf32> to vector<2x64xf32>
    %2512 = arith.mulf %2511, %2468 : vector<2x64xf32>
    %2513 = arith.addf %2509, %2512 : vector<2x64xf32>
    %2514 = vector.extract_strided_slice %1850 {offsets = [6, 0], sizes = [2, 1], strides = [1, 1]} : vector<16x1xf32> to vector<2x1xf32>
    %2515 = vector.broadcast %2514 : vector<2x1xf32> to vector<2x64xf32>
    %2516 = arith.mulf %2515, %2513 : vector<2x64xf32>
    %2517 = arith.addf %2505, %2516 : vector<2x64xf32>
    %2518 = vector.broadcast %1819 : vector<1x64xf32> to vector<2x64xf32>
    %2519 = arith.mulf %2467, %2518 : vector<2x64xf32>
    %2520 = math.exp %2519 : vector<2x64xf32>
    %2521 = arith.mulf %2520, %2329 : vector<2x64xf32>
    %2522 = vector.extract_strided_slice %1835 {offsets = [6, 0], sizes = [2, 1], strides = [1, 1]} : vector<16x1xf32> to vector<2x1xf32>
    %2523 = vector.broadcast %2522 : vector<2x1xf32> to vector<2x64xf32>
    %2524 = arith.mulf %2523, %2468 : vector<2x64xf32>
    %2525 = arith.addf %2521, %2524 : vector<2x64xf32>
    %2526 = vector.extract_strided_slice %1851 {offsets = [6, 0], sizes = [2, 1], strides = [1, 1]} : vector<16x1xf32> to vector<2x1xf32>
    %2527 = vector.broadcast %2526 : vector<2x1xf32> to vector<2x64xf32>
    %2528 = arith.mulf %2527, %2525 : vector<2x64xf32>
    %2529 = arith.addf %2517, %2528 : vector<2x64xf32>
    %2530 = vector.broadcast %1820 : vector<1x64xf32> to vector<2x64xf32>
    %2531 = arith.mulf %2467, %2530 : vector<2x64xf32>
    %2532 = math.exp %2531 : vector<2x64xf32>
    %2533 = arith.mulf %2532, %2341 : vector<2x64xf32>
    %2534 = vector.extract_strided_slice %1836 {offsets = [6, 0], sizes = [2, 1], strides = [1, 1]} : vector<16x1xf32> to vector<2x1xf32>
    %2535 = vector.broadcast %2534 : vector<2x1xf32> to vector<2x64xf32>
    %2536 = arith.mulf %2535, %2468 : vector<2x64xf32>
    %2537 = arith.addf %2533, %2536 : vector<2x64xf32>
    %2538 = vector.extract_strided_slice %1852 {offsets = [6, 0], sizes = [2, 1], strides = [1, 1]} : vector<16x1xf32> to vector<2x1xf32>
    %2539 = vector.broadcast %2538 : vector<2x1xf32> to vector<2x64xf32>
    %2540 = arith.mulf %2539, %2537 : vector<2x64xf32>
    %2541 = arith.addf %2529, %2540 : vector<2x64xf32>
    %2542 = vector.broadcast %1821 : vector<1x64xf32> to vector<2x64xf32>
    %2543 = arith.mulf %2467, %2542 : vector<2x64xf32>
    %2544 = math.exp %2543 : vector<2x64xf32>
    %2545 = arith.mulf %2544, %2353 : vector<2x64xf32>
    %2546 = vector.extract_strided_slice %1837 {offsets = [6, 0], sizes = [2, 1], strides = [1, 1]} : vector<16x1xf32> to vector<2x1xf32>
    %2547 = vector.broadcast %2546 : vector<2x1xf32> to vector<2x64xf32>
    %2548 = arith.mulf %2547, %2468 : vector<2x64xf32>
    %2549 = arith.addf %2545, %2548 : vector<2x64xf32>
    %2550 = vector.extract_strided_slice %1853 {offsets = [6, 0], sizes = [2, 1], strides = [1, 1]} : vector<16x1xf32> to vector<2x1xf32>
    %2551 = vector.broadcast %2550 : vector<2x1xf32> to vector<2x64xf32>
    %2552 = arith.mulf %2551, %2549 : vector<2x64xf32>
    %2553 = arith.addf %2541, %2552 : vector<2x64xf32>
    %2554 = vector.broadcast %1822 : vector<1x64xf32> to vector<2x64xf32>
    %2555 = arith.mulf %2467, %2554 : vector<2x64xf32>
    %2556 = math.exp %2555 : vector<2x64xf32>
    %2557 = arith.mulf %2556, %2365 : vector<2x64xf32>
    %2558 = vector.extract_strided_slice %1838 {offsets = [6, 0], sizes = [2, 1], strides = [1, 1]} : vector<16x1xf32> to vector<2x1xf32>
    %2559 = vector.broadcast %2558 : vector<2x1xf32> to vector<2x64xf32>
    %2560 = arith.mulf %2559, %2468 : vector<2x64xf32>
    %2561 = arith.addf %2557, %2560 : vector<2x64xf32>
    %2562 = vector.extract_strided_slice %1854 {offsets = [6, 0], sizes = [2, 1], strides = [1, 1]} : vector<16x1xf32> to vector<2x1xf32>
    %2563 = vector.broadcast %2562 : vector<2x1xf32> to vector<2x64xf32>
    %2564 = arith.mulf %2563, %2561 : vector<2x64xf32>
    %2565 = arith.addf %2553, %2564 : vector<2x64xf32>
    %2566 = vector.broadcast %1823 : vector<1x64xf32> to vector<2x64xf32>
    %2567 = arith.mulf %2467, %2566 : vector<2x64xf32>
    %2568 = math.exp %2567 : vector<2x64xf32>
    %2569 = arith.mulf %2568, %2377 : vector<2x64xf32>
    %2570 = vector.extract_strided_slice %1839 {offsets = [6, 0], sizes = [2, 1], strides = [1, 1]} : vector<16x1xf32> to vector<2x1xf32>
    %2571 = vector.broadcast %2570 : vector<2x1xf32> to vector<2x64xf32>
    %2572 = arith.mulf %2571, %2468 : vector<2x64xf32>
    %2573 = arith.addf %2569, %2572 : vector<2x64xf32>
    %2574 = vector.extract_strided_slice %1855 {offsets = [6, 0], sizes = [2, 1], strides = [1, 1]} : vector<16x1xf32> to vector<2x1xf32>
    %2575 = vector.broadcast %2574 : vector<2x1xf32> to vector<2x64xf32>
    %2576 = arith.mulf %2575, %2573 : vector<2x64xf32>
    %2577 = arith.addf %2565, %2576 : vector<2x64xf32>
    %2578 = vector.broadcast %1824 : vector<1x64xf32> to vector<2x64xf32>
    %2579 = arith.mulf %2467, %2578 : vector<2x64xf32>
    %2580 = math.exp %2579 : vector<2x64xf32>
    %2581 = arith.mulf %2580, %2389 : vector<2x64xf32>
    %2582 = vector.extract_strided_slice %1840 {offsets = [6, 0], sizes = [2, 1], strides = [1, 1]} : vector<16x1xf32> to vector<2x1xf32>
    %2583 = vector.broadcast %2582 : vector<2x1xf32> to vector<2x64xf32>
    %2584 = arith.mulf %2583, %2468 : vector<2x64xf32>
    %2585 = arith.addf %2581, %2584 : vector<2x64xf32>
    %2586 = vector.extract_strided_slice %1856 {offsets = [6, 0], sizes = [2, 1], strides = [1, 1]} : vector<16x1xf32> to vector<2x1xf32>
    %2587 = vector.broadcast %2586 : vector<2x1xf32> to vector<2x64xf32>
    %2588 = arith.mulf %2587, %2585 : vector<2x64xf32>
    %2589 = arith.addf %2577, %2588 : vector<2x64xf32>
    %2590 = vector.broadcast %1825 : vector<1x64xf32> to vector<2x64xf32>
    %2591 = arith.mulf %2467, %2590 : vector<2x64xf32>
    %2592 = math.exp %2591 : vector<2x64xf32>
    %2593 = arith.mulf %2592, %2401 : vector<2x64xf32>
    %2594 = vector.extract_strided_slice %1841 {offsets = [6, 0], sizes = [2, 1], strides = [1, 1]} : vector<16x1xf32> to vector<2x1xf32>
    %2595 = vector.broadcast %2594 : vector<2x1xf32> to vector<2x64xf32>
    %2596 = arith.mulf %2595, %2468 : vector<2x64xf32>
    %2597 = arith.addf %2593, %2596 : vector<2x64xf32>
    %2598 = vector.extract_strided_slice %1857 {offsets = [6, 0], sizes = [2, 1], strides = [1, 1]} : vector<16x1xf32> to vector<2x1xf32>
    %2599 = vector.broadcast %2598 : vector<2x1xf32> to vector<2x64xf32>
    %2600 = arith.mulf %2599, %2597 : vector<2x64xf32>
    %2601 = arith.addf %2589, %2600 : vector<2x64xf32>
    %2602 = vector.broadcast %1826 : vector<1x64xf32> to vector<2x64xf32>
    %2603 = arith.mulf %2467, %2602 : vector<2x64xf32>
    %2604 = math.exp %2603 : vector<2x64xf32>
    %2605 = arith.mulf %2604, %2413 : vector<2x64xf32>
    %2606 = vector.extract_strided_slice %1842 {offsets = [6, 0], sizes = [2, 1], strides = [1, 1]} : vector<16x1xf32> to vector<2x1xf32>
    %2607 = vector.broadcast %2606 : vector<2x1xf32> to vector<2x64xf32>
    %2608 = arith.mulf %2607, %2468 : vector<2x64xf32>
    %2609 = arith.addf %2605, %2608 : vector<2x64xf32>
    %2610 = vector.extract_strided_slice %1858 {offsets = [6, 0], sizes = [2, 1], strides = [1, 1]} : vector<16x1xf32> to vector<2x1xf32>
    %2611 = vector.broadcast %2610 : vector<2x1xf32> to vector<2x64xf32>
    %2612 = arith.mulf %2611, %2609 : vector<2x64xf32>
    %2613 = arith.addf %2601, %2612 : vector<2x64xf32>
    %2614 = vector.broadcast %1827 : vector<1x64xf32> to vector<2x64xf32>
    %2615 = arith.mulf %2467, %2614 : vector<2x64xf32>
    %2616 = math.exp %2615 : vector<2x64xf32>
    %2617 = arith.mulf %2616, %2425 : vector<2x64xf32>
    %2618 = vector.extract_strided_slice %1843 {offsets = [6, 0], sizes = [2, 1], strides = [1, 1]} : vector<16x1xf32> to vector<2x1xf32>
    %2619 = vector.broadcast %2618 : vector<2x1xf32> to vector<2x64xf32>
    %2620 = arith.mulf %2619, %2468 : vector<2x64xf32>
    %2621 = arith.addf %2617, %2620 : vector<2x64xf32>
    %2622 = vector.extract_strided_slice %1859 {offsets = [6, 0], sizes = [2, 1], strides = [1, 1]} : vector<16x1xf32> to vector<2x1xf32>
    %2623 = vector.broadcast %2622 : vector<2x1xf32> to vector<2x64xf32>
    %2624 = arith.mulf %2623, %2621 : vector<2x64xf32>
    %2625 = arith.addf %2613, %2624 : vector<2x64xf32>
    %2626 = vector.broadcast %1828 : vector<1x64xf32> to vector<2x64xf32>
    %2627 = arith.mulf %2467, %2626 : vector<2x64xf32>
    %2628 = math.exp %2627 : vector<2x64xf32>
    %2629 = arith.mulf %2628, %2437 : vector<2x64xf32>
    %2630 = vector.extract_strided_slice %1844 {offsets = [6, 0], sizes = [2, 1], strides = [1, 1]} : vector<16x1xf32> to vector<2x1xf32>
    %2631 = vector.broadcast %2630 : vector<2x1xf32> to vector<2x64xf32>
    %2632 = arith.mulf %2631, %2468 : vector<2x64xf32>
    %2633 = arith.addf %2629, %2632 : vector<2x64xf32>
    %2634 = vector.extract_strided_slice %1860 {offsets = [6, 0], sizes = [2, 1], strides = [1, 1]} : vector<16x1xf32> to vector<2x1xf32>
    %2635 = vector.broadcast %2634 : vector<2x1xf32> to vector<2x64xf32>
    %2636 = arith.mulf %2635, %2633 : vector<2x64xf32>
    %2637 = arith.addf %2625, %2636 : vector<2x64xf32>
    %2638 = vector.broadcast %1829 : vector<1x64xf32> to vector<2x64xf32>
    %2639 = arith.mulf %2467, %2638 : vector<2x64xf32>
    %2640 = math.exp %2639 : vector<2x64xf32>
    %2641 = arith.mulf %2640, %2449 : vector<2x64xf32>
    %2642 = vector.extract_strided_slice %1845 {offsets = [6, 0], sizes = [2, 1], strides = [1, 1]} : vector<16x1xf32> to vector<2x1xf32>
    %2643 = vector.broadcast %2642 : vector<2x1xf32> to vector<2x64xf32>
    %2644 = arith.mulf %2643, %2468 : vector<2x64xf32>
    %2645 = arith.addf %2641, %2644 : vector<2x64xf32>
    %2646 = vector.extract_strided_slice %1861 {offsets = [6, 0], sizes = [2, 1], strides = [1, 1]} : vector<16x1xf32> to vector<2x1xf32>
    %2647 = vector.broadcast %2646 : vector<2x1xf32> to vector<2x64xf32>
    %2648 = arith.mulf %2647, %2645 : vector<2x64xf32>
    %2649 = arith.addf %2637, %2648 : vector<2x64xf32>
    %2650 = vector.broadcast %1830 : vector<1x64xf32> to vector<2x64xf32>
    %2651 = arith.mulf %2467, %2650 : vector<2x64xf32>
    %2652 = math.exp %2651 : vector<2x64xf32>
    %2653 = arith.mulf %2652, %2461 : vector<2x64xf32>
    %2654 = vector.extract_strided_slice %1846 {offsets = [6, 0], sizes = [2, 1], strides = [1, 1]} : vector<16x1xf32> to vector<2x1xf32>
    %2655 = vector.broadcast %2654 : vector<2x1xf32> to vector<2x64xf32>
    %2656 = arith.mulf %2655, %2468 : vector<2x64xf32>
    %2657 = arith.addf %2653, %2656 : vector<2x64xf32>
    %2658 = vector.extract_strided_slice %1862 {offsets = [6, 0], sizes = [2, 1], strides = [1, 1]} : vector<16x1xf32> to vector<2x1xf32>
    %2659 = vector.broadcast %2658 : vector<2x1xf32> to vector<2x64xf32>
    %2660 = arith.mulf %2659, %2657 : vector<2x64xf32>
    %2661 = arith.addf %2649, %2660 : vector<2x64xf32>
    %c6_123 = arith.constant 6 : index
    %c0_124 = arith.constant 0 : index
    %2662 = vector.load %arg9[%c6_123, %c0_124] : memref<16x64xf32, #tpu.memory_space<vmem>>, vector<2x64xf32>
    tpu.vector_store %arg9[%c6_123, %c0_124], %2661 {strides = array<i32>} : memref<16x64xf32, #tpu.memory_space<vmem>>, vector<2x64xf32>,
    %2663 = vector.extract_strided_slice %1811 {offsets = [8, 0], sizes = [2, 64], strides = [1, 1]} : vector<16x64xf32> to vector<2x64xf32>
    %2664 = vector.extract_strided_slice %1814 {offsets = [8, 0], sizes = [2, 64], strides = [1, 1]} : vector<16x64xf32> to vector<2x64xf32>
    %cst_125 = arith.constant 0.000000e+00 : f32
    %2665 = vector.broadcast %cst_125 : f32 to vector<2x64xf32>
    %2666 = vector.broadcast %1815 : vector<1x64xf32> to vector<2x64xf32>
    %2667 = arith.mulf %2663, %2666 : vector<2x64xf32>
    %2668 = math.exp %2667 : vector<2x64xf32>
    %2669 = arith.mulf %2668, %2477 : vector<2x64xf32>
    %2670 = vector.extract_strided_slice %1831 {offsets = [8, 0], sizes = [2, 1], strides = [1, 1]} : vector<16x1xf32> to vector<2x1xf32>
    %2671 = vector.broadcast %2670 : vector<2x1xf32> to vector<2x64xf32>
    %2672 = arith.mulf %2671, %2664 : vector<2x64xf32>
    %2673 = arith.addf %2669, %2672 : vector<2x64xf32>
    %2674 = vector.extract_strided_slice %1847 {offsets = [8, 0], sizes = [2, 1], strides = [1, 1]} : vector<16x1xf32> to vector<2x1xf32>
    %2675 = vector.broadcast %2674 : vector<2x1xf32> to vector<2x64xf32>
    %2676 = arith.mulf %2675, %2673 : vector<2x64xf32>
    %2677 = arith.addf %2665, %2676 : vector<2x64xf32>
    %2678 = vector.broadcast %1816 : vector<1x64xf32> to vector<2x64xf32>
    %2679 = arith.mulf %2663, %2678 : vector<2x64xf32>
    %2680 = math.exp %2679 : vector<2x64xf32>
    %2681 = arith.mulf %2680, %2489 : vector<2x64xf32>
    %2682 = vector.extract_strided_slice %1832 {offsets = [8, 0], sizes = [2, 1], strides = [1, 1]} : vector<16x1xf32> to vector<2x1xf32>
    %2683 = vector.broadcast %2682 : vector<2x1xf32> to vector<2x64xf32>
    %2684 = arith.mulf %2683, %2664 : vector<2x64xf32>
    %2685 = arith.addf %2681, %2684 : vector<2x64xf32>
    %2686 = vector.extract_strided_slice %1848 {offsets = [8, 0], sizes = [2, 1], strides = [1, 1]} : vector<16x1xf32> to vector<2x1xf32>
    %2687 = vector.broadcast %2686 : vector<2x1xf32> to vector<2x64xf32>
    %2688 = arith.mulf %2687, %2685 : vector<2x64xf32>
    %2689 = arith.addf %2677, %2688 : vector<2x64xf32>
    %2690 = vector.broadcast %1817 : vector<1x64xf32> to vector<2x64xf32>
    %2691 = arith.mulf %2663, %2690 : vector<2x64xf32>
    %2692 = math.exp %2691 : vector<2x64xf32>
    %2693 = arith.mulf %2692, %2501 : vector<2x64xf32>
    %2694 = vector.extract_strided_slice %1833 {offsets = [8, 0], sizes = [2, 1], strides = [1, 1]} : vector<16x1xf32> to vector<2x1xf32>
    %2695 = vector.broadcast %2694 : vector<2x1xf32> to vector<2x64xf32>
    %2696 = arith.mulf %2695, %2664 : vector<2x64xf32>
    %2697 = arith.addf %2693, %2696 : vector<2x64xf32>
    %2698 = vector.extract_strided_slice %1849 {offsets = [8, 0], sizes = [2, 1], strides = [1, 1]} : vector<16x1xf32> to vector<2x1xf32>
    %2699 = vector.broadcast %2698 : vector<2x1xf32> to vector<2x64xf32>
    %2700 = arith.mulf %2699, %2697 : vector<2x64xf32>
    %2701 = arith.addf %2689, %2700 : vector<2x64xf32>
    %2702 = vector.broadcast %1818 : vector<1x64xf32> to vector<2x64xf32>
    %2703 = arith.mulf %2663, %2702 : vector<2x64xf32>
    %2704 = math.exp %2703 : vector<2x64xf32>
    %2705 = arith.mulf %2704, %2513 : vector<2x64xf32>
    %2706 = vector.extract_strided_slice %1834 {offsets = [8, 0], sizes = [2, 1], strides = [1, 1]} : vector<16x1xf32> to vector<2x1xf32>
    %2707 = vector.broadcast %2706 : vector<2x1xf32> to vector<2x64xf32>
    %2708 = arith.mulf %2707, %2664 : vector<2x64xf32>
    %2709 = arith.addf %2705, %2708 : vector<2x64xf32>
    %2710 = vector.extract_strided_slice %1850 {offsets = [8, 0], sizes = [2, 1], strides = [1, 1]} : vector<16x1xf32> to vector<2x1xf32>
    %2711 = vector.broadcast %2710 : vector<2x1xf32> to vector<2x64xf32>
    %2712 = arith.mulf %2711, %2709 : vector<2x64xf32>
    %2713 = arith.addf %2701, %2712 : vector<2x64xf32>
    %2714 = vector.broadcast %1819 : vector<1x64xf32> to vector<2x64xf32>
    %2715 = arith.mulf %2663, %2714 : vector<2x64xf32>
    %2716 = math.exp %2715 : vector<2x64xf32>
    %2717 = arith.mulf %2716, %2525 : vector<2x64xf32>
    %2718 = vector.extract_strided_slice %1835 {offsets = [8, 0], sizes = [2, 1], strides = [1, 1]} : vector<16x1xf32> to vector<2x1xf32>
    %2719 = vector.broadcast %2718 : vector<2x1xf32> to vector<2x64xf32>
    %2720 = arith.mulf %2719, %2664 : vector<2x64xf32>
    %2721 = arith.addf %2717, %2720 : vector<2x64xf32>
    %2722 = vector.extract_strided_slice %1851 {offsets = [8, 0], sizes = [2, 1], strides = [1, 1]} : vector<16x1xf32> to vector<2x1xf32>
    %2723 = vector.broadcast %2722 : vector<2x1xf32> to vector<2x64xf32>
    %2724 = arith.mulf %2723, %2721 : vector<2x64xf32>
    %2725 = arith.addf %2713, %2724 : vector<2x64xf32>
    %2726 = vector.broadcast %1820 : vector<1x64xf32> to vector<2x64xf32>
    %2727 = arith.mulf %2663, %2726 : vector<2x64xf32>
    %2728 = math.exp %2727 : vector<2x64xf32>
    %2729 = arith.mulf %2728, %2537 : vector<2x64xf32>
    %2730 = vector.extract_strided_slice %1836 {offsets = [8, 0], sizes = [2, 1], strides = [1, 1]} : vector<16x1xf32> to vector<2x1xf32>
    %2731 = vector.broadcast %2730 : vector<2x1xf32> to vector<2x64xf32>
    %2732 = arith.mulf %2731, %2664 : vector<2x64xf32>
    %2733 = arith.addf %2729, %2732 : vector<2x64xf32>
    %2734 = vector.extract_strided_slice %1852 {offsets = [8, 0], sizes = [2, 1], strides = [1, 1]} : vector<16x1xf32> to vector<2x1xf32>
    %2735 = vector.broadcast %2734 : vector<2x1xf32> to vector<2x64xf32>
    %2736 = arith.mulf %2735, %2733 : vector<2x64xf32>
    %2737 = arith.addf %2725, %2736 : vector<2x64xf32>
    %2738 = vector.broadcast %1821 : vector<1x64xf32> to vector<2x64xf32>
    %2739 = arith.mulf %2663, %2738 : vector<2x64xf32>
    %2740 = math.exp %2739 : vector<2x64xf32>
    %2741 = arith.mulf %2740, %2549 : vector<2x64xf32>
    %2742 = vector.extract_strided_slice %1837 {offsets = [8, 0], sizes = [2, 1], strides = [1, 1]} : vector<16x1xf32> to vector<2x1xf32>
    %2743 = vector.broadcast %2742 : vector<2x1xf32> to vector<2x64xf32>
    %2744 = arith.mulf %2743, %2664 : vector<2x64xf32>
    %2745 = arith.addf %2741, %2744 : vector<2x64xf32>
    %2746 = vector.extract_strided_slice %1853 {offsets = [8, 0], sizes = [2, 1], strides = [1, 1]} : vector<16x1xf32> to vector<2x1xf32>
    %2747 = vector.broadcast %2746 : vector<2x1xf32> to vector<2x64xf32>
    %2748 = arith.mulf %2747, %2745 : vector<2x64xf32>
    %2749 = arith.addf %2737, %2748 : vector<2x64xf32>
    %2750 = vector.broadcast %1822 : vector<1x64xf32> to vector<2x64xf32>
    %2751 = arith.mulf %2663, %2750 : vector<2x64xf32>
    %2752 = math.exp %2751 : vector<2x64xf32>
    %2753 = arith.mulf %2752, %2561 : vector<2x64xf32>
    %2754 = vector.extract_strided_slice %1838 {offsets = [8, 0], sizes = [2, 1], strides = [1, 1]} : vector<16x1xf32> to vector<2x1xf32>
    %2755 = vector.broadcast %2754 : vector<2x1xf32> to vector<2x64xf32>
    %2756 = arith.mulf %2755, %2664 : vector<2x64xf32>
    %2757 = arith.addf %2753, %2756 : vector<2x64xf32>
    %2758 = vector.extract_strided_slice %1854 {offsets = [8, 0], sizes = [2, 1], strides = [1, 1]} : vector<16x1xf32> to vector<2x1xf32>
    %2759 = vector.broadcast %2758 : vector<2x1xf32> to vector<2x64xf32>
    %2760 = arith.mulf %2759, %2757 : vector<2x64xf32>
    %2761 = arith.addf %2749, %2760 : vector<2x64xf32>
    %2762 = vector.broadcast %1823 : vector<1x64xf32> to vector<2x64xf32>
    %2763 = arith.mulf %2663, %2762 : vector<2x64xf32>
    %2764 = math.exp %2763 : vector<2x64xf32>
    %2765 = arith.mulf %2764, %2573 : vector<2x64xf32>
    %2766 = vector.extract_strided_slice %1839 {offsets = [8, 0], sizes = [2, 1], strides = [1, 1]} : vector<16x1xf32> to vector<2x1xf32>
    %2767 = vector.broadcast %2766 : vector<2x1xf32> to vector<2x64xf32>
    %2768 = arith.mulf %2767, %2664 : vector<2x64xf32>
    %2769 = arith.addf %2765, %2768 : vector<2x64xf32>
    %2770 = vector.extract_strided_slice %1855 {offsets = [8, 0], sizes = [2, 1], strides = [1, 1]} : vector<16x1xf32> to vector<2x1xf32>
    %2771 = vector.broadcast %2770 : vector<2x1xf32> to vector<2x64xf32>
    %2772 = arith.mulf %2771, %2769 : vector<2x64xf32>
    %2773 = arith.addf %2761, %2772 : vector<2x64xf32>
    %2774 = vector.broadcast %1824 : vector<1x64xf32> to vector<2x64xf32>
    %2775 = arith.mulf %2663, %2774 : vector<2x64xf32>
    %2776 = math.exp %2775 : vector<2x64xf32>
    %2777 = arith.mulf %2776, %2585 : vector<2x64xf32>
    %2778 = vector.extract_strided_slice %1840 {offsets = [8, 0], sizes = [2, 1], strides = [1, 1]} : vector<16x1xf32> to vector<2x1xf32>
    %2779 = vector.broadcast %2778 : vector<2x1xf32> to vector<2x64xf32>
    %2780 = arith.mulf %2779, %2664 : vector<2x64xf32>
    %2781 = arith.addf %2777, %2780 : vector<2x64xf32>
    %2782 = vector.extract_strided_slice %1856 {offsets = [8, 0], sizes = [2, 1], strides = [1, 1]} : vector<16x1xf32> to vector<2x1xf32>
    %2783 = vector.broadcast %2782 : vector<2x1xf32> to vector<2x64xf32>
    %2784 = arith.mulf %2783, %2781 : vector<2x64xf32>
    %2785 = arith.addf %2773, %2784 : vector<2x64xf32>
    %2786 = vector.broadcast %1825 : vector<1x64xf32> to vector<2x64xf32>
    %2787 = arith.mulf %2663, %2786 : vector<2x64xf32>
    %2788 = math.exp %2787 : vector<2x64xf32>
    %2789 = arith.mulf %2788, %2597 : vector<2x64xf32>
    %2790 = vector.extract_strided_slice %1841 {offsets = [8, 0], sizes = [2, 1], strides = [1, 1]} : vector<16x1xf32> to vector<2x1xf32>
    %2791 = vector.broadcast %2790 : vector<2x1xf32> to vector<2x64xf32>
    %2792 = arith.mulf %2791, %2664 : vector<2x64xf32>
    %2793 = arith.addf %2789, %2792 : vector<2x64xf32>
    %2794 = vector.extract_strided_slice %1857 {offsets = [8, 0], sizes = [2, 1], strides = [1, 1]} : vector<16x1xf32> to vector<2x1xf32>
    %2795 = vector.broadcast %2794 : vector<2x1xf32> to vector<2x64xf32>
    %2796 = arith.mulf %2795, %2793 : vector<2x64xf32>
    %2797 = arith.addf %2785, %2796 : vector<2x64xf32>
    %2798 = vector.broadcast %1826 : vector<1x64xf32> to vector<2x64xf32>
    %2799 = arith.mulf %2663, %2798 : vector<2x64xf32>
    %2800 = math.exp %2799 : vector<2x64xf32>
    %2801 = arith.mulf %2800, %2609 : vector<2x64xf32>
    %2802 = vector.extract_strided_slice %1842 {offsets = [8, 0], sizes = [2, 1], strides = [1, 1]} : vector<16x1xf32> to vector<2x1xf32>
    %2803 = vector.broadcast %2802 : vector<2x1xf32> to vector<2x64xf32>
    %2804 = arith.mulf %2803, %2664 : vector<2x64xf32>
    %2805 = arith.addf %2801, %2804 : vector<2x64xf32>
    %2806 = vector.extract_strided_slice %1858 {offsets = [8, 0], sizes = [2, 1], strides = [1, 1]} : vector<16x1xf32> to vector<2x1xf32>
    %2807 = vector.broadcast %2806 : vector<2x1xf32> to vector<2x64xf32>
    %2808 = arith.mulf %2807, %2805 : vector<2x64xf32>
    %2809 = arith.addf %2797, %2808 : vector<2x64xf32>
    %2810 = vector.broadcast %1827 : vector<1x64xf32> to vector<2x64xf32>
    %2811 = arith.mulf %2663, %2810 : vector<2x64xf32>
    %2812 = math.exp %2811 : vector<2x64xf32>
    %2813 = arith.mulf %2812, %2621 : vector<2x64xf32>
    %2814 = vector.extract_strided_slice %1843 {offsets = [8, 0], sizes = [2, 1], strides = [1, 1]} : vector<16x1xf32> to vector<2x1xf32>
    %2815 = vector.broadcast %2814 : vector<2x1xf32> to vector<2x64xf32>
    %2816 = arith.mulf %2815, %2664 : vector<2x64xf32>
    %2817 = arith.addf %2813, %2816 : vector<2x64xf32>
    %2818 = vector.extract_strided_slice %1859 {offsets = [8, 0], sizes = [2, 1], strides = [1, 1]} : vector<16x1xf32> to vector<2x1xf32>
    %2819 = vector.broadcast %2818 : vector<2x1xf32> to vector<2x64xf32>
    %2820 = arith.mulf %2819, %2817 : vector<2x64xf32>
    %2821 = arith.addf %2809, %2820 : vector<2x64xf32>
    %2822 = vector.broadcast %1828 : vector<1x64xf32> to vector<2x64xf32>
    %2823 = arith.mulf %2663, %2822 : vector<2x64xf32>
    %2824 = math.exp %2823 : vector<2x64xf32>
    %2825 = arith.mulf %2824, %2633 : vector<2x64xf32>
    %2826 = vector.extract_strided_slice %1844 {offsets = [8, 0], sizes = [2, 1], strides = [1, 1]} : vector<16x1xf32> to vector<2x1xf32>
    %2827 = vector.broadcast %2826 : vector<2x1xf32> to vector<2x64xf32>
    %2828 = arith.mulf %2827, %2664 : vector<2x64xf32>
    %2829 = arith.addf %2825, %2828 : vector<2x64xf32>
    %2830 = vector.extract_strided_slice %1860 {offsets = [8, 0], sizes = [2, 1], strides = [1, 1]} : vector<16x1xf32> to vector<2x1xf32>
    %2831 = vector.broadcast %2830 : vector<2x1xf32> to vector<2x64xf32>
    %2832 = arith.mulf %2831, %2829 : vector<2x64xf32>
    %2833 = arith.addf %2821, %2832 : vector<2x64xf32>
    %2834 = vector.broadcast %1829 : vector<1x64xf32> to vector<2x64xf32>
    %2835 = arith.mulf %2663, %2834 : vector<2x64xf32>
    %2836 = math.exp %2835 : vector<2x64xf32>
    %2837 = arith.mulf %2836, %2645 : vector<2x64xf32>
    %2838 = vector.extract_strided_slice %1845 {offsets = [8, 0], sizes = [2, 1], strides = [1, 1]} : vector<16x1xf32> to vector<2x1xf32>
    %2839 = vector.broadcast %2838 : vector<2x1xf32> to vector<2x64xf32>
    %2840 = arith.mulf %2839, %2664 : vector<2x64xf32>
    %2841 = arith.addf %2837, %2840 : vector<2x64xf32>
    %2842 = vector.extract_strided_slice %1861 {offsets = [8, 0], sizes = [2, 1], strides = [1, 1]} : vector<16x1xf32> to vector<2x1xf32>
    %2843 = vector.broadcast %2842 : vector<2x1xf32> to vector<2x64xf32>
    %2844 = arith.mulf %2843, %2841 : vector<2x64xf32>
    %2845 = arith.addf %2833, %2844 : vector<2x64xf32>
    %2846 = vector.broadcast %1830 : vector<1x64xf32> to vector<2x64xf32>
    %2847 = arith.mulf %2663, %2846 : vector<2x64xf32>
    %2848 = math.exp %2847 : vector<2x64xf32>
    %2849 = arith.mulf %2848, %2657 : vector<2x64xf32>
    %2850 = vector.extract_strided_slice %1846 {offsets = [8, 0], sizes = [2, 1], strides = [1, 1]} : vector<16x1xf32> to vector<2x1xf32>
    %2851 = vector.broadcast %2850 : vector<2x1xf32> to vector<2x64xf32>
    %2852 = arith.mulf %2851, %2664 : vector<2x64xf32>
    %2853 = arith.addf %2849, %2852 : vector<2x64xf32>
    %2854 = vector.extract_strided_slice %1862 {offsets = [8, 0], sizes = [2, 1], strides = [1, 1]} : vector<16x1xf32> to vector<2x1xf32>
    %2855 = vector.broadcast %2854 : vector<2x1xf32> to vector<2x64xf32>
    %2856 = arith.mulf %2855, %2853 : vector<2x64xf32>
    %2857 = arith.addf %2845, %2856 : vector<2x64xf32>
    %c8_126 = arith.constant 8 : index
    %c0_127 = arith.constant 0 : index
    %2858 = vector.load %arg9[%c8_126, %c0_127] : memref<16x64xf32, #tpu.memory_space<vmem>>, vector<2x64xf32>
    tpu.vector_store %arg9[%c8_126, %c0_127], %2857 {strides = array<i32>} : memref<16x64xf32, #tpu.memory_space<vmem>>, vector<2x64xf32>,
    %2859 = vector.extract_strided_slice %1811 {offsets = [10, 0], sizes = [2, 64], strides = [1, 1]} : vector<16x64xf32> to vector<2x64xf32>
    %2860 = vector.extract_strided_slice %1814 {offsets = [10, 0], sizes = [2, 64], strides = [1, 1]} : vector<16x64xf32> to vector<2x64xf32>
    %cst_128 = arith.constant 0.000000e+00 : f32
    %2861 = vector.broadcast %cst_128 : f32 to vector<2x64xf32>
    %2862 = vector.broadcast %1815 : vector<1x64xf32> to vector<2x64xf32>
    %2863 = arith.mulf %2859, %2862 : vector<2x64xf32>
    %2864 = math.exp %2863 : vector<2x64xf32>
    %2865 = arith.mulf %2864, %2673 : vector<2x64xf32>
    %2866 = vector.extract_strided_slice %1831 {offsets = [10, 0], sizes = [2, 1], strides = [1, 1]} : vector<16x1xf32> to vector<2x1xf32>
    %2867 = vector.broadcast %2866 : vector<2x1xf32> to vector<2x64xf32>
    %2868 = arith.mulf %2867, %2860 : vector<2x64xf32>
    %2869 = arith.addf %2865, %2868 : vector<2x64xf32>
    %2870 = vector.extract_strided_slice %1847 {offsets = [10, 0], sizes = [2, 1], strides = [1, 1]} : vector<16x1xf32> to vector<2x1xf32>
    %2871 = vector.broadcast %2870 : vector<2x1xf32> to vector<2x64xf32>
    %2872 = arith.mulf %2871, %2869 : vector<2x64xf32>
    %2873 = arith.addf %2861, %2872 : vector<2x64xf32>
    %2874 = vector.broadcast %1816 : vector<1x64xf32> to vector<2x64xf32>
    %2875 = arith.mulf %2859, %2874 : vector<2x64xf32>
    %2876 = math.exp %2875 : vector<2x64xf32>
    %2877 = arith.mulf %2876, %2685 : vector<2x64xf32>
    %2878 = vector.extract_strided_slice %1832 {offsets = [10, 0], sizes = [2, 1], strides = [1, 1]} : vector<16x1xf32> to vector<2x1xf32>
    %2879 = vector.broadcast %2878 : vector<2x1xf32> to vector<2x64xf32>
    %2880 = arith.mulf %2879, %2860 : vector<2x64xf32>
    %2881 = arith.addf %2877, %2880 : vector<2x64xf32>
    %2882 = vector.extract_strided_slice %1848 {offsets = [10, 0], sizes = [2, 1], strides = [1, 1]} : vector<16x1xf32> to vector<2x1xf32>
    %2883 = vector.broadcast %2882 : vector<2x1xf32> to vector<2x64xf32>
    %2884 = arith.mulf %2883, %2881 : vector<2x64xf32>
    %2885 = arith.addf %2873, %2884 : vector<2x64xf32>
    %2886 = vector.broadcast %1817 : vector<1x64xf32> to vector<2x64xf32>
    %2887 = arith.mulf %2859, %2886 : vector<2x64xf32>
    %2888 = math.exp %2887 : vector<2x64xf32>
    %2889 = arith.mulf %2888, %2697 : vector<2x64xf32>
    %2890 = vector.extract_strided_slice %1833 {offsets = [10, 0], sizes = [2, 1], strides = [1, 1]} : vector<16x1xf32> to vector<2x1xf32>
    %2891 = vector.broadcast %2890 : vector<2x1xf32> to vector<2x64xf32>
    %2892 = arith.mulf %2891, %2860 : vector<2x64xf32>
    %2893 = arith.addf %2889, %2892 : vector<2x64xf32>
    %2894 = vector.extract_strided_slice %1849 {offsets = [10, 0], sizes = [2, 1], strides = [1, 1]} : vector<16x1xf32> to vector<2x1xf32>
    %2895 = vector.broadcast %2894 : vector<2x1xf32> to vector<2x64xf32>
    %2896 = arith.mulf %2895, %2893 : vector<2x64xf32>
    %2897 = arith.addf %2885, %2896 : vector<2x64xf32>
    %2898 = vector.broadcast %1818 : vector<1x64xf32> to vector<2x64xf32>
    %2899 = arith.mulf %2859, %2898 : vector<2x64xf32>
    %2900 = math.exp %2899 : vector<2x64xf32>
    %2901 = arith.mulf %2900, %2709 : vector<2x64xf32>
    %2902 = vector.extract_strided_slice %1834 {offsets = [10, 0], sizes = [2, 1], strides = [1, 1]} : vector<16x1xf32> to vector<2x1xf32>
    %2903 = vector.broadcast %2902 : vector<2x1xf32> to vector<2x64xf32>
    %2904 = arith.mulf %2903, %2860 : vector<2x64xf32>
    %2905 = arith.addf %2901, %2904 : vector<2x64xf32>
    %2906 = vector.extract_strided_slice %1850 {offsets = [10, 0], sizes = [2, 1], strides = [1, 1]} : vector<16x1xf32> to vector<2x1xf32>
    %2907 = vector.broadcast %2906 : vector<2x1xf32> to vector<2x64xf32>
    %2908 = arith.mulf %2907, %2905 : vector<2x64xf32>
    %2909 = arith.addf %2897, %2908 : vector<2x64xf32>
    %2910 = vector.broadcast %1819 : vector<1x64xf32> to vector<2x64xf32>
    %2911 = arith.mulf %2859, %2910 : vector<2x64xf32>
    %2912 = math.exp %2911 : vector<2x64xf32>
    %2913 = arith.mulf %2912, %2721 : vector<2x64xf32>
    %2914 = vector.extract_strided_slice %1835 {offsets = [10, 0], sizes = [2, 1], strides = [1, 1]} : vector<16x1xf32> to vector<2x1xf32>
    %2915 = vector.broadcast %2914 : vector<2x1xf32> to vector<2x64xf32>
    %2916 = arith.mulf %2915, %2860 : vector<2x64xf32>
    %2917 = arith.addf %2913, %2916 : vector<2x64xf32>
    %2918 = vector.extract_strided_slice %1851 {offsets = [10, 0], sizes = [2, 1], strides = [1, 1]} : vector<16x1xf32> to vector<2x1xf32>
    %2919 = vector.broadcast %2918 : vector<2x1xf32> to vector<2x64xf32>
    %2920 = arith.mulf %2919, %2917 : vector<2x64xf32>
    %2921 = arith.addf %2909, %2920 : vector<2x64xf32>
    %2922 = vector.broadcast %1820 : vector<1x64xf32> to vector<2x64xf32>
    %2923 = arith.mulf %2859, %2922 : vector<2x64xf32>
    %2924 = math.exp %2923 : vector<2x64xf32>
    %2925 = arith.mulf %2924, %2733 : vector<2x64xf32>
    %2926 = vector.extract_strided_slice %1836 {offsets = [10, 0], sizes = [2, 1], strides = [1, 1]} : vector<16x1xf32> to vector<2x1xf32>
    %2927 = vector.broadcast %2926 : vector<2x1xf32> to vector<2x64xf32>
    %2928 = arith.mulf %2927, %2860 : vector<2x64xf32>
    %2929 = arith.addf %2925, %2928 : vector<2x64xf32>
    %2930 = vector.extract_strided_slice %1852 {offsets = [10, 0], sizes = [2, 1], strides = [1, 1]} : vector<16x1xf32> to vector<2x1xf32>
    %2931 = vector.broadcast %2930 : vector<2x1xf32> to vector<2x64xf32>
    %2932 = arith.mulf %2931, %2929 : vector<2x64xf32>
    %2933 = arith.addf %2921, %2932 : vector<2x64xf32>
    %2934 = vector.broadcast %1821 : vector<1x64xf32> to vector<2x64xf32>
    %2935 = arith.mulf %2859, %2934 : vector<2x64xf32>
    %2936 = math.exp %2935 : vector<2x64xf32>
    %2937 = arith.mulf %2936, %2745 : vector<2x64xf32>
    %2938 = vector.extract_strided_slice %1837 {offsets = [10, 0], sizes = [2, 1], strides = [1, 1]} : vector<16x1xf32> to vector<2x1xf32>
    %2939 = vector.broadcast %2938 : vector<2x1xf32> to vector<2x64xf32>
    %2940 = arith.mulf %2939, %2860 : vector<2x64xf32>
    %2941 = arith.addf %2937, %2940 : vector<2x64xf32>
    %2942 = vector.extract_strided_slice %1853 {offsets = [10, 0], sizes = [2, 1], strides = [1, 1]} : vector<16x1xf32> to vector<2x1xf32>
    %2943 = vector.broadcast %2942 : vector<2x1xf32> to vector<2x64xf32>
    %2944 = arith.mulf %2943, %2941 : vector<2x64xf32>
    %2945 = arith.addf %2933, %2944 : vector<2x64xf32>
    %2946 = vector.broadcast %1822 : vector<1x64xf32> to vector<2x64xf32>
    %2947 = arith.mulf %2859, %2946 : vector<2x64xf32>
    %2948 = math.exp %2947 : vector<2x64xf32>
    %2949 = arith.mulf %2948, %2757 : vector<2x64xf32>
    %2950 = vector.extract_strided_slice %1838 {offsets = [10, 0], sizes = [2, 1], strides = [1, 1]} : vector<16x1xf32> to vector<2x1xf32>
    %2951 = vector.broadcast %2950 : vector<2x1xf32> to vector<2x64xf32>
    %2952 = arith.mulf %2951, %2860 : vector<2x64xf32>
    %2953 = arith.addf %2949, %2952 : vector<2x64xf32>
    %2954 = vector.extract_strided_slice %1854 {offsets = [10, 0], sizes = [2, 1], strides = [1, 1]} : vector<16x1xf32> to vector<2x1xf32>
    %2955 = vector.broadcast %2954 : vector<2x1xf32> to vector<2x64xf32>
    %2956 = arith.mulf %2955, %2953 : vector<2x64xf32>
    %2957 = arith.addf %2945, %2956 : vector<2x64xf32>
    %2958 = vector.broadcast %1823 : vector<1x64xf32> to vector<2x64xf32>
    %2959 = arith.mulf %2859, %2958 : vector<2x64xf32>
    %2960 = math.exp %2959 : vector<2x64xf32>
    %2961 = arith.mulf %2960, %2769 : vector<2x64xf32>
    %2962 = vector.extract_strided_slice %1839 {offsets = [10, 0], sizes = [2, 1], strides = [1, 1]} : vector<16x1xf32> to vector<2x1xf32>
    %2963 = vector.broadcast %2962 : vector<2x1xf32> to vector<2x64xf32>
    %2964 = arith.mulf %2963, %2860 : vector<2x64xf32>
    %2965 = arith.addf %2961, %2964 : vector<2x64xf32>
    %2966 = vector.extract_strided_slice %1855 {offsets = [10, 0], sizes = [2, 1], strides = [1, 1]} : vector<16x1xf32> to vector<2x1xf32>
    %2967 = vector.broadcast %2966 : vector<2x1xf32> to vector<2x64xf32>
    %2968 = arith.mulf %2967, %2965 : vector<2x64xf32>
    %2969 = arith.addf %2957, %2968 : vector<2x64xf32>
    %2970 = vector.broadcast %1824 : vector<1x64xf32> to vector<2x64xf32>
    %2971 = arith.mulf %2859, %2970 : vector<2x64xf32>
    %2972 = math.exp %2971 : vector<2x64xf32>
    %2973 = arith.mulf %2972, %2781 : vector<2x64xf32>
    %2974 = vector.extract_strided_slice %1840 {offsets = [10, 0], sizes = [2, 1], strides = [1, 1]} : vector<16x1xf32> to vector<2x1xf32>
    %2975 = vector.broadcast %2974 : vector<2x1xf32> to vector<2x64xf32>
    %2976 = arith.mulf %2975, %2860 : vector<2x64xf32>
    %2977 = arith.addf %2973, %2976 : vector<2x64xf32>
    %2978 = vector.extract_strided_slice %1856 {offsets = [10, 0], sizes = [2, 1], strides = [1, 1]} : vector<16x1xf32> to vector<2x1xf32>
    %2979 = vector.broadcast %2978 : vector<2x1xf32> to vector<2x64xf32>
    %2980 = arith.mulf %2979, %2977 : vector<2x64xf32>
    %2981 = arith.addf %2969, %2980 : vector<2x64xf32>
    %2982 = vector.broadcast %1825 : vector<1x64xf32> to vector<2x64xf32>
    %2983 = arith.mulf %2859, %2982 : vector<2x64xf32>
    %2984 = math.exp %2983 : vector<2x64xf32>
    %2985 = arith.mulf %2984, %2793 : vector<2x64xf32>
    %2986 = vector.extract_strided_slice %1841 {offsets = [10, 0], sizes = [2, 1], strides = [1, 1]} : vector<16x1xf32> to vector<2x1xf32>
    %2987 = vector.broadcast %2986 : vector<2x1xf32> to vector<2x64xf32>
    %2988 = arith.mulf %2987, %2860 : vector<2x64xf32>
    %2989 = arith.addf %2985, %2988 : vector<2x64xf32>
    %2990 = vector.extract_strided_slice %1857 {offsets = [10, 0], sizes = [2, 1], strides = [1, 1]} : vector<16x1xf32> to vector<2x1xf32>
    %2991 = vector.broadcast %2990 : vector<2x1xf32> to vector<2x64xf32>
    %2992 = arith.mulf %2991, %2989 : vector<2x64xf32>
    %2993 = arith.addf %2981, %2992 : vector<2x64xf32>
    %2994 = vector.broadcast %1826 : vector<1x64xf32> to vector<2x64xf32>
    %2995 = arith.mulf %2859, %2994 : vector<2x64xf32>
    %2996 = math.exp %2995 : vector<2x64xf32>
    %2997 = arith.mulf %2996, %2805 : vector<2x64xf32>
    %2998 = vector.extract_strided_slice %1842 {offsets = [10, 0], sizes = [2, 1], strides = [1, 1]} : vector<16x1xf32> to vector<2x1xf32>
    %2999 = vector.broadcast %2998 : vector<2x1xf32> to vector<2x64xf32>
    %3000 = arith.mulf %2999, %2860 : vector<2x64xf32>
    %3001 = arith.addf %2997, %3000 : vector<2x64xf32>
    %3002 = vector.extract_strided_slice %1858 {offsets = [10, 0], sizes = [2, 1], strides = [1, 1]} : vector<16x1xf32> to vector<2x1xf32>
    %3003 = vector.broadcast %3002 : vector<2x1xf32> to vector<2x64xf32>
    %3004 = arith.mulf %3003, %3001 : vector<2x64xf32>
    %3005 = arith.addf %2993, %3004 : vector<2x64xf32>
    %3006 = vector.broadcast %1827 : vector<1x64xf32> to vector<2x64xf32>
    %3007 = arith.mulf %2859, %3006 : vector<2x64xf32>
    %3008 = math.exp %3007 : vector<2x64xf32>
    %3009 = arith.mulf %3008, %2817 : vector<2x64xf32>
    %3010 = vector.extract_strided_slice %1843 {offsets = [10, 0], sizes = [2, 1], strides = [1, 1]} : vector<16x1xf32> to vector<2x1xf32>
    %3011 = vector.broadcast %3010 : vector<2x1xf32> to vector<2x64xf32>
    %3012 = arith.mulf %3011, %2860 : vector<2x64xf32>
    %3013 = arith.addf %3009, %3012 : vector<2x64xf32>
    %3014 = vector.extract_strided_slice %1859 {offsets = [10, 0], sizes = [2, 1], strides = [1, 1]} : vector<16x1xf32> to vector<2x1xf32>
    %3015 = vector.broadcast %3014 : vector<2x1xf32> to vector<2x64xf32>
    %3016 = arith.mulf %3015, %3013 : vector<2x64xf32>
    %3017 = arith.addf %3005, %3016 : vector<2x64xf32>
    %3018 = vector.broadcast %1828 : vector<1x64xf32> to vector<2x64xf32>
    %3019 = arith.mulf %2859, %3018 : vector<2x64xf32>
    %3020 = math.exp %3019 : vector<2x64xf32>
    %3021 = arith.mulf %3020, %2829 : vector<2x64xf32>
    %3022 = vector.extract_strided_slice %1844 {offsets = [10, 0], sizes = [2, 1], strides = [1, 1]} : vector<16x1xf32> to vector<2x1xf32>
    %3023 = vector.broadcast %3022 : vector<2x1xf32> to vector<2x64xf32>
    %3024 = arith.mulf %3023, %2860 : vector<2x64xf32>
    %3025 = arith.addf %3021, %3024 : vector<2x64xf32>
    %3026 = vector.extract_strided_slice %1860 {offsets = [10, 0], sizes = [2, 1], strides = [1, 1]} : vector<16x1xf32> to vector<2x1xf32>
    %3027 = vector.broadcast %3026 : vector<2x1xf32> to vector<2x64xf32>
    %3028 = arith.mulf %3027, %3025 : vector<2x64xf32>
    %3029 = arith.addf %3017, %3028 : vector<2x64xf32>
    %3030 = vector.broadcast %1829 : vector<1x64xf32> to vector<2x64xf32>
    %3031 = arith.mulf %2859, %3030 : vector<2x64xf32>
    %3032 = math.exp %3031 : vector<2x64xf32>
    %3033 = arith.mulf %3032, %2841 : vector<2x64xf32>
    %3034 = vector.extract_strided_slice %1845 {offsets = [10, 0], sizes = [2, 1], strides = [1, 1]} : vector<16x1xf32> to vector<2x1xf32>
    %3035 = vector.broadcast %3034 : vector<2x1xf32> to vector<2x64xf32>
    %3036 = arith.mulf %3035, %2860 : vector<2x64xf32>
    %3037 = arith.addf %3033, %3036 : vector<2x64xf32>
    %3038 = vector.extract_strided_slice %1861 {offsets = [10, 0], sizes = [2, 1], strides = [1, 1]} : vector<16x1xf32> to vector<2x1xf32>
    %3039 = vector.broadcast %3038 : vector<2x1xf32> to vector<2x64xf32>
    %3040 = arith.mulf %3039, %3037 : vector<2x64xf32>
    %3041 = arith.addf %3029, %3040 : vector<2x64xf32>
    %3042 = vector.broadcast %1830 : vector<1x64xf32> to vector<2x64xf32>
    %3043 = arith.mulf %2859, %3042 : vector<2x64xf32>
    %3044 = math.exp %3043 : vector<2x64xf32>
    %3045 = arith.mulf %3044, %2853 : vector<2x64xf32>
    %3046 = vector.extract_strided_slice %1846 {offsets = [10, 0], sizes = [2, 1], strides = [1, 1]} : vector<16x1xf32> to vector<2x1xf32>
    %3047 = vector.broadcast %3046 : vector<2x1xf32> to vector<2x64xf32>
    %3048 = arith.mulf %3047, %2860 : vector<2x64xf32>
    %3049 = arith.addf %3045, %3048 : vector<2x64xf32>
    %3050 = vector.extract_strided_slice %1862 {offsets = [10, 0], sizes = [2, 1], strides = [1, 1]} : vector<16x1xf32> to vector<2x1xf32>
    %3051 = vector.broadcast %3050 : vector<2x1xf32> to vector<2x64xf32>
    %3052 = arith.mulf %3051, %3049 : vector<2x64xf32>
    %3053 = arith.addf %3041, %3052 : vector<2x64xf32>
    %c10_129 = arith.constant 10 : index
    %c0_130 = arith.constant 0 : index
    %3054 = vector.load %arg9[%c10_129, %c0_130] : memref<16x64xf32, #tpu.memory_space<vmem>>, vector<2x64xf32>
    tpu.vector_store %arg9[%c10_129, %c0_130], %3053 {strides = array<i32>} : memref<16x64xf32, #tpu.memory_space<vmem>>, vector<2x64xf32>,
    %3055 = vector.extract_strided_slice %1811 {offsets = [12, 0], sizes = [2, 64], strides = [1, 1]} : vector<16x64xf32> to vector<2x64xf32>
    %3056 = vector.extract_strided_slice %1814 {offsets = [12, 0], sizes = [2, 64], strides = [1, 1]} : vector<16x64xf32> to vector<2x64xf32>
    %cst_131 = arith.constant 0.000000e+00 : f32
    %3057 = vector.broadcast %cst_131 : f32 to vector<2x64xf32>
    %3058 = vector.broadcast %1815 : vector<1x64xf32> to vector<2x64xf32>
    %3059 = arith.mulf %3055, %3058 : vector<2x64xf32>
    %3060 = math.exp %3059 : vector<2x64xf32>
    %3061 = arith.mulf %3060, %2869 : vector<2x64xf32>
    %3062 = vector.extract_strided_slice %1831 {offsets = [12, 0], sizes = [2, 1], strides = [1, 1]} : vector<16x1xf32> to vector<2x1xf32>
    %3063 = vector.broadcast %3062 : vector<2x1xf32> to vector<2x64xf32>
    %3064 = arith.mulf %3063, %3056 : vector<2x64xf32>
    %3065 = arith.addf %3061, %3064 : vector<2x64xf32>
    %3066 = vector.extract_strided_slice %1847 {offsets = [12, 0], sizes = [2, 1], strides = [1, 1]} : vector<16x1xf32> to vector<2x1xf32>
    %3067 = vector.broadcast %3066 : vector<2x1xf32> to vector<2x64xf32>
    %3068 = arith.mulf %3067, %3065 : vector<2x64xf32>
    %3069 = arith.addf %3057, %3068 : vector<2x64xf32>
    %3070 = vector.broadcast %1816 : vector<1x64xf32> to vector<2x64xf32>
    %3071 = arith.mulf %3055, %3070 : vector<2x64xf32>
    %3072 = math.exp %3071 : vector<2x64xf32>
    %3073 = arith.mulf %3072, %2881 : vector<2x64xf32>
    %3074 = vector.extract_strided_slice %1832 {offsets = [12, 0], sizes = [2, 1], strides = [1, 1]} : vector<16x1xf32> to vector<2x1xf32>
    %3075 = vector.broadcast %3074 : vector<2x1xf32> to vector<2x64xf32>
    %3076 = arith.mulf %3075, %3056 : vector<2x64xf32>
    %3077 = arith.addf %3073, %3076 : vector<2x64xf32>
    %3078 = vector.extract_strided_slice %1848 {offsets = [12, 0], sizes = [2, 1], strides = [1, 1]} : vector<16x1xf32> to vector<2x1xf32>
    %3079 = vector.broadcast %3078 : vector<2x1xf32> to vector<2x64xf32>
    %3080 = arith.mulf %3079, %3077 : vector<2x64xf32>
    %3081 = arith.addf %3069, %3080 : vector<2x64xf32>
    %3082 = vector.broadcast %1817 : vector<1x64xf32> to vector<2x64xf32>
    %3083 = arith.mulf %3055, %3082 : vector<2x64xf32>
    %3084 = math.exp %3083 : vector<2x64xf32>
    %3085 = arith.mulf %3084, %2893 : vector<2x64xf32>
    %3086 = vector.extract_strided_slice %1833 {offsets = [12, 0], sizes = [2, 1], strides = [1, 1]} : vector<16x1xf32> to vector<2x1xf32>
    %3087 = vector.broadcast %3086 : vector<2x1xf32> to vector<2x64xf32>
    %3088 = arith.mulf %3087, %3056 : vector<2x64xf32>
    %3089 = arith.addf %3085, %3088 : vector<2x64xf32>
    %3090 = vector.extract_strided_slice %1849 {offsets = [12, 0], sizes = [2, 1], strides = [1, 1]} : vector<16x1xf32> to vector<2x1xf32>
    %3091 = vector.broadcast %3090 : vector<2x1xf32> to vector<2x64xf32>
    %3092 = arith.mulf %3091, %3089 : vector<2x64xf32>
    %3093 = arith.addf %3081, %3092 : vector<2x64xf32>
    %3094 = vector.broadcast %1818 : vector<1x64xf32> to vector<2x64xf32>
    %3095 = arith.mulf %3055, %3094 : vector<2x64xf32>
    %3096 = math.exp %3095 : vector<2x64xf32>
    %3097 = arith.mulf %3096, %2905 : vector<2x64xf32>
    %3098 = vector.extract_strided_slice %1834 {offsets = [12, 0], sizes = [2, 1], strides = [1, 1]} : vector<16x1xf32> to vector<2x1xf32>
    %3099 = vector.broadcast %3098 : vector<2x1xf32> to vector<2x64xf32>
    %3100 = arith.mulf %3099, %3056 : vector<2x64xf32>
    %3101 = arith.addf %3097, %3100 : vector<2x64xf32>
    %3102 = vector.extract_strided_slice %1850 {offsets = [12, 0], sizes = [2, 1], strides = [1, 1]} : vector<16x1xf32> to vector<2x1xf32>
    %3103 = vector.broadcast %3102 : vector<2x1xf32> to vector<2x64xf32>
    %3104 = arith.mulf %3103, %3101 : vector<2x64xf32>
    %3105 = arith.addf %3093, %3104 : vector<2x64xf32>
    %3106 = vector.broadcast %1819 : vector<1x64xf32> to vector<2x64xf32>
    %3107 = arith.mulf %3055, %3106 : vector<2x64xf32>
    %3108 = math.exp %3107 : vector<2x64xf32>
    %3109 = arith.mulf %3108, %2917 : vector<2x64xf32>
    %3110 = vector.extract_strided_slice %1835 {offsets = [12, 0], sizes = [2, 1], strides = [1, 1]} : vector<16x1xf32> to vector<2x1xf32>
    %3111 = vector.broadcast %3110 : vector<2x1xf32> to vector<2x64xf32>
    %3112 = arith.mulf %3111, %3056 : vector<2x64xf32>
    %3113 = arith.addf %3109, %3112 : vector<2x64xf32>
    %3114 = vector.extract_strided_slice %1851 {offsets = [12, 0], sizes = [2, 1], strides = [1, 1]} : vector<16x1xf32> to vector<2x1xf32>
    %3115 = vector.broadcast %3114 : vector<2x1xf32> to vector<2x64xf32>
    %3116 = arith.mulf %3115, %3113 : vector<2x64xf32>
    %3117 = arith.addf %3105, %3116 : vector<2x64xf32>
    %3118 = vector.broadcast %1820 : vector<1x64xf32> to vector<2x64xf32>
    %3119 = arith.mulf %3055, %3118 : vector<2x64xf32>
    %3120 = math.exp %3119 : vector<2x64xf32>
    %3121 = arith.mulf %3120, %2929 : vector<2x64xf32>
    %3122 = vector.extract_strided_slice %1836 {offsets = [12, 0], sizes = [2, 1], strides = [1, 1]} : vector<16x1xf32> to vector<2x1xf32>
    %3123 = vector.broadcast %3122 : vector<2x1xf32> to vector<2x64xf32>
    %3124 = arith.mulf %3123, %3056 : vector<2x64xf32>
    %3125 = arith.addf %3121, %3124 : vector<2x64xf32>
    %3126 = vector.extract_strided_slice %1852 {offsets = [12, 0], sizes = [2, 1], strides = [1, 1]} : vector<16x1xf32> to vector<2x1xf32>
    %3127 = vector.broadcast %3126 : vector<2x1xf32> to vector<2x64xf32>
    %3128 = arith.mulf %3127, %3125 : vector<2x64xf32>
    %3129 = arith.addf %3117, %3128 : vector<2x64xf32>
    %3130 = vector.broadcast %1821 : vector<1x64xf32> to vector<2x64xf32>
    %3131 = arith.mulf %3055, %3130 : vector<2x64xf32>
    %3132 = math.exp %3131 : vector<2x64xf32>
    %3133 = arith.mulf %3132, %2941 : vector<2x64xf32>
    %3134 = vector.extract_strided_slice %1837 {offsets = [12, 0], sizes = [2, 1], strides = [1, 1]} : vector<16x1xf32> to vector<2x1xf32>
    %3135 = vector.broadcast %3134 : vector<2x1xf32> to vector<2x64xf32>
    %3136 = arith.mulf %3135, %3056 : vector<2x64xf32>
    %3137 = arith.addf %3133, %3136 : vector<2x64xf32>
    %3138 = vector.extract_strided_slice %1853 {offsets = [12, 0], sizes = [2, 1], strides = [1, 1]} : vector<16x1xf32> to vector<2x1xf32>
    %3139 = vector.broadcast %3138 : vector<2x1xf32> to vector<2x64xf32>
    %3140 = arith.mulf %3139, %3137 : vector<2x64xf32>
    %3141 = arith.addf %3129, %3140 : vector<2x64xf32>
    %3142 = vector.broadcast %1822 : vector<1x64xf32> to vector<2x64xf32>
    %3143 = arith.mulf %3055, %3142 : vector<2x64xf32>
    %3144 = math.exp %3143 : vector<2x64xf32>
    %3145 = arith.mulf %3144, %2953 : vector<2x64xf32>
    %3146 = vector.extract_strided_slice %1838 {offsets = [12, 0], sizes = [2, 1], strides = [1, 1]} : vector<16x1xf32> to vector<2x1xf32>
    %3147 = vector.broadcast %3146 : vector<2x1xf32> to vector<2x64xf32>
    %3148 = arith.mulf %3147, %3056 : vector<2x64xf32>
    %3149 = arith.addf %3145, %3148 : vector<2x64xf32>
    %3150 = vector.extract_strided_slice %1854 {offsets = [12, 0], sizes = [2, 1], strides = [1, 1]} : vector<16x1xf32> to vector<2x1xf32>
    %3151 = vector.broadcast %3150 : vector<2x1xf32> to vector<2x64xf32>
    %3152 = arith.mulf %3151, %3149 : vector<2x64xf32>
    %3153 = arith.addf %3141, %3152 : vector<2x64xf32>
    %3154 = vector.broadcast %1823 : vector<1x64xf32> to vector<2x64xf32>
    %3155 = arith.mulf %3055, %3154 : vector<2x64xf32>
    %3156 = math.exp %3155 : vector<2x64xf32>
    %3157 = arith.mulf %3156, %2965 : vector<2x64xf32>
    %3158 = vector.extract_strided_slice %1839 {offsets = [12, 0], sizes = [2, 1], strides = [1, 1]} : vector<16x1xf32> to vector<2x1xf32>
    %3159 = vector.broadcast %3158 : vector<2x1xf32> to vector<2x64xf32>
    %3160 = arith.mulf %3159, %3056 : vector<2x64xf32>
    %3161 = arith.addf %3157, %3160 : vector<2x64xf32>
    %3162 = vector.extract_strided_slice %1855 {offsets = [12, 0], sizes = [2, 1], strides = [1, 1]} : vector<16x1xf32> to vector<2x1xf32>
    %3163 = vector.broadcast %3162 : vector<2x1xf32> to vector<2x64xf32>
    %3164 = arith.mulf %3163, %3161 : vector<2x64xf32>
    %3165 = arith.addf %3153, %3164 : vector<2x64xf32>
    %3166 = vector.broadcast %1824 : vector<1x64xf32> to vector<2x64xf32>
    %3167 = arith.mulf %3055, %3166 : vector<2x64xf32>
    %3168 = math.exp %3167 : vector<2x64xf32>
    %3169 = arith.mulf %3168, %2977 : vector<2x64xf32>
    %3170 = vector.extract_strided_slice %1840 {offsets = [12, 0], sizes = [2, 1], strides = [1, 1]} : vector<16x1xf32> to vector<2x1xf32>
    %3171 = vector.broadcast %3170 : vector<2x1xf32> to vector<2x64xf32>
    %3172 = arith.mulf %3171, %3056 : vector<2x64xf32>
    %3173 = arith.addf %3169, %3172 : vector<2x64xf32>
    %3174 = vector.extract_strided_slice %1856 {offsets = [12, 0], sizes = [2, 1], strides = [1, 1]} : vector<16x1xf32> to vector<2x1xf32>
    %3175 = vector.broadcast %3174 : vector<2x1xf32> to vector<2x64xf32>
    %3176 = arith.mulf %3175, %3173 : vector<2x64xf32>
    %3177 = arith.addf %3165, %3176 : vector<2x64xf32>
    %3178 = vector.broadcast %1825 : vector<1x64xf32> to vector<2x64xf32>
    %3179 = arith.mulf %3055, %3178 : vector<2x64xf32>
    %3180 = math.exp %3179 : vector<2x64xf32>
    %3181 = arith.mulf %3180, %2989 : vector<2x64xf32>
    %3182 = vector.extract_strided_slice %1841 {offsets = [12, 0], sizes = [2, 1], strides = [1, 1]} : vector<16x1xf32> to vector<2x1xf32>
    %3183 = vector.broadcast %3182 : vector<2x1xf32> to vector<2x64xf32>
    %3184 = arith.mulf %3183, %3056 : vector<2x64xf32>
    %3185 = arith.addf %3181, %3184 : vector<2x64xf32>
    %3186 = vector.extract_strided_slice %1857 {offsets = [12, 0], sizes = [2, 1], strides = [1, 1]} : vector<16x1xf32> to vector<2x1xf32>
    %3187 = vector.broadcast %3186 : vector<2x1xf32> to vector<2x64xf32>
    %3188 = arith.mulf %3187, %3185 : vector<2x64xf32>
    %3189 = arith.addf %3177, %3188 : vector<2x64xf32>
    %3190 = vector.broadcast %1826 : vector<1x64xf32> to vector<2x64xf32>
    %3191 = arith.mulf %3055, %3190 : vector<2x64xf32>
    %3192 = math.exp %3191 : vector<2x64xf32>
    %3193 = arith.mulf %3192, %3001 : vector<2x64xf32>
    %3194 = vector.extract_strided_slice %1842 {offsets = [12, 0], sizes = [2, 1], strides = [1, 1]} : vector<16x1xf32> to vector<2x1xf32>
    %3195 = vector.broadcast %3194 : vector<2x1xf32> to vector<2x64xf32>
    %3196 = arith.mulf %3195, %3056 : vector<2x64xf32>
    %3197 = arith.addf %3193, %3196 : vector<2x64xf32>
    %3198 = vector.extract_strided_slice %1858 {offsets = [12, 0], sizes = [2, 1], strides = [1, 1]} : vector<16x1xf32> to vector<2x1xf32>
    %3199 = vector.broadcast %3198 : vector<2x1xf32> to vector<2x64xf32>
    %3200 = arith.mulf %3199, %3197 : vector<2x64xf32>
    %3201 = arith.addf %3189, %3200 : vector<2x64xf32>
    %3202 = vector.broadcast %1827 : vector<1x64xf32> to vector<2x64xf32>
    %3203 = arith.mulf %3055, %3202 : vector<2x64xf32>
    %3204 = math.exp %3203 : vector<2x64xf32>
    %3205 = arith.mulf %3204, %3013 : vector<2x64xf32>
    %3206 = vector.extract_strided_slice %1843 {offsets = [12, 0], sizes = [2, 1], strides = [1, 1]} : vector<16x1xf32> to vector<2x1xf32>
    %3207 = vector.broadcast %3206 : vector<2x1xf32> to vector<2x64xf32>
    %3208 = arith.mulf %3207, %3056 : vector<2x64xf32>
    %3209 = arith.addf %3205, %3208 : vector<2x64xf32>
    %3210 = vector.extract_strided_slice %1859 {offsets = [12, 0], sizes = [2, 1], strides = [1, 1]} : vector<16x1xf32> to vector<2x1xf32>
    %3211 = vector.broadcast %3210 : vector<2x1xf32> to vector<2x64xf32>
    %3212 = arith.mulf %3211, %3209 : vector<2x64xf32>
    %3213 = arith.addf %3201, %3212 : vector<2x64xf32>
    %3214 = vector.broadcast %1828 : vector<1x64xf32> to vector<2x64xf32>
    %3215 = arith.mulf %3055, %3214 : vector<2x64xf32>
    %3216 = math.exp %3215 : vector<2x64xf32>
    %3217 = arith.mulf %3216, %3025 : vector<2x64xf32>
    %3218 = vector.extract_strided_slice %1844 {offsets = [12, 0], sizes = [2, 1], strides = [1, 1]} : vector<16x1xf32> to vector<2x1xf32>
    %3219 = vector.broadcast %3218 : vector<2x1xf32> to vector<2x64xf32>
    %3220 = arith.mulf %3219, %3056 : vector<2x64xf32>
    %3221 = arith.addf %3217, %3220 : vector<2x64xf32>
    %3222 = vector.extract_strided_slice %1860 {offsets = [12, 0], sizes = [2, 1], strides = [1, 1]} : vector<16x1xf32> to vector<2x1xf32>
    %3223 = vector.broadcast %3222 : vector<2x1xf32> to vector<2x64xf32>
    %3224 = arith.mulf %3223, %3221 : vector<2x64xf32>
    %3225 = arith.addf %3213, %3224 : vector<2x64xf32>
    %3226 = vector.broadcast %1829 : vector<1x64xf32> to vector<2x64xf32>
    %3227 = arith.mulf %3055, %3226 : vector<2x64xf32>
    %3228 = math.exp %3227 : vector<2x64xf32>
    %3229 = arith.mulf %3228, %3037 : vector<2x64xf32>
    %3230 = vector.extract_strided_slice %1845 {offsets = [12, 0], sizes = [2, 1], strides = [1, 1]} : vector<16x1xf32> to vector<2x1xf32>
    %3231 = vector.broadcast %3230 : vector<2x1xf32> to vector<2x64xf32>
    %3232 = arith.mulf %3231, %3056 : vector<2x64xf32>
    %3233 = arith.addf %3229, %3232 : vector<2x64xf32>
    %3234 = vector.extract_strided_slice %1861 {offsets = [12, 0], sizes = [2, 1], strides = [1, 1]} : vector<16x1xf32> to vector<2x1xf32>
    %3235 = vector.broadcast %3234 : vector<2x1xf32> to vector<2x64xf32>
    %3236 = arith.mulf %3235, %3233 : vector<2x64xf32>
    %3237 = arith.addf %3225, %3236 : vector<2x64xf32>
    %3238 = vector.broadcast %1830 : vector<1x64xf32> to vector<2x64xf32>
    %3239 = arith.mulf %3055, %3238 : vector<2x64xf32>
    %3240 = math.exp %3239 : vector<2x64xf32>
    %3241 = arith.mulf %3240, %3049 : vector<2x64xf32>
    %3242 = vector.extract_strided_slice %1846 {offsets = [12, 0], sizes = [2, 1], strides = [1, 1]} : vector<16x1xf32> to vector<2x1xf32>
    %3243 = vector.broadcast %3242 : vector<2x1xf32> to vector<2x64xf32>
    %3244 = arith.mulf %3243, %3056 : vector<2x64xf32>
    %3245 = arith.addf %3241, %3244 : vector<2x64xf32>
    %3246 = vector.extract_strided_slice %1862 {offsets = [12, 0], sizes = [2, 1], strides = [1, 1]} : vector<16x1xf32> to vector<2x1xf32>
    %3247 = vector.broadcast %3246 : vector<2x1xf32> to vector<2x64xf32>
    %3248 = arith.mulf %3247, %3245 : vector<2x64xf32>
    %3249 = arith.addf %3237, %3248 : vector<2x64xf32>
    %c12_132 = arith.constant 12 : index
    %c0_133 = arith.constant 0 : index
    %3250 = vector.load %arg9[%c12_132, %c0_133] : memref<16x64xf32, #tpu.memory_space<vmem>>, vector<2x64xf32>
    tpu.vector_store %arg9[%c12_132, %c0_133], %3249 {strides = array<i32>} : memref<16x64xf32, #tpu.memory_space<vmem>>, vector<2x64xf32>,
    %3251 = vector.extract_strided_slice %1811 {offsets = [14, 0], sizes = [2, 64], strides = [1, 1]} : vector<16x64xf32> to vector<2x64xf32>
    %3252 = vector.extract_strided_slice %1814 {offsets = [14, 0], sizes = [2, 64], strides = [1, 1]} : vector<16x64xf32> to vector<2x64xf32>
    %cst_134 = arith.constant 0.000000e+00 : f32
    %3253 = vector.broadcast %cst_134 : f32 to vector<2x64xf32>
    %3254 = vector.broadcast %1815 : vector<1x64xf32> to vector<2x64xf32>
    %3255 = arith.mulf %3251, %3254 : vector<2x64xf32>
    %3256 = math.exp %3255 : vector<2x64xf32>
    %3257 = arith.mulf %3256, %3065 : vector<2x64xf32>
    %3258 = vector.extract_strided_slice %1831 {offsets = [14, 0], sizes = [2, 1], strides = [1, 1]} : vector<16x1xf32> to vector<2x1xf32>
    %3259 = vector.broadcast %3258 : vector<2x1xf32> to vector<2x64xf32>
    %3260 = arith.mulf %3259, %3252 : vector<2x64xf32>
    %3261 = arith.addf %3257, %3260 : vector<2x64xf32>
    %3262 = vector.extract_strided_slice %1847 {offsets = [14, 0], sizes = [2, 1], strides = [1, 1]} : vector<16x1xf32> to vector<2x1xf32>
    %3263 = vector.broadcast %3262 : vector<2x1xf32> to vector<2x64xf32>
    %3264 = arith.mulf %3263, %3261 : vector<2x64xf32>
    %3265 = arith.addf %3253, %3264 : vector<2x64xf32>
    %3266 = vector.broadcast %1816 : vector<1x64xf32> to vector<2x64xf32>
    %3267 = arith.mulf %3251, %3266 : vector<2x64xf32>
    %3268 = math.exp %3267 : vector<2x64xf32>
    %3269 = arith.mulf %3268, %3077 : vector<2x64xf32>
    %3270 = vector.extract_strided_slice %1832 {offsets = [14, 0], sizes = [2, 1], strides = [1, 1]} : vector<16x1xf32> to vector<2x1xf32>
    %3271 = vector.broadcast %3270 : vector<2x1xf32> to vector<2x64xf32>
    %3272 = arith.mulf %3271, %3252 : vector<2x64xf32>
    %3273 = arith.addf %3269, %3272 : vector<2x64xf32>
    %3274 = vector.extract_strided_slice %1848 {offsets = [14, 0], sizes = [2, 1], strides = [1, 1]} : vector<16x1xf32> to vector<2x1xf32>
    %3275 = vector.broadcast %3274 : vector<2x1xf32> to vector<2x64xf32>
    %3276 = arith.mulf %3275, %3273 : vector<2x64xf32>
    %3277 = arith.addf %3265, %3276 : vector<2x64xf32>
    %3278 = vector.broadcast %1817 : vector<1x64xf32> to vector<2x64xf32>
    %3279 = arith.mulf %3251, %3278 : vector<2x64xf32>
    %3280 = math.exp %3279 : vector<2x64xf32>
    %3281 = arith.mulf %3280, %3089 : vector<2x64xf32>
    %3282 = vector.extract_strided_slice %1833 {offsets = [14, 0], sizes = [2, 1], strides = [1, 1]} : vector<16x1xf32> to vector<2x1xf32>
    %3283 = vector.broadcast %3282 : vector<2x1xf32> to vector<2x64xf32>
    %3284 = arith.mulf %3283, %3252 : vector<2x64xf32>
    %3285 = arith.addf %3281, %3284 : vector<2x64xf32>
    %3286 = vector.extract_strided_slice %1849 {offsets = [14, 0], sizes = [2, 1], strides = [1, 1]} : vector<16x1xf32> to vector<2x1xf32>
    %3287 = vector.broadcast %3286 : vector<2x1xf32> to vector<2x64xf32>
    %3288 = arith.mulf %3287, %3285 : vector<2x64xf32>
    %3289 = arith.addf %3277, %3288 : vector<2x64xf32>
    %3290 = vector.broadcast %1818 : vector<1x64xf32> to vector<2x64xf32>
    %3291 = arith.mulf %3251, %3290 : vector<2x64xf32>
    %3292 = math.exp %3291 : vector<2x64xf32>
    %3293 = arith.mulf %3292, %3101 : vector<2x64xf32>
    %3294 = vector.extract_strided_slice %1834 {offsets = [14, 0], sizes = [2, 1], strides = [1, 1]} : vector<16x1xf32> to vector<2x1xf32>
    %3295 = vector.broadcast %3294 : vector<2x1xf32> to vector<2x64xf32>
    %3296 = arith.mulf %3295, %3252 : vector<2x64xf32>
    %3297 = arith.addf %3293, %3296 : vector<2x64xf32>
    %3298 = vector.extract_strided_slice %1850 {offsets = [14, 0], sizes = [2, 1], strides = [1, 1]} : vector<16x1xf32> to vector<2x1xf32>
    %3299 = vector.broadcast %3298 : vector<2x1xf32> to vector<2x64xf32>
    %3300 = arith.mulf %3299, %3297 : vector<2x64xf32>
    %3301 = arith.addf %3289, %3300 : vector<2x64xf32>
    %3302 = vector.broadcast %1819 : vector<1x64xf32> to vector<2x64xf32>
    %3303 = arith.mulf %3251, %3302 : vector<2x64xf32>
    %3304 = math.exp %3303 : vector<2x64xf32>
    %3305 = arith.mulf %3304, %3113 : vector<2x64xf32>
    %3306 = vector.extract_strided_slice %1835 {offsets = [14, 0], sizes = [2, 1], strides = [1, 1]} : vector<16x1xf32> to vector<2x1xf32>
    %3307 = vector.broadcast %3306 : vector<2x1xf32> to vector<2x64xf32>
    %3308 = arith.mulf %3307, %3252 : vector<2x64xf32>
    %3309 = arith.addf %3305, %3308 : vector<2x64xf32>
    %3310 = vector.extract_strided_slice %1851 {offsets = [14, 0], sizes = [2, 1], strides = [1, 1]} : vector<16x1xf32> to vector<2x1xf32>
    %3311 = vector.broadcast %3310 : vector<2x1xf32> to vector<2x64xf32>
    %3312 = arith.mulf %3311, %3309 : vector<2x64xf32>
    %3313 = arith.addf %3301, %3312 : vector<2x64xf32>
    %3314 = vector.broadcast %1820 : vector<1x64xf32> to vector<2x64xf32>
    %3315 = arith.mulf %3251, %3314 : vector<2x64xf32>
    %3316 = math.exp %3315 : vector<2x64xf32>
    %3317 = arith.mulf %3316, %3125 : vector<2x64xf32>
    %3318 = vector.extract_strided_slice %1836 {offsets = [14, 0], sizes = [2, 1], strides = [1, 1]} : vector<16x1xf32> to vector<2x1xf32>
    %3319 = vector.broadcast %3318 : vector<2x1xf32> to vector<2x64xf32>
    %3320 = arith.mulf %3319, %3252 : vector<2x64xf32>
    %3321 = arith.addf %3317, %3320 : vector<2x64xf32>
    %3322 = vector.extract_strided_slice %1852 {offsets = [14, 0], sizes = [2, 1], strides = [1, 1]} : vector<16x1xf32> to vector<2x1xf32>
    %3323 = vector.broadcast %3322 : vector<2x1xf32> to vector<2x64xf32>
    %3324 = arith.mulf %3323, %3321 : vector<2x64xf32>
    %3325 = arith.addf %3313, %3324 : vector<2x64xf32>
    %3326 = vector.broadcast %1821 : vector<1x64xf32> to vector<2x64xf32>
    %3327 = arith.mulf %3251, %3326 : vector<2x64xf32>
    %3328 = math.exp %3327 : vector<2x64xf32>
    %3329 = arith.mulf %3328, %3137 : vector<2x64xf32>
    %3330 = vector.extract_strided_slice %1837 {offsets = [14, 0], sizes = [2, 1], strides = [1, 1]} : vector<16x1xf32> to vector<2x1xf32>
    %3331 = vector.broadcast %3330 : vector<2x1xf32> to vector<2x64xf32>
    %3332 = arith.mulf %3331, %3252 : vector<2x64xf32>
    %3333 = arith.addf %3329, %3332 : vector<2x64xf32>
    %3334 = vector.extract_strided_slice %1853 {offsets = [14, 0], sizes = [2, 1], strides = [1, 1]} : vector<16x1xf32> to vector<2x1xf32>
    %3335 = vector.broadcast %3334 : vector<2x1xf32> to vector<2x64xf32>
    %3336 = arith.mulf %3335, %3333 : vector<2x64xf32>
    %3337 = arith.addf %3325, %3336 : vector<2x64xf32>
    %3338 = vector.broadcast %1822 : vector<1x64xf32> to vector<2x64xf32>
    %3339 = arith.mulf %3251, %3338 : vector<2x64xf32>
    %3340 = math.exp %3339 : vector<2x64xf32>
    %3341 = arith.mulf %3340, %3149 : vector<2x64xf32>
    %3342 = vector.extract_strided_slice %1838 {offsets = [14, 0], sizes = [2, 1], strides = [1, 1]} : vector<16x1xf32> to vector<2x1xf32>
    %3343 = vector.broadcast %3342 : vector<2x1xf32> to vector<2x64xf32>
    %3344 = arith.mulf %3343, %3252 : vector<2x64xf32>
    %3345 = arith.addf %3341, %3344 : vector<2x64xf32>
    %3346 = vector.extract_strided_slice %1854 {offsets = [14, 0], sizes = [2, 1], strides = [1, 1]} : vector<16x1xf32> to vector<2x1xf32>
    %3347 = vector.broadcast %3346 : vector<2x1xf32> to vector<2x64xf32>
    %3348 = arith.mulf %3347, %3345 : vector<2x64xf32>
    %3349 = arith.addf %3337, %3348 : vector<2x64xf32>
    %3350 = vector.broadcast %1823 : vector<1x64xf32> to vector<2x64xf32>
    %3351 = arith.mulf %3251, %3350 : vector<2x64xf32>
    %3352 = math.exp %3351 : vector<2x64xf32>
    %3353 = arith.mulf %3352, %3161 : vector<2x64xf32>
    %3354 = vector.extract_strided_slice %1839 {offsets = [14, 0], sizes = [2, 1], strides = [1, 1]} : vector<16x1xf32> to vector<2x1xf32>
    %3355 = vector.broadcast %3354 : vector<2x1xf32> to vector<2x64xf32>
    %3356 = arith.mulf %3355, %3252 : vector<2x64xf32>
    %3357 = arith.addf %3353, %3356 : vector<2x64xf32>
    %3358 = vector.extract_strided_slice %1855 {offsets = [14, 0], sizes = [2, 1], strides = [1, 1]} : vector<16x1xf32> to vector<2x1xf32>
    %3359 = vector.broadcast %3358 : vector<2x1xf32> to vector<2x64xf32>
    %3360 = arith.mulf %3359, %3357 : vector<2x64xf32>
    %3361 = arith.addf %3349, %3360 : vector<2x64xf32>
    %3362 = vector.broadcast %1824 : vector<1x64xf32> to vector<2x64xf32>
    %3363 = arith.mulf %3251, %3362 : vector<2x64xf32>
    %3364 = math.exp %3363 : vector<2x64xf32>
    %3365 = arith.mulf %3364, %3173 : vector<2x64xf32>
    %3366 = vector.extract_strided_slice %1840 {offsets = [14, 0], sizes = [2, 1], strides = [1, 1]} : vector<16x1xf32> to vector<2x1xf32>
    %3367 = vector.broadcast %3366 : vector<2x1xf32> to vector<2x64xf32>
    %3368 = arith.mulf %3367, %3252 : vector<2x64xf32>
    %3369 = arith.addf %3365, %3368 : vector<2x64xf32>
    %3370 = vector.extract_strided_slice %1856 {offsets = [14, 0], sizes = [2, 1], strides = [1, 1]} : vector<16x1xf32> to vector<2x1xf32>
    %3371 = vector.broadcast %3370 : vector<2x1xf32> to vector<2x64xf32>
    %3372 = arith.mulf %3371, %3369 : vector<2x64xf32>
    %3373 = arith.addf %3361, %3372 : vector<2x64xf32>
    %3374 = vector.broadcast %1825 : vector<1x64xf32> to vector<2x64xf32>
    %3375 = arith.mulf %3251, %3374 : vector<2x64xf32>
    %3376 = math.exp %3375 : vector<2x64xf32>
    %3377 = arith.mulf %3376, %3185 : vector<2x64xf32>
    %3378 = vector.extract_strided_slice %1841 {offsets = [14, 0], sizes = [2, 1], strides = [1, 1]} : vector<16x1xf32> to vector<2x1xf32>
    %3379 = vector.broadcast %3378 : vector<2x1xf32> to vector<2x64xf32>
    %3380 = arith.mulf %3379, %3252 : vector<2x64xf32>
    %3381 = arith.addf %3377, %3380 : vector<2x64xf32>
    %3382 = vector.extract_strided_slice %1857 {offsets = [14, 0], sizes = [2, 1], strides = [1, 1]} : vector<16x1xf32> to vector<2x1xf32>
    %3383 = vector.broadcast %3382 : vector<2x1xf32> to vector<2x64xf32>
    %3384 = arith.mulf %3383, %3381 : vector<2x64xf32>
    %3385 = arith.addf %3373, %3384 : vector<2x64xf32>
    %3386 = vector.broadcast %1826 : vector<1x64xf32> to vector<2x64xf32>
    %3387 = arith.mulf %3251, %3386 : vector<2x64xf32>
    %3388 = math.exp %3387 : vector<2x64xf32>
    %3389 = arith.mulf %3388, %3197 : vector<2x64xf32>
    %3390 = vector.extract_strided_slice %1842 {offsets = [14, 0], sizes = [2, 1], strides = [1, 1]} : vector<16x1xf32> to vector<2x1xf32>
    %3391 = vector.broadcast %3390 : vector<2x1xf32> to vector<2x64xf32>
    %3392 = arith.mulf %3391, %3252 : vector<2x64xf32>
    %3393 = arith.addf %3389, %3392 : vector<2x64xf32>
    %3394 = vector.extract_strided_slice %1858 {offsets = [14, 0], sizes = [2, 1], strides = [1, 1]} : vector<16x1xf32> to vector<2x1xf32>
    %3395 = vector.broadcast %3394 : vector<2x1xf32> to vector<2x64xf32>
    %3396 = arith.mulf %3395, %3393 : vector<2x64xf32>
    %3397 = arith.addf %3385, %3396 : vector<2x64xf32>
    %3398 = vector.broadcast %1827 : vector<1x64xf32> to vector<2x64xf32>
    %3399 = arith.mulf %3251, %3398 : vector<2x64xf32>
    %3400 = math.exp %3399 : vector<2x64xf32>
    %3401 = arith.mulf %3400, %3209 : vector<2x64xf32>
    %3402 = vector.extract_strided_slice %1843 {offsets = [14, 0], sizes = [2, 1], strides = [1, 1]} : vector<16x1xf32> to vector<2x1xf32>
    %3403 = vector.broadcast %3402 : vector<2x1xf32> to vector<2x64xf32>
    %3404 = arith.mulf %3403, %3252 : vector<2x64xf32>
    %3405 = arith.addf %3401, %3404 : vector<2x64xf32>
    %3406 = vector.extract_strided_slice %1859 {offsets = [14, 0], sizes = [2, 1], strides = [1, 1]} : vector<16x1xf32> to vector<2x1xf32>
    %3407 = vector.broadcast %3406 : vector<2x1xf32> to vector<2x64xf32>
    %3408 = arith.mulf %3407, %3405 : vector<2x64xf32>
    %3409 = arith.addf %3397, %3408 : vector<2x64xf32>
    %3410 = vector.broadcast %1828 : vector<1x64xf32> to vector<2x64xf32>
    %3411 = arith.mulf %3251, %3410 : vector<2x64xf32>
    %3412 = math.exp %3411 : vector<2x64xf32>
    %3413 = arith.mulf %3412, %3221 : vector<2x64xf32>
    %3414 = vector.extract_strided_slice %1844 {offsets = [14, 0], sizes = [2, 1], strides = [1, 1]} : vector<16x1xf32> to vector<2x1xf32>
    %3415 = vector.broadcast %3414 : vector<2x1xf32> to vector<2x64xf32>
    %3416 = arith.mulf %3415, %3252 : vector<2x64xf32>
    %3417 = arith.addf %3413, %3416 : vector<2x64xf32>
    %3418 = vector.extract_strided_slice %1860 {offsets = [14, 0], sizes = [2, 1], strides = [1, 1]} : vector<16x1xf32> to vector<2x1xf32>
    %3419 = vector.broadcast %3418 : vector<2x1xf32> to vector<2x64xf32>
    %3420 = arith.mulf %3419, %3417 : vector<2x64xf32>
    %3421 = arith.addf %3409, %3420 : vector<2x64xf32>
    %3422 = vector.broadcast %1829 : vector<1x64xf32> to vector<2x64xf32>
    %3423 = arith.mulf %3251, %3422 : vector<2x64xf32>
    %3424 = math.exp %3423 : vector<2x64xf32>
    %3425 = arith.mulf %3424, %3233 : vector<2x64xf32>
    %3426 = vector.extract_strided_slice %1845 {offsets = [14, 0], sizes = [2, 1], strides = [1, 1]} : vector<16x1xf32> to vector<2x1xf32>
    %3427 = vector.broadcast %3426 : vector<2x1xf32> to vector<2x64xf32>
    %3428 = arith.mulf %3427, %3252 : vector<2x64xf32>
    %3429 = arith.addf %3425, %3428 : vector<2x64xf32>
    %3430 = vector.extract_strided_slice %1861 {offsets = [14, 0], sizes = [2, 1], strides = [1, 1]} : vector<16x1xf32> to vector<2x1xf32>
    %3431 = vector.broadcast %3430 : vector<2x1xf32> to vector<2x64xf32>
    %3432 = arith.mulf %3431, %3429 : vector<2x64xf32>
    %3433 = arith.addf %3421, %3432 : vector<2x64xf32>
    %3434 = vector.broadcast %1830 : vector<1x64xf32> to vector<2x64xf32>
    %3435 = arith.mulf %3251, %3434 : vector<2x64xf32>
    %3436 = math.exp %3435 : vector<2x64xf32>
    %3437 = arith.mulf %3436, %3245 : vector<2x64xf32>
    %3438 = vector.extract_strided_slice %1846 {offsets = [14, 0], sizes = [2, 1], strides = [1, 1]} : vector<16x1xf32> to vector<2x1xf32>
    %3439 = vector.broadcast %3438 : vector<2x1xf32> to vector<2x64xf32>
    %3440 = arith.mulf %3439, %3252 : vector<2x64xf32>
    %3441 = arith.addf %3437, %3440 : vector<2x64xf32>
    %3442 = vector.extract_strided_slice %1862 {offsets = [14, 0], sizes = [2, 1], strides = [1, 1]} : vector<16x1xf32> to vector<2x1xf32>
    %3443 = vector.broadcast %3442 : vector<2x1xf32> to vector<2x64xf32>
    %3444 = arith.mulf %3443, %3441 : vector<2x64xf32>
    %3445 = arith.addf %3433, %3444 : vector<2x64xf32>
    %c14_135 = arith.constant 14 : index
    %c0_136 = arith.constant 0 : index
    %3446 = vector.load %arg9[%c14_135, %c0_136] : memref<16x64xf32, #tpu.memory_space<vmem>>, vector<2x64xf32>
    tpu.vector_store %arg9[%c14_135, %c0_136], %3445 {strides = array<i32>} : memref<16x64xf32, #tpu.memory_space<vmem>>, vector<2x64xf32>,
    %c0_137 = arith.constant 0 : index
    %c0_138 = arith.constant 0 : index
    %3447 = vector.load %arg9[%c0_137, %c0_138] : memref<16x64xf32, #tpu.memory_space<vmem>>, vector<16x64xf32>
    %3448 = vector.broadcast %1745 : vector<1x64xf32> to vector<16x64xf32>
    %3449 = arith.mulf %1795, %3448 : vector<16x64xf32>
    %3450 = arith.addf %3447, %3449 : vector<16x64xf32>
    %cst_139 = arith.constant 0.000000e+00 : f32
    %3451 = vector.broadcast %cst_139 : f32 to vector<16x64xf32>
    %3452 = arith.subf %3451, %1761 : vector<16x64xf32>
    %3453 = math.exp %3452 : vector<16x64xf32>
    %cst_140 = arith.constant 1.000000e+00 : f32
    %3454 = vector.broadcast %cst_140 : f32 to vector<16x64xf32>
    %3455 = arith.addf %3454, %3453 : vector<16x64xf32>
    %cst_141 = arith.constant 1.000000e+00 : f32
    %3456 = vector.broadcast %cst_141 : f32 to vector<16x64xf32>
    %3457 = arith.divf %3456, %3455 : vector<16x64xf32>
    %3458 = arith.mulf %1761, %3457 : vector<16x64xf32>
    %3459 = arith.mulf %3450, %3458 : vector<16x64xf32>
    %3460 = arith.truncf %3459 : vector<16x64xf32> to vector<16x64xbf16>
    %3461 = vector.extract_strided_slice %1740 {offsets = [0, 96], sizes = [64, 32], strides = [1, 1]} : vector<64x128xbf16> to vector<64x32xbf16>
    %cst_142 = arith.constant dense<0.000000e+00> : vector<16x32xf32>
    %3462 = tpu.matmul %3460, %3461, %cst_142 {dimension_numbers = #tpu.dot_dimension_numbers<[1], [0], [0], [1], [0, 0, 1, 1], [], []>} : vector<16x64xbf16>, vector<64x32xbf16>, vector<16x32xf32> -> vector<16x32xf32>
    %3463 = arith.addf %1732, %3462 : vector<16x32xf32>
    %3464 = vector.extract_strided_slice %3463 {offsets = [0, 0], sizes = [2, 32], strides = [1, 1]} : vector<16x32xf32> to vector<2x32xf32>
    %3465 = vector.extract_strided_slice %3463 {offsets = [2, 0], sizes = [2, 32], strides = [1, 1]} : vector<16x32xf32> to vector<2x32xf32>
    %3466 = arith.addf %3464, %3465 : vector<2x32xf32>
    %3467 = vector.extract_strided_slice %3463 {offsets = [4, 0], sizes = [2, 32], strides = [1, 1]} : vector<16x32xf32> to vector<2x32xf32>
    %3468 = arith.addf %3466, %3467 : vector<2x32xf32>
    %3469 = vector.extract_strided_slice %3463 {offsets = [6, 0], sizes = [2, 32], strides = [1, 1]} : vector<16x32xf32> to vector<2x32xf32>
    %3470 = arith.addf %3468, %3469 : vector<2x32xf32>
    %3471 = vector.extract_strided_slice %3463 {offsets = [8, 0], sizes = [2, 32], strides = [1, 1]} : vector<16x32xf32> to vector<2x32xf32>
    %3472 = arith.addf %3470, %3471 : vector<2x32xf32>
    %3473 = vector.extract_strided_slice %3463 {offsets = [10, 0], sizes = [2, 32], strides = [1, 1]} : vector<16x32xf32> to vector<2x32xf32>
    %3474 = arith.addf %3472, %3473 : vector<2x32xf32>
    %3475 = vector.extract_strided_slice %3463 {offsets = [12, 0], sizes = [2, 32], strides = [1, 1]} : vector<16x32xf32> to vector<2x32xf32>
    %3476 = arith.addf %3474, %3475 : vector<2x32xf32>
    %3477 = vector.extract_strided_slice %3463 {offsets = [14, 0], sizes = [2, 32], strides = [1, 1]} : vector<16x32xf32> to vector<2x32xf32>
    %3478 = arith.addf %3476, %3477 : vector<2x32xf32>
    %cst_143 = arith.constant 1.250000e-01 : f32
    %3479 = vector.broadcast %cst_143 : f32 to vector<2x32xf32>
    %3480 = arith.mulf %3478, %3479 : vector<2x32xf32>
    %cst_144 = arith.constant dense<0.000000e+00> : vector<2xf32>
    %3481 = vector.multi_reduction <add>, %3480, %cst_144 [1] : vector<2x32xf32> to vector<2xf32>
    %3482 = vector.shape_cast %3481 : vector<2xf32> to vector<2x1xf32>
    %cst_145 = arith.constant 3.200000e+01 : f32
    %3483 = vector.broadcast %cst_145 : f32 to vector<2x1xf32>
    %3484 = arith.divf %3482, %3483 : vector<2x1xf32>
    %3485 = vector.broadcast %3484 : vector<2x1xf32> to vector<2x32xf32>
    %3486 = arith.subf %3480, %3485 : vector<2x32xf32>
    %3487 = vector.broadcast %3484 : vector<2x1xf32> to vector<2x32xf32>
    %3488 = arith.subf %3480, %3487 : vector<2x32xf32>
    %3489 = arith.mulf %3486, %3488 : vector<2x32xf32>
    %cst_146 = arith.constant dense<0.000000e+00> : vector<2xf32>
    %3490 = vector.multi_reduction <add>, %3489, %cst_146 [1] : vector<2x32xf32> to vector<2xf32>
    %3491 = vector.shape_cast %3490 : vector<2xf32> to vector<2x1xf32>
    %cst_147 = arith.constant 3.200000e+01 : f32
    %3492 = vector.broadcast %cst_147 : f32 to vector<2x1xf32>
    %3493 = arith.divf %3491, %3492 : vector<2x1xf32>
    %3494 = vector.broadcast %3484 : vector<2x1xf32> to vector<2x32xf32>
    %3495 = arith.subf %3480, %3494 : vector<2x32xf32>
    %cst_148 = arith.constant 9.99999974E-6 : f32
    %3496 = vector.broadcast %cst_148 : f32 to vector<2x1xf32>
    %3497 = arith.addf %3493, %3496 : vector<2x1xf32>
    %3498 = math.rsqrt %3497 : vector<2x1xf32>
    %3499 = vector.broadcast %3498 : vector<2x1xf32> to vector<2x32xf32>
    %3500 = arith.mulf %3495, %3499 : vector<2x32xf32>
    %c0_149 = arith.constant 0 : index
    %c0_150 = arith.constant 0 : index
    %3501 = vector.load %arg7[%c0_149, %c0_150] : memref<4x32xf32, #tpu.memory_space<vmem>>, vector<1x32xf32>
    %3502 = vector.broadcast %3501 : vector<1x32xf32> to vector<2x32xf32>
    %3503 = arith.mulf %3500, %3502 : vector<2x32xf32>
    %c1_151 = arith.constant 1 : index
    %c0_152 = arith.constant 0 : index
    %3504 = vector.load %arg7[%c1_151, %c0_152] : memref<4x32xf32, #tpu.memory_space<vmem>>, vector<1x32xf32>
    %3505 = vector.broadcast %3504 : vector<1x32xf32> to vector<2x32xf32>
    %3506 = arith.addf %3503, %3505 : vector<2x32xf32>
    %c2_153 = arith.constant 2 : index
    %c0_154 = arith.constant 0 : index
    %3507 = vector.load %arg7[%c2_153, %c0_154] : memref<4x32xf32, #tpu.memory_space<vmem>>, vector<1x32xf32>
    %3508 = vector.broadcast %3507 : vector<1x32xf32> to vector<2x32xf32>
    %3509 = arith.mulf %3506, %3508 : vector<2x32xf32>
    %cst_155 = arith.constant dense<0.000000e+00> : vector<2xf32>
    %3510 = vector.multi_reduction <add>, %3509, %cst_155 [1] : vector<2x32xf32> to vector<2xf32>
    %3511 = vector.shape_cast %3510 : vector<2xf32> to vector<2x1xf32>
    %c3 = arith.constant 3 : index
    %c0_156 = arith.constant 0 : index
    %3512 = vector.load %arg7[%c3, %c0_156] : memref<4x32xf32, #tpu.memory_space<vmem>>, vector<1x1xf32>
    %3513 = vector.broadcast %3512 : vector<1x1xf32> to vector<2x1xf32>
    %3514 = arith.addf %3511, %3513 : vector<2x1xf32>
    %c0_157 = arith.constant 0 : index
    %c0_158 = arith.constant 0 : index
    %3515 = vector.load %arg8[%c0_157, %c0_158] : memref<2x1xf32, #tpu.memory_space<vmem>>, vector<2x1xf32>
    tpu.vector_store %arg8[%c0_157, %c0_158], %3514 {strides = array<i32>} : memref<2x1xf32, #tpu.memory_space<vmem>>, vector<2x1xf32>,
    return
  }
  func.func @transform_0(%arg0: i32) -> (i32, i32, i32) {
    %c0_i32 = arith.constant 0 : i32
    %c0_i32_0 = arith.constant 0 : i32
    %c0_i32_1 = arith.constant 0 : i32
    return %arg0, %c0_i32, %c0_i32_0 : i32, i32, i32
  }
  func.func @transform_1(%arg0: i32) -> (i32, i32, i32) {
    %c0_i32 = arith.constant 0 : i32
    %c0_i32_0 = arith.constant 0 : i32
    %c0_i32_1 = arith.constant 0 : i32
    %c0_i32_2 = arith.constant 0 : i32
    return %c0_i32, %c0_i32_0, %c0_i32_1 : i32, i32, i32
  }
  func.func @transform_2(%arg0: i32) -> (i32, i32, i32) {
    %c0_i32 = arith.constant 0 : i32
    %c0_i32_0 = arith.constant 0 : i32
    %c0_i32_1 = arith.constant 0 : i32
    %c0_i32_2 = arith.constant 0 : i32
    return %c0_i32, %c0_i32_0, %c0_i32_1 : i32, i32, i32
  }
  func.func @transform_3(%arg0: i32) -> (i32, i32, i32) {
    %c0_i32 = arith.constant 0 : i32
    %c0_i32_0 = arith.constant 0 : i32
    %c0_i32_1 = arith.constant 0 : i32
    %c0_i32_2 = arith.constant 0 : i32
    return %c0_i32, %c0_i32_0, %c0_i32_1 : i32, i32, i32
  }
  func.func @transform_4(%arg0: i32) -> (i32, i32, i32) {
    %c0_i32 = arith.constant 0 : i32
    %c0_i32_0 = arith.constant 0 : i32
    %c0_i32_1 = arith.constant 0 : i32
    %c0_i32_2 = arith.constant 0 : i32
    return %c0_i32, %c0_i32_0, %c0_i32_1 : i32, i32, i32
  }
  func.func @transform_5(%arg0: i32) -> (i32, i32, i32) {
    %c0_i32 = arith.constant 0 : i32
    %c0_i32_0 = arith.constant 0 : i32
    %c0_i32_1 = arith.constant 0 : i32
    %c0_i32_2 = arith.constant 0 : i32
    return %c0_i32, %c0_i32_0, %c0_i32_1 : i32, i32, i32
  }
  func.func @transform_6(%arg0: i32) -> (i32, i32) {
    %c0_i32 = arith.constant 0 : i32
    %c0_i32_0 = arith.constant 0 : i32
    %c0_i32_1 = arith.constant 0 : i32
    return %c0_i32, %c0_i32_0 : i32, i32
  }
  func.func @transform_7(%arg0: i32) -> (i32, i32) {
    %c0_i32 = arith.constant 0 : i32
    %c0_i32_0 = arith.constant 0 : i32
    return %arg0, %c0_i32 : i32, i32
  }
}

</mosaic_0001>

<llo_original>
// kernel: forward.1
$region0: #{forward.1}
  #allocation0 [shape = 'u32[]', space=smem, size = 0x4, offset = 0x4, fixed_abs, tag = 'smem constant byte address 0x4 - core index']
  #allocation1 [shape = 'u32[144,128]{1,0:T(1,128)}', space=vmem, size = 0x12000, scoped, tag = 'internal scratch']
  #allocation2 [shape = 'f32[16,64]{1,0:T(8,128)}', space=vmem, size = 0x2000, scoped, tag = 'scratch operand']
  %s0 = inlined_call_operand.vmem [shape: f32[1,16,32], index: 0, kind: input, shape index: {}]
  %s1 = inlined_call_operand.vmem [shape: f32[2,1,32], index: 1, kind: input, shape index: {}]
  %s2 = inlined_call_operand.vmem [shape: bf16[2,32,128], index: 2, kind: input, shape index: {}]
  %s3 = inlined_call_operand.vmem [shape: f32[2,8,64], index: 3, kind: input, shape index: {}]
  %s4 = inlined_call_operand.vmem [shape: bf16[2,64,128], index: 4, kind: input, shape index: {}]
  %s5 = inlined_call_operand.vmem [shape: f32[2,16,64], index: 5, kind: input, shape index: {}]
  %s6 = inlined_call_operand.vmem [shape: f32[4,32], index: 6, kind: input, shape index: {}]
  %s7 = inlined_call_operand.vmem [shape: f32[2,1], index: 7, kind: output, shape index: {}]
  %s8 = sld [smem:[#allocation0]]
  $region38: #{forward.1} parent=0
    _
  %s10 = ssub.s32 1, %s8
  %s11 = scalar_select 0, %s10, %s8
  // Predicated region
  $region2: #{forward.1} parent=0 // pred_check
    _
  $region3: #{forward.1} parent=0 // pred_check_branch
    %13 = sbr.rel (0) target = $region5
  $region4: #{forward.1} parent=0 // pred_region
    _
  $region5: #{forward.1} parent=0 // pred_fallthru
    _
  // Predicated region
  $region6: #{forward.1} parent=0 // pred_check
    _
  $region7: #{forward.1} parent=0 // pred_check_branch
    %15 = sbr.rel (0) target = $region9
  $region8: #{forward.1} parent=0 // pred_region
    _
  $region9: #{forward.1} parent=0 // pred_fallthru
    _
  // Predicated region
  $region10: #{forward.1} parent=0 // pred_check
    _
  $region11: #{forward.1} parent=0 // pred_check_branch
    %17 = sbr.rel (0) target = $region13
  $region12: #{forward.1} parent=0 // pred_region
    _
  $region13: #{forward.1} parent=0 // pred_fallthru
    _
  // Predicated region
  $region14: #{forward.1} parent=0 // pred_check
    _
  $region15: #{forward.1} parent=0 // pred_check_branch
    %19 = sbr.rel (0) target = $region17
  $region16: #{forward.1} parent=0 // pred_region
    _
  $region17: #{forward.1} parent=0 // pred_fallthru
    _
  // Predicated region
  $region18: #{forward.1} parent=0 // pred_check
    _
  $region19: #{forward.1} parent=0 // pred_check_branch
    %21 = sbr.rel (0) target = $region21
  $region20: #{forward.1} parent=0 // pred_region
    _
  $region21: #{forward.1} parent=0 // pred_fallthru
    _
  // Predicated region
  $region22: #{forward.1} parent=0 // pred_check
    _
  $region23: #{forward.1} parent=0 // pred_check_branch
    %23 = sbr.rel (0) target = $region25
  $region24: #{forward.1} parent=0 // pred_region
    _
  $region25: #{forward.1} parent=0 // pred_fallthru
    _
  // Predicated region
  $region26: #{forward.1} parent=0 // pred_check
    _
  $region27: #{forward.1} parent=0 // pred_check_branch
    %25 = sbr.rel (0) target = $region29
  $region28: #{forward.1} parent=0 // pred_region
    _
  $region29: #{forward.1} parent=0 // pred_fallthru
    _
  %v27 = vld [vmem:[%s0] sm:$0xff]
  %v28 = vld [vmem:[%s0 + $0x8] sm:$0xff]
  %v29 = vld [vmem:[%s1] sm:$0x1]
  %v30 = vld [vmem:[%s2] sm:$0xf]
  %v31 = vld [vmem:[%s2 + $0x4] sm:$0xf]
  %v32 = vld [vmem:[%s2 + $0x8] sm:$0xf]
  %v33 = vld [vmem:[%s2 + $0xc] sm:$0xf]
  %v34 = vld [vmem:[%s3] sm:$0xff]
  %v35 = vld [vmem:[%s4] sm:$0xf]
  %v36 = vld [vmem:[%s4 + $0x4] sm:$0xf]
  %v37 = vld [vmem:[%s4 + $0x8] sm:$0xf]
  %v38 = vld [vmem:[%s4 + $0xc] sm:$0xf]
  %v39 = vld [vmem:[%s4 + $0x10] sm:$0xf]
  %v40 = vld [vmem:[%s4 + $0x14] sm:$0xf]
  %v41 = vld [vmem:[%s4 + $0x18] sm:$0xf]
  %v42 = vld [vmem:[%s4 + $0x1c] sm:$0xf]
  %v43 = vld [vmem:[%s5] sm:$0xff]
  %v44 = vld [vmem:[%s5 + $0x8] sm:$0xff]
  %v45 = vmul.f32 %v27, %v27
  %v46 = vmul.f32 %v28, %v28
  %vm47 = vcmask 261120
  %v48 = vsel %vm47, %v45, 0.0
  %49 = vadd.xlane.f32.xlu0 %v48
  %v50 = vpop.xlane.xlu0 %49
  %v51 = vsel %vm47, %v46, 0.0
  %52 = vadd.xlane.f32.xlu0 %v51
  %v53 = vpop.xlane.xlu0 %52
  %v54 = vrcp.pop 32.0
  %v55 = vmul.f32 %v50, %v54
  %v56 = vmul.f32 %v53, %v54
  %v57 = vadd.f32 %v55, 1e-05
  %v58 = vadd.f32 %v56, 1e-05
  %v59 = vrsqrt.pop %v57
  %v60 = vrsqrt.pop %v58
  %v61 = vmul.f32 %v27, %v59
  %v62 = vmul.f32 %v28, %v60
  %v64 = vlaneseq
  %v65 = vshrl.u32 %v64, 7
  %v66 = vsub.s32 0, %v65
  %v67 = vrot.slane %v29, %v66
  %v69 = vmul.f32 %v61, %v67
  %v70 = vmul.f32 %v62, %v67
  %v71 = vpack.c.bf16 %v70, %v69
  %v76 = vunpack.c.l.b16 %v30
  %v77 = vunpack.c.l.b16 %v31
  %v78 = vunpack.c.l.b16 %v32
  %v79 = vunpack.c.l.b16 %v33
  %v80 = vpack.c.b16 %v77, %v76
  %v81 = vpack.c.b16 %v79, %v78
  %v85 = vsel %vm47, %v71, 0
  %87 = vmatprep.subr.bf16.mxu0 0
  %88 = vmatpush1.bf16.msra.mxu0 %v80
  %89 = vmatprep.subr.bf16.mxu0 0
  %90 = vmatpush1.bf16.msra.mxu0 %v81
  %91 = vmatprep.subr.bf16.mxu0 0
  %92 = vmatpush1.bf16.msra.mxu0 0
  %93 = vmatprep.subr.bf16.mxu0 0
  %94 = vmatpush1.bf16.msra.mxu0 0
  %95 = vmatprep.subr.bf16.mxu0 0
  %96 = vmatpush1.bf16.msra.mxu0 0
  %97 = vmatprep.subr.bf16.mxu0 0
  %98 = vmatpush1.bf16.msra.mxu0 0
  %99 = vmatprep.subr.bf16.mxu0 0
  %100 = vmatpush1.bf16.msra.mxu0 0
  %101 = vmatprep.subr.bf16.mxu0 0
  %102 = vmatpush1.bf16.msra.mxu0 0
  %103 = vmatprep.subr.bf16.mxu0 0
  %104 = vmatpush1.bf16.msra.mxu0 0
  %105 = vmatprep.subr.bf16.mxu0 0
  %106 = vmatpush1.bf16.msra.mxu0 0
  %107 = vmatprep.subr.bf16.mxu0 0
  %108 = vmatpush1.bf16.msra.mxu0 0
  %109 = vmatprep.subr.bf16.mxu0 0
  %110 = vmatpush1.bf16.msra.mxu0 0
  %111 = vmatprep.subr.bf16.mxu0 0
  %112 = vmatpush1.bf16.msra.mxu0 0
  %113 = vmatprep.subr.bf16.mxu0 0
  %114 = vmatpush1.bf16.msra.mxu0 0
  %115 = vmatprep.subr.bf16.mxu0 0
  %116 = vmatpush1.bf16.msra.mxu0 0
  %117 = vmatprep.subr.bf16.mxu0 0
  %118 = vmatpush1.bf16.msra.mxu0 0
  %119 = vmatprep.mubr.bf16.mxu0 0
  %120 = vmatmul.mubr.bf16.gmra.mrb[0].mxu0 %v85
  %v121 = vpop.f32.mrb[0].mxu0
  %v122 = vadd.f32 0.0, %v121
  %v123 = vpop.f32.mrb[0].mxu0
  %v124 = vpop.f32.mrb[0].mxu0
  %v125 = vadd.f32 0.0, %v124
  %v126 = vpop.f32.mrb[0].mxu0
  %127 = vdwg.mxu0
  %v128 = vlaneseq
  %v129 = vshrl.u32 %v128, 7
  %v130 = vsub.s32 3, %v129
  %v131 = vrot.slane %v34, %v130
  %v132 = vmul.f32 %v122, %v131
  %v133 = vmul.f32 %v125, %v131
  %vm136 = vcmask 1041408
  %v137 = vrot.slane %v122, 6
  %v138 = vrot.slane %v125, 6
  %v139 = vsel %vm136, %v137, %v138
  %v142 = vsel %vm136, 0.0, %v137
  %v143 = vlaneseq
  %v144 = vshrl.u32 %v143, 7
  %v145 = vsub.s32 2, %v144
  %v146 = vrot.slane %v34, %v145
  %v147 = vmul.f32 %v142, %v146
  %v148 = vmul.f32 %v139, %v146
  %v149 = vadd.f32 %v132, %v147
  %v150 = vadd.f32 %v133, %v148
  %vm151 = vcmask 1043456
  %v152 = vrot.slane %v122, 4
  %v153 = vrot.slane %v125, 4
  %v154 = vsel %vm151, %v152, %v153
  %v157 = vsel %vm151, 0.0, %v152
  %v158 = vlaneseq
  %v159 = vshrl.u32 %v158, 7
  %v160 = vsub.s32 1, %v159
  %v161 = vrot.slane %v34, %v160
  %v162 = vmul.f32 %v157, %v161
  %v163 = vmul.f32 %v154, %v161
  %v164 = vadd.f32 %v149, %v162
  %v165 = vadd.f32 %v150, %v163
  %vm166 = vcmask 1045504
  %v167 = vrot.slane %v122, 2
  %v168 = vrot.slane %v125, 2
  %v169 = vsel %vm166, %v167, %v168
  %v172 = vsel %vm166, 0.0, %v167
  %v173 = vlaneseq
  %v174 = vshrl.u32 %v173, 7
  %v175 = vsub.s32 0, %v174
  %v176 = vrot.slane %v34, %v175
  %v177 = vmul.f32 %v172, %v176
  %v178 = vmul.f32 %v169, %v176
  %v179 = vadd.f32 %v164, %v177
  %v180 = vadd.f32 %v165, %v178
  %v181 = vlaneseq
  %v182 = vshrl.u32 %v181, 7
  %v183 = vsub.s32 4, %v182
  %v184 = vrot.slane %v34, %v183
  %v185 = vadd.f32 %v179, %v184
  %v186 = vadd.f32 %v180, %v184
  %v187 = vsub.f32 0.0, %v185
  %v188 = vsub.f32 0.0, %v186
  %v189 = vmul.f32 %v187, 1.442695
  %v190 = vpow.pop %v189
  %v191 = vmul.f32 %v188, 1.442695
  %v192 = vpow.pop %v191
  %v193 = vadd.f32 %v190, 1.0
  %v194 = vadd.f32 %v192, 1.0
  %v195 = vrcp.pop %v193
  %v196 = vmul.f32 1.0, %v195
  %v197 = vrcp.pop %v194
  %v198 = vmul.f32 1.0, %v197
  %v199 = vmul.f32 %v185, %v196
  %v200 = vmul.f32 %v186, %v198
  %v201 = vpack.c.bf16 %v200, %v199
  %v210 = vunpack.c.l.b16 %v35
  %v211 = vunpack.c.l.b16 %v36
  %v212 = vunpack.c.l.b16 %v37
  %v213 = vunpack.c.l.b16 %v38
  %v214 = vunpack.c.l.b16 %v39
  %v215 = vunpack.c.l.b16 %v40
  %v216 = vunpack.c.l.b16 %v41
  %v217 = vunpack.c.l.b16 %v42
  %v218 = vpack.c.b16 %v211, %v210
  %v219 = vpack.c.b16 %v213, %v212
  %v220 = vpack.c.b16 %v215, %v214
  %v221 = vpack.c.b16 %v217, %v216
  %vm226 = vcmask 523264
  %v228 = vsel %vm226, %v201, 0
  %230 = vmatprep.subr.bf16.mxu0 0
  %231 = vmatpush1.bf16.msra.mxu0 %v218
  %232 = vmatprep.subr.bf16.mxu0 0
  %233 = vmatpush1.bf16.msra.mxu0 %v219
  %234 = vmatprep.subr.bf16.mxu0 0
  %235 = vmatpush1.bf16.msra.mxu0 %v220
  %236 = vmatprep.subr.bf16.mxu0 0
  %237 = vmatpush1.bf16.msra.mxu0 %v221
  %238 = vmatprep.subr.bf16.mxu0 0
  %239 = vmatpush1.bf16.msra.mxu0 0
  %240 = vmatprep.subr.bf16.mxu0 0
  %241 = vmatpush1.bf16.msra.mxu0 0
  %242 = vmatprep.subr.bf16.mxu0 0
  %243 = vmatpush1.bf16.msra.mxu0 0
  %244 = vmatprep.subr.bf16.mxu0 0
  %245 = vmatpush1.bf16.msra.mxu0 0
  %246 = vmatprep.subr.bf16.mxu0 0
  %247 = vmatpush1.bf16.msra.mxu0 0
  %248 = vmatprep.subr.bf16.mxu0 0
  %249 = vmatpush1.bf16.msra.mxu0 0
  %250 = vmatprep.subr.bf16.mxu0 0
  %251 = vmatpush1.bf16.msra.mxu0 0
  %252 = vmatprep.subr.bf16.mxu0 0
  %253 = vmatpush1.bf16.msra.mxu0 0
  %254 = vmatprep.subr.bf16.mxu0 0
  %255 = vmatpush1.bf16.msra.mxu0 0
  %256 = vmatprep.subr.bf16.mxu0 0
  %257 = vmatpush1.bf16.msra.mxu0 0
  %258 = vmatprep.subr.bf16.mxu0 0
  %259 = vmatpush1.bf16.msra.mxu0 0
  %260 = vmatprep.subr.bf16.mxu0 0
  %261 = vmatpush1.bf16.msra.mxu0 0
  %262 = vmatprep.mubr.bf16.mxu0 0
  %263 = vmatmul.mubr.bf16.gmra.mrb[0].mxu0 %v228
  %v264 = vpop.f32.mrb[0].mxu0
  %v265 = vadd.f32 0.0, %v264
  %v266 = vpop.f32.mrb[0].mxu0
  %v267 = vpop.f32.mrb[0].mxu0
  %v268 = vadd.f32 0.0, %v267
  %v269 = vpop.f32.mrb[0].mxu0
  %270 = vdwg.mxu0
  %v271 = vlaneseq
  %v272 = vshrl.u32 %v271, 7
  %v273 = vsub.s32 5, %v272
  %v274 = vrot.slane %v34, %v273
  %v275 = vadd.f32 %v265, %v274
  %v276 = vadd.f32 %v268, %v274
  %v277 = vmax.f32 %v275, 0.0
  %v278 = vmax.f32 %v276, 0.0
  %v279 = vand.u32 2147483647, %v275
  %v280 = vand.u32 2147483647, %v276
  %v281 = vsub.f32 0.0, %v279
  %v282 = vsub.f32 0.0, %v280
  %v283 = vmul.f32 %v281, 1.442695
  %v284 = vpow.pop %v283
  %v285 = vmul.f32 %v282, 1.442695
  %v286 = vpow.pop %v285
  %v287 = vadd.f32 %v284, 1.0
  %v288 = vadd.f32 %v286, 1.0
  %v289 = vlog2.pop %v287
  %v290 = vmul.f32 %v289, 0.6931472
  %v291 = vlog2.pop %v288
  %v292 = vmul.f32 %v291, 0.6931472
  %v293 = vadd.f32 %v277, %v290
  %v294 = vadd.f32 %v278, %v292
  %v295 = vmul.f32 %v293, %v199
  %v296 = vmul.f32 %v294, %v200
  %v297 = vlaneseq
  %v298 = vshrl.u32 %v297, 7
  %v299 = vsub.s32 0, %v298
  %v300 = vrot.slane %v43, %v299
  %v301 = vmul.f32 %v293, %v300
  %v302 = vmul.f32 %v301, 1.442695
  %v303 = vpow.pop %v302
  %v304 = vmul.f32 %v303, 0.0
  %306 = vset.pattern.permute.xlu0 64
  %307 = vperm.xlu0 %306, %v265
  %v308 = vpop.permute.xlu0 %307
  %v310 = vmul.f32 %v308, %v295
  %v311 = vadd.f32 %v304, %v310
  %312 = vset.pattern.permute.xlu0 80
  %313 = vperm.xlu0 %312, %v265
  %v314 = vpop.permute.xlu0 %313
  %v316 = vmul.f32 %v314, %v311
  %v317 = vadd.f32 %v316, 0.0
  %v318 = vlaneseq
  %v319 = vshrl.u32 %v318, 7
  %v320 = vsub.s32 1, %v319
  %v321 = vrot.slane %v43, %v320
  %v322 = vmul.f32 %v293, %v321
  %v323 = vmul.f32 %v322, 1.442695
  %v324 = vpow.pop %v323
  %v325 = vmul.f32 %v324, 0.0
  %326 = vset.pattern.permute.xlu0 65
  %327 = vperm.xlu0 %326, %v265
  %v328 = vpop.permute.xlu0 %327
  %v330 = vmul.f32 %v328, %v295
  %v331 = vadd.f32 %v325, %v330
  %332 = vset.pattern.permute.xlu0 81
  %333 = vperm.xlu0 %332, %v265
  %v334 = vpop.permute.xlu0 %333
  %v336 = vmul.f32 %v334, %v331
  %v337 = vadd.f32 %v317, %v336
  %v338 = vlaneseq
  %v339 = vshrl.u32 %v338, 7
  %v340 = vsub.s32 2, %v339
  %v341 = vrot.slane %v43, %v340
  %v342 = vmul.f32 %v293, %v341
  %v343 = vmul.f32 %v342, 1.442695
  %v344 = vpow.pop %v343
  %v345 = vmul.f32 %v344, 0.0
  %346 = vset.pattern.permute.xlu0 66
  %347 = vperm.xlu0 %346, %v265
  %v348 = vpop.permute.xlu0 %347
  %v350 = vmul.f32 %v348, %v295
  %v351 = vadd.f32 %v345, %v350
  %352 = vset.pattern.permute.xlu0 82
  %353 = vperm.xlu0 %352, %v265
  %v354 = vpop.permute.xlu0 %353
  %v356 = vmul.f32 %v354, %v351
  %v357 = vadd.f32 %v337, %v356
  %v358 = vlaneseq
  %v359 = vshrl.u32 %v358, 7
  %v360 = vsub.s32 3, %v359
  %v361 = vrot.slane %v43, %v360
  %v362 = vmul.f32 %v293, %v361
  %v363 = vmul.f32 %v362, 1.442695
  %v364 = vpow.pop %v363
  %v365 = vmul.f32 %v364, 0.0
  %366 = vset.pattern.permute.xlu0 67
  %367 = vperm.xlu0 %366, %v265
  %v368 = vpop.permute.xlu0 %367
  %v370 = vmul.f32 %v368, %v295
  %v371 = vadd.f32 %v365, %v370
  %372 = vset.pattern.permute.xlu0 83
  %373 = vperm.xlu0 %372, %v265
  %v374 = vpop.permute.xlu0 %373
  %v376 = vmul.f32 %v374, %v371
  %v377 = vadd.f32 %v357, %v376
  %v378 = vlaneseq
  %v379 = vshrl.u32 %v378, 7
  %v380 = vsub.s32 4, %v379
  %v381 = vrot.slane %v43, %v380
  %v382 = vmul.f32 %v293, %v381
  %v383 = vmul.f32 %v382, 1.442695
  %v384 = vpow.pop %v383
  %v385 = vmul.f32 %v384, 0.0
  %386 = vset.pattern.permute.xlu0 68
  %387 = vperm.xlu0 %386, %v265
  %v388 = vpop.permute.xlu0 %387
  %v390 = vmul.f32 %v388, %v295
  %v391 = vadd.f32 %v385, %v390
  %392 = vset.pattern.permute.xlu0 84
  %393 = vperm.xlu0 %392, %v265
  %v394 = vpop.permute.xlu0 %393
  %v396 = vmul.f32 %v394, %v391
  %v397 = vadd.f32 %v377, %v396
  %v398 = vlaneseq
  %v399 = vshrl.u32 %v398, 7
  %v400 = vsub.s32 5, %v399
  %v401 = vrot.slane %v43, %v400
  %v402 = vmul.f32 %v293, %v401
  %v403 = vmul.f32 %v402, 1.442695
  %v404 = vpow.pop %v403
  %v405 = vmul.f32 %v404, 0.0
  %406 = vset.pattern.permute.xlu0 69
  %407 = vperm.xlu0 %406, %v265
  %v408 = vpop.permute.xlu0 %407
  %v410 = vmul.f32 %v408, %v295
  %v411 = vadd.f32 %v405, %v410
  %412 = vset.pattern.permute.xlu0 85
  %413 = vperm.xlu0 %412, %v265
  %v414 = vpop.permute.xlu0 %413
  %v416 = vmul.f32 %v414, %v411
  %v417 = vadd.f32 %v397, %v416
  %v418 = vlaneseq
  %v419 = vshrl.u32 %v418, 7
  %v420 = vsub.s32 6, %v419
  %v421 = vrot.slane %v43, %v420
  %v422 = vmul.f32 %v293, %v421
  %v423 = vmul.f32 %v422, 1.442695
  %v424 = vpow.pop %v423
  %v425 = vmul.f32 %v424, 0.0
  %426 = vset.pattern.permute.xlu0 70
  %427 = vperm.xlu0 %426, %v265
  %v428 = vpop.permute.xlu0 %427
  %v430 = vmul.f32 %v428, %v295
  %v431 = vadd.f32 %v425, %v430
  %432 = vset.pattern.permute.xlu0 86
  %433 = vperm.xlu0 %432, %v265
  %v434 = vpop.permute.xlu0 %433
  %v436 = vmul.f32 %v434, %v431
  %v437 = vadd.f32 %v417, %v436
  %v438 = vlaneseq
  %v439 = vshrl.u32 %v438, 7
  %v440 = vsub.s32 7, %v439
  %v441 = vrot.slane %v43, %v440
  %v442 = vmul.f32 %v293, %v441
  %v443 = vmul.f32 %v442, 1.442695
  %v444 = vpow.pop %v443
  %v445 = vmul.f32 %v444, 0.0
  %446 = vset.pattern.permute.xlu0 71
  %447 = vperm.xlu0 %446, %v265
  %v448 = vpop.permute.xlu0 %447
  %v450 = vmul.f32 %v448, %v295
  %v451 = vadd.f32 %v445, %v450
  %452 = vset.pattern.permute.xlu0 87
  %453 = vperm.xlu0 %452, %v265
  %v454 = vpop.permute.xlu0 %453
  %v456 = vmul.f32 %v454, %v451
  %v457 = vadd.f32 %v437, %v456
  %v458 = vlaneseq
  %v459 = vshrl.u32 %v458, 7
  %v460 = vsub.s32 0, %v459
  %v461 = vrot.slane %v44, %v460
  %v462 = vmul.f32 %v293, %v461
  %v463 = vmul.f32 %v462, 1.442695
  %v464 = vpow.pop %v463
  %v465 = vmul.f32 %v464, 0.0
  %466 = vset.pattern.permute.xlu0 72
  %467 = vperm.xlu0 %466, %v265
  %v468 = vpop.permute.xlu0 %467
  %v470 = vmul.f32 %v468, %v295
  %v471 = vadd.f32 %v465, %v470
  %472 = vset.pattern.permute.xlu0 88
  %473 = vperm.xlu0 %472, %v265
  %v474 = vpop.permute.xlu0 %473
  %v476 = vmul.f32 %v474, %v471
  %v477 = vadd.f32 %v457, %v476
  %v478 = vlaneseq
  %v479 = vshrl.u32 %v478, 7
  %v480 = vsub.s32 1, %v479
  %v481 = vrot.slane %v44, %v480
  %v482 = vmul.f32 %v293, %v481
  %v483 = vmul.f32 %v482, 1.442695
  %v484 = vpow.pop %v483
  %v485 = vmul.f32 %v484, 0.0
  %486 = vset.pattern.permute.xlu0 73
  %487 = vperm.xlu0 %486, %v265
  %v488 = vpop.permute.xlu0 %487
  %v490 = vmul.f32 %v488, %v295
  %v491 = vadd.f32 %v485, %v490
  %492 = vset.pattern.permute.xlu0 89
  %493 = vperm.xlu0 %492, %v265
  %v494 = vpop.permute.xlu0 %493
  %v496 = vmul.f32 %v494, %v491
  %v497 = vadd.f32 %v477, %v496
  %v498 = vlaneseq
  %v499 = vshrl.u32 %v498, 7
  %v500 = vsub.s32 2, %v499
  %v501 = vrot.slane %v44, %v500
  %v502 = vmul.f32 %v293, %v501
  %v503 = vmul.f32 %v502, 1.442695
  %v504 = vpow.pop %v503
  %v505 = vmul.f32 %v504, 0.0
  %506 = vset.pattern.permute.xlu0 74
  %507 = vperm.xlu0 %506, %v265
  %v508 = vpop.permute.xlu0 %507
  %v510 = vmul.f32 %v508, %v295
  %v511 = vadd.f32 %v505, %v510
  %512 = vset.pattern.permute.xlu0 90
  %513 = vperm.xlu0 %512, %v265
  %v514 = vpop.permute.xlu0 %513
  %v516 = vmul.f32 %v514, %v511
  %v517 = vadd.f32 %v497, %v516
  %v518 = vlaneseq
  %v519 = vshrl.u32 %v518, 7
  %v520 = vsub.s32 3, %v519
  %v521 = vrot.slane %v44, %v520
  %v522 = vmul.f32 %v293, %v521
  %v523 = vmul.f32 %v522, 1.442695
  %v524 = vpow.pop %v523
  %v525 = vmul.f32 %v524, 0.0
  %526 = vset.pattern.permute.xlu0 75
  %527 = vperm.xlu0 %526, %v265
  %v528 = vpop.permute.xlu0 %527
  %v530 = vmul.f32 %v528, %v295
  %v531 = vadd.f32 %v525, %v530
  %532 = vset.pattern.permute.xlu0 91
  %533 = vperm.xlu0 %532, %v265
  %v534 = vpop.permute.xlu0 %533
  %v536 = vmul.f32 %v534, %v531
  %v537 = vadd.f32 %v517, %v536
  %v538 = vlaneseq
  %v539 = vshrl.u32 %v538, 7
  %v540 = vsub.s32 4, %v539
  %v541 = vrot.slane %v44, %v540
  %v542 = vmul.f32 %v293, %v541
  %v543 = vmul.f32 %v542, 1.442695
  %v544 = vpow.pop %v543
  %v545 = vmul.f32 %v544, 0.0
  %546 = vset.pattern.permute.xlu0 76
  %547 = vperm.xlu0 %546, %v265
  %v548 = vpop.permute.xlu0 %547
  %v550 = vmul.f32 %v548, %v295
  %v551 = vadd.f32 %v545, %v550
  %552 = vset.pattern.permute.xlu0 92
  %553 = vperm.xlu0 %552, %v265
  %v554 = vpop.permute.xlu0 %553
  %v556 = vmul.f32 %v554, %v551
  %v557 = vadd.f32 %v537, %v556
  %v558 = vlaneseq
  %v559 = vshrl.u32 %v558, 7
  %v560 = vsub.s32 5, %v559
  %v561 = vrot.slane %v44, %v560
  %v562 = vmul.f32 %v293, %v561
  %v563 = vmul.f32 %v562, 1.442695
  %v564 = vpow.pop %v563
  %v565 = vmul.f32 %v564, 0.0
  %566 = vset.pattern.permute.xlu0 77
  %567 = vperm.xlu0 %566, %v265
  %v568 = vpop.permute.xlu0 %567
  %v570 = vmul.f32 %v568, %v295
  %v571 = vadd.f32 %v565, %v570
  %572 = vset.pattern.permute.xlu0 93
  %573 = vperm.xlu0 %572, %v265
  %v574 = vpop.permute.xlu0 %573
  %v576 = vmul.f32 %v574, %v571
  %v577 = vadd.f32 %v557, %v576
  %v578 = vlaneseq
  %v579 = vshrl.u32 %v578, 7
  %v580 = vsub.s32 6, %v579
  %v581 = vrot.slane %v44, %v580
  %v582 = vmul.f32 %v293, %v581
  %v583 = vmul.f32 %v582, 1.442695
  %v584 = vpow.pop %v583
  %v585 = vmul.f32 %v584, 0.0
  %586 = vset.pattern.permute.xlu0 78
  %587 = vperm.xlu0 %586, %v265
  %v588 = vpop.permute.xlu0 %587
  %v590 = vmul.f32 %v588, %v295
  %v591 = vadd.f32 %v585, %v590
  %592 = vset.pattern.permute.xlu0 94
  %593 = vperm.xlu0 %592, %v265
  %v594 = vpop.permute.xlu0 %593
  %v596 = vmul.f32 %v594, %v591
  %v597 = vadd.f32 %v577, %v596
  %v598 = vlaneseq
  %v599 = vshrl.u32 %v598, 7
  %v600 = vsub.s32 7, %v599
  %v601 = vrot.slane %v44, %v600
  %v602 = vmul.f32 %v293, %v601
  %v603 = vmul.f32 %v602, 1.442695
  %v604 = vpow.pop %v603
  %v605 = vmul.f32 %v604, 0.0
  %606 = vset.pattern.permute.xlu0 79
  %607 = vperm.xlu0 %606, %v265
  %v608 = vpop.permute.xlu0 %607
  %v610 = vmul.f32 %v608, %v295
  %v611 = vadd.f32 %v605, %v610
  %612 = vset.pattern.permute.xlu0 95
  %613 = vperm.xlu0 %612, %v265
  %v614 = vpop.permute.xlu0 %613
  %v616 = vmul.f32 %v614, %v611
  %v617 = vadd.f32 %v597, %v616
  %vm618 = vcmask 517120
  %619 = vst.msk [vmem:[#allocation2] sm:$0x3] %vm618, %v617
  %v621 = vrot.slane %v311, 6
  %v623 = vmul.f32 %v303, %v621
  %v624 = vadd.f32 %v623, %v310
  %v625 = vmul.f32 %v314, %v624
  %v626 = vadd.f32 %v625, 0.0
  %v628 = vrot.slane %v331, 6
  %v630 = vmul.f32 %v324, %v628
  %v631 = vadd.f32 %v630, %v330
  %v632 = vmul.f32 %v334, %v631
  %v633 = vadd.f32 %v626, %v632
  %v635 = vrot.slane %v351, 6
  %v637 = vmul.f32 %v344, %v635
  %v638 = vadd.f32 %v637, %v350
  %v639 = vmul.f32 %v354, %v638
  %v640 = vadd.f32 %v633, %v639
  %v642 = vrot.slane %v371, 6
  %v644 = vmul.f32 %v364, %v642
  %v645 = vadd.f32 %v644, %v370
  %v646 = vmul.f32 %v374, %v645
  %v647 = vadd.f32 %v640, %v646
  %v649 = vrot.slane %v391, 6
  %v651 = vmul.f32 %v384, %v649
  %v652 = vadd.f32 %v651, %v390
  %v653 = vmul.f32 %v394, %v652
  %v654 = vadd.f32 %v647, %v653
  %v656 = vrot.slane %v411, 6
  %v658 = vmul.f32 %v404, %v656
  %v659 = vadd.f32 %v658, %v410
  %v660 = vmul.f32 %v414, %v659
  %v661 = vadd.f32 %v654, %v660
  %v663 = vrot.slane %v431, 6
  %v665 = vmul.f32 %v424, %v663
  %v666 = vadd.f32 %v665, %v430
  %v667 = vmul.f32 %v434, %v666
  %v668 = vadd.f32 %v661, %v667
  %v670 = vrot.slane %v451, 6
  %v672 = vmul.f32 %v444, %v670
  %v673 = vadd.f32 %v672, %v450
  %v674 = vmul.f32 %v454, %v673
  %v675 = vadd.f32 %v668, %v674
  %v677 = vrot.slane %v471, 6
  %v679 = vmul.f32 %v464, %v677
  %v680 = vadd.f32 %v679, %v470
  %v681 = vmul.f32 %v474, %v680
  %v682 = vadd.f32 %v675, %v681
  %v684 = vrot.slane %v491, 6
  %v686 = vmul.f32 %v484, %v684
  %v687 = vadd.f32 %v686, %v490
  %v688 = vmul.f32 %v494, %v687
  %v689 = vadd.f32 %v682, %v688
  %v691 = vrot.slane %v511, 6
  %v693 = vmul.f32 %v504, %v691
  %v694 = vadd.f32 %v693, %v510
  %v695 = vmul.f32 %v514, %v694
  %v696 = vadd.f32 %v689, %v695
  %v698 = vrot.slane %v531, 6
  %v700 = vmul.f32 %v524, %v698
  %v701 = vadd.f32 %v700, %v530
  %v702 = vmul.f32 %v534, %v701
  %v703 = vadd.f32 %v696, %v702
  %v705 = vrot.slane %v551, 6
  %v707 = vmul.f32 %v544, %v705
  %v708 = vadd.f32 %v707, %v550
  %v709 = vmul.f32 %v554, %v708
  %v710 = vadd.f32 %v703, %v709
  %v712 = vrot.slane %v571, 6
  %v714 = vmul.f32 %v564, %v712
  %v715 = vadd.f32 %v714, %v570
  %v716 = vmul.f32 %v574, %v715
  %v717 = vadd.f32 %v710, %v716
  %v719 = vrot.slane %v591, 6
  %v721 = vmul.f32 %v584, %v719
  %v722 = vadd.f32 %v721, %v590
  %v723 = vmul.f32 %v594, %v722
  %v724 = vadd.f32 %v717, %v723
  %v726 = vrot.slane %v611, 6
  %v728 = vmul.f32 %v604, %v726
  %v729 = vadd.f32 %v728, %v610
  %v730 = vmul.f32 %v614, %v729
  %v731 = vadd.f32 %v724, %v730
  %vm732 = vcmask 519170
  %733 = vst.msk [vmem:[#allocation2] sm:$0xc] %vm732, %v731
  %v735 = vrot.slane %v624, 6
  %v737 = vmul.f32 %v303, %v735
  %v738 = vadd.f32 %v737, %v310
  %v739 = vmul.f32 %v314, %v738
  %v740 = vadd.f32 %v739, 0.0
  %v742 = vrot.slane %v631, 6
  %v744 = vmul.f32 %v324, %v742
  %v745 = vadd.f32 %v744, %v330
  %v746 = vmul.f32 %v334, %v745
  %v747 = vadd.f32 %v740, %v746
  %v749 = vrot.slane %v638, 6
  %v751 = vmul.f32 %v344, %v749
  %v752 = vadd.f32 %v751, %v350
  %v753 = vmul.f32 %v354, %v752
  %v754 = vadd.f32 %v747, %v753
  %v756 = vrot.slane %v645, 6
  %v758 = vmul.f32 %v364, %v756
  %v759 = vadd.f32 %v758, %v370
  %v760 = vmul.f32 %v374, %v759
  %v761 = vadd.f32 %v754, %v760
  %v763 = vrot.slane %v652, 6
  %v765 = vmul.f32 %v384, %v763
  %v766 = vadd.f32 %v765, %v390
  %v767 = vmul.f32 %v394, %v766
  %v768 = vadd.f32 %v761, %v767
  %v770 = vrot.slane %v659, 6
  %v772 = vmul.f32 %v404, %v770
  %v773 = vadd.f32 %v772, %v410
  %v774 = vmul.f32 %v414, %v773
  %v775 = vadd.f32 %v768, %v774
  %v777 = vrot.slane %v666, 6
  %v779 = vmul.f32 %v424, %v777
  %v780 = vadd.f32 %v779, %v430
  %v781 = vmul.f32 %v434, %v780
  %v782 = vadd.f32 %v775, %v781
  %v784 = vrot.slane %v673, 6
  %v786 = vmul.f32 %v444, %v784
  %v787 = vadd.f32 %v786, %v450
  %v788 = vmul.f32 %v454, %v787
  %v789 = vadd.f32 %v782, %v788
  %v791 = vrot.slane %v680, 6
  %v793 = vmul.f32 %v464, %v791
  %v794 = vadd.f32 %v793, %v470
  %v795 = vmul.f32 %v474, %v794
  %v796 = vadd.f32 %v789, %v795
  %v798 = vrot.slane %v687, 6
  %v800 = vmul.f32 %v484, %v798
  %v801 = vadd.f32 %v800, %v490
  %v802 = vmul.f32 %v494, %v801
  %v803 = vadd.f32 %v796, %v802
  %v805 = vrot.slane %v694, 6
  %v807 = vmul.f32 %v504, %v805
  %v808 = vadd.f32 %v807, %v510
  %v809 = vmul.f32 %v514, %v808
  %v810 = vadd.f32 %v803, %v809
  %v812 = vrot.slane %v701, 6
  %v814 = vmul.f32 %v524, %v812
  %v815 = vadd.f32 %v814, %v530
  %v816 = vmul.f32 %v534, %v815
  %v817 = vadd.f32 %v810, %v816
  %v819 = vrot.slane %v708, 6
  %v821 = vmul.f32 %v544, %v819
  %v822 = vadd.f32 %v821, %v550
  %v823 = vmul.f32 %v554, %v822
  %v824 = vadd.f32 %v817, %v823
  %v826 = vrot.slane %v715, 6
  %v828 = vmul.f32 %v564, %v826
  %v829 = vadd.f32 %v828, %v570
  %v830 = vmul.f32 %v574, %v829
  %v831 = vadd.f32 %v824, %v830
  %v833 = vrot.slane %v722, 6
  %v835 = vmul.f32 %v584, %v833
  %v836 = vadd.f32 %v835, %v590
  %v837 = vmul.f32 %v594, %v836
  %v838 = vadd.f32 %v831, %v837
  %v840 = vrot.slane %v729, 6
  %v842 = vmul.f32 %v604, %v840
  %v843 = vadd.f32 %v842, %v610
  %v844 = vmul.f32 %v614, %v843
  %v845 = vadd.f32 %v838, %v844
  %vm846 = vcmask 521220
  %847 = vst.msk [vmem:[#allocation2] sm:$0x30] %vm846, %v845
  %v849 = vrot.slane %v738, 6
  %v851 = vmul.f32 %v303, %v849
  %v852 = vadd.f32 %v851, %v310
  %v853 = vmul.f32 %v314, %v852
  %v854 = vadd.f32 %v853, 0.0
  %v856 = vrot.slane %v745, 6
  %v858 = vmul.f32 %v324, %v856
  %v859 = vadd.f32 %v858, %v330
  %v860 = vmul.f32 %v334, %v859
  %v861 = vadd.f32 %v854, %v860
  %v863 = vrot.slane %v752, 6
  %v865 = vmul.f32 %v344, %v863
  %v866 = vadd.f32 %v865, %v350
  %v867 = vmul.f32 %v354, %v866
  %v868 = vadd.f32 %v861, %v867
  %v870 = vrot.slane %v759, 6
  %v872 = vmul.f32 %v364, %v870
  %v873 = vadd.f32 %v872, %v370
  %v874 = vmul.f32 %v374, %v873
  %v875 = vadd.f32 %v868, %v874
  %v877 = vrot.slane %v766, 6
  %v879 = vmul.f32 %v384, %v877
  %v880 = vadd.f32 %v879, %v390
  %v881 = vmul.f32 %v394, %v880
  %v882 = vadd.f32 %v875, %v881
  %v884 = vrot.slane %v773, 6
  %v886 = vmul.f32 %v404, %v884
  %v887 = vadd.f32 %v886, %v410
  %v888 = vmul.f32 %v414, %v887
  %v889 = vadd.f32 %v882, %v888
  %v891 = vrot.slane %v780, 6
  %v893 = vmul.f32 %v424, %v891
  %v894 = vadd.f32 %v893, %v430
  %v895 = vmul.f32 %v434, %v894
  %v896 = vadd.f32 %v889, %v895
  %v898 = vrot.slane %v787, 6
  %v900 = vmul.f32 %v444, %v898
  %v901 = vadd.f32 %v900, %v450
  %v902 = vmul.f32 %v454, %v901
  %v903 = vadd.f32 %v896, %v902
  %v905 = vrot.slane %v794, 6
  %v907 = vmul.f32 %v464, %v905
  %v908 = vadd.f32 %v907, %v470
  %v909 = vmul.f32 %v474, %v908
  %v910 = vadd.f32 %v903, %v909
  %v912 = vrot.slane %v801, 6
  %v914 = vmul.f32 %v484, %v912
  %v915 = vadd.f32 %v914, %v490
  %v916 = vmul.f32 %v494, %v915
  %v917 = vadd.f32 %v910, %v916
  %v919 = vrot.slane %v808, 6
  %v921 = vmul.f32 %v504, %v919
  %v922 = vadd.f32 %v921, %v510
  %v923 = vmul.f32 %v514, %v922
  %v924 = vadd.f32 %v917, %v923
  %v926 = vrot.slane %v815, 6
  %v928 = vmul.f32 %v524, %v926
  %v929 = vadd.f32 %v928, %v530
  %v930 = vmul.f32 %v534, %v929
  %v931 = vadd.f32 %v924, %v930
  %v933 = vrot.slane %v822, 6
  %v935 = vmul.f32 %v544, %v933
  %v936 = vadd.f32 %v935, %v550
  %v937 = vmul.f32 %v554, %v936
  %v938 = vadd.f32 %v931, %v937
  %v940 = vrot.slane %v829, 6
  %v942 = vmul.f32 %v564, %v940
  %v943 = vadd.f32 %v942, %v570
  %v944 = vmul.f32 %v574, %v943
  %v945 = vadd.f32 %v938, %v944
  %v947 = vrot.slane %v836, 6
  %v949 = vmul.f32 %v584, %v947
  %v950 = vadd.f32 %v949, %v590
  %v951 = vmul.f32 %v594, %v950
  %v952 = vadd.f32 %v945, %v951
  %v954 = vrot.slane %v843, 6
  %v956 = vmul.f32 %v604, %v954
  %v957 = vadd.f32 %v956, %v610
  %v958 = vmul.f32 %v614, %v957
  %v959 = vadd.f32 %v952, %v958
  %vm960 = vcmask 523270
  %961 = vst.msk [vmem:[#allocation2] sm:$0xc0] %vm960, %v959
  %v962 = vmul.f32 %v294, %v300
  %v963 = vmul.f32 %v962, 1.442695
  %v964 = vpow.pop %v963
  %v966 = vrot.slane %v852, 6
  %v968 = vmul.f32 %v964, %v966
  %970 = vset.pattern.permute.xlu0 64
  %971 = vperm.xlu0 %970, %v268
  %v972 = vpop.permute.xlu0 %971
  %v974 = vmul.f32 %v972, %v296
  %v975 = vadd.f32 %v968, %v974
  %976 = vset.pattern.permute.xlu0 80
  %977 = vperm.xlu0 %976, %v268
  %v978 = vpop.permute.xlu0 %977
  %v980 = vmul.f32 %v978, %v975
  %v981 = vadd.f32 %v980, 0.0
  %v982 = vmul.f32 %v294, %v321
  %v983 = vmul.f32 %v982, 1.442695
  %v984 = vpow.pop %v983
  %v986 = vrot.slane %v859, 6
  %v988 = vmul.f32 %v984, %v986
  %989 = vset.pattern.permute.xlu0 65
  %990 = vperm.xlu0 %989, %v268
  %v991 = vpop.permute.xlu0 %990
  %v993 = vmul.f32 %v991, %v296
  %v994 = vadd.f32 %v988, %v993
  %995 = vset.pattern.permute.xlu0 81
  %996 = vperm.xlu0 %995, %v268
  %v997 = vpop.permute.xlu0 %996
  %v999 = vmul.f32 %v997, %v994
  %v1000 = vadd.f32 %v981, %v999
  %v1001 = vmul.f32 %v294, %v341
  %v1002 = vmul.f32 %v1001, 1.442695
  %v1003 = vpow.pop %v1002
  %v1005 = vrot.slane %v866, 6
  %v1007 = vmul.f32 %v1003, %v1005
  %1008 = vset.pattern.permute.xlu0 66
  %1009 = vperm.xlu0 %1008, %v268
  %v1010 = vpop.permute.xlu0 %1009
  %v1012 = vmul.f32 %v1010, %v296
  %v1013 = vadd.f32 %v1007, %v1012
  %1014 = vset.pattern.permute.xlu0 82
  %1015 = vperm.xlu0 %1014, %v268
  %v1016 = vpop.permute.xlu0 %1015
  %v1018 = vmul.f32 %v1016, %v1013
  %v1019 = vadd.f32 %v1000, %v1018
  %v1020 = vmul.f32 %v294, %v361
  %v1021 = vmul.f32 %v1020, 1.442695
  %v1022 = vpow.pop %v1021
  %v1024 = vrot.slane %v873, 6
  %v1026 = vmul.f32 %v1022, %v1024
  %1027 = vset.pattern.permute.xlu0 67
  %1028 = vperm.xlu0 %1027, %v268
  %v1029 = vpop.permute.xlu0 %1028
  %v1031 = vmul.f32 %v1029, %v296
  %v1032 = vadd.f32 %v1026, %v1031
  %1033 = vset.pattern.permute.xlu0 83
  %1034 = vperm.xlu0 %1033, %v268
  %v1035 = vpop.permute.xlu0 %1034
  %v1037 = vmul.f32 %v1035, %v1032
  %v1038 = vadd.f32 %v1019, %v1037
  %v1039 = vmul.f32 %v294, %v381
  %v1040 = vmul.f32 %v1039, 1.442695
  %v1041 = vpow.pop %v1040
  %v1043 = vrot.slane %v880, 6
  %v1045 = vmul.f32 %v1041, %v1043
  %1046 = vset.pattern.permute.xlu0 68
  %1047 = vperm.xlu0 %1046, %v268
  %v1048 = vpop.permute.xlu0 %1047
  %v1050 = vmul.f32 %v1048, %v296
  %v1051 = vadd.f32 %v1045, %v1050
  %1052 = vset.pattern.permute.xlu0 84
  %1053 = vperm.xlu0 %1052, %v268
  %v1054 = vpop.permute.xlu0 %1053
  %v1056 = vmul.f32 %v1054, %v1051
  %v1057 = vadd.f32 %v1038, %v1056
  %v1058 = vmul.f32 %v294, %v401
  %v1059 = vmul.f32 %v1058, 1.442695
  %v1060 = vpow.pop %v1059
  %v1062 = vrot.slane %v887, 6
  %v1064 = vmul.f32 %v1060, %v1062
  %1065 = vset.pattern.permute.xlu0 69
  %1066 = vperm.xlu0 %1065, %v268
  %v1067 = vpop.permute.xlu0 %1066
  %v1069 = vmul.f32 %v1067, %v296
  %v1070 = vadd.f32 %v1064, %v1069
  %1071 = vset.pattern.permute.xlu0 85
  %1072 = vperm.xlu0 %1071, %v268
  %v1073 = vpop.permute.xlu0 %1072
  %v1075 = vmul.f32 %v1073, %v1070
  %v1076 = vadd.f32 %v1057, %v1075
  %v1077 = vmul.f32 %v294, %v421
  %v1078 = vmul.f32 %v1077, 1.442695
  %v1079 = vpow.pop %v1078
  %v1081 = vrot.slane %v894, 6
  %v1083 = vmul.f32 %v1079, %v1081
  %1084 = vset.pattern.permute.xlu0 70
  %1085 = vperm.xlu0 %1084, %v268
  %v1086 = vpop.permute.xlu0 %1085
  %v1088 = vmul.f32 %v1086, %v296
  %v1089 = vadd.f32 %v1083, %v1088
  %1090 = vset.pattern.permute.xlu0 86
  %1091 = vperm.xlu0 %1090, %v268
  %v1092 = vpop.permute.xlu0 %1091
  %v1094 = vmul.f32 %v1092, %v1089
  %v1095 = vadd.f32 %v1076, %v1094
  %v1096 = vmul.f32 %v294, %v441
  %v1097 = vmul.f32 %v1096, 1.442695
  %v1098 = vpow.pop %v1097
  %v1100 = vrot.slane %v901, 6
  %v1102 = vmul.f32 %v1098, %v1100
  %1103 = vset.pattern.permute.xlu0 71
  %1104 = vperm.xlu0 %1103, %v268
  %v1105 = vpop.permute.xlu0 %1104
  %v1107 = vmul.f32 %v1105, %v296
  %v1108 = vadd.f32 %v1102, %v1107
  %1109 = vset.pattern.permute.xlu0 87
  %1110 = vperm.xlu0 %1109, %v268
  %v1111 = vpop.permute.xlu0 %1110
  %v1113 = vmul.f32 %v1111, %v1108
  %v1114 = vadd.f32 %v1095, %v1113
  %v1115 = vmul.f32 %v294, %v461
  %v1116 = vmul.f32 %v1115, 1.442695
  %v1117 = vpow.pop %v1116
  %v1119 = vrot.slane %v908, 6
  %v1121 = vmul.f32 %v1117, %v1119
  %1122 = vset.pattern.permute.xlu0 72
  %1123 = vperm.xlu0 %1122, %v268
  %v1124 = vpop.permute.xlu0 %1123
  %v1126 = vmul.f32 %v1124, %v296
  %v1127 = vadd.f32 %v1121, %v1126
  %1128 = vset.pattern.permute.xlu0 88
  %1129 = vperm.xlu0 %1128, %v268
  %v1130 = vpop.permute.xlu0 %1129
  %v1132 = vmul.f32 %v1130, %v1127
  %v1133 = vadd.f32 %v1114, %v1132
  %v1134 = vmul.f32 %v294, %v481
  %v1135 = vmul.f32 %v1134, 1.442695
  %v1136 = vpow.pop %v1135
  %v1138 = vrot.slane %v915, 6
  %v1140 = vmul.f32 %v1136, %v1138
  %1141 = vset.pattern.permute.xlu0 73
  %1142 = vperm.xlu0 %1141, %v268
  %v1143 = vpop.permute.xlu0 %1142
  %v1145 = vmul.f32 %v1143, %v296
  %v1146 = vadd.f32 %v1140, %v1145
  %1147 = vset.pattern.permute.xlu0 89
  %1148 = vperm.xlu0 %1147, %v268
  %v1149 = vpop.permute.xlu0 %1148
  %v1151 = vmul.f32 %v1149, %v1146
  %v1152 = vadd.f32 %v1133, %v1151
  %v1153 = vmul.f32 %v294, %v501
  %v1154 = vmul.f32 %v1153, 1.442695
  %v1155 = vpow.pop %v1154
  %v1157 = vrot.slane %v922, 6
  %v1159 = vmul.f32 %v1155, %v1157
  %1160 = vset.pattern.permute.xlu0 74
  %1161 = vperm.xlu0 %1160, %v268
  %v1162 = vpop.permute.xlu0 %1161
  %v1164 = vmul.f32 %v1162, %v296
  %v1165 = vadd.f32 %v1159, %v1164
  %1166 = vset.pattern.permute.xlu0 90
  %1167 = vperm.xlu0 %1166, %v268
  %v1168 = vpop.permute.xlu0 %1167
  %v1170 = vmul.f32 %v1168, %v1165
  %v1171 = vadd.f32 %v1152, %v1170
  %v1172 = vmul.f32 %v294, %v521
  %v1173 = vmul.f32 %v1172, 1.442695
  %v1174 = vpow.pop %v1173
  %v1176 = vrot.slane %v929, 6
  %v1178 = vmul.f32 %v1174, %v1176
  %1179 = vset.pattern.permute.xlu0 75
  %1180 = vperm.xlu0 %1179, %v268
  %v1181 = vpop.permute.xlu0 %1180
  %v1183 = vmul.f32 %v1181, %v296
  %v1184 = vadd.f32 %v1178, %v1183
  %1185 = vset.pattern.permute.xlu0 91
  %1186 = vperm.xlu0 %1185, %v268
  %v1187 = vpop.permute.xlu0 %1186
  %v1189 = vmul.f32 %v1187, %v1184
  %v1190 = vadd.f32 %v1171, %v1189
  %v1191 = vmul.f32 %v294, %v541
  %v1192 = vmul.f32 %v1191, 1.442695
  %v1193 = vpow.pop %v1192
  %v1195 = vrot.slane %v936, 6
  %v1197 = vmul.f32 %v1193, %v1195
  %1198 = vset.pattern.permute.xlu0 76
  %1199 = vperm.xlu0 %1198, %v268
  %v1200 = vpop.permute.xlu0 %1199
  %v1202 = vmul.f32 %v1200, %v296
  %v1203 = vadd.f32 %v1197, %v1202
  %1204 = vset.pattern.permute.xlu0 92
  %1205 = vperm.xlu0 %1204, %v268
  %v1206 = vpop.permute.xlu0 %1205
  %v1208 = vmul.f32 %v1206, %v1203
  %v1209 = vadd.f32 %v1190, %v1208
  %v1210 = vmul.f32 %v294, %v561
  %v1211 = vmul.f32 %v1210, 1.442695
  %v1212 = vpow.pop %v1211
  %v1214 = vrot.slane %v943, 6
  %v1216 = vmul.f32 %v1212, %v1214
  %1217 = vset.pattern.permute.xlu0 77
  %1218 = vperm.xlu0 %1217, %v268
  %v1219 = vpop.permute.xlu0 %1218
  %v1221 = vmul.f32 %v1219, %v296
  %v1222 = vadd.f32 %v1216, %v1221
  %1223 = vset.pattern.permute.xlu0 93
  %1224 = vperm.xlu0 %1223, %v268
  %v1225 = vpop.permute.xlu0 %1224
  %v1227 = vmul.f32 %v1225, %v1222
  %v1228 = vadd.f32 %v1209, %v1227
  %v1229 = vmul.f32 %v294, %v581
  %v1230 = vmul.f32 %v1229, 1.442695
  %v1231 = vpow.pop %v1230
  %v1233 = vrot.slane %v950, 6
  %v1235 = vmul.f32 %v1231, %v1233
  %1236 = vset.pattern.permute.xlu0 78
  %1237 = vperm.xlu0 %1236, %v268
  %v1238 = vpop.permute.xlu0 %1237
  %v1240 = vmul.f32 %v1238, %v296
  %v1241 = vadd.f32 %v1235, %v1240
  %1242 = vset.pattern.permute.xlu0 94
  %1243 = vperm.xlu0 %1242, %v268
  %v1244 = vpop.permute.xlu0 %1243
  %v1246 = vmul.f32 %v1244, %v1241
  %v1247 = vadd.f32 %v1228, %v1246
  %v1248 = vmul.f32 %v294, %v601
  %v1249 = vmul.f32 %v1248, 1.442695
  %v1250 = vpow.pop %v1249
  %v1252 = vrot.slane %v957, 6
  %v1254 = vmul.f32 %v1250, %v1252
  %1255 = vset.pattern.permute.xlu0 79
  %1256 = vperm.xlu0 %1255, %v268
  %v1257 = vpop.permute.xlu0 %1256
  %v1259 = vmul.f32 %v1257, %v296
  %v1260 = vadd.f32 %v1254, %v1259
  %1261 = vset.pattern.permute.xlu0 95
  %1262 = vperm.xlu0 %1261, %v268
  %v1263 = vpop.permute.xlu0 %1262
  %v1265 = vmul.f32 %v1263, %v1260
  %v1266 = vadd.f32 %v1247, %v1265
  %1267 = vst.msk [vmem:[#allocation2 + $0x8] sm:$0x3] %vm618, %v1266
  %v1269 = vrot.slane %v975, 6
  %v1271 = vmul.f32 %v964, %v1269
  %v1272 = vadd.f32 %v1271, %v974
  %v1273 = vmul.f32 %v978, %v1272
  %v1274 = vadd.f32 %v1273, 0.0
  %v1276 = vrot.slane %v994, 6
  %v1278 = vmul.f32 %v984, %v1276
  %v1279 = vadd.f32 %v1278, %v993
  %v1280 = vmul.f32 %v997, %v1279
  %v1281 = vadd.f32 %v1274, %v1280
  %v1283 = vrot.slane %v1013, 6
  %v1285 = vmul.f32 %v1003, %v1283
  %v1286 = vadd.f32 %v1285, %v1012
  %v1287 = vmul.f32 %v1016, %v1286
  %v1288 = vadd.f32 %v1281, %v1287
  %v1290 = vrot.slane %v1032, 6
  %v1292 = vmul.f32 %v1022, %v1290
  %v1293 = vadd.f32 %v1292, %v1031
  %v1294 = vmul.f32 %v1035, %v1293
  %v1295 = vadd.f32 %v1288, %v1294
  %v1297 = vrot.slane %v1051, 6
  %v1299 = vmul.f32 %v1041, %v1297
  %v1300 = vadd.f32 %v1299, %v1050
  %v1301 = vmul.f32 %v1054, %v1300
  %v1302 = vadd.f32 %v1295, %v1301
  %v1304 = vrot.slane %v1070, 6
  %v1306 = vmul.f32 %v1060, %v1304
  %v1307 = vadd.f32 %v1306, %v1069
  %v1308 = vmul.f32 %v1073, %v1307
  %v1309 = vadd.f32 %v1302, %v1308
  %v1311 = vrot.slane %v1089, 6
  %v1313 = vmul.f32 %v1079, %v1311
  %v1314 = vadd.f32 %v1313, %v1088
  %v1315 = vmul.f32 %v1092, %v1314
  %v1316 = vadd.f32 %v1309, %v1315
  %v1318 = vrot.slane %v1108, 6
  %v1320 = vmul.f32 %v1098, %v1318
  %v1321 = vadd.f32 %v1320, %v1107
  %v1322 = vmul.f32 %v1111, %v1321
  %v1323 = vadd.f32 %v1316, %v1322
  %v1325 = vrot.slane %v1127, 6
  %v1327 = vmul.f32 %v1117, %v1325
  %v1328 = vadd.f32 %v1327, %v1126
  %v1329 = vmul.f32 %v1130, %v1328
  %v1330 = vadd.f32 %v1323, %v1329
  %v1332 = vrot.slane %v1146, 6
  %v1334 = vmul.f32 %v1136, %v1332
  %v1335 = vadd.f32 %v1334, %v1145
  %v1336 = vmul.f32 %v1149, %v1335
  %v1337 = vadd.f32 %v1330, %v1336
  %v1339 = vrot.slane %v1165, 6
  %v1341 = vmul.f32 %v1155, %v1339
  %v1342 = vadd.f32 %v1341, %v1164
  %v1343 = vmul.f32 %v1168, %v1342
  %v1344 = vadd.f32 %v1337, %v1343
  %v1346 = vrot.slane %v1184, 6
  %v1348 = vmul.f32 %v1174, %v1346
  %v1349 = vadd.f32 %v1348, %v1183
  %v1350 = vmul.f32 %v1187, %v1349
  %v1351 = vadd.f32 %v1344, %v1350
  %v1353 = vrot.slane %v1203, 6
  %v1355 = vmul.f32 %v1193, %v1353
  %v1356 = vadd.f32 %v1355, %v1202
  %v1357 = vmul.f32 %v1206, %v1356
  %v1358 = vadd.f32 %v1351, %v1357
  %v1360 = vrot.slane %v1222, 6
  %v1362 = vmul.f32 %v1212, %v1360
  %v1363 = vadd.f32 %v1362, %v1221
  %v1364 = vmul.f32 %v1225, %v1363
  %v1365 = vadd.f32 %v1358, %v1364
  %v1367 = vrot.slane %v1241, 6
  %v1369 = vmul.f32 %v1231, %v1367
  %v1370 = vadd.f32 %v1369, %v1240
  %v1371 = vmul.f32 %v1244, %v1370
  %v1372 = vadd.f32 %v1365, %v1371
  %v1374 = vrot.slane %v1260, 6
  %v1376 = vmul.f32 %v1250, %v1374
  %v1377 = vadd.f32 %v1376, %v1259
  %v1378 = vmul.f32 %v1263, %v1377
  %v1379 = vadd.f32 %v1372, %v1378
  %1380 = vst.msk [vmem:[#allocation2 + $0x8] sm:$0xc] %vm732, %v1379
  %v1382 = vrot.slane %v1272, 6
  %v1384 = vmul.f32 %v964, %v1382
  %v1385 = vadd.f32 %v1384, %v974
  %v1386 = vmul.f32 %v978, %v1385
  %v1387 = vadd.f32 %v1386, 0.0
  %v1389 = vrot.slane %v1279, 6
  %v1391 = vmul.f32 %v984, %v1389
  %v1392 = vadd.f32 %v1391, %v993
  %v1393 = vmul.f32 %v997, %v1392
  %v1394 = vadd.f32 %v1387, %v1393
  %v1396 = vrot.slane %v1286, 6
  %v1398 = vmul.f32 %v1003, %v1396
  %v1399 = vadd.f32 %v1398, %v1012
  %v1400 = vmul.f32 %v1016, %v1399
  %v1401 = vadd.f32 %v1394, %v1400
  %v1403 = vrot.slane %v1293, 6
  %v1405 = vmul.f32 %v1022, %v1403
  %v1406 = vadd.f32 %v1405, %v1031
  %v1407 = vmul.f32 %v1035, %v1406
  %v1408 = vadd.f32 %v1401, %v1407
  %v1410 = vrot.slane %v1300, 6
  %v1412 = vmul.f32 %v1041, %v1410
  %v1413 = vadd.f32 %v1412, %v1050
  %v1414 = vmul.f32 %v1054, %v1413
  %v1415 = vadd.f32 %v1408, %v1414
  %v1417 = vrot.slane %v1307, 6
  %v1419 = vmul.f32 %v1060, %v1417
  %v1420 = vadd.f32 %v1419, %v1069
  %v1421 = vmul.f32 %v1073, %v1420
  %v1422 = vadd.f32 %v1415, %v1421
  %v1424 = vrot.slane %v1314, 6
  %v1426 = vmul.f32 %v1079, %v1424
  %v1427 = vadd.f32 %v1426, %v1088
  %v1428 = vmul.f32 %v1092, %v1427
  %v1429 = vadd.f32 %v1422, %v1428
  %v1431 = vrot.slane %v1321, 6
  %v1433 = vmul.f32 %v1098, %v1431
  %v1434 = vadd.f32 %v1433, %v1107
  %v1435 = vmul.f32 %v1111, %v1434
  %v1436 = vadd.f32 %v1429, %v1435
  %v1438 = vrot.slane %v1328, 6
  %v1440 = vmul.f32 %v1117, %v1438
  %v1441 = vadd.f32 %v1440, %v1126
  %v1442 = vmul.f32 %v1130, %v1441
  %v1443 = vadd.f32 %v1436, %v1442
  %v1445 = vrot.slane %v1335, 6
  %v1447 = vmul.f32 %v1136, %v1445
  %v1448 = vadd.f32 %v1447, %v1145
  %v1449 = vmul.f32 %v1149, %v1448
  %v1450 = vadd.f32 %v1443, %v1449
  %v1452 = vrot.slane %v1342, 6
  %v1454 = vmul.f32 %v1155, %v1452
  %v1455 = vadd.f32 %v1454, %v1164
  %v1456 = vmul.f32 %v1168, %v1455
  %v1457 = vadd.f32 %v1450, %v1456
  %v1459 = vrot.slane %v1349, 6
  %v1461 = vmul.f32 %v1174, %v1459
  %v1462 = vadd.f32 %v1461, %v1183
  %v1463 = vmul.f32 %v1187, %v1462
  %v1464 = vadd.f32 %v1457, %v1463
  %v1466 = vrot.slane %v1356, 6
  %v1468 = vmul.f32 %v1193, %v1466
  %v1469 = vadd.f32 %v1468, %v1202
  %v1470 = vmul.f32 %v1206, %v1469
  %v1471 = vadd.f32 %v1464, %v1470
  %v1473 = vrot.slane %v1363, 6
  %v1475 = vmul.f32 %v1212, %v1473
  %v1476 = vadd.f32 %v1475, %v1221
  %v1477 = vmul.f32 %v1225, %v1476
  %v1478 = vadd.f32 %v1471, %v1477
  %v1480 = vrot.slane %v1370, 6
  %v1482 = vmul.f32 %v1231, %v1480
  %v1483 = vadd.f32 %v1482, %v1240
  %v1484 = vmul.f32 %v1244, %v1483
  %v1485 = vadd.f32 %v1478, %v1484
  %v1487 = vrot.slane %v1377, 6
  %v1489 = vmul.f32 %v1250, %v1487
  %v1490 = vadd.f32 %v1489, %v1259
  %v1491 = vmul.f32 %v1263, %v1490
  %v1492 = vadd.f32 %v1485, %v1491
  %1493 = vst.msk [vmem:[#allocation2 + $0x8] sm:$0x30] %vm846, %v1492
  %v1495 = vrot.slane %v1385, 6
  %v1497 = vmul.f32 %v964, %v1495
  %v1498 = vadd.f32 %v1497, %v974
  %v1499 = vmul.f32 %v978, %v1498
  %v1500 = vadd.f32 %v1499, 0.0
  %v1502 = vrot.slane %v1392, 6
  %v1504 = vmul.f32 %v984, %v1502
  %v1505 = vadd.f32 %v1504, %v993
  %v1506 = vmul.f32 %v997, %v1505
  %v1507 = vadd.f32 %v1500, %v1506
  %v1509 = vrot.slane %v1399, 6
  %v1511 = vmul.f32 %v1003, %v1509
  %v1512 = vadd.f32 %v1511, %v1012
  %v1513 = vmul.f32 %v1016, %v1512
  %v1514 = vadd.f32 %v1507, %v1513
  %v1516 = vrot.slane %v1406, 6
  %v1518 = vmul.f32 %v1022, %v1516
  %v1519 = vadd.f32 %v1518, %v1031
  %v1520 = vmul.f32 %v1035, %v1519
  %v1521 = vadd.f32 %v1514, %v1520
  %v1523 = vrot.slane %v1413, 6
  %v1525 = vmul.f32 %v1041, %v1523
  %v1526 = vadd.f32 %v1525, %v1050
  %v1527 = vmul.f32 %v1054, %v1526
  %v1528 = vadd.f32 %v1521, %v1527
  %v1530 = vrot.slane %v1420, 6
  %v1532 = vmul.f32 %v1060, %v1530
  %v1533 = vadd.f32 %v1532, %v1069
  %v1534 = vmul.f32 %v1073, %v1533
  %v1535 = vadd.f32 %v1528, %v1534
  %v1537 = vrot.slane %v1427, 6
  %v1539 = vmul.f32 %v1079, %v1537
  %v1540 = vadd.f32 %v1539, %v1088
  %v1541 = vmul.f32 %v1092, %v1540
  %v1542 = vadd.f32 %v1535, %v1541
  %v1544 = vrot.slane %v1434, 6
  %v1546 = vmul.f32 %v1098, %v1544
  %v1547 = vadd.f32 %v1546, %v1107
  %v1548 = vmul.f32 %v1111, %v1547
  %v1549 = vadd.f32 %v1542, %v1548
  %v1551 = vrot.slane %v1441, 6
  %v1553 = vmul.f32 %v1117, %v1551
  %v1554 = vadd.f32 %v1553, %v1126
  %v1555 = vmul.f32 %v1130, %v1554
  %v1556 = vadd.f32 %v1549, %v1555
  %v1558 = vrot.slane %v1448, 6
  %v1560 = vmul.f32 %v1136, %v1558
  %v1561 = vadd.f32 %v1560, %v1145
  %v1562 = vmul.f32 %v1149, %v1561
  %v1563 = vadd.f32 %v1556, %v1562
  %v1565 = vrot.slane %v1455, 6
  %v1567 = vmul.f32 %v1155, %v1565
  %v1568 = vadd.f32 %v1567, %v1164
  %v1569 = vmul.f32 %v1168, %v1568
  %v1570 = vadd.f32 %v1563, %v1569
  %v1572 = vrot.slane %v1462, 6
  %v1574 = vmul.f32 %v1174, %v1572
  %v1575 = vadd.f32 %v1574, %v1183
  %v1576 = vmul.f32 %v1187, %v1575
  %v1577 = vadd.f32 %v1570, %v1576
  %v1579 = vrot.slane %v1469, 6
  %v1581 = vmul.f32 %v1193, %v1579
  %v1582 = vadd.f32 %v1581, %v1202
  %v1583 = vmul.f32 %v1206, %v1582
  %v1584 = vadd.f32 %v1577, %v1583
  %v1586 = vrot.slane %v1476, 6
  %v1588 = vmul.f32 %v1212, %v1586
  %v1589 = vadd.f32 %v1588, %v1221
  %v1590 = vmul.f32 %v1225, %v1589
  %v1591 = vadd.f32 %v1584, %v1590
  %v1593 = vrot.slane %v1483, 6
  %v1595 = vmul.f32 %v1231, %v1593
  %v1596 = vadd.f32 %v1595, %v1240
  %v1597 = vmul.f32 %v1244, %v1596
  %v1598 = vadd.f32 %v1591, %v1597
  %v1600 = vrot.slane %v1490, 6
  %v1602 = vmul.f32 %v1250, %v1600
  %v1603 = vadd.f32 %v1602, %v1259
  %v1604 = vmul.f32 %v1263, %v1603
  %v1605 = vadd.f32 %v1598, %v1604
  %1606 = vst.msk [vmem:[#allocation2 + $0x8] sm:$0xc0] %vm960, %v1605
  %v1607 = vld [vmem:[#allocation2] sm:$0xff]
  %v1608 = vld [vmem:[#allocation2 + $0x8] sm:$0xff]
  %v1609 = vlaneseq
  %v1610 = vshrl.u32 %v1609, 7
  %v1611 = vsub.s32 6, %v1610
  %v1612 = vrot.slane %v34, %v1611
  %v1613 = vmul.f32 %v199, %v1612
  %v1614 = vmul.f32 %v200, %v1612
  %v1615 = vadd.f32 %v1607, %v1613
  %v1616 = vadd.f32 %v1608, %v1614
  %v1617 = vsub.f32 0.0, %v122
  %v1618 = vsub.f32 0.0, %v125
  %v1619 = vmul.f32 %v1617, 1.442695
  %v1620 = vpow.pop %v1619
  %v1621 = vmul.f32 %v1618, 1.442695
  %v1622 = vpow.pop %v1621
  %v1623 = vadd.f32 %v1620, 1.0
  %v1624 = vadd.f32 %v1622, 1.0
  %v1625 = vrcp.pop %v1623
  %v1626 = vmul.f32 1.0, %v1625
  %v1627 = vrcp.pop %v1624
  %v1628 = vmul.f32 1.0, %v1627
  %v1629 = vmul.f32 %v122, %v1626
  %v1630 = vmul.f32 %v125, %v1628
  %1633 = vrot.lane.b32.xlu0 %v1629, 64
  %v1634 = vpop.permute.xlu0 %1633
  %1635 = vrot.lane.b32.xlu0 %v1630, 64
  %v1636 = vpop.permute.xlu0 %1635
  %v1639 = vmul.f32 %v1615, %v1634
  %v1640 = vmul.f32 %v1616, %v1636
  %v1641 = vpack.c.bf16 %v1640, %v1639
  %1642 = vrot.lane.b32.xlu0 %v218, 32
  %v1643 = vpop.permute.xlu0 %1642
  %1644 = vrot.lane.b32.xlu0 %v219, 32
  %v1645 = vpop.permute.xlu0 %1644
  %1646 = vrot.lane.b32.xlu0 %v220, 32
  %v1647 = vpop.permute.xlu0 %1646
  %1648 = vrot.lane.b32.xlu0 %v221, 32
  %v1649 = vpop.permute.xlu0 %1648
  %v1655 = vsel %vm226, %v1641, 0
  %1657 = vmatprep.subr.bf16.mxu0 0
  %1658 = vmatpush1.bf16.msra.mxu0 %v1643
  %1659 = vmatprep.subr.bf16.mxu0 0
  %1660 = vmatpush1.bf16.msra.mxu0 %v1645
  %1661 = vmatprep.subr.bf16.mxu0 0
  %1662 = vmatpush1.bf16.msra.mxu0 %v1647
  %1663 = vmatprep.subr.bf16.mxu0 0
  %1664 = vmatpush1.bf16.msra.mxu0 %v1649
  %1665 = vmatprep.subr.bf16.mxu0 0
  %1666 = vmatpush1.bf16.msra.mxu0 0
  %1667 = vmatprep.subr.bf16.mxu0 0
  %1668 = vmatpush1.bf16.msra.mxu0 0
  %1669 = vmatprep.subr.bf16.mxu0 0
  %1670 = vmatpush1.bf16.msra.mxu0 0
  %1671 = vmatprep.subr.bf16.mxu0 0
  %1672 = vmatpush1.bf16.msra.mxu0 0
  %1673 = vmatprep.subr.bf16.mxu0 0
  %1674 = vmatpush1.bf16.msra.mxu0 0
  %1675 = vmatprep.subr.bf16.mxu0 0
  %1676 = vmatpush1.bf16.msra.mxu0 0
  %1677 = vmatprep.subr.bf16.mxu0 0
  %1678 = vmatpush1.bf16.msra.mxu0 0
  %1679 = vmatprep.subr.bf16.mxu0 0
  %1680 = vmatpush1.bf16.msra.mxu0 0
  %1681 = vmatprep.subr.bf16.mxu0 0
  %1682 = vmatpush1.bf16.msra.mxu0 0
  %1683 = vmatprep.subr.bf16.mxu0 0
  %1684 = vmatpush1.bf16.msra.mxu0 0
  %1685 = vmatprep.subr.bf16.mxu0 0
  %1686 = vmatpush1.bf16.msra.mxu0 0
  %1687 = vmatprep.subr.bf16.mxu0 0
  %1688 = vmatpush1.bf16.msra.mxu0 0
  %1689 = vmatprep.mubr.bf16.mxu0 0
  %1690 = vmatmul.mubr.bf16.gmra.mrb[0].mxu0 %v1655
  %v1691 = vpop.f32.mrb[0].mxu0
  %v1692 = vadd.f32 0.0, %v1691
  %v1693 = vpop.f32.mrb[0].mxu0
  %v1694 = vpop.f32.mrb[0].mxu0
  %v1695 = vadd.f32 0.0, %v1694
  %v1696 = vpop.f32.mrb[0].mxu0
  %1697 = vdwg.mxu0
  %v1698 = vadd.f32 %v27, %v1692
  %v1699 = vadd.f32 %v28, %v1695
  %s1700 = scalar_lea.vmem %s1, 1
  %v1701 = vld [vmem:[%s1700] sm:$0x1]
  %s1702 = scalar_lea.vmem %s2, 16
  %v1703 = vld [vmem:[%s1702] sm:$0xf]
  %v1704 = vld [vmem:[%s1702 + $0x4] sm:$0xf]
  %v1705 = vld [vmem:[%s1702 + $0x8] sm:$0xf]
  %v1706 = vld [vmem:[%s1702 + $0xc] sm:$0xf]
  %s1707 = scalar_lea.vmem %s3, 8
  %v1708 = vld [vmem:[%s1707] sm:$0xff]
  %s1709 = scalar_lea.vmem %s4, 32
  %v1710 = vld [vmem:[%s1709] sm:$0xf]
  %v1711 = vld [vmem:[%s1709 + $0x4] sm:$0xf]
  %v1712 = vld [vmem:[%s1709 + $0x8] sm:$0xf]
  %v1713 = vld [vmem:[%s1709 + $0xc] sm:$0xf]
  %v1714 = vld [vmem:[%s1709 + $0x10] sm:$0xf]
  %v1715 = vld [vmem:[%s1709 + $0x14] sm:$0xf]
  %v1716 = vld [vmem:[%s1709 + $0x18] sm:$0xf]
  %v1717 = vld [vmem:[%s1709 + $0x1c] sm:$0xf]
  %s1718 = scalar_lea.vmem %s5, 16
  %v1719 = vld [vmem:[%s1718] sm:$0xff]
  %v1720 = vld [vmem:[%s1718 + $0x8] sm:$0xff]
  %v1721 = vmul.f32 %v1698, %v1698
  %v1722 = vmul.f32 %v1699, %v1699
  %v1723 = vsel %vm47, %v1721, 0.0
  %1724 = vadd.xlane.f32.xlu0 %v1723
  %v1725 = vpop.xlane.xlu0 %1724
  %v1726 = vsel %vm47, %v1722, 0.0
  %1727 = vadd.xlane.f32.xlu0 %v1726
  %v1728 = vpop.xlane.xlu0 %1727
  %v1729 = vmul.f32 %v1725, %v54
  %v1730 = vmul.f32 %v1728, %v54
  %v1731 = vadd.f32 %v1729, 1e-05
  %v1732 = vadd.f32 %v1730, 1e-05
  %v1733 = vrsqrt.pop %v1731
  %v1734 = vrsqrt.pop %v1732
  %v1735 = vmul.f32 %v1698, %v1733
  %v1736 = vmul.f32 %v1699, %v1734
  %v1738 = vlaneseq
  %v1739 = vshrl.u32 %v1738, 7
  %v1740 = vsub.s32 0, %v1739
  %v1741 = vrot.slane %v1701, %v1740
  %v1743 = vmul.f32 %v1735, %v1741
  %v1744 = vmul.f32 %v1736, %v1741
  %v1745 = vpack.c.bf16 %v1744, %v1743
  %v1750 = vunpack.c.l.b16 %v1703
  %v1751 = vunpack.c.l.b16 %v1704
  %v1752 = vunpack.c.l.b16 %v1705
  %v1753 = vunpack.c.l.b16 %v1706
  %v1754 = vpack.c.b16 %v1751, %v1750
  %v1755 = vpack.c.b16 %v1753, %v1752
  %v1759 = vsel %vm47, %v1745, 0
  %1761 = vmatprep.subr.bf16.mxu0 0
  %1762 = vmatpush1.bf16.msra.mxu0 %v1754
  %1763 = vmatprep.subr.bf16.mxu0 0
  %1764 = vmatpush1.bf16.msra.mxu0 %v1755
  %1765 = vmatprep.subr.bf16.mxu0 0
  %1766 = vmatpush1.bf16.msra.mxu0 0
  %1767 = vmatprep.subr.bf16.mxu0 0
  %1768 = vmatpush1.bf16.msra.mxu0 0
  %1769 = vmatprep.subr.bf16.mxu0 0
  %1770 = vmatpush1.bf16.msra.mxu0 0
  %1771 = vmatprep.subr.bf16.mxu0 0
  %1772 = vmatpush1.bf16.msra.mxu0 0
  %1773 = vmatprep.subr.bf16.mxu0 0
  %1774 = vmatpush1.bf16.msra.mxu0 0
  %1775 = vmatprep.subr.bf16.mxu0 0
  %1776 = vmatpush1.bf16.msra.mxu0 0
  %1777 = vmatprep.subr.bf16.mxu0 0
  %1778 = vmatpush1.bf16.msra.mxu0 0
  %1779 = vmatprep.subr.bf16.mxu0 0
  %1780 = vmatpush1.bf16.msra.mxu0 0
  %1781 = vmatprep.subr.bf16.mxu0 0
  %1782 = vmatpush1.bf16.msra.mxu0 0
  %1783 = vmatprep.subr.bf16.mxu0 0
  %1784 = vmatpush1.bf16.msra.mxu0 0
  %1785 = vmatprep.subr.bf16.mxu0 0
  %1786 = vmatpush1.bf16.msra.mxu0 0
  %1787 = vmatprep.subr.bf16.mxu0 0
  %1788 = vmatpush1.bf16.msra.mxu0 0
  %1789 = vmatprep.subr.bf16.mxu0 0
  %1790 = vmatpush1.bf16.msra.mxu0 0
  %1791 = vmatprep.subr.bf16.mxu0 0
  %1792 = vmatpush1.bf16.msra.mxu0 0
  %1793 = vmatprep.mubr.bf16.mxu0 0
  %1794 = vmatmul.mubr.bf16.gmra.mrb[0].mxu0 %v1759
  %v1795 = vpop.f32.mrb[0].mxu0
  %v1796 = vadd.f32 0.0, %v1795
  %v1797 = vpop.f32.mrb[0].mxu0
  %v1798 = vpop.f32.mrb[0].mxu0
  %v1799 = vadd.f32 0.0, %v1798
  %v1800 = vpop.f32.mrb[0].mxu0
  %1801 = vdwg.mxu0
  %v1802 = vlaneseq
  %v1803 = vshrl.u32 %v1802, 7
  %v1804 = vsub.s32 3, %v1803
  %v1805 = vrot.slane %v1708, %v1804
  %v1806 = vmul.f32 %v1796, %v1805
  %v1807 = vmul.f32 %v1799, %v1805
  %v1810 = vrot.slane %v1796, 6
  %v1811 = vrot.slane %v1799, 6
  %v1812 = vsel %vm136, %v1810, %v1811
  %v1815 = vsel %vm136, 0.0, %v1810
  %v1816 = vlaneseq
  %v1817 = vshrl.u32 %v1816, 7
  %v1818 = vsub.s32 2, %v1817
  %v1819 = vrot.slane %v1708, %v1818
  %v1820 = vmul.f32 %v1815, %v1819
  %v1821 = vmul.f32 %v1812, %v1819
  %v1822 = vadd.f32 %v1806, %v1820
  %v1823 = vadd.f32 %v1807, %v1821
  %v1824 = vrot.slane %v1796, 4
  %v1825 = vrot.slane %v1799, 4
  %v1826 = vsel %vm151, %v1824, %v1825
  %v1829 = vsel %vm151, 0.0, %v1824
  %v1830 = vlaneseq
  %v1831 = vshrl.u32 %v1830, 7
  %v1832 = vsub.s32 1, %v1831
  %v1833 = vrot.slane %v1708, %v1832
  %v1834 = vmul.f32 %v1829, %v1833
  %v1835 = vmul.f32 %v1826, %v1833
  %v1836 = vadd.f32 %v1822, %v1834
  %v1837 = vadd.f32 %v1823, %v1835
  %v1838 = vrot.slane %v1796, 2
  %v1839 = vrot.slane %v1799, 2
  %v1840 = vsel %vm166, %v1838, %v1839
  %v1843 = vsel %vm166, 0.0, %v1838
  %v1844 = vlaneseq
  %v1845 = vshrl.u32 %v1844, 7
  %v1846 = vsub.s32 0, %v1845
  %v1847 = vrot.slane %v1708, %v1846
  %v1848 = vmul.f32 %v1843, %v1847
  %v1849 = vmul.f32 %v1840, %v1847
  %v1850 = vadd.f32 %v1836, %v1848
  %v1851 = vadd.f32 %v1837, %v1849
  %v1852 = vlaneseq
  %v1853 = vshrl.u32 %v1852, 7
  %v1854 = vsub.s32 4, %v1853
  %v1855 = vrot.slane %v1708, %v1854
  %v1856 = vadd.f32 %v1850, %v1855
  %v1857 = vadd.f32 %v1851, %v1855
  %v1858 = vsub.f32 0.0, %v1856
  %v1859 = vsub.f32 0.0, %v1857
  %v1860 = vmul.f32 %v1858, 1.442695
  %v1861 = vpow.pop %v1860
  %v1862 = vmul.f32 %v1859, 1.442695
  %v1863 = vpow.pop %v1862
  %v1864 = vadd.f32 %v1861, 1.0
  %v1865 = vadd.f32 %v1863, 1.0
  %v1866 = vrcp.pop %v1864
  %v1867 = vmul.f32 1.0, %v1866
  %v1868 = vrcp.pop %v1865
  %v1869 = vmul.f32 1.0, %v1868
  %v1870 = vmul.f32 %v1856, %v1867
  %v1871 = vmul.f32 %v1857, %v1869
  %v1872 = vpack.c.bf16 %v1871, %v1870
  %v1881 = vunpack.c.l.b16 %v1710
  %v1882 = vunpack.c.l.b16 %v1711
  %v1883 = vunpack.c.l.b16 %v1712
  %v1884 = vunpack.c.l.b16 %v1713
  %v1885 = vunpack.c.l.b16 %v1714
  %v1886 = vunpack.c.l.b16 %v1715
  %v1887 = vunpack.c.l.b16 %v1716
  %v1888 = vunpack.c.l.b16 %v1717
  %v1889 = vpack.c.b16 %v1882, %v1881
  %v1890 = vpack.c.b16 %v1884, %v1883
  %v1891 = vpack.c.b16 %v1886, %v1885
  %v1892 = vpack.c.b16 %v1888, %v1887
  %v1898 = vsel %vm226, %v1872, 0
  %1900 = vmatprep.subr.bf16.mxu0 0
  %1901 = vmatpush1.bf16.msra.mxu0 %v1889
  %1902 = vmatprep.subr.bf16.mxu0 0
  %1903 = vmatpush1.bf16.msra.mxu0 %v1890
  %1904 = vmatprep.subr.bf16.mxu0 0
  %1905 = vmatpush1.bf16.msra.mxu0 %v1891
  %1906 = vmatprep.subr.bf16.mxu0 0
  %1907 = vmatpush1.bf16.msra.mxu0 %v1892
  %1908 = vmatprep.subr.bf16.mxu0 0
  %1909 = vmatpush1.bf16.msra.mxu0 0
  %1910 = vmatprep.subr.bf16.mxu0 0
  %1911 = vmatpush1.bf16.msra.mxu0 0
  %1912 = vmatprep.subr.bf16.mxu0 0
  %1913 = vmatpush1.bf16.msra.mxu0 0
  %1914 = vmatprep.subr.bf16.mxu0 0
  %1915 = vmatpush1.bf16.msra.mxu0 0
  %1916 = vmatprep.subr.bf16.mxu0 0
  %1917 = vmatpush1.bf16.msra.mxu0 0
  %1918 = vmatprep.subr.bf16.mxu0 0
  %1919 = vmatpush1.bf16.msra.mxu0 0
  %1920 = vmatprep.subr.bf16.mxu0 0
  %1921 = vmatpush1.bf16.msra.mxu0 0
  %1922 = vmatprep.subr.bf16.mxu0 0
  %1923 = vmatpush1.bf16.msra.mxu0 0
  %1924 = vmatprep.subr.bf16.mxu0 0
  %1925 = vmatpush1.bf16.msra.mxu0 0
  %1926 = vmatprep.subr.bf16.mxu0 0
  %1927 = vmatpush1.bf16.msra.mxu0 0
  %1928 = vmatprep.subr.bf16.mxu0 0
  %1929 = vmatpush1.bf16.msra.mxu0 0
  %1930 = vmatprep.subr.bf16.mxu0 0
  %1931 = vmatpush1.bf16.msra.mxu0 0
  %1932 = vmatprep.mubr.bf16.mxu0 0
  %1933 = vmatmul.mubr.bf16.gmra.mrb[0].mxu0 %v1898
  %v1934 = vpop.f32.mrb[0].mxu0
  %v1935 = vadd.f32 0.0, %v1934
  %v1936 = vpop.f32.mrb[0].mxu0
  %v1937 = vpop.f32.mrb[0].mxu0
  %v1938 = vadd.f32 0.0, %v1937
  %v1939 = vpop.f32.mrb[0].mxu0
  %1940 = vdwg.mxu0
  %v1941 = vlaneseq
  %v1942 = vshrl.u32 %v1941, 7
  %v1943 = vsub.s32 5, %v1942
  %v1944 = vrot.slane %v1708, %v1943
  %v1945 = vadd.f32 %v1935, %v1944
  %v1946 = vadd.f32 %v1938, %v1944
  %v1947 = vmax.f32 %v1945, 0.0
  %v1948 = vmax.f32 %v1946, 0.0
  %v1949 = vand.u32 2147483647, %v1945
  %v1950 = vand.u32 2147483647, %v1946
  %v1951 = vsub.f32 0.0, %v1949
  %v1952 = vsub.f32 0.0, %v1950
  %v1953 = vmul.f32 %v1951, 1.442695
  %v1954 = vpow.pop %v1953
  %v1955 = vmul.f32 %v1952, 1.442695
  %v1956 = vpow.pop %v1955
  %v1957 = vadd.f32 %v1954, 1.0
  %v1958 = vadd.f32 %v1956, 1.0
  %v1959 = vlog2.pop %v1957
  %v1960 = vmul.f32 %v1959, 0.6931472
  %v1961 = vlog2.pop %v1958
  %v1962 = vmul.f32 %v1961, 0.6931472
  %v1963 = vadd.f32 %v1947, %v1960
  %v1964 = vadd.f32 %v1948, %v1962
  %v1965 = vmul.f32 %v1963, %v1870
  %v1966 = vmul.f32 %v1964, %v1871
  %v1967 = vlaneseq
  %v1968 = vshrl.u32 %v1967, 7
  %v1969 = vsub.s32 0, %v1968
  %v1970 = vrot.slane %v1719, %v1969
  %v1971 = vmul.f32 %v1963, %v1970
  %v1972 = vmul.f32 %v1971, 1.442695
  %v1973 = vpow.pop %v1972
  %v1974 = vmul.f32 %v1973, 0.0
  %1976 = vset.pattern.permute.xlu0 64
  %1977 = vperm.xlu0 %1976, %v1935
  %v1978 = vpop.permute.xlu0 %1977
  %v1980 = vmul.f32 %v1978, %v1965
  %v1981 = vadd.f32 %v1974, %v1980
  %1982 = vset.pattern.permute.xlu0 80
  %1983 = vperm.xlu0 %1982, %v1935
  %v1984 = vpop.permute.xlu0 %1983
  %v1986 = vmul.f32 %v1984, %v1981
  %v1987 = vadd.f32 %v1986, 0.0
  %v1988 = vlaneseq
  %v1989 = vshrl.u32 %v1988, 7
  %v1990 = vsub.s32 1, %v1989
  %v1991 = vrot.slane %v1719, %v1990
  %v1992 = vmul.f32 %v1963, %v1991
  %v1993 = vmul.f32 %v1992, 1.442695
  %v1994 = vpow.pop %v1993
  %v1995 = vmul.f32 %v1994, 0.0
  %1996 = vset.pattern.permute.xlu0 65
  %1997 = vperm.xlu0 %1996, %v1935
  %v1998 = vpop.permute.xlu0 %1997
  %v2000 = vmul.f32 %v1998, %v1965
  %v2001 = vadd.f32 %v1995, %v2000
  %2002 = vset.pattern.permute.xlu0 81
  %2003 = vperm.xlu0 %2002, %v1935
  %v2004 = vpop.permute.xlu0 %2003
  %v2006 = vmul.f32 %v2004, %v2001
  %v2007 = vadd.f32 %v1987, %v2006
  %v2008 = vlaneseq
  %v2009 = vshrl.u32 %v2008, 7
  %v2010 = vsub.s32 2, %v2009
  %v2011 = vrot.slane %v1719, %v2010
  %v2012 = vmul.f32 %v1963, %v2011
  %v2013 = vmul.f32 %v2012, 1.442695
  %v2014 = vpow.pop %v2013
  %v2015 = vmul.f32 %v2014, 0.0
  %2016 = vset.pattern.permute.xlu0 66
  %2017 = vperm.xlu0 %2016, %v1935
  %v2018 = vpop.permute.xlu0 %2017
  %v2020 = vmul.f32 %v2018, %v1965
  %v2021 = vadd.f32 %v2015, %v2020
  %2022 = vset.pattern.permute.xlu0 82
  %2023 = vperm.xlu0 %2022, %v1935
  %v2024 = vpop.permute.xlu0 %2023
  %v2026 = vmul.f32 %v2024, %v2021
  %v2027 = vadd.f32 %v2007, %v2026
  %v2028 = vlaneseq
  %v2029 = vshrl.u32 %v2028, 7
  %v2030 = vsub.s32 3, %v2029
  %v2031 = vrot.slane %v1719, %v2030
  %v2032 = vmul.f32 %v1963, %v2031
  %v2033 = vmul.f32 %v2032, 1.442695
  %v2034 = vpow.pop %v2033
  %v2035 = vmul.f32 %v2034, 0.0
  %2036 = vset.pattern.permute.xlu0 67
  %2037 = vperm.xlu0 %2036, %v1935
  %v2038 = vpop.permute.xlu0 %2037
  %v2040 = vmul.f32 %v2038, %v1965
  %v2041 = vadd.f32 %v2035, %v2040
  %2042 = vset.pattern.permute.xlu0 83
  %2043 = vperm.xlu0 %2042, %v1935
  %v2044 = vpop.permute.xlu0 %2043
  %v2046 = vmul.f32 %v2044, %v2041
  %v2047 = vadd.f32 %v2027, %v2046
  %v2048 = vlaneseq
  %v2049 = vshrl.u32 %v2048, 7
  %v2050 = vsub.s32 4, %v2049
  %v2051 = vrot.slane %v1719, %v2050
  %v2052 = vmul.f32 %v1963, %v2051
  %v2053 = vmul.f32 %v2052, 1.442695
  %v2054 = vpow.pop %v2053
  %v2055 = vmul.f32 %v2054, 0.0
  %2056 = vset.pattern.permute.xlu0 68
  %2057 = vperm.xlu0 %2056, %v1935
  %v2058 = vpop.permute.xlu0 %2057
  %v2060 = vmul.f32 %v2058, %v1965
  %v2061 = vadd.f32 %v2055, %v2060
  %2062 = vset.pattern.permute.xlu0 84
  %2063 = vperm.xlu0 %2062, %v1935
  %v2064 = vpop.permute.xlu0 %2063
  %v2066 = vmul.f32 %v2064, %v2061
  %v2067 = vadd.f32 %v2047, %v2066
  %v2068 = vlaneseq
  %v2069 = vshrl.u32 %v2068, 7
  %v2070 = vsub.s32 5, %v2069
  %v2071 = vrot.slane %v1719, %v2070
  %v2072 = vmul.f32 %v1963, %v2071
  %v2073 = vmul.f32 %v2072, 1.442695
  %v2074 = vpow.pop %v2073
  %v2075 = vmul.f32 %v2074, 0.0
  %2076 = vset.pattern.permute.xlu0 69
  %2077 = vperm.xlu0 %2076, %v1935
  %v2078 = vpop.permute.xlu0 %2077
  %v2080 = vmul.f32 %v2078, %v1965
  %v2081 = vadd.f32 %v2075, %v2080
  %2082 = vset.pattern.permute.xlu0 85
  %2083 = vperm.xlu0 %2082, %v1935
  %v2084 = vpop.permute.xlu0 %2083
  %v2086 = vmul.f32 %v2084, %v2081
  %v2087 = vadd.f32 %v2067, %v2086
  %v2088 = vlaneseq
  %v2089 = vshrl.u32 %v2088, 7
  %v2090 = vsub.s32 6, %v2089
  %v2091 = vrot.slane %v1719, %v2090
  %v2092 = vmul.f32 %v1963, %v2091
  %v2093 = vmul.f32 %v2092, 1.442695
  %v2094 = vpow.pop %v2093
  %v2095 = vmul.f32 %v2094, 0.0
  %2096 = vset.pattern.permute.xlu0 70
  %2097 = vperm.xlu0 %2096, %v1935
  %v2098 = vpop.permute.xlu0 %2097
  %v2100 = vmul.f32 %v2098, %v1965
  %v2101 = vadd.f32 %v2095, %v2100
  %2102 = vset.pattern.permute.xlu0 86
  %2103 = vperm.xlu0 %2102, %v1935
  %v2104 = vpop.permute.xlu0 %2103
  %v2106 = vmul.f32 %v2104, %v2101
  %v2107 = vadd.f32 %v2087, %v2106
  %v2108 = vlaneseq
  %v2109 = vshrl.u32 %v2108, 7
  %v2110 = vsub.s32 7, %v2109
  %v2111 = vrot.slane %v1719, %v2110
  %v2112 = vmul.f32 %v1963, %v2111
  %v2113 = vmul.f32 %v2112, 1.442695
  %v2114 = vpow.pop %v2113
  %v2115 = vmul.f32 %v2114, 0.0
  %2116 = vset.pattern.permute.xlu0 71
  %2117 = vperm.xlu0 %2116, %v1935
  %v2118 = vpop.permute.xlu0 %2117
  %v2120 = vmul.f32 %v2118, %v1965
  %v2121 = vadd.f32 %v2115, %v2120
  %2122 = vset.pattern.permute.xlu0 87
  %2123 = vperm.xlu0 %2122, %v1935
  %v2124 = vpop.permute.xlu0 %2123
  %v2126 = vmul.f32 %v2124, %v2121
  %v2127 = vadd.f32 %v2107, %v2126
  %v2128 = vlaneseq
  %v2129 = vshrl.u32 %v2128, 7
  %v2130 = vsub.s32 0, %v2129
  %v2131 = vrot.slane %v1720, %v2130
  %v2132 = vmul.f32 %v1963, %v2131
  %v2133 = vmul.f32 %v2132, 1.442695
  %v2134 = vpow.pop %v2133
  %v2135 = vmul.f32 %v2134, 0.0
  %2136 = vset.pattern.permute.xlu0 72
  %2137 = vperm.xlu0 %2136, %v1935
  %v2138 = vpop.permute.xlu0 %2137
  %v2140 = vmul.f32 %v2138, %v1965
  %v2141 = vadd.f32 %v2135, %v2140
  %2142 = vset.pattern.permute.xlu0 88
  %2143 = vperm.xlu0 %2142, %v1935
  %v2144 = vpop.permute.xlu0 %2143
  %v2146 = vmul.f32 %v2144, %v2141
  %v2147 = vadd.f32 %v2127, %v2146
  %v2148 = vlaneseq
  %v2149 = vshrl.u32 %v2148, 7
  %v2150 = vsub.s32 1, %v2149
  %v2151 = vrot.slane %v1720, %v2150
  %v2152 = vmul.f32 %v1963, %v2151
  %v2153 = vmul.f32 %v2152, 1.442695
  %v2154 = vpow.pop %v2153
  %v2155 = vmul.f32 %v2154, 0.0
  %2156 = vset.pattern.permute.xlu0 73
  %2157 = vperm.xlu0 %2156, %v1935
  %v2158 = vpop.permute.xlu0 %2157
  %v2160 = vmul.f32 %v2158, %v1965
  %v2161 = vadd.f32 %v2155, %v2160
  %2162 = vset.pattern.permute.xlu0 89
  %2163 = vperm.xlu0 %2162, %v1935
  %v2164 = vpop.permute.xlu0 %2163
  %v2166 = vmul.f32 %v2164, %v2161
  %v2167 = vadd.f32 %v2147, %v2166
  %v2168 = vlaneseq
  %v2169 = vshrl.u32 %v2168, 7
  %v2170 = vsub.s32 2, %v2169
  %v2171 = vrot.slane %v1720, %v2170
  %v2172 = vmul.f32 %v1963, %v2171
  %v2173 = vmul.f32 %v2172, 1.442695
  %v2174 = vpow.pop %v2173
  %v2175 = vmul.f32 %v2174, 0.0
  %2176 = vset.pattern.permute.xlu0 74
  %2177 = vperm.xlu0 %2176, %v1935
  %v2178 = vpop.permute.xlu0 %2177
  %v2180 = vmul.f32 %v2178, %v1965
  %v2181 = vadd.f32 %v2175, %v2180
  %2182 = vset.pattern.permute.xlu0 90
  %2183 = vperm.xlu0 %2182, %v1935
  %v2184 = vpop.permute.xlu0 %2183
  %v2186 = vmul.f32 %v2184, %v2181
  %v2187 = vadd.f32 %v2167, %v2186
  %v2188 = vlaneseq
  %v2189 = vshrl.u32 %v2188, 7
  %v2190 = vsub.s32 3, %v2189
  %v2191 = vrot.slane %v1720, %v2190
  %v2192 = vmul.f32 %v1963, %v2191
  %v2193 = vmul.f32 %v2192, 1.442695
  %v2194 = vpow.pop %v2193
  %v2195 = vmul.f32 %v2194, 0.0
  %2196 = vset.pattern.permute.xlu0 75
  %2197 = vperm.xlu0 %2196, %v1935
  %v2198 = vpop.permute.xlu0 %2197
  %v2200 = vmul.f32 %v2198, %v1965
  %v2201 = vadd.f32 %v2195, %v2200
  %2202 = vset.pattern.permute.xlu0 91
  %2203 = vperm.xlu0 %2202, %v1935
  %v2204 = vpop.permute.xlu0 %2203
  %v2206 = vmul.f32 %v2204, %v2201
  %v2207 = vadd.f32 %v2187, %v2206
  %v2208 = vlaneseq
  %v2209 = vshrl.u32 %v2208, 7
  %v2210 = vsub.s32 4, %v2209
  %v2211 = vrot.slane %v1720, %v2210
  %v2212 = vmul.f32 %v1963, %v2211
  %v2213 = vmul.f32 %v2212, 1.442695
  %v2214 = vpow.pop %v2213
  %v2215 = vmul.f32 %v2214, 0.0
  %2216 = vset.pattern.permute.xlu0 76
  %2217 = vperm.xlu0 %2216, %v1935
  %v2218 = vpop.permute.xlu0 %2217
  %v2220 = vmul.f32 %v2218, %v1965
  %v2221 = vadd.f32 %v2215, %v2220
  %2222 = vset.pattern.permute.xlu0 92
  %2223 = vperm.xlu0 %2222, %v1935
  %v2224 = vpop.permute.xlu0 %2223
  %v2226 = vmul.f32 %v2224, %v2221
  %v2227 = vadd.f32 %v2207, %v2226
  %v2228 = vlaneseq
  %v2229 = vshrl.u32 %v2228, 7
  %v2230 = vsub.s32 5, %v2229
  %v2231 = vrot.slane %v1720, %v2230
  %v2232 = vmul.f32 %v1963, %v2231
  %v2233 = vmul.f32 %v2232, 1.442695
  %v2234 = vpow.pop %v2233
  %v2235 = vmul.f32 %v2234, 0.0
  %2236 = vset.pattern.permute.xlu0 77
  %2237 = vperm.xlu0 %2236, %v1935
  %v2238 = vpop.permute.xlu0 %2237
  %v2240 = vmul.f32 %v2238, %v1965
  %v2241 = vadd.f32 %v2235, %v2240
  %2242 = vset.pattern.permute.xlu0 93
  %2243 = vperm.xlu0 %2242, %v1935
  %v2244 = vpop.permute.xlu0 %2243
  %v2246 = vmul.f32 %v2244, %v2241
  %v2247 = vadd.f32 %v2227, %v2246
  %v2248 = vlaneseq
  %v2249 = vshrl.u32 %v2248, 7
  %v2250 = vsub.s32 6, %v2249
  %v2251 = vrot.slane %v1720, %v2250
  %v2252 = vmul.f32 %v1963, %v2251
  %v2253 = vmul.f32 %v2252, 1.442695
  %v2254 = vpow.pop %v2253
  %v2255 = vmul.f32 %v2254, 0.0
  %2256 = vset.pattern.permute.xlu0 78
  %2257 = vperm.xlu0 %2256, %v1935
  %v2258 = vpop.permute.xlu0 %2257
  %v2260 = vmul.f32 %v2258, %v1965
  %v2261 = vadd.f32 %v2255, %v2260
  %2262 = vset.pattern.permute.xlu0 94
  %2263 = vperm.xlu0 %2262, %v1935
  %v2264 = vpop.permute.xlu0 %2263
  %v2266 = vmul.f32 %v2264, %v2261
  %v2267 = vadd.f32 %v2247, %v2266
  %v2268 = vlaneseq
  %v2269 = vshrl.u32 %v2268, 7
  %v2270 = vsub.s32 7, %v2269
  %v2271 = vrot.slane %v1720, %v2270
  %v2272 = vmul.f32 %v1963, %v2271
  %v2273 = vmul.f32 %v2272, 1.442695
  %v2274 = vpow.pop %v2273
  %v2275 = vmul.f32 %v2274, 0.0
  %2276 = vset.pattern.permute.xlu0 79
  %2277 = vperm.xlu0 %2276, %v1935
  %v2278 = vpop.permute.xlu0 %2277
  %v2280 = vmul.f32 %v2278, %v1965
  %v2281 = vadd.f32 %v2275, %v2280
  %2282 = vset.pattern.permute.xlu0 95
  %2283 = vperm.xlu0 %2282, %v1935
  %v2284 = vpop.permute.xlu0 %2283
  %v2286 = vmul.f32 %v2284, %v2281
  %v2287 = vadd.f32 %v2267, %v2286
  %2288 = vst.msk [vmem:[#allocation2] sm:$0x3] %vm618, %v2287
  %v2290 = vrot.slane %v1981, 6
  %v2292 = vmul.f32 %v1973, %v2290
  %v2293 = vadd.f32 %v2292, %v1980
  %v2294 = vmul.f32 %v1984, %v2293
  %v2295 = vadd.f32 %v2294, 0.0
  %v2297 = vrot.slane %v2001, 6
  %v2299 = vmul.f32 %v1994, %v2297
  %v2300 = vadd.f32 %v2299, %v2000
  %v2301 = vmul.f32 %v2004, %v2300
  %v2302 = vadd.f32 %v2295, %v2301
  %v2304 = vrot.slane %v2021, 6
  %v2306 = vmul.f32 %v2014, %v2304
  %v2307 = vadd.f32 %v2306, %v2020
  %v2308 = vmul.f32 %v2024, %v2307
  %v2309 = vadd.f32 %v2302, %v2308
  %v2311 = vrot.slane %v2041, 6
  %v2313 = vmul.f32 %v2034, %v2311
  %v2314 = vadd.f32 %v2313, %v2040
  %v2315 = vmul.f32 %v2044, %v2314
  %v2316 = vadd.f32 %v2309, %v2315
  %v2318 = vrot.slane %v2061, 6
  %v2320 = vmul.f32 %v2054, %v2318
  %v2321 = vadd.f32 %v2320, %v2060
  %v2322 = vmul.f32 %v2064, %v2321
  %v2323 = vadd.f32 %v2316, %v2322
  %v2325 = vrot.slane %v2081, 6
  %v2327 = vmul.f32 %v2074, %v2325
  %v2328 = vadd.f32 %v2327, %v2080
  %v2329 = vmul.f32 %v2084, %v2328
  %v2330 = vadd.f32 %v2323, %v2329
  %v2332 = vrot.slane %v2101, 6
  %v2334 = vmul.f32 %v2094, %v2332
  %v2335 = vadd.f32 %v2334, %v2100
  %v2336 = vmul.f32 %v2104, %v2335
  %v2337 = vadd.f32 %v2330, %v2336
  %v2339 = vrot.slane %v2121, 6
  %v2341 = vmul.f32 %v2114, %v2339
  %v2342 = vadd.f32 %v2341, %v2120
  %v2343 = vmul.f32 %v2124, %v2342
  %v2344 = vadd.f32 %v2337, %v2343
  %v2346 = vrot.slane %v2141, 6
  %v2348 = vmul.f32 %v2134, %v2346
  %v2349 = vadd.f32 %v2348, %v2140
  %v2350 = vmul.f32 %v2144, %v2349
  %v2351 = vadd.f32 %v2344, %v2350
  %v2353 = vrot.slane %v2161, 6
  %v2355 = vmul.f32 %v2154, %v2353
  %v2356 = vadd.f32 %v2355, %v2160
  %v2357 = vmul.f32 %v2164, %v2356
  %v2358 = vadd.f32 %v2351, %v2357
  %v2360 = vrot.slane %v2181, 6
  %v2362 = vmul.f32 %v2174, %v2360
  %v2363 = vadd.f32 %v2362, %v2180
  %v2364 = vmul.f32 %v2184, %v2363
  %v2365 = vadd.f32 %v2358, %v2364
  %v2367 = vrot.slane %v2201, 6
  %v2369 = vmul.f32 %v2194, %v2367
  %v2370 = vadd.f32 %v2369, %v2200
  %v2371 = vmul.f32 %v2204, %v2370
  %v2372 = vadd.f32 %v2365, %v2371
  %v2374 = vrot.slane %v2221, 6
  %v2376 = vmul.f32 %v2214, %v2374
  %v2377 = vadd.f32 %v2376, %v2220
  %v2378 = vmul.f32 %v2224, %v2377
  %v2379 = vadd.f32 %v2372, %v2378
  %v2381 = vrot.slane %v2241, 6
  %v2383 = vmul.f32 %v2234, %v2381
  %v2384 = vadd.f32 %v2383, %v2240
  %v2385 = vmul.f32 %v2244, %v2384
  %v2386 = vadd.f32 %v2379, %v2385
  %v2388 = vrot.slane %v2261, 6
  %v2390 = vmul.f32 %v2254, %v2388
  %v2391 = vadd.f32 %v2390, %v2260
  %v2392 = vmul.f32 %v2264, %v2391
  %v2393 = vadd.f32 %v2386, %v2392
  %v2395 = vrot.slane %v2281, 6
  %v2397 = vmul.f32 %v2274, %v2395
  %v2398 = vadd.f32 %v2397, %v2280
  %v2399 = vmul.f32 %v2284, %v2398
  %v2400 = vadd.f32 %v2393, %v2399
  %2401 = vst.msk [vmem:[#allocation2] sm:$0xc] %vm732, %v2400
  %v2403 = vrot.slane %v2293, 6
  %v2405 = vmul.f32 %v1973, %v2403
  %v2406 = vadd.f32 %v2405, %v1980
  %v2407 = vmul.f32 %v1984, %v2406
  %v2408 = vadd.f32 %v2407, 0.0
  %v2410 = vrot.slane %v2300, 6
  %v2412 = vmul.f32 %v1994, %v2410
  %v2413 = vadd.f32 %v2412, %v2000
  %v2414 = vmul.f32 %v2004, %v2413
  %v2415 = vadd.f32 %v2408, %v2414
  %v2417 = vrot.slane %v2307, 6
  %v2419 = vmul.f32 %v2014, %v2417
  %v2420 = vadd.f32 %v2419, %v2020
  %v2421 = vmul.f32 %v2024, %v2420
  %v2422 = vadd.f32 %v2415, %v2421
  %v2424 = vrot.slane %v2314, 6
  %v2426 = vmul.f32 %v2034, %v2424
  %v2427 = vadd.f32 %v2426, %v2040
  %v2428 = vmul.f32 %v2044, %v2427
  %v2429 = vadd.f32 %v2422, %v2428
  %v2431 = vrot.slane %v2321, 6
  %v2433 = vmul.f32 %v2054, %v2431
  %v2434 = vadd.f32 %v2433, %v2060
  %v2435 = vmul.f32 %v2064, %v2434
  %v2436 = vadd.f32 %v2429, %v2435
  %v2438 = vrot.slane %v2328, 6
  %v2440 = vmul.f32 %v2074, %v2438
  %v2441 = vadd.f32 %v2440, %v2080
  %v2442 = vmul.f32 %v2084, %v2441
  %v2443 = vadd.f32 %v2436, %v2442
  %v2445 = vrot.slane %v2335, 6
  %v2447 = vmul.f32 %v2094, %v2445
  %v2448 = vadd.f32 %v2447, %v2100
  %v2449 = vmul.f32 %v2104, %v2448
  %v2450 = vadd.f32 %v2443, %v2449
  %v2452 = vrot.slane %v2342, 6
  %v2454 = vmul.f32 %v2114, %v2452
  %v2455 = vadd.f32 %v2454, %v2120
  %v2456 = vmul.f32 %v2124, %v2455
  %v2457 = vadd.f32 %v2450, %v2456
  %v2459 = vrot.slane %v2349, 6
  %v2461 = vmul.f32 %v2134, %v2459
  %v2462 = vadd.f32 %v2461, %v2140
  %v2463 = vmul.f32 %v2144, %v2462
  %v2464 = vadd.f32 %v2457, %v2463
  %v2466 = vrot.slane %v2356, 6
  %v2468 = vmul.f32 %v2154, %v2466
  %v2469 = vadd.f32 %v2468, %v2160
  %v2470 = vmul.f32 %v2164, %v2469
  %v2471 = vadd.f32 %v2464, %v2470
  %v2473 = vrot.slane %v2363, 6
  %v2475 = vmul.f32 %v2174, %v2473
  %v2476 = vadd.f32 %v2475, %v2180
  %v2477 = vmul.f32 %v2184, %v2476
  %v2478 = vadd.f32 %v2471, %v2477
  %v2480 = vrot.slane %v2370, 6
  %v2482 = vmul.f32 %v2194, %v2480
  %v2483 = vadd.f32 %v2482, %v2200
  %v2484 = vmul.f32 %v2204, %v2483
  %v2485 = vadd.f32 %v2478, %v2484
  %v2487 = vrot.slane %v2377, 6
  %v2489 = vmul.f32 %v2214, %v2487
  %v2490 = vadd.f32 %v2489, %v2220
  %v2491 = vmul.f32 %v2224, %v2490
  %v2492 = vadd.f32 %v2485, %v2491
  %v2494 = vrot.slane %v2384, 6
  %v2496 = vmul.f32 %v2234, %v2494
  %v2497 = vadd.f32 %v2496, %v2240
  %v2498 = vmul.f32 %v2244, %v2497
  %v2499 = vadd.f32 %v2492, %v2498
  %v2501 = vrot.slane %v2391, 6
  %v2503 = vmul.f32 %v2254, %v2501
  %v2504 = vadd.f32 %v2503, %v2260
  %v2505 = vmul.f32 %v2264, %v2504
  %v2506 = vadd.f32 %v2499, %v2505
  %v2508 = vrot.slane %v2398, 6
  %v2510 = vmul.f32 %v2274, %v2508
  %v2511 = vadd.f32 %v2510, %v2280
  %v2512 = vmul.f32 %v2284, %v2511
  %v2513 = vadd.f32 %v2506, %v2512
  %2514 = vst.msk [vmem:[#allocation2] sm:$0x30] %vm846, %v2513
  %v2516 = vrot.slane %v2406, 6
  %v2518 = vmul.f32 %v1973, %v2516
  %v2519 = vadd.f32 %v2518, %v1980
  %v2520 = vmul.f32 %v1984, %v2519
  %v2521 = vadd.f32 %v2520, 0.0
  %v2523 = vrot.slane %v2413, 6
  %v2525 = vmul.f32 %v1994, %v2523
  %v2526 = vadd.f32 %v2525, %v2000
  %v2527 = vmul.f32 %v2004, %v2526
  %v2528 = vadd.f32 %v2521, %v2527
  %v2530 = vrot.slane %v2420, 6
  %v2532 = vmul.f32 %v2014, %v2530
  %v2533 = vadd.f32 %v2532, %v2020
  %v2534 = vmul.f32 %v2024, %v2533
  %v2535 = vadd.f32 %v2528, %v2534
  %v2537 = vrot.slane %v2427, 6
  %v2539 = vmul.f32 %v2034, %v2537
  %v2540 = vadd.f32 %v2539, %v2040
  %v2541 = vmul.f32 %v2044, %v2540
  %v2542 = vadd.f32 %v2535, %v2541
  %v2544 = vrot.slane %v2434, 6
  %v2546 = vmul.f32 %v2054, %v2544
  %v2547 = vadd.f32 %v2546, %v2060
  %v2548 = vmul.f32 %v2064, %v2547
  %v2549 = vadd.f32 %v2542, %v2548
  %v2551 = vrot.slane %v2441, 6
  %v2553 = vmul.f32 %v2074, %v2551
  %v2554 = vadd.f32 %v2553, %v2080
  %v2555 = vmul.f32 %v2084, %v2554
  %v2556 = vadd.f32 %v2549, %v2555
  %v2558 = vrot.slane %v2448, 6
  %v2560 = vmul.f32 %v2094, %v2558
  %v2561 = vadd.f32 %v2560, %v2100
  %v2562 = vmul.f32 %v2104, %v2561
  %v2563 = vadd.f32 %v2556, %v2562
  %v2565 = vrot.slane %v2455, 6
  %v2567 = vmul.f32 %v2114, %v2565
  %v2568 = vadd.f32 %v2567, %v2120
  %v2569 = vmul.f32 %v2124, %v2568
  %v2570 = vadd.f32 %v2563, %v2569
  %v2572 = vrot.slane %v2462, 6
  %v2574 = vmul.f32 %v2134, %v2572
  %v2575 = vadd.f32 %v2574, %v2140
  %v2576 = vmul.f32 %v2144, %v2575
  %v2577 = vadd.f32 %v2570, %v2576
  %v2579 = vrot.slane %v2469, 6
  %v2581 = vmul.f32 %v2154, %v2579
  %v2582 = vadd.f32 %v2581, %v2160
  %v2583 = vmul.f32 %v2164, %v2582
  %v2584 = vadd.f32 %v2577, %v2583
  %v2586 = vrot.slane %v2476, 6
  %v2588 = vmul.f32 %v2174, %v2586
  %v2589 = vadd.f32 %v2588, %v2180
  %v2590 = vmul.f32 %v2184, %v2589
  %v2591 = vadd.f32 %v2584, %v2590
  %v2593 = vrot.slane %v2483, 6
  %v2595 = vmul.f32 %v2194, %v2593
  %v2596 = vadd.f32 %v2595, %v2200
  %v2597 = vmul.f32 %v2204, %v2596
  %v2598 = vadd.f32 %v2591, %v2597
  %v2600 = vrot.slane %v2490, 6
  %v2602 = vmul.f32 %v2214, %v2600
  %v2603 = vadd.f32 %v2602, %v2220
  %v2604 = vmul.f32 %v2224, %v2603
  %v2605 = vadd.f32 %v2598, %v2604
  %v2607 = vrot.slane %v2497, 6
  %v2609 = vmul.f32 %v2234, %v2607
  %v2610 = vadd.f32 %v2609, %v2240
  %v2611 = vmul.f32 %v2244, %v2610
  %v2612 = vadd.f32 %v2605, %v2611
  %v2614 = vrot.slane %v2504, 6
  %v2616 = vmul.f32 %v2254, %v2614
  %v2617 = vadd.f32 %v2616, %v2260
  %v2618 = vmul.f32 %v2264, %v2617
  %v2619 = vadd.f32 %v2612, %v2618
  %v2621 = vrot.slane %v2511, 6
  %v2623 = vmul.f32 %v2274, %v2621
  %v2624 = vadd.f32 %v2623, %v2280
  %v2625 = vmul.f32 %v2284, %v2624
  %v2626 = vadd.f32 %v2619, %v2625
  %2627 = vst.msk [vmem:[#allocation2] sm:$0xc0] %vm960, %v2626
  %v2628 = vmul.f32 %v1964, %v1970
  %v2629 = vmul.f32 %v2628, 1.442695
  %v2630 = vpow.pop %v2629
  %v2632 = vrot.slane %v2519, 6
  %v2634 = vmul.f32 %v2630, %v2632
  %2636 = vset.pattern.permute.xlu0 64
  %2637 = vperm.xlu0 %2636, %v1938
  %v2638 = vpop.permute.xlu0 %2637
  %v2640 = vmul.f32 %v2638, %v1966
  %v2641 = vadd.f32 %v2634, %v2640
  %2642 = vset.pattern.permute.xlu0 80
  %2643 = vperm.xlu0 %2642, %v1938
  %v2644 = vpop.permute.xlu0 %2643
  %v2646 = vmul.f32 %v2644, %v2641
  %v2647 = vadd.f32 %v2646, 0.0
  %v2648 = vmul.f32 %v1964, %v1991
  %v2649 = vmul.f32 %v2648, 1.442695
  %v2650 = vpow.pop %v2649
  %v2652 = vrot.slane %v2526, 6
  %v2654 = vmul.f32 %v2650, %v2652
  %2655 = vset.pattern.permute.xlu0 65
  %2656 = vperm.xlu0 %2655, %v1938
  %v2657 = vpop.permute.xlu0 %2656
  %v2659 = vmul.f32 %v2657, %v1966
  %v2660 = vadd.f32 %v2654, %v2659
  %2661 = vset.pattern.permute.xlu0 81
  %2662 = vperm.xlu0 %2661, %v1938
  %v2663 = vpop.permute.xlu0 %2662
  %v2665 = vmul.f32 %v2663, %v2660
  %v2666 = vadd.f32 %v2647, %v2665
  %v2667 = vmul.f32 %v1964, %v2011
  %v2668 = vmul.f32 %v2667, 1.442695
  %v2669 = vpow.pop %v2668
  %v2671 = vrot.slane %v2533, 6
  %v2673 = vmul.f32 %v2669, %v2671
  %2674 = vset.pattern.permute.xlu0 66
  %2675 = vperm.xlu0 %2674, %v1938
  %v2676 = vpop.permute.xlu0 %2675
  %v2678 = vmul.f32 %v2676, %v1966
  %v2679 = vadd.f32 %v2673, %v2678
  %2680 = vset.pattern.permute.xlu0 82
  %2681 = vperm.xlu0 %2680, %v1938
  %v2682 = vpop.permute.xlu0 %2681
  %v2684 = vmul.f32 %v2682, %v2679
  %v2685 = vadd.f32 %v2666, %v2684
  %v2686 = vmul.f32 %v1964, %v2031
  %v2687 = vmul.f32 %v2686, 1.442695
  %v2688 = vpow.pop %v2687
  %v2690 = vrot.slane %v2540, 6
  %v2692 = vmul.f32 %v2688, %v2690
  %2693 = vset.pattern.permute.xlu0 67
  %2694 = vperm.xlu0 %2693, %v1938
  %v2695 = vpop.permute.xlu0 %2694
  %v2697 = vmul.f32 %v2695, %v1966
  %v2698 = vadd.f32 %v2692, %v2697
  %2699 = vset.pattern.permute.xlu0 83
  %2700 = vperm.xlu0 %2699, %v1938
  %v2701 = vpop.permute.xlu0 %2700
  %v2703 = vmul.f32 %v2701, %v2698
  %v2704 = vadd.f32 %v2685, %v2703
  %v2705 = vmul.f32 %v1964, %v2051
  %v2706 = vmul.f32 %v2705, 1.442695
  %v2707 = vpow.pop %v2706
  %v2709 = vrot.slane %v2547, 6
  %v2711 = vmul.f32 %v2707, %v2709
  %2712 = vset.pattern.permute.xlu0 68
  %2713 = vperm.xlu0 %2712, %v1938
  %v2714 = vpop.permute.xlu0 %2713
  %v2716 = vmul.f32 %v2714, %v1966
  %v2717 = vadd.f32 %v2711, %v2716
  %2718 = vset.pattern.permute.xlu0 84
  %2719 = vperm.xlu0 %2718, %v1938
  %v2720 = vpop.permute.xlu0 %2719
  %v2722 = vmul.f32 %v2720, %v2717
  %v2723 = vadd.f32 %v2704, %v2722
  %v2724 = vmul.f32 %v1964, %v2071
  %v2725 = vmul.f32 %v2724, 1.442695
  %v2726 = vpow.pop %v2725
  %v2728 = vrot.slane %v2554, 6
  %v2730 = vmul.f32 %v2726, %v2728
  %2731 = vset.pattern.permute.xlu0 69
  %2732 = vperm.xlu0 %2731, %v1938
  %v2733 = vpop.permute.xlu0 %2732
  %v2735 = vmul.f32 %v2733, %v1966
  %v2736 = vadd.f32 %v2730, %v2735
  %2737 = vset.pattern.permute.xlu0 85
  %2738 = vperm.xlu0 %2737, %v1938
  %v2739 = vpop.permute.xlu0 %2738
  %v2741 = vmul.f32 %v2739, %v2736
  %v2742 = vadd.f32 %v2723, %v2741
  %v2743 = vmul.f32 %v1964, %v2091
  %v2744 = vmul.f32 %v2743, 1.442695
  %v2745 = vpow.pop %v2744
  %v2747 = vrot.slane %v2561, 6
  %v2749 = vmul.f32 %v2745, %v2747
  %2750 = vset.pattern.permute.xlu0 70
  %2751 = vperm.xlu0 %2750, %v1938
  %v2752 = vpop.permute.xlu0 %2751
  %v2754 = vmul.f32 %v2752, %v1966
  %v2755 = vadd.f32 %v2749, %v2754
  %2756 = vset.pattern.permute.xlu0 86
  %2757 = vperm.xlu0 %2756, %v1938
  %v2758 = vpop.permute.xlu0 %2757
  %v2760 = vmul.f32 %v2758, %v2755
  %v2761 = vadd.f32 %v2742, %v2760
  %v2762 = vmul.f32 %v1964, %v2111
  %v2763 = vmul.f32 %v2762, 1.442695
  %v2764 = vpow.pop %v2763
  %v2766 = vrot.slane %v2568, 6
  %v2768 = vmul.f32 %v2764, %v2766
  %2769 = vset.pattern.permute.xlu0 71
  %2770 = vperm.xlu0 %2769, %v1938
  %v2771 = vpop.permute.xlu0 %2770
  %v2773 = vmul.f32 %v2771, %v1966
  %v2774 = vadd.f32 %v2768, %v2773
  %2775 = vset.pattern.permute.xlu0 87
  %2776 = vperm.xlu0 %2775, %v1938
  %v2777 = vpop.permute.xlu0 %2776
  %v2779 = vmul.f32 %v2777, %v2774
  %v2780 = vadd.f32 %v2761, %v2779
  %v2781 = vmul.f32 %v1964, %v2131
  %v2782 = vmul.f32 %v2781, 1.442695
  %v2783 = vpow.pop %v2782
  %v2785 = vrot.slane %v2575, 6
  %v2787 = vmul.f32 %v2783, %v2785
  %2788 = vset.pattern.permute.xlu0 72
  %2789 = vperm.xlu0 %2788, %v1938
  %v2790 = vpop.permute.xlu0 %2789
  %v2792 = vmul.f32 %v2790, %v1966
  %v2793 = vadd.f32 %v2787, %v2792
  %2794 = vset.pattern.permute.xlu0 88
  %2795 = vperm.xlu0 %2794, %v1938
  %v2796 = vpop.permute.xlu0 %2795
  %v2798 = vmul.f32 %v2796, %v2793
  %v2799 = vadd.f32 %v2780, %v2798
  %v2800 = vmul.f32 %v1964, %v2151
  %v2801 = vmul.f32 %v2800, 1.442695
  %v2802 = vpow.pop %v2801
  %v2804 = vrot.slane %v2582, 6
  %v2806 = vmul.f32 %v2802, %v2804
  %2807 = vset.pattern.permute.xlu0 73
  %2808 = vperm.xlu0 %2807, %v1938
  %v2809 = vpop.permute.xlu0 %2808
  %v2811 = vmul.f32 %v2809, %v1966
  %v2812 = vadd.f32 %v2806, %v2811
  %2813 = vset.pattern.permute.xlu0 89
  %2814 = vperm.xlu0 %2813, %v1938
  %v2815 = vpop.permute.xlu0 %2814
  %v2817 = vmul.f32 %v2815, %v2812
  %v2818 = vadd.f32 %v2799, %v2817
  %v2819 = vmul.f32 %v1964, %v2171
  %v2820 = vmul.f32 %v2819, 1.442695
  %v2821 = vpow.pop %v2820
  %v2823 = vrot.slane %v2589, 6
  %v2825 = vmul.f32 %v2821, %v2823
  %2826 = vset.pattern.permute.xlu0 74
  %2827 = vperm.xlu0 %2826, %v1938
  %v2828 = vpop.permute.xlu0 %2827
  %v2830 = vmul.f32 %v2828, %v1966
  %v2831 = vadd.f32 %v2825, %v2830
  %2832 = vset.pattern.permute.xlu0 90
  %2833 = vperm.xlu0 %2832, %v1938
  %v2834 = vpop.permute.xlu0 %2833
  %v2836 = vmul.f32 %v2834, %v2831
  %v2837 = vadd.f32 %v2818, %v2836
  %v2838 = vmul.f32 %v1964, %v2191
  %v2839 = vmul.f32 %v2838, 1.442695
  %v2840 = vpow.pop %v2839
  %v2842 = vrot.slane %v2596, 6
  %v2844 = vmul.f32 %v2840, %v2842
  %2845 = vset.pattern.permute.xlu0 75
  %2846 = vperm.xlu0 %2845, %v1938
  %v2847 = vpop.permute.xlu0 %2846
  %v2849 = vmul.f32 %v2847, %v1966
  %v2850 = vadd.f32 %v2844, %v2849
  %2851 = vset.pattern.permute.xlu0 91
  %2852 = vperm.xlu0 %2851, %v1938
  %v2853 = vpop.permute.xlu0 %2852
  %v2855 = vmul.f32 %v2853, %v2850
  %v2856 = vadd.f32 %v2837, %v2855
  %v2857 = vmul.f32 %v1964, %v2211
  %v2858 = vmul.f32 %v2857, 1.442695
  %v2859 = vpow.pop %v2858
  %v2861 = vrot.slane %v2603, 6
  %v2863 = vmul.f32 %v2859, %v2861
  %2864 = vset.pattern.permute.xlu0 76
  %2865 = vperm.xlu0 %2864, %v1938
  %v2866 = vpop.permute.xlu0 %2865
  %v2868 = vmul.f32 %v2866, %v1966
  %v2869 = vadd.f32 %v2863, %v2868
  %2870 = vset.pattern.permute.xlu0 92
  %2871 = vperm.xlu0 %2870, %v1938
  %v2872 = vpop.permute.xlu0 %2871
  %v2874 = vmul.f32 %v2872, %v2869
  %v2875 = vadd.f32 %v2856, %v2874
  %v2876 = vmul.f32 %v1964, %v2231
  %v2877 = vmul.f32 %v2876, 1.442695
  %v2878 = vpow.pop %v2877
  %v2880 = vrot.slane %v2610, 6
  %v2882 = vmul.f32 %v2878, %v2880
  %2883 = vset.pattern.permute.xlu0 77
  %2884 = vperm.xlu0 %2883, %v1938
  %v2885 = vpop.permute.xlu0 %2884
  %v2887 = vmul.f32 %v2885, %v1966
  %v2888 = vadd.f32 %v2882, %v2887
  %2889 = vset.pattern.permute.xlu0 93
  %2890 = vperm.xlu0 %2889, %v1938
  %v2891 = vpop.permute.xlu0 %2890
  %v2893 = vmul.f32 %v2891, %v2888
  %v2894 = vadd.f32 %v2875, %v2893
  %v2895 = vmul.f32 %v1964, %v2251
  %v2896 = vmul.f32 %v2895, 1.442695
  %v2897 = vpow.pop %v2896
  %v2899 = vrot.slane %v2617, 6
  %v2901 = vmul.f32 %v2897, %v2899
  %2902 = vset.pattern.permute.xlu0 78
  %2903 = vperm.xlu0 %2902, %v1938
  %v2904 = vpop.permute.xlu0 %2903
  %v2906 = vmul.f32 %v2904, %v1966
  %v2907 = vadd.f32 %v2901, %v2906
  %2908 = vset.pattern.permute.xlu0 94
  %2909 = vperm.xlu0 %2908, %v1938
  %v2910 = vpop.permute.xlu0 %2909
  %v2912 = vmul.f32 %v2910, %v2907
  %v2913 = vadd.f32 %v2894, %v2912
  %v2914 = vmul.f32 %v1964, %v2271
  %v2915 = vmul.f32 %v2914, 1.442695
  %v2916 = vpow.pop %v2915
  %v2918 = vrot.slane %v2624, 6
  %v2920 = vmul.f32 %v2916, %v2918
  %2921 = vset.pattern.permute.xlu0 79
  %2922 = vperm.xlu0 %2921, %v1938
  %v2923 = vpop.permute.xlu0 %2922
  %v2925 = vmul.f32 %v2923, %v1966
  %v2926 = vadd.f32 %v2920, %v2925
  %2927 = vset.pattern.permute.xlu0 95
  %2928 = vperm.xlu0 %2927, %v1938
  %v2929 = vpop.permute.xlu0 %2928
  %v2931 = vmul.f32 %v2929, %v2926
  %v2932 = vadd.f32 %v2913, %v2931
  %2933 = vst.msk [vmem:[#allocation2 + $0x8] sm:$0x3] %vm618, %v2932
  %v2935 = vrot.slane %v2641, 6
  %v2937 = vmul.f32 %v2630, %v2935
  %v2938 = vadd.f32 %v2937, %v2640
  %v2939 = vmul.f32 %v2644, %v2938
  %v2940 = vadd.f32 %v2939, 0.0
  %v2942 = vrot.slane %v2660, 6
  %v2944 = vmul.f32 %v2650, %v2942
  %v2945 = vadd.f32 %v2944, %v2659
  %v2946 = vmul.f32 %v2663, %v2945
  %v2947 = vadd.f32 %v2940, %v2946
  %v2949 = vrot.slane %v2679, 6
  %v2951 = vmul.f32 %v2669, %v2949
  %v2952 = vadd.f32 %v2951, %v2678
  %v2953 = vmul.f32 %v2682, %v2952
  %v2954 = vadd.f32 %v2947, %v2953
  %v2956 = vrot.slane %v2698, 6
  %v2958 = vmul.f32 %v2688, %v2956
  %v2959 = vadd.f32 %v2958, %v2697
  %v2960 = vmul.f32 %v2701, %v2959
  %v2961 = vadd.f32 %v2954, %v2960
  %v2963 = vrot.slane %v2717, 6
  %v2965 = vmul.f32 %v2707, %v2963
  %v2966 = vadd.f32 %v2965, %v2716
  %v2967 = vmul.f32 %v2720, %v2966
  %v2968 = vadd.f32 %v2961, %v2967
  %v2970 = vrot.slane %v2736, 6
  %v2972 = vmul.f32 %v2726, %v2970
  %v2973 = vadd.f32 %v2972, %v2735
  %v2974 = vmul.f32 %v2739, %v2973
  %v2975 = vadd.f32 %v2968, %v2974
  %v2977 = vrot.slane %v2755, 6
  %v2979 = vmul.f32 %v2745, %v2977
  %v2980 = vadd.f32 %v2979, %v2754
  %v2981 = vmul.f32 %v2758, %v2980
  %v2982 = vadd.f32 %v2975, %v2981
  %v2984 = vrot.slane %v2774, 6
  %v2986 = vmul.f32 %v2764, %v2984
  %v2987 = vadd.f32 %v2986, %v2773
  %v2988 = vmul.f32 %v2777, %v2987
  %v2989 = vadd.f32 %v2982, %v2988
  %v2991 = vrot.slane %v2793, 6
  %v2993 = vmul.f32 %v2783, %v2991
  %v2994 = vadd.f32 %v2993, %v2792
  %v2995 = vmul.f32 %v2796, %v2994
  %v2996 = vadd.f32 %v2989, %v2995
  %v2998 = vrot.slane %v2812, 6
  %v3000 = vmul.f32 %v2802, %v2998
  %v3001 = vadd.f32 %v3000, %v2811
  %v3002 = vmul.f32 %v2815, %v3001
  %v3003 = vadd.f32 %v2996, %v3002
  %v3005 = vrot.slane %v2831, 6
  %v3007 = vmul.f32 %v2821, %v3005
  %v3008 = vadd.f32 %v3007, %v2830
  %v3009 = vmul.f32 %v2834, %v3008
  %v3010 = vadd.f32 %v3003, %v3009
  %v3012 = vrot.slane %v2850, 6
  %v3014 = vmul.f32 %v2840, %v3012
  %v3015 = vadd.f32 %v3014, %v2849
  %v3016 = vmul.f32 %v2853, %v3015
  %v3017 = vadd.f32 %v3010, %v3016
  %v3019 = vrot.slane %v2869, 6
  %v3021 = vmul.f32 %v2859, %v3019
  %v3022 = vadd.f32 %v3021, %v2868
  %v3023 = vmul.f32 %v2872, %v3022
  %v3024 = vadd.f32 %v3017, %v3023
  %v3026 = vrot.slane %v2888, 6
  %v3028 = vmul.f32 %v2878, %v3026
  %v3029 = vadd.f32 %v3028, %v2887
  %v3030 = vmul.f32 %v2891, %v3029
  %v3031 = vadd.f32 %v3024, %v3030
  %v3033 = vrot.slane %v2907, 6
  %v3035 = vmul.f32 %v2897, %v3033
  %v3036 = vadd.f32 %v3035, %v2906
  %v3037 = vmul.f32 %v2910, %v3036
  %v3038 = vadd.f32 %v3031, %v3037
  %v3040 = vrot.slane %v2926, 6
  %v3042 = vmul.f32 %v2916, %v3040
  %v3043 = vadd.f32 %v3042, %v2925
  %v3044 = vmul.f32 %v2929, %v3043
  %v3045 = vadd.f32 %v3038, %v3044
  %3046 = vst.msk [vmem:[#allocation2 + $0x8] sm:$0xc] %vm732, %v3045
  %v3048 = vrot.slane %v2938, 6
  %v3050 = vmul.f32 %v2630, %v3048
  %v3051 = vadd.f32 %v3050, %v2640
  %v3052 = vmul.f32 %v2644, %v3051
  %v3053 = vadd.f32 %v3052, 0.0
  %v3055 = vrot.slane %v2945, 6
  %v3057 = vmul.f32 %v2650, %v3055
  %v3058 = vadd.f32 %v3057, %v2659
  %v3059 = vmul.f32 %v2663, %v3058
  %v3060 = vadd.f32 %v3053, %v3059
  %v3062 = vrot.slane %v2952, 6
  %v3064 = vmul.f32 %v2669, %v3062
  %v3065 = vadd.f32 %v3064, %v2678
  %v3066 = vmul.f32 %v2682, %v3065
  %v3067 = vadd.f32 %v3060, %v3066
  %v3069 = vrot.slane %v2959, 6
  %v3071 = vmul.f32 %v2688, %v3069
  %v3072 = vadd.f32 %v3071, %v2697
  %v3073 = vmul.f32 %v2701, %v3072
  %v3074 = vadd.f32 %v3067, %v3073
  %v3076 = vrot.slane %v2966, 6
  %v3078 = vmul.f32 %v2707, %v3076
  %v3079 = vadd.f32 %v3078, %v2716
  %v3080 = vmul.f32 %v2720, %v3079
  %v3081 = vadd.f32 %v3074, %v3080
  %v3083 = vrot.slane %v2973, 6
  %v3085 = vmul.f32 %v2726, %v3083
  %v3086 = vadd.f32 %v3085, %v2735
  %v3087 = vmul.f32 %v2739, %v3086
  %v3088 = vadd.f32 %v3081, %v3087
  %v3090 = vrot.slane %v2980, 6
  %v3092 = vmul.f32 %v2745, %v3090
  %v3093 = vadd.f32 %v3092, %v2754
  %v3094 = vmul.f32 %v2758, %v3093
  %v3095 = vadd.f32 %v3088, %v3094
  %v3097 = vrot.slane %v2987, 6
  %v3099 = vmul.f32 %v2764, %v3097
  %v3100 = vadd.f32 %v3099, %v2773
  %v3101 = vmul.f32 %v2777, %v3100
  %v3102 = vadd.f32 %v3095, %v3101
  %v3104 = vrot.slane %v2994, 6
  %v3106 = vmul.f32 %v2783, %v3104
  %v3107 = vadd.f32 %v3106, %v2792
  %v3108 = vmul.f32 %v2796, %v3107
  %v3109 = vadd.f32 %v3102, %v3108
  %v3111 = vrot.slane %v3001, 6
  %v3113 = vmul.f32 %v2802, %v3111
  %v3114 = vadd.f32 %v3113, %v2811
  %v3115 = vmul.f32 %v2815, %v3114
  %v3116 = vadd.f32 %v3109, %v3115
  %v3118 = vrot.slane %v3008, 6
  %v3120 = vmul.f32 %v2821, %v3118
  %v3121 = vadd.f32 %v3120, %v2830
  %v3122 = vmul.f32 %v2834, %v3121
  %v3123 = vadd.f32 %v3116, %v3122
  %v3125 = vrot.slane %v3015, 6
  %v3127 = vmul.f32 %v2840, %v3125
  %v3128 = vadd.f32 %v3127, %v2849
  %v3129 = vmul.f32 %v2853, %v3128
  %v3130 = vadd.f32 %v3123, %v3129
  %v3132 = vrot.slane %v3022, 6
  %v3134 = vmul.f32 %v2859, %v3132
  %v3135 = vadd.f32 %v3134, %v2868
  %v3136 = vmul.f32 %v2872, %v3135
  %v3137 = vadd.f32 %v3130, %v3136
  %v3139 = vrot.slane %v3029, 6
  %v3141 = vmul.f32 %v2878, %v3139
  %v3142 = vadd.f32 %v3141, %v2887
  %v3143 = vmul.f32 %v2891, %v3142
  %v3144 = vadd.f32 %v3137, %v3143
  %v3146 = vrot.slane %v3036, 6
  %v3148 = vmul.f32 %v2897, %v3146
  %v3149 = vadd.f32 %v3148, %v2906
  %v3150 = vmul.f32 %v2910, %v3149
  %v3151 = vadd.f32 %v3144, %v3150
  %v3153 = vrot.slane %v3043, 6
  %v3155 = vmul.f32 %v2916, %v3153
  %v3156 = vadd.f32 %v3155, %v2925
  %v3157 = vmul.f32 %v2929, %v3156
  %v3158 = vadd.f32 %v3151, %v3157
  %3159 = vst.msk [vmem:[#allocation2 + $0x8] sm:$0x30] %vm846, %v3158
  %v3161 = vrot.slane %v3051, 6
  %v3163 = vmul.f32 %v2630, %v3161
  %v3164 = vadd.f32 %v3163, %v2640
  %v3165 = vmul.f32 %v2644, %v3164
  %v3166 = vadd.f32 %v3165, 0.0
  %v3168 = vrot.slane %v3058, 6
  %v3170 = vmul.f32 %v2650, %v3168
  %v3171 = vadd.f32 %v3170, %v2659
  %v3172 = vmul.f32 %v2663, %v3171
  %v3173 = vadd.f32 %v3166, %v3172
  %v3175 = vrot.slane %v3065, 6
  %v3177 = vmul.f32 %v2669, %v3175
  %v3178 = vadd.f32 %v3177, %v2678
  %v3179 = vmul.f32 %v2682, %v3178
  %v3180 = vadd.f32 %v3173, %v3179
  %v3182 = vrot.slane %v3072, 6
  %v3184 = vmul.f32 %v2688, %v3182
  %v3185 = vadd.f32 %v3184, %v2697
  %v3186 = vmul.f32 %v2701, %v3185
  %v3187 = vadd.f32 %v3180, %v3186
  %v3189 = vrot.slane %v3079, 6
  %v3191 = vmul.f32 %v2707, %v3189
  %v3192 = vadd.f32 %v3191, %v2716
  %v3193 = vmul.f32 %v2720, %v3192
  %v3194 = vadd.f32 %v3187, %v3193
  %v3196 = vrot.slane %v3086, 6
  %v3198 = vmul.f32 %v2726, %v3196
  %v3199 = vadd.f32 %v3198, %v2735
  %v3200 = vmul.f32 %v2739, %v3199
  %v3201 = vadd.f32 %v3194, %v3200
  %v3203 = vrot.slane %v3093, 6
  %v3205 = vmul.f32 %v2745, %v3203
  %v3206 = vadd.f32 %v3205, %v2754
  %v3207 = vmul.f32 %v2758, %v3206
  %v3208 = vadd.f32 %v3201, %v3207
  %v3210 = vrot.slane %v3100, 6
  %v3212 = vmul.f32 %v2764, %v3210
  %v3213 = vadd.f32 %v3212, %v2773
  %v3214 = vmul.f32 %v2777, %v3213
  %v3215 = vadd.f32 %v3208, %v3214
  %v3217 = vrot.slane %v3107, 6
  %v3219 = vmul.f32 %v2783, %v3217
  %v3220 = vadd.f32 %v3219, %v2792
  %v3221 = vmul.f32 %v2796, %v3220
  %v3222 = vadd.f32 %v3215, %v3221
  %v3224 = vrot.slane %v3114, 6
  %v3226 = vmul.f32 %v2802, %v3224
  %v3227 = vadd.f32 %v3226, %v2811
  %v3228 = vmul.f32 %v2815, %v3227
  %v3229 = vadd.f32 %v3222, %v3228
  %v3231 = vrot.slane %v3121, 6
  %v3233 = vmul.f32 %v2821, %v3231
  %v3234 = vadd.f32 %v3233, %v2830
  %v3235 = vmul.f32 %v2834, %v3234
  %v3236 = vadd.f32 %v3229, %v3235
  %v3238 = vrot.slane %v3128, 6
  %v3240 = vmul.f32 %v2840, %v3238
  %v3241 = vadd.f32 %v3240, %v2849
  %v3242 = vmul.f32 %v2853, %v3241
  %v3243 = vadd.f32 %v3236, %v3242
  %v3245 = vrot.slane %v3135, 6
  %v3247 = vmul.f32 %v2859, %v3245
  %v3248 = vadd.f32 %v3247, %v2868
  %v3249 = vmul.f32 %v2872, %v3248
  %v3250 = vadd.f32 %v3243, %v3249
  %v3252 = vrot.slane %v3142, 6
  %v3254 = vmul.f32 %v2878, %v3252
  %v3255 = vadd.f32 %v3254, %v2887
  %v3256 = vmul.f32 %v2891, %v3255
  %v3257 = vadd.f32 %v3250, %v3256
  %v3259 = vrot.slane %v3149, 6
  %v3261 = vmul.f32 %v2897, %v3259
  %v3262 = vadd.f32 %v3261, %v2906
  %v3263 = vmul.f32 %v2910, %v3262
  %v3264 = vadd.f32 %v3257, %v3263
  %v3266 = vrot.slane %v3156, 6
  %v3268 = vmul.f32 %v2916, %v3266
  %v3269 = vadd.f32 %v3268, %v2925
  %v3270 = vmul.f32 %v2929, %v3269
  %v3271 = vadd.f32 %v3264, %v3270
  %3272 = vst.msk [vmem:[#allocation2 + $0x8] sm:$0xc0] %vm960, %v3271
  %v3273 = vld [vmem:[#allocation2] sm:$0xff]
  %v3274 = vld [vmem:[#allocation2 + $0x8] sm:$0xff]
  %v3275 = vlaneseq
  %v3276 = vshrl.u32 %v3275, 7
  %v3277 = vsub.s32 6, %v3276
  %v3278 = vrot.slane %v1708, %v3277
  %v3279 = vmul.f32 %v1870, %v3278
  %v3280 = vmul.f32 %v1871, %v3278
  %v3281 = vadd.f32 %v3273, %v3279
  %v3282 = vadd.f32 %v3274, %v3280
  %v3283 = vsub.f32 0.0, %v1796
  %v3284 = vsub.f32 0.0, %v1799
  %v3285 = vmul.f32 %v3283, 1.442695
  %v3286 = vpow.pop %v3285
  %v3287 = vmul.f32 %v3284, 1.442695
  %v3288 = vpow.pop %v3287
  %v3289 = vadd.f32 %v3286, 1.0
  %v3290 = vadd.f32 %v3288, 1.0
  %v3291 = vrcp.pop %v3289
  %v3292 = vmul.f32 1.0, %v3291
  %v3293 = vrcp.pop %v3290
  %v3294 = vmul.f32 1.0, %v3293
  %v3295 = vmul.f32 %v1796, %v3292
  %v3296 = vmul.f32 %v1799, %v3294
  %3299 = vrot.lane.b32.xlu0 %v3295, 64
  %v3300 = vpop.permute.xlu0 %3299
  %3301 = vrot.lane.b32.xlu0 %v3296, 64
  %v3302 = vpop.permute.xlu0 %3301
  %v3305 = vmul.f32 %v3281, %v3300
  %v3306 = vmul.f32 %v3282, %v3302
  %v3307 = vpack.c.bf16 %v3306, %v3305
  %3308 = vrot.lane.b32.xlu0 %v1889, 32
  %v3309 = vpop.permute.xlu0 %3308
  %3310 = vrot.lane.b32.xlu0 %v1890, 32
  %v3311 = vpop.permute.xlu0 %3310
  %3312 = vrot.lane.b32.xlu0 %v1891, 32
  %v3313 = vpop.permute.xlu0 %3312
  %3314 = vrot.lane.b32.xlu0 %v1892, 32
  %v3315 = vpop.permute.xlu0 %3314
  %v3321 = vsel %vm226, %v3307, 0
  %3323 = vmatprep.subr.bf16.mxu0 0
  %3324 = vmatpush1.bf16.msra.mxu0 %v3309
  %3325 = vmatprep.subr.bf16.mxu0 0
  %3326 = vmatpush1.bf16.msra.mxu0 %v3311
  %3327 = vmatprep.subr.bf16.mxu0 0
  %3328 = vmatpush1.bf16.msra.mxu0 %v3313
  %3329 = vmatprep.subr.bf16.mxu0 0
  %3330 = vmatpush1.bf16.msra.mxu0 %v3315
  %3331 = vmatprep.subr.bf16.mxu0 0
  %3332 = vmatpush1.bf16.msra.mxu0 0
  %3333 = vmatprep.subr.bf16.mxu0 0
  %3334 = vmatpush1.bf16.msra.mxu0 0
  %3335 = vmatprep.subr.bf16.mxu0 0
  %3336 = vmatpush1.bf16.msra.mxu0 0
  %3337 = vmatprep.subr.bf16.mxu0 0
  %3338 = vmatpush1.bf16.msra.mxu0 0
  %3339 = vmatprep.subr.bf16.mxu0 0
  %3340 = vmatpush1.bf16.msra.mxu0 0
  %3341 = vmatprep.subr.bf16.mxu0 0
  %3342 = vmatpush1.bf16.msra.mxu0 0
  %3343 = vmatprep.subr.bf16.mxu0 0
  %3344 = vmatpush1.bf16.msra.mxu0 0
  %3345 = vmatprep.subr.bf16.mxu0 0
  %3346 = vmatpush1.bf16.msra.mxu0 0
  %3347 = vmatprep.subr.bf16.mxu0 0
  %3348 = vmatpush1.bf16.msra.mxu0 0
  %3349 = vmatprep.subr.bf16.mxu0 0
  %3350 = vmatpush1.bf16.msra.mxu0 0
  %3351 = vmatprep.subr.bf16.mxu0 0
  %3352 = vmatpush1.bf16.msra.mxu0 0
  %3353 = vmatprep.subr.bf16.mxu0 0
  %3354 = vmatpush1.bf16.msra.mxu0 0
  %3355 = vmatprep.mubr.bf16.mxu0 0
  %3356 = vmatmul.mubr.bf16.gmra.mrb[0].mxu0 %v3321
  %v3357 = vpop.f32.mrb[0].mxu0
  %v3358 = vadd.f32 0.0, %v3357
  %v3359 = vpop.f32.mrb[0].mxu0
  %v3360 = vpop.f32.mrb[0].mxu0
  %v3361 = vadd.f32 0.0, %v3360
  %v3362 = vpop.f32.mrb[0].mxu0
  %3363 = vdwg.mxu0
  %v3364 = vadd.f32 %v1698, %v3358
  %v3365 = vadd.f32 %v1699, %v3361
  %v3367 = vrot.slane %v3364, 2
  %v3369 = vadd.f32 %v3364, %v3367
  %v3370 = vrot.slane %v3364, 4
  %v3372 = vadd.f32 %v3369, %v3370
  %v3373 = vrot.slane %v3364, 6
  %v3375 = vadd.f32 %v3372, %v3373
  %v3376 = vadd.f32 %v3375, %v3365
  %v3378 = vrot.slane %v3365, 2
  %v3380 = vadd.f32 %v3376, %v3378
  %v3381 = vrot.slane %v3365, 4
  %v3383 = vadd.f32 %v3380, %v3381
  %v3384 = vrot.slane %v3365, 6
  %v3386 = vadd.f32 %v3383, %v3384
  %v3387 = vmul.f32 %v3386, 0.125
  %vm3388 = vcmask 254976
  %v3389 = vsel %vm3388, %v3387, 0.0
  %3390 = vadd.xlane.f32.xlu0 %v3389
  %v3391 = vpop.xlane.xlu0 %3390
  %v3392 = vmul.f32 %v3391, %v54
  %v3393 = vsub.f32 %v3387, %v3392
  %v3394 = vmul.f32 %v3393, %v3393
  %v3395 = vsel %vm3388, %v3394, 0.0
  %3396 = vadd.xlane.f32.xlu0 %v3395
  %v3397 = vpop.xlane.xlu0 %3396
  %v3398 = vmul.f32 %v3397, %v54
  %v3399 = vadd.f32 %v3398, 1e-05
  %v3400 = vrsqrt.pop %v3399
  %v3401 = vmul.f32 %v3393, %v3400
  %v3402 = vld [vmem:[%s6] sm:$0x1]
  %v3403 = vlaneseq
  %v3404 = vshrl.u32 %v3403, 7
  %v3405 = vsub.s32 0, %v3404
  %v3406 = vrot.slane %v3402, %v3405
  %v3407 = vmul.f32 %v3401, %v3406
  %v3408 = vld [vmem:[%s6 + $0x1] sm:$0x1]
  %v3409 = vlaneseq
  %v3410 = vshrl.u32 %v3409, 7
  %v3411 = vsub.s32 0, %v3410
  %v3412 = vrot.slane %v3408, %v3411
  %v3413 = vadd.f32 %v3407, %v3412
  %v3414 = vld [vmem:[%s6 + $0x2] sm:$0x1]
  %v3415 = vlaneseq
  %v3416 = vshrl.u32 %v3415, 7
  %v3417 = vsub.s32 0, %v3416
  %v3418 = vrot.slane %v3414, %v3417
  %v3419 = vmul.f32 %v3413, %v3418
  %v3420 = vsel %vm3388, %v3419, 0.0
  %3421 = vadd.xlane.f32.xlu0 %v3420
  %v3422 = vpop.xlane.xlu0 %3421
  %v3423 = vld [vmem:[%s6 + $0x3] sm:$0x1]
  %v3424 = vlaneseq
  %v3425 = vshrl.u32 %v3424, 7
  %v3426 = vsub.s32 0, %v3425
  %v3427 = vrot.slane %v3423, %v3426
  %v3428 = vadd.f32 %v3422, %v3427
  %vm3429 = vcmask 1024
  %3430 = vst.msk [vmem:[%s7] sm:$0x3] %vm3429, %v3428
  // Predicated region
  $region30: #{forward.1} parent=0 // pred_check
    _
  $region31: #{forward.1} parent=0 // pred_check_branch
    %3432 = sbr.rel (0) target = $region33
  $region32: #{forward.1} parent=0 // pred_region
    _
  $region33: #{forward.1} parent=0 // pred_fallthru
    _
  // Predicated region
  $region34: #{forward.1} parent=0 // pred_check
    _
  $region35: #{forward.1} parent=0 // pred_check_branch
    %3434 = sbr.rel (0) target = $region37
  $region36: #{forward.1} parent=0 // pred_region
    _
  $region37: #{forward.1} parent=0 // pred_fallthru
    _

</llo_original>
